<compile_context>
chip_gen: v6e
topology: v6e:2x2x1
jax: 0.10.0
libtpu: 0.0.40
codegen_flags: <defaults>
</compile_context>

<pallas_src>
import functools

import jax
import jax.numpy as jnp
from jax import lax
from jax.experimental import pallas as pl
from jax.experimental.pallas import tpu as pltpu


def _round_up(x, m):
    return ((x + m - 1) // m) * m


# ---------------------------------------------------------------------------
# LSTM branch: single fused kernel (input projection + recurrence)
# ---------------------------------------------------------------------------
def _lstm_branch_kernel(x_ref, wih_ref, whh_ref, b_ref, o_ref, xw_ref, *,
                        seq_len, bp, hidden):
    """Fused LSTM branch for one tile of `bp` batch rows.

    x_ref  : (T, bp, F)   time-major input tile
    wih_ref: (F, 4H)      W_ih^T
    whh_ref: (H, 4H)      W_hh^T
    b_ref  : (1, 4H)      b_ih + b_hh
    o_ref  : (bp, H)      last hidden state
    xw_ref : (T*bp, 4H)   VMEM scratch for the batched input projection
    """
    f_in = x_ref.shape[-1]
    # Batched input projection for ALL T steps in one MXU matmul (M = T*bp).
    x2d = x_ref[...].reshape(seq_len * bp, f_in)      # fold (T, bp) -> T*bp
    xw_ref[...] = (jnp.dot(x2d, wih_ref[...],
                           preferred_element_type=jnp.float32) + b_ref[...])

    h = jnp.zeros((bp, hidden), jnp.float32)
    c = jnp.zeros((bp, hidden), jnp.float32)
    # Static unroll of the recurrence (no per-step grid / pipeline overhead;
    # xw slices are static & 8-aligned; PyTorch gate order i, f, g, o).
    for t in range(seq_len):
        gates = (xw_ref[pl.ds(t * bp, bp), :]
                 + jnp.dot(h, whh_ref[...], preferred_element_type=jnp.float32))
        i = jax.nn.sigmoid(gates[:, 0 * hidden:1 * hidden])
        f = jax.nn.sigmoid(gates[:, 1 * hidden:2 * hidden])
        g = jnp.tanh(gates[:, 2 * hidden:3 * hidden])
        o = jax.nn.sigmoid(gates[:, 3 * hidden:4 * hidden])
        c = f * c + i * g
        h = o * jnp.tanh(c)
    o_ref[...] = h.astype(o_ref.dtype)


def lstm_branch_pallas(x, lstm_p):
    """x: (B, T, F) -> last hidden state (B, H)."""
    B, T, F = x.shape
    H = lstm_p['w_hh_t'].shape[0]
    BP = 8                                       # batch rows per grid step
    b_pad = _round_up(B, BP)

    xt = jnp.transpose(x, (1, 0, 2))             # (T, B, F) -- tiny glue
    if b_pad != B:
        xt = jnp.pad(xt, ((0, 0), (0, b_pad - B), (0, 0)))

    kernel = functools.partial(_lstm_branch_kernel, seq_len=T, bp=BP, hidden=H)
    out = pl.pallas_call(
        kernel,
        out_shape=jax.ShapeDtypeStruct((b_pad, H), jnp.float32),
        grid_spec=pltpu.PrefetchScalarGridSpec(
            num_scalar_prefetch=0,
            grid=(b_pad // BP,),                 # parallel batch tiles (v7x: 2 TCs)
            in_specs=[pl.BlockSpec((T, BP, F), lambda i: (0, i, 0)),
                      pl.BlockSpec((F, 4 * H), lambda i: (0, 0)),
                      pl.BlockSpec((H, 4 * H), lambda i: (0, 0)),
                      pl.BlockSpec((1, 4 * H), lambda i: (0, 0))],
            out_specs=pl.BlockSpec((BP, H), lambda i: (i, 0)),
            scratch_shapes=[pltpu.VMEM((T * BP, 4 * H), jnp.float32)]),
        compiler_params=pltpu.CompilerParams(
            dimension_semantics=("parallel",)),
        cost_estimate=pl.CostEstimate(
            flops=2 * T * b_pad * (F + H) * 4 * H,
            transcendentals=5 * T * b_pad * H,
            bytes_accessed=4 * (T * b_pad * F + (F + H + 1) * 4 * H + b_pad * H)),
    )(xt, lstm_p['w_ih_t'], lstm_p['w_hh_t'], lstm_p['b'].reshape(1, 4 * H))
    return out[:B]


# ---------------------------------------------------------------------------
# Conv (FCN) branch: conv1+bn+relu -> conv2+bn+relu -> conv3+bn+relu -> mean_t
# fused into a single kernel; activations stay on-chip.
# ---------------------------------------------------------------------------
def _fcn_branch_kernel(x_ref, w1_ref, s1_ref, t1_ref, w2_ref, s2_ref, t2_ref,
                       w3_ref, s3_ref, t3_ref, o_ref, *,
                       bb, k1, k2, k3, l1, l2, l3, l3_valid):
    """x_ref: (bb, T_pad, F); w1_ref: (k1*F, C1); w2_ref: (k2, C1, C2);
    w3_ref: (k3, C2, C3); s*/t*: (1, C) folded BN scale/shift; o_ref: (bb, C3).
    l1/l2/l3 are the per-layer computed row counts (multiples of 8, >= valid
    lengths); only the first l3_valid conv3 rows enter the temporal mean."""
    f_in = x_ref.shape[-1]
    c1 = w1_ref.shape[-1]
    c2 = w2_ref.shape[-1]
    c3 = w3_ref.shape[-1]
    xv = x_ref[...]

    # conv1: taps concatenated along K in VMEM -> ONE lane-dense K = k1*F
    # matmul with M = bb*l1 rows (instead of k1 matmuls with K = F).
    taps = [xv[:, dt:dt + l1, :] for dt in range(k1)]
    patches = jnp.concatenate(taps, axis=-1).reshape(bb * l1, k1 * f_in)
    a1 = jnp.dot(patches, w1_ref[...], preferred_element_type=jnp.float32)
    h1 = jnp.maximum(a1 * s1_ref[...] + t1_ref[...], 0.0).reshape(bb, l1, c1)

    # conv2: accumulate the k2 shifted taps on the MXU, M = bb*l2.
    acc2 = jnp.zeros((bb * l2, c2), jnp.float32)
    for dt in range(k2):
        tap = h1[:, dt:dt + l2, :].reshape(bb * l2, c1)
        acc2 = acc2 + jnp.dot(tap, w2_ref[dt], preferred_element_type=jnp.float32)
    h2 = jnp.maximum(acc2 * s2_ref[...] + t2_ref[...], 0.0).reshape(bb, l2, c2)

    # conv3 + fused temporal mean over the valid output positions.
    acc3 = jnp.zeros((bb * l3, c3), jnp.float32)
    for dt in range(k3):
        tap = h2[:, dt:dt + l3, :].reshape(bb * l3, c2)
        acc3 = acc3 + jnp.dot(tap, w3_ref[dt], preferred_element_type=jnp.float32)
    h3 = jnp.maximum(acc3 * s3_ref[...] + t3_ref[...], 0.0).reshape(bb, l3, c3)
    o_ref[...] = (jnp.sum(h3[:, :l3_valid, :], axis=1)
                  * (1.0 / l3_valid)).astype(o_ref.dtype)


def _fold_bn(conv_p, eps=1e-5):
    """Fold eval-mode BatchNorm1d (+ conv bias) into per-channel scale/shift."""
    scale = conv_p['gamma'] * lax.rsqrt(conv_p['var'] + eps)
    shift = (conv_p['b'] - conv_p['mean']) * scale + conv_p['beta']
    return scale, shift


def conv_branch_pallas(x, c1p, c2p, c3p, eps=1e-5):
    """x: (B, T, F) (NLC) -> (B, C3) temporal mean of the fused conv stack."""
    B, T, F = x.shape
    k1, _, C1 = c1p['w'].shape
    k2, _, C2 = c2p['w'].shape
    k3, _, C3 = c3p['w'].shape
    L1 = T - k1 + 1
    L2 = L1 - k2 + 1
    L3 = L2 - k3 + 1
    assert L3 >= 1, "sequence too short for the 8/5/3 valid convolutions"

    # Row budgets per layer: multiples of 8 (so (Bb,L,C) <-> (Bb*L,C) reshapes
    # are layout-preserving) and large enough for the next layer's tap slices.
    # Padded rows only ever read zero-padded input or other padded rows, so the
    # valid outputs are exact.
    l3n = _round_up(L3, 8)
    l2n = _round_up(max(L2, (k3 - 1) + l3n), 8)
    l1n = _round_up(max(L1, (k2 - 1) + l2n), 8)
    t_need = max(T, (k1 - 1) + l1n)

    bb = B if B <= 8 else 8                      # batch rows per grid step
    b_pad = _round_up(B, bb)
    xp = x
    if b_pad != B or t_need != T:
        xp = jnp.pad(x, ((0, b_pad - B), (0, t_need - T), (0, 0)))

    w1_2d = c1p['w'].reshape(k1 * F, C1)         # taps flattened along K
    s1, t1 = _fold_bn(c1p, eps)
    s2, t2 = _fold_bn(c2p, eps)
    s3, t3 = _fold_bn(c3p, eps)
    s1, t1 = s1.reshape(1, C1).astype(jnp.float32), t1.reshape(1, C1).astype(jnp.float32)
    s2, t2 = s2.reshape(1, C2).astype(jnp.float32), t2.reshape(1, C2).astype(jnp.float32)
    s3, t3 = s3.reshape(1, C3).astype(jnp.float32), t3.reshape(1, C3).astype(jnp.float32)

    kernel = functools.partial(_fcn_branch_kernel, bb=bb, k1=k1, k2=k2, k3=k3,
                               l1=l1n, l2=l2n, l3=l3n, l3_valid=L3)
    flops = 2 * b_pad * (l1n * k1 * F * C1 + l2n * k2 * C1 * C2
                         + l3n * k3 * C2 * C3)
    bytes_accessed = 4 * (b_pad * t_need * F + k1 * F * C1 + k2 * C1 * C2
                          + k3 * C2 * C3 + b_pad * C3)

    out = pl.pallas_call(
        kernel,
        out_shape=jax.ShapeDtypeStruct((b_pad, C3), jnp.float32),
        grid_spec=pltpu.PrefetchScalarGridSpec(
            num_scalar_prefetch=0,
            grid=(b_pad // bb,),
            in_specs=[pl.BlockSpec((bb, t_need, F), lambda i: (i, 0, 0)),
                      pl.BlockSpec((k1 * F, C1), lambda i: (0, 0)),
                      pl.BlockSpec((1, C1), lambda i: (0, 0)),
                      pl.BlockSpec((1, C1), lambda i: (0, 0)),
                      pl.BlockSpec((k2, C1, C2), lambda i: (0, 0, 0)),
                      pl.BlockSpec((1, C2), lambda i: (0, 0)),
                      pl.BlockSpec((1, C2), lambda i: (0, 0)),
                      pl.BlockSpec((k3, C2, C3), lambda i: (0, 0, 0)),
                      pl.BlockSpec((1, C3), lambda i: (0, 0)),
                      pl.BlockSpec((1, C3), lambda i: (0, 0))],
            out_specs=pl.BlockSpec((bb, C3), lambda i: (i, 0))),
        compiler_params=pltpu.CompilerParams(
            dimension_semantics=("parallel",)),
        cost_estimate=pl.CostEstimate(flops=flops, transcendentals=0,
                                      bytes_accessed=bytes_accessed),
    )(xp, w1_2d, s1, t1, c2p['w'], s2, t2, c3p['w'], s3, t3)
    return out[:B]


# ---------------------------------------------------------------------------
# Parameters (deterministic synthetic init) and forward pass
# ---------------------------------------------------------------------------
def init_params(key, *, num_features, num_lstm_out=128,
                conv1_nf=128, conv2_nf=256, conv3_nf=128):
    F, H = num_features, num_lstm_out
    ks = jax.random.split(key, 24)
    w_ih = jax.random.normal(ks[0], (4 * H, F), jnp.float32) / jnp.sqrt(float(F))
    w_hh = jax.random.normal(ks[1], (4 * H, H), jnp.float32) / jnp.sqrt(float(H))
    b_ih = 0.01 * jax.random.normal(ks[2], (4 * H,), jnp.float32)
    b_hh = 0.01 * jax.random.normal(ks[3], (4 * H,), jnp.float32)
    params = {'lstm': {'w_ih_t': w_ih.T, 'w_hh_t': w_hh.T, 'b': b_ih + b_hh}}

    cins = [F, conv1_nf, conv2_nf]
    couts = [conv1_nf, conv2_nf, conv3_nf]
    ksizes = [8, 5, 3]
    idx = 4
    for li, (cin, cout, kk) in enumerate(zip(cins, couts, ksizes), 1):
        w = jax.random.normal(ks[idx], (kk, cin, cout), jnp.float32) \
            / jnp.sqrt(float(kk * cin)); idx += 1
        b = 0.01 * jax.random.normal(ks[idx], (cout,), jnp.float32); idx += 1
        gamma = 1.0 + 0.1 * jax.random.normal(ks[idx], (cout,), jnp.float32); idx += 1
        beta = 0.1 * jax.random.normal(ks[idx], (cout,), jnp.float32); idx += 1
        mean = 0.1 * jax.random.normal(ks[idx], (cout,), jnp.float32); idx += 1
        var = 1.0 + 0.1 * jnp.abs(jax.random.normal(ks[idx], (cout,), jnp.float32)); idx += 1
        params[f'conv{li}'] = {'w': w, 'b': b, 'gamma': gamma, 'beta': beta,
                               'mean': mean, 'var': var}
    return params


def mlstm_fcn_forward(params, x):
    """MLSTMfcn.forward: x:(B,T,F) -> concat(lstm_last_hidden, mean_t(conv FCN))."""
    # PyTorch's x.transpose(2,1) produces NCW for the convs; in NLC layout the
    # conv branch consumes x directly.  Dropout layers are eval-mode identity.
    x1 = lstm_branch_pallas(x, params['lstm'])                         # (B, H)
    x2 = conv_branch_pallas(x, params['conv1'], params['conv2'],
                            params['conv3'])                           # (B, C3)
    return jnp.concatenate([x1, x2], axis=1)                           # (B, H + C3)


# ---------------------------------------------------------------------------
# Pure-JAX reference (for correctness checking only)
# ---------------------------------------------------------------------------
def _reference_forward(params, x, eps=1e-5):
    B, T, F = x.shape
    H = params['lstm']['w_hh_t'].shape[0]
    w_ih_t, w_hh_t, b = (params['lstm']['w_ih_t'], params['lstm']['w_hh_t'],
                         params['lstm']['b'])

    def step(carry, xt):
        h, c = carry
        gates = (jnp.dot(xt, w_ih_t, precision=lax.Precision.HIGHEST)
                 + jnp.dot(h, w_hh_t, precision=lax.Precision.HIGHEST) + b)
        i = jax.nn.sigmoid(gates[:, :H])
        f = jax.nn.sigmoid(gates[:, H:2 * H])
        g = jnp.tanh(gates[:, 2 * H:3 * H])
        o = jax.nn.sigmoid(gates[:, 3 * H:])
        c = f * c + i * g
        h = o * jnp.tanh(c)
        return (h, c), None

    init = (jnp.zeros((B, H), jnp.float32), jnp.zeros((B, H), jnp.float32))
    (h_last, _), _ = lax.scan(step, init, jnp.transpose(x, (1, 0, 2)))
    x1 = h_last

    h = x
    for name in ('conv1', 'conv2', 'conv3'):
        p = params[name]
        y = lax.conv_general_dilated(
            h, p['w'], (1,), 'VALID',
            dimension_numbers=('NWC', 'WIO', 'NWC'),
            precision=lax.Precision.HIGHEST)
        y = y + p['b']
        y = p['gamma'] * (y - p['mean']) * lax.rsqrt(p['var'] + eps) + p['beta']
        h = jnp.maximum(y, 0.0)
    x2 = jnp.mean(h, axis=1)
    return jnp.concatenate([x1, x2], axis=1)


# ---------------------------------------------------------------------------
if __name__ == "__main__":
    key = jax.random.PRNGKey(0)
    B, T, F = 2, 32, 16          # T >= 14 required by the 8/5/3 valid convs
    params = init_params(jax.random.fold_in(key, 1), num_features=F)
    x = jax.random.normal(jax.random.fold_in(key, 2), (B, T, F), jnp.float32)

    out = jax.jit(mlstm_fcn_forward)(params, x)
    jax.block_until_ready(out)
    assert out.shape == (B, 256), out.shape   # num_lstm_out + conv3_nf

    ref = jax.jit(_reference_forward)(params, x)
    jax.block_until_ready(ref)
    max_err = float(jnp.max(jnp.abs(out - ref)))
    if not bool(jnp.all(jnp.isfinite(out))) or max_err > 5e-3:
        raise AssertionError(f"Pallas output mismatch vs reference: max_err={max_err}")

    print("KERNEL_OK")
</pallas_src>

<mosaic_0001>
module attributes {stable_mosaic.version = 11 : i64} {
  func.func @_fcn_branch_kernel(%arg0: i32, %arg1: memref<2x47x16xf32, #tpu.memory_space<vmem>>, %arg2: memref<128x128xf32, #tpu.memory_space<vmem>>, %arg3: memref<1x128xf32, #tpu.memory_space<vmem>>, %arg4: memref<1x128xf32, #tpu.memory_space<vmem>>, %arg5: memref<5x128x256xf32, #tpu.memory_space<vmem>>, %arg6: memref<1x256xf32, #tpu.memory_space<vmem>>, %arg7: memref<1x256xf32, #tpu.memory_space<vmem>>, %arg8: memref<3x256x128xf32, #tpu.memory_space<vmem>>, %arg9: memref<1x128xf32, #tpu.memory_space<vmem>>, %arg10: memref<1x128xf32, #tpu.memory_space<vmem>>, %arg11: memref<2x128xf32, #tpu.memory_space<vmem>>) attributes {dimension_semantics = [#tpu.dimension_semantics<parallel>], iteration_bounds = array<i64: 1>, scalar_prefetch = 0 : i64, scratch_operands = 0 : i64, tpu.core_type = #tpu.core_type<tc>, window_params = [{transform_indices = @transform_0, window_bounds = array<i64: 2, 47, 16>}, {pipeline_mode = #tpu.pipeline_mode<synchronous>, transform_indices = @transform_1, window_bounds = array<i64: 128, 128>}, {pipeline_mode = #tpu.pipeline_mode<synchronous>, transform_indices = @transform_2, window_bounds = array<i64: 1, 128>}, {pipeline_mode = #tpu.pipeline_mode<synchronous>, transform_indices = @transform_3, window_bounds = array<i64: 1, 128>}, {pipeline_mode = #tpu.pipeline_mode<synchronous>, transform_indices = @transform_4, window_bounds = array<i64: 5, 128, 256>}, {pipeline_mode = #tpu.pipeline_mode<synchronous>, transform_indices = @transform_5, window_bounds = array<i64: 1, 256>}, {pipeline_mode = #tpu.pipeline_mode<synchronous>, transform_indices = @transform_6, window_bounds = array<i64: 1, 256>}, {pipeline_mode = #tpu.pipeline_mode<synchronous>, transform_indices = @transform_7, window_bounds = array<i64: 3, 256, 128>}, {pipeline_mode = #tpu.pipeline_mode<synchronous>, transform_indices = @transform_8, window_bounds = array<i64: 1, 128>}, {pipeline_mode = #tpu.pipeline_mode<synchronous>, transform_indices = @transform_9, window_bounds = array<i64: 1, 128>}, {transform_indices = @transform_10, window_bounds = array<i64: 2, 128>}]} {
    %c0 = arith.constant 0 : index
    %c0_0 = arith.constant 0 : index
    %c0_1 = arith.constant 0 : index
    %0 = vector.load %arg1[%c0, %c0_0, %c0_1] : memref<2x47x16xf32, #tpu.memory_space<vmem>>, vector<2x47x16xf32>
    %1 = vector.extract_strided_slice %0 {offsets = [0, 0, 0], sizes = [2, 40, 16], strides = [1, 1, 1]} : vector<2x47x16xf32> to vector<2x40x16xf32>
    %2 = vector.extract_strided_slice %0 {offsets = [0, 1, 0], sizes = [2, 40, 16], strides = [1, 1, 1]} : vector<2x47x16xf32> to vector<2x40x16xf32>
    %3 = vector.extract_strided_slice %0 {offsets = [0, 2, 0], sizes = [2, 40, 16], strides = [1, 1, 1]} : vector<2x47x16xf32> to vector<2x40x16xf32>
    %4 = vector.extract_strided_slice %0 {offsets = [0, 3, 0], sizes = [2, 40, 16], strides = [1, 1, 1]} : vector<2x47x16xf32> to vector<2x40x16xf32>
    %5 = vector.extract_strided_slice %0 {offsets = [0, 4, 0], sizes = [2, 40, 16], strides = [1, 1, 1]} : vector<2x47x16xf32> to vector<2x40x16xf32>
    %6 = vector.extract_strided_slice %0 {offsets = [0, 5, 0], sizes = [2, 40, 16], strides = [1, 1, 1]} : vector<2x47x16xf32> to vector<2x40x16xf32>
    %7 = vector.extract_strided_slice %0 {offsets = [0, 6, 0], sizes = [2, 40, 16], strides = [1, 1, 1]} : vector<2x47x16xf32> to vector<2x40x16xf32>
    %8 = vector.extract_strided_slice %0 {offsets = [0, 7, 0], sizes = [2, 40, 16], strides = [1, 1, 1]} : vector<2x47x16xf32> to vector<2x40x16xf32>
    %9 = tpu.concatenate %1, %2, %3, %4, %5, %6, %7, %8 in 2 : vector<2x40x16xf32>, vector<2x40x16xf32>, vector<2x40x16xf32>, vector<2x40x16xf32>, vector<2x40x16xf32>, vector<2x40x16xf32>, vector<2x40x16xf32>, vector<2x40x16xf32> -> vector<2x40x128xf32>
    %10 = vector.shape_cast %9 : vector<2x40x128xf32> to vector<80x128xf32>
    %c0_2 = arith.constant 0 : index
    %c0_3 = arith.constant 0 : index
    %11 = vector.load %arg2[%c0_2, %c0_3] : memref<128x128xf32, #tpu.memory_space<vmem>>, vector<128x128xf32>
    %cst = arith.constant dense<0.000000e+00> : vector<80x128xf32>
    %12 = tpu.matmul %10, %11, %cst {dimension_numbers = #tpu.dot_dimension_numbers<[1], [0], [0], [1], [0, 0, 1, 1], [], []>} : vector<80x128xf32>, vector<128x128xf32>, vector<80x128xf32> -> vector<80x128xf32>
    %c0_4 = arith.constant 0 : index
    %c0_5 = arith.constant 0 : index
    %13 = vector.load %arg3[%c0_4, %c0_5] : memref<1x128xf32, #tpu.memory_space<vmem>>, vector<1x128xf32>
    %14 = vector.broadcast %13 : vector<1x128xf32> to vector<80x128xf32>
    %15 = arith.mulf %12, %14 : vector<80x128xf32>
    %c0_6 = arith.constant 0 : index
    %c0_7 = arith.constant 0 : index
    %16 = vector.load %arg4[%c0_6, %c0_7] : memref<1x128xf32, #tpu.memory_space<vmem>>, vector<1x128xf32>
    %17 = vector.broadcast %16 : vector<1x128xf32> to vector<80x128xf32>
    %18 = arith.addf %15, %17 : vector<80x128xf32>
    %cst_8 = arith.constant 0.000000e+00 : f32
    %19 = vector.broadcast %cst_8 : f32 to vector<80x128xf32>
    %20 = arith.maximumf %18, %19 : vector<80x128xf32>
    %21 = vector.shape_cast %20 : vector<80x128xf32> to vector<2x40x128xf32>
    %cst_9 = arith.constant 0.000000e+00 : f32
    %22 = vector.broadcast %cst_9 : f32 to vector<64x256xf32>
    %23 = vector.extract_strided_slice %21 {offsets = [0, 0, 0], sizes = [2, 32, 128], strides = [1, 1, 1]} : vector<2x40x128xf32> to vector<2x32x128xf32>
    %24 = vector.shape_cast %23 : vector<2x32x128xf32> to vector<64x128xf32>
    %c0_10 = arith.constant 0 : index
    %c0_11 = arith.constant 0 : index
    %c0_12 = arith.constant 0 : index
    %25 = vector.load %arg5[%c0_10, %c0_11, %c0_12] : memref<5x128x256xf32, #tpu.memory_space<vmem>>, vector<1x128x256xf32>
    %26 = vector.shape_cast %25 : vector<1x128x256xf32> to vector<128x256xf32>
    %cst_13 = arith.constant dense<0.000000e+00> : vector<64x256xf32>
    %27 = tpu.matmul %24, %26, %cst_13 {dimension_numbers = #tpu.dot_dimension_numbers<[1], [0], [0], [1], [0, 0, 1, 1], [], []>} : vector<64x128xf32>, vector<128x256xf32>, vector<64x256xf32> -> vector<64x256xf32>
    %28 = arith.addf %22, %27 : vector<64x256xf32>
    %29 = vector.extract_strided_slice %21 {offsets = [0, 1, 0], sizes = [2, 32, 128], strides = [1, 1, 1]} : vector<2x40x128xf32> to vector<2x32x128xf32>
    %30 = vector.shape_cast %29 : vector<2x32x128xf32> to vector<64x128xf32>
    %c1 = arith.constant 1 : index
    %c0_14 = arith.constant 0 : index
    %c0_15 = arith.constant 0 : index
    %31 = vector.load %arg5[%c1, %c0_14, %c0_15] : memref<5x128x256xf32, #tpu.memory_space<vmem>>, vector<1x128x256xf32>
    %32 = vector.shape_cast %31 : vector<1x128x256xf32> to vector<128x256xf32>
    %cst_16 = arith.constant dense<0.000000e+00> : vector<64x256xf32>
    %33 = tpu.matmul %30, %32, %cst_16 {dimension_numbers = #tpu.dot_dimension_numbers<[1], [0], [0], [1], [0, 0, 1, 1], [], []>} : vector<64x128xf32>, vector<128x256xf32>, vector<64x256xf32> -> vector<64x256xf32>
    %34 = arith.addf %28, %33 : vector<64x256xf32>
    %35 = vector.extract_strided_slice %21 {offsets = [0, 2, 0], sizes = [2, 32, 128], strides = [1, 1, 1]} : vector<2x40x128xf32> to vector<2x32x128xf32>
    %36 = vector.shape_cast %35 : vector<2x32x128xf32> to vector<64x128xf32>
    %c2 = arith.constant 2 : index
    %c0_17 = arith.constant 0 : index
    %c0_18 = arith.constant 0 : index
    %37 = vector.load %arg5[%c2, %c0_17, %c0_18] : memref<5x128x256xf32, #tpu.memory_space<vmem>>, vector<1x128x256xf32>
    %38 = vector.shape_cast %37 : vector<1x128x256xf32> to vector<128x256xf32>
    %cst_19 = arith.constant dense<0.000000e+00> : vector<64x256xf32>
    %39 = tpu.matmul %36, %38, %cst_19 {dimension_numbers = #tpu.dot_dimension_numbers<[1], [0], [0], [1], [0, 0, 1, 1], [], []>} : vector<64x128xf32>, vector<128x256xf32>, vector<64x256xf32> -> vector<64x256xf32>
    %40 = arith.addf %34, %39 : vector<64x256xf32>
    %41 = vector.extract_strided_slice %21 {offsets = [0, 3, 0], sizes = [2, 32, 128], strides = [1, 1, 1]} : vector<2x40x128xf32> to vector<2x32x128xf32>
    %42 = vector.shape_cast %41 : vector<2x32x128xf32> to vector<64x128xf32>
    %c3 = arith.constant 3 : index
    %c0_20 = arith.constant 0 : index
    %c0_21 = arith.constant 0 : index
    %43 = vector.load %arg5[%c3, %c0_20, %c0_21] : memref<5x128x256xf32, #tpu.memory_space<vmem>>, vector<1x128x256xf32>
    %44 = vector.shape_cast %43 : vector<1x128x256xf32> to vector<128x256xf32>
    %cst_22 = arith.constant dense<0.000000e+00> : vector<64x256xf32>
    %45 = tpu.matmul %42, %44, %cst_22 {dimension_numbers = #tpu.dot_dimension_numbers<[1], [0], [0], [1], [0, 0, 1, 1], [], []>} : vector<64x128xf32>, vector<128x256xf32>, vector<64x256xf32> -> vector<64x256xf32>
    %46 = arith.addf %40, %45 : vector<64x256xf32>
    %47 = vector.extract_strided_slice %21 {offsets = [0, 4, 0], sizes = [2, 32, 128], strides = [1, 1, 1]} : vector<2x40x128xf32> to vector<2x32x128xf32>
    %48 = vector.shape_cast %47 : vector<2x32x128xf32> to vector<64x128xf32>
    %c4 = arith.constant 4 : index
    %c0_23 = arith.constant 0 : index
    %c0_24 = arith.constant 0 : index
    %49 = vector.load %arg5[%c4, %c0_23, %c0_24] : memref<5x128x256xf32, #tpu.memory_space<vmem>>, vector<1x128x256xf32>
    %50 = vector.shape_cast %49 : vector<1x128x256xf32> to vector<128x256xf32>
    %cst_25 = arith.constant dense<0.000000e+00> : vector<64x256xf32>
    %51 = tpu.matmul %48, %50, %cst_25 {dimension_numbers = #tpu.dot_dimension_numbers<[1], [0], [0], [1], [0, 0, 1, 1], [], []>} : vector<64x128xf32>, vector<128x256xf32>, vector<64x256xf32> -> vector<64x256xf32>
    %52 = arith.addf %46, %51 : vector<64x256xf32>
    %c0_26 = arith.constant 0 : index
    %c0_27 = arith.constant 0 : index
    %53 = vector.load %arg6[%c0_26, %c0_27] : memref<1x256xf32, #tpu.memory_space<vmem>>, vector<1x256xf32>
    %54 = vector.broadcast %53 : vector<1x256xf32> to vector<64x256xf32>
    %55 = arith.mulf %52, %54 : vector<64x256xf32>
    %c0_28 = arith.constant 0 : index
    %c0_29 = arith.constant 0 : index
    %56 = vector.load %arg7[%c0_28, %c0_29] : memref<1x256xf32, #tpu.memory_space<vmem>>, vector<1x256xf32>
    %57 = vector.broadcast %56 : vector<1x256xf32> to vector<64x256xf32>
    %58 = arith.addf %55, %57 : vector<64x256xf32>
    %cst_30 = arith.constant 0.000000e+00 : f32
    %59 = vector.broadcast %cst_30 : f32 to vector<64x256xf32>
    %60 = arith.maximumf %58, %59 : vector<64x256xf32>
    %61 = vector.shape_cast %60 : vector<64x256xf32> to vector<2x32x256xf32>
    %cst_31 = arith.constant 0.000000e+00 : f32
    %62 = vector.broadcast %cst_31 : f32 to vector<48x128xf32>
    %63 = vector.extract_strided_slice %61 {offsets = [0, 0, 0], sizes = [2, 24, 256], strides = [1, 1, 1]} : vector<2x32x256xf32> to vector<2x24x256xf32>
    %64 = vector.shape_cast %63 : vector<2x24x256xf32> to vector<48x256xf32>
    %c0_32 = arith.constant 0 : index
    %c0_33 = arith.constant 0 : index
    %c0_34 = arith.constant 0 : index
    %65 = vector.load %arg8[%c0_32, %c0_33, %c0_34] : memref<3x256x128xf32, #tpu.memory_space<vmem>>, vector<1x256x128xf32>
    %66 = vector.shape_cast %65 : vector<1x256x128xf32> to vector<256x128xf32>
    %cst_35 = arith.constant dense<0.000000e+00> : vector<48x128xf32>
    %67 = tpu.matmul %64, %66, %cst_35 {dimension_numbers = #tpu.dot_dimension_numbers<[1], [0], [0], [1], [0, 0, 1, 1], [], []>} : vector<48x256xf32>, vector<256x128xf32>, vector<48x128xf32> -> vector<48x128xf32>
    %68 = arith.addf %62, %67 : vector<48x128xf32>
    %69 = vector.extract_strided_slice %61 {offsets = [0, 1, 0], sizes = [2, 24, 256], strides = [1, 1, 1]} : vector<2x32x256xf32> to vector<2x24x256xf32>
    %70 = vector.shape_cast %69 : vector<2x24x256xf32> to vector<48x256xf32>
    %c1_36 = arith.constant 1 : index
    %c0_37 = arith.constant 0 : index
    %c0_38 = arith.constant 0 : index
    %71 = vector.load %arg8[%c1_36, %c0_37, %c0_38] : memref<3x256x128xf32, #tpu.memory_space<vmem>>, vector<1x256x128xf32>
    %72 = vector.shape_cast %71 : vector<1x256x128xf32> to vector<256x128xf32>
    %cst_39 = arith.constant dense<0.000000e+00> : vector<48x128xf32>
    %73 = tpu.matmul %70, %72, %cst_39 {dimension_numbers = #tpu.dot_dimension_numbers<[1], [0], [0], [1], [0, 0, 1, 1], [], []>} : vector<48x256xf32>, vector<256x128xf32>, vector<48x128xf32> -> vector<48x128xf32>
    %74 = arith.addf %68, %73 : vector<48x128xf32>
    %75 = vector.extract_strided_slice %61 {offsets = [0, 2, 0], sizes = [2, 24, 256], strides = [1, 1, 1]} : vector<2x32x256xf32> to vector<2x24x256xf32>
    %76 = vector.shape_cast %75 : vector<2x24x256xf32> to vector<48x256xf32>
    %c2_40 = arith.constant 2 : index
    %c0_41 = arith.constant 0 : index
    %c0_42 = arith.constant 0 : index
    %77 = vector.load %arg8[%c2_40, %c0_41, %c0_42] : memref<3x256x128xf32, #tpu.memory_space<vmem>>, vector<1x256x128xf32>
    %78 = vector.shape_cast %77 : vector<1x256x128xf32> to vector<256x128xf32>
    %cst_43 = arith.constant dense<0.000000e+00> : vector<48x128xf32>
    %79 = tpu.matmul %76, %78, %cst_43 {dimension_numbers = #tpu.dot_dimension_numbers<[1], [0], [0], [1], [0, 0, 1, 1], [], []>} : vector<48x256xf32>, vector<256x128xf32>, vector<48x128xf32> -> vector<48x128xf32>
    %80 = arith.addf %74, %79 : vector<48x128xf32>
    %c0_44 = arith.constant 0 : index
    %c0_45 = arith.constant 0 : index
    %81 = vector.load %arg9[%c0_44, %c0_45] : memref<1x128xf32, #tpu.memory_space<vmem>>, vector<1x128xf32>
    %82 = vector.broadcast %81 : vector<1x128xf32> to vector<48x128xf32>
    %83 = arith.mulf %80, %82 : vector<48x128xf32>
    %c0_46 = arith.constant 0 : index
    %c0_47 = arith.constant 0 : index
    %84 = vector.load %arg10[%c0_46, %c0_47] : memref<1x128xf32, #tpu.memory_space<vmem>>, vector<1x128xf32>
    %85 = vector.broadcast %84 : vector<1x128xf32> to vector<48x128xf32>
    %86 = arith.addf %83, %85 : vector<48x128xf32>
    %cst_48 = arith.constant 0.000000e+00 : f32
    %87 = vector.broadcast %cst_48 : f32 to vector<48x128xf32>
    %88 = arith.maximumf %86, %87 : vector<48x128xf32>
    %89 = vector.shape_cast %88 : vector<48x128xf32> to vector<2x24x128xf32>
    %90 = vector.extract_strided_slice %89 {offsets = [0, 0, 0], sizes = [2, 19, 128], strides = [1, 1, 1]} : vector<2x24x128xf32> to vector<2x19x128xf32>
    %cst_49 = arith.constant dense<0.000000e+00> : vector<2x128xf32>
    %91 = vector.multi_reduction <add>, %90, %cst_49 [1] : vector<2x19x128xf32> to vector<2x128xf32>
    %cst_50 = arith.constant 0.0526315793 : f32
    %92 = vector.broadcast %cst_50 : f32 to vector<2x128xf32>
    %93 = arith.mulf %91, %92 : vector<2x128xf32>
    %c0_51 = arith.constant 0 : index
    %c0_52 = arith.constant 0 : index
    %94 = vector.load %arg11[%c0_51, %c0_52] : memref<2x128xf32, #tpu.memory_space<vmem>>, vector<2x128xf32>
    tpu.vector_store %arg11[%c0_51, %c0_52], %93 {strides = array<i32>} : memref<2x128xf32, #tpu.memory_space<vmem>>, vector<2x128xf32>,
    return
  }
  func.func @transform_0(%arg0: i32) -> (i32, i32, i32) {
    %c0_i32 = arith.constant 0 : i32
    %c0_i32_0 = arith.constant 0 : i32
    %c0_i32_1 = arith.constant 0 : i32
    return %arg0, %c0_i32, %c0_i32_0 : i32, i32, i32
  }
  func.func @transform_1(%arg0: i32) -> (i32, i32) {
    %c0_i32 = arith.constant 0 : i32
    %c0_i32_0 = arith.constant 0 : i32
    %c0_i32_1 = arith.constant 0 : i32
    return %c0_i32, %c0_i32_0 : i32, i32
  }
  func.func @transform_2(%arg0: i32) -> (i32, i32) {
    %c0_i32 = arith.constant 0 : i32
    %c0_i32_0 = arith.constant 0 : i32
    %c0_i32_1 = arith.constant 0 : i32
    return %c0_i32, %c0_i32_0 : i32, i32
  }
  func.func @transform_3(%arg0: i32) -> (i32, i32) {
    %c0_i32 = arith.constant 0 : i32
    %c0_i32_0 = arith.constant 0 : i32
    %c0_i32_1 = arith.constant 0 : i32
    return %c0_i32, %c0_i32_0 : i32, i32
  }
  func.func @transform_4(%arg0: i32) -> (i32, i32, i32) {
    %c0_i32 = arith.constant 0 : i32
    %c0_i32_0 = arith.constant 0 : i32
    %c0_i32_1 = arith.constant 0 : i32
    %c0_i32_2 = arith.constant 0 : i32
    return %c0_i32, %c0_i32_0, %c0_i32_1 : i32, i32, i32
  }
  func.func @transform_5(%arg0: i32) -> (i32, i32) {
    %c0_i32 = arith.constant 0 : i32
    %c0_i32_0 = arith.constant 0 : i32
    %c0_i32_1 = arith.constant 0 : i32
    return %c0_i32, %c0_i32_0 : i32, i32
  }
  func.func @transform_6(%arg0: i32) -> (i32, i32) {
    %c0_i32 = arith.constant 0 : i32
    %c0_i32_0 = arith.constant 0 : i32
    %c0_i32_1 = arith.constant 0 : i32
    return %c0_i32, %c0_i32_0 : i32, i32
  }
  func.func @transform_7(%arg0: i32) -> (i32, i32, i32) {
    %c0_i32 = arith.constant 0 : i32
    %c0_i32_0 = arith.constant 0 : i32
    %c0_i32_1 = arith.constant 0 : i32
    %c0_i32_2 = arith.constant 0 : i32
    return %c0_i32, %c0_i32_0, %c0_i32_1 : i32, i32, i32
  }
  func.func @transform_8(%arg0: i32) -> (i32, i32) {
    %c0_i32 = arith.constant 0 : i32
    %c0_i32_0 = arith.constant 0 : i32
    %c0_i32_1 = arith.constant 0 : i32
    return %c0_i32, %c0_i32_0 : i32, i32
  }
  func.func @transform_9(%arg0: i32) -> (i32, i32) {
    %c0_i32 = arith.constant 0 : i32
    %c0_i32_0 = arith.constant 0 : i32
    %c0_i32_1 = arith.constant 0 : i32
    return %c0_i32, %c0_i32_0 : i32, i32
  }
  func.func @transform_10(%arg0: i32) -> (i32, i32) {
    %c0_i32 = arith.constant 0 : i32
    %c0_i32_0 = arith.constant 0 : i32
    return %arg0, %c0_i32 : i32, i32
  }
}

module attributes {stable_mosaic.version = 11 : i64} {
  func.func @_lstm_branch_kernel(%arg0: i32, %arg1: memref<32x8x16xf32, #tpu.memory_space<vmem>>, %arg2: memref<16x512xf32, #tpu.memory_space<vmem>>, %arg3: memref<128x512xf32, #tpu.memory_space<vmem>>, %arg4: memref<1x512xf32, #tpu.memory_space<vmem>>, %arg5: memref<8x128xf32, #tpu.memory_space<vmem>>, %arg6: memref<256x512xf32, #tpu.memory_space<vmem>>) attributes {dimension_semantics = [#tpu.dimension_semantics<parallel>], iteration_bounds = array<i64: 1>, scalar_prefetch = 0 : i64, scratch_operands = 1 : i64, tpu.core_type = #tpu.core_type<tc>, window_params = [{transform_indices = @transform_0, window_bounds = array<i64: 32, 8, 16>}, {pipeline_mode = #tpu.pipeline_mode<synchronous>, transform_indices = @transform_1, window_bounds = array<i64: 16, 512>}, {pipeline_mode = #tpu.pipeline_mode<synchronous>, transform_indices = @transform_2, window_bounds = array<i64: 128, 512>}, {pipeline_mode = #tpu.pipeline_mode<synchronous>, transform_indices = @transform_3, window_bounds = array<i64: 1, 512>}, {transform_indices = @transform_4, window_bounds = array<i64: 8, 128>}]} {
    %c0 = arith.constant 0 : index
    %c0_0 = arith.constant 0 : index
    %c0_1 = arith.constant 0 : index
    %0 = vector.load %arg1[%c0, %c0_0, %c0_1] : memref<32x8x16xf32, #tpu.memory_space<vmem>>, vector<32x8x16xf32>
    %1 = vector.shape_cast %0 : vector<32x8x16xf32> to vector<256x16xf32>
    %c0_2 = arith.constant 0 : index
    %c0_3 = arith.constant 0 : index
    %2 = vector.load %arg2[%c0_2, %c0_3] : memref<16x512xf32, #tpu.memory_space<vmem>>, vector<16x512xf32>
    %cst = arith.constant dense<0.000000e+00> : vector<256x512xf32>
    %3 = tpu.matmul %1, %2, %cst {dimension_numbers = #tpu.dot_dimension_numbers<[1], [0], [0], [1], [0, 0, 1, 1], [], []>} : vector<256x16xf32>, vector<16x512xf32>, vector<256x512xf32> -> vector<256x512xf32>
    %c0_4 = arith.constant 0 : index
    %c0_5 = arith.constant 0 : index
    %4 = vector.load %arg4[%c0_4, %c0_5] : memref<1x512xf32, #tpu.memory_space<vmem>>, vector<1x512xf32>
    %5 = vector.broadcast %4 : vector<1x512xf32> to vector<256x512xf32>
    %6 = arith.addf %3, %5 : vector<256x512xf32>
    %c0_6 = arith.constant 0 : index
    %c0_7 = arith.constant 0 : index
    %7 = vector.load %arg6[%c0_6, %c0_7] : memref<256x512xf32, #tpu.memory_space<vmem>>, vector<256x512xf32>
    tpu.vector_store %arg6[%c0_6, %c0_7], %6 {strides = array<i32>} : memref<256x512xf32, #tpu.memory_space<vmem>>, vector<256x512xf32>,
    %cst_8 = arith.constant 0.000000e+00 : f32
    %8 = vector.broadcast %cst_8 : f32 to vector<8x128xf32>
    %cst_9 = arith.constant 0.000000e+00 : f32
    %9 = vector.broadcast %cst_9 : f32 to vector<8x128xf32>
    %c0_10 = arith.constant 0 : index
    %c0_11 = arith.constant 0 : index
    %10 = vector.load %arg6[%c0_10, %c0_11] : memref<256x512xf32, #tpu.memory_space<vmem>>, vector<8x512xf32>
    %c0_12 = arith.constant 0 : index
    %c0_13 = arith.constant 0 : index
    %11 = vector.load %arg3[%c0_12, %c0_13] : memref<128x512xf32, #tpu.memory_space<vmem>>, vector<128x512xf32>
    %cst_14 = arith.constant dense<0.000000e+00> : vector<8x512xf32>
    %12 = tpu.matmul %8, %11, %cst_14 {dimension_numbers = #tpu.dot_dimension_numbers<[1], [0], [0], [1], [0, 0, 1, 1], [], []>} : vector<8x128xf32>, vector<128x512xf32>, vector<8x512xf32> -> vector<8x512xf32>
    %13 = arith.addf %10, %12 : vector<8x512xf32>
    %14 = vector.extract_strided_slice %13 {offsets = [0, 0], sizes = [8, 128], strides = [1, 1]} : vector<8x512xf32> to vector<8x128xf32>
    %15 = arith.negf %14 : vector<8x128xf32>
    %16 = math.exp %15 : vector<8x128xf32>
    %cst_15 = arith.constant 1.000000e+00 : f32
    %17 = vector.broadcast %cst_15 : f32 to vector<8x128xf32>
    %18 = arith.addf %17, %16 : vector<8x128xf32>
    %19 = arith.divf %17, %18 : vector<8x128xf32>
    %20 = vector.extract_strided_slice %13 {offsets = [0, 128], sizes = [8, 128], strides = [1, 1]} : vector<8x512xf32> to vector<8x128xf32>
    %21 = arith.negf %20 : vector<8x128xf32>
    %22 = math.exp %21 : vector<8x128xf32>
    %cst_16 = arith.constant 1.000000e+00 : f32
    %23 = vector.broadcast %cst_16 : f32 to vector<8x128xf32>
    %24 = arith.addf %23, %22 : vector<8x128xf32>
    %25 = arith.divf %23, %24 : vector<8x128xf32>
    %26 = vector.extract_strided_slice %13 {offsets = [0, 256], sizes = [8, 128], strides = [1, 1]} : vector<8x512xf32> to vector<8x128xf32>
    %27 = math.tanh %26 : vector<8x128xf32>
    %28 = vector.extract_strided_slice %13 {offsets = [0, 384], sizes = [8, 128], strides = [1, 1]} : vector<8x512xf32> to vector<8x128xf32>
    %29 = arith.negf %28 : vector<8x128xf32>
    %30 = math.exp %29 : vector<8x128xf32>
    %cst_17 = arith.constant 1.000000e+00 : f32
    %31 = vector.broadcast %cst_17 : f32 to vector<8x128xf32>
    %32 = arith.addf %31, %30 : vector<8x128xf32>
    %33 = arith.divf %31, %32 : vector<8x128xf32>
    %34 = arith.mulf %25, %9 : vector<8x128xf32>
    %35 = arith.mulf %19, %27 : vector<8x128xf32>
    %36 = arith.addf %34, %35 : vector<8x128xf32>
    %37 = math.tanh %36 : vector<8x128xf32>
    %38 = arith.mulf %33, %37 : vector<8x128xf32>
    %c8 = arith.constant 8 : index
    %c0_18 = arith.constant 0 : index
    %39 = vector.load %arg6[%c8, %c0_18] : memref<256x512xf32, #tpu.memory_space<vmem>>, vector<8x512xf32>
    %c0_19 = arith.constant 0 : index
    %c0_20 = arith.constant 0 : index
    %40 = vector.load %arg3[%c0_19, %c0_20] : memref<128x512xf32, #tpu.memory_space<vmem>>, vector<128x512xf32>
    %cst_21 = arith.constant dense<0.000000e+00> : vector<8x512xf32>
    %41 = tpu.matmul %38, %40, %cst_21 {dimension_numbers = #tpu.dot_dimension_numbers<[1], [0], [0], [1], [0, 0, 1, 1], [], []>} : vector<8x128xf32>, vector<128x512xf32>, vector<8x512xf32> -> vector<8x512xf32>
    %42 = arith.addf %39, %41 : vector<8x512xf32>
    %43 = vector.extract_strided_slice %42 {offsets = [0, 0], sizes = [8, 128], strides = [1, 1]} : vector<8x512xf32> to vector<8x128xf32>
    %44 = arith.negf %43 : vector<8x128xf32>
    %45 = math.exp %44 : vector<8x128xf32>
    %cst_22 = arith.constant 1.000000e+00 : f32
    %46 = vector.broadcast %cst_22 : f32 to vector<8x128xf32>
    %47 = arith.addf %46, %45 : vector<8x128xf32>
    %48 = arith.divf %46, %47 : vector<8x128xf32>
    %49 = vector.extract_strided_slice %42 {offsets = [0, 128], sizes = [8, 128], strides = [1, 1]} : vector<8x512xf32> to vector<8x128xf32>
    %50 = arith.negf %49 : vector<8x128xf32>
    %51 = math.exp %50 : vector<8x128xf32>
    %cst_23 = arith.constant 1.000000e+00 : f32
    %52 = vector.broadcast %cst_23 : f32 to vector<8x128xf32>
    %53 = arith.addf %52, %51 : vector<8x128xf32>
    %54 = arith.divf %52, %53 : vector<8x128xf32>
    %55 = vector.extract_strided_slice %42 {offsets = [0, 256], sizes = [8, 128], strides = [1, 1]} : vector<8x512xf32> to vector<8x128xf32>
    %56 = math.tanh %55 : vector<8x128xf32>
    %57 = vector.extract_strided_slice %42 {offsets = [0, 384], sizes = [8, 128], strides = [1, 1]} : vector<8x512xf32> to vector<8x128xf32>
    %58 = arith.negf %57 : vector<8x128xf32>
    %59 = math.exp %58 : vector<8x128xf32>
    %cst_24 = arith.constant 1.000000e+00 : f32
    %60 = vector.broadcast %cst_24 : f32 to vector<8x128xf32>
    %61 = arith.addf %60, %59 : vector<8x128xf32>
    %62 = arith.divf %60, %61 : vector<8x128xf32>
    %63 = arith.mulf %54, %36 : vector<8x128xf32>
    %64 = arith.mulf %48, %56 : vector<8x128xf32>
    %65 = arith.addf %63, %64 : vector<8x128xf32>
    %66 = math.tanh %65 : vector<8x128xf32>
    %67 = arith.mulf %62, %66 : vector<8x128xf32>
    %c16 = arith.constant 16 : index
    %c0_25 = arith.constant 0 : index
    %68 = vector.load %arg6[%c16, %c0_25] : memref<256x512xf32, #tpu.memory_space<vmem>>, vector<8x512xf32>
    %c0_26 = arith.constant 0 : index
    %c0_27 = arith.constant 0 : index
    %69 = vector.load %arg3[%c0_26, %c0_27] : memref<128x512xf32, #tpu.memory_space<vmem>>, vector<128x512xf32>
    %cst_28 = arith.constant dense<0.000000e+00> : vector<8x512xf32>
    %70 = tpu.matmul %67, %69, %cst_28 {dimension_numbers = #tpu.dot_dimension_numbers<[1], [0], [0], [1], [0, 0, 1, 1], [], []>} : vector<8x128xf32>, vector<128x512xf32>, vector<8x512xf32> -> vector<8x512xf32>
    %71 = arith.addf %68, %70 : vector<8x512xf32>
    %72 = vector.extract_strided_slice %71 {offsets = [0, 0], sizes = [8, 128], strides = [1, 1]} : vector<8x512xf32> to vector<8x128xf32>
    %73 = arith.negf %72 : vector<8x128xf32>
    %74 = math.exp %73 : vector<8x128xf32>
    %cst_29 = arith.constant 1.000000e+00 : f32
    %75 = vector.broadcast %cst_29 : f32 to vector<8x128xf32>
    %76 = arith.addf %75, %74 : vector<8x128xf32>
    %77 = arith.divf %75, %76 : vector<8x128xf32>
    %78 = vector.extract_strided_slice %71 {offsets = [0, 128], sizes = [8, 128], strides = [1, 1]} : vector<8x512xf32> to vector<8x128xf32>
    %79 = arith.negf %78 : vector<8x128xf32>
    %80 = math.exp %79 : vector<8x128xf32>
    %cst_30 = arith.constant 1.000000e+00 : f32
    %81 = vector.broadcast %cst_30 : f32 to vector<8x128xf32>
    %82 = arith.addf %81, %80 : vector<8x128xf32>
    %83 = arith.divf %81, %82 : vector<8x128xf32>
    %84 = vector.extract_strided_slice %71 {offsets = [0, 256], sizes = [8, 128], strides = [1, 1]} : vector<8x512xf32> to vector<8x128xf32>
    %85 = math.tanh %84 : vector<8x128xf32>
    %86 = vector.extract_strided_slice %71 {offsets = [0, 384], sizes = [8, 128], strides = [1, 1]} : vector<8x512xf32> to vector<8x128xf32>
    %87 = arith.negf %86 : vector<8x128xf32>
    %88 = math.exp %87 : vector<8x128xf32>
    %cst_31 = arith.constant 1.000000e+00 : f32
    %89 = vector.broadcast %cst_31 : f32 to vector<8x128xf32>
    %90 = arith.addf %89, %88 : vector<8x128xf32>
    %91 = arith.divf %89, %90 : vector<8x128xf32>
    %92 = arith.mulf %83, %65 : vector<8x128xf32>
    %93 = arith.mulf %77, %85 : vector<8x128xf32>
    %94 = arith.addf %92, %93 : vector<8x128xf32>
    %95 = math.tanh %94 : vector<8x128xf32>
    %96 = arith.mulf %91, %95 : vector<8x128xf32>
    %c24 = arith.constant 24 : index
    %c0_32 = arith.constant 0 : index
    %97 = vector.load %arg6[%c24, %c0_32] : memref<256x512xf32, #tpu.memory_space<vmem>>, vector<8x512xf32>
    %c0_33 = arith.constant 0 : index
    %c0_34 = arith.constant 0 : index
    %98 = vector.load %arg3[%c0_33, %c0_34] : memref<128x512xf32, #tpu.memory_space<vmem>>, vector<128x512xf32>
    %cst_35 = arith.constant dense<0.000000e+00> : vector<8x512xf32>
    %99 = tpu.matmul %96, %98, %cst_35 {dimension_numbers = #tpu.dot_dimension_numbers<[1], [0], [0], [1], [0, 0, 1, 1], [], []>} : vector<8x128xf32>, vector<128x512xf32>, vector<8x512xf32> -> vector<8x512xf32>
    %100 = arith.addf %97, %99 : vector<8x512xf32>
    %101 = vector.extract_strided_slice %100 {offsets = [0, 0], sizes = [8, 128], strides = [1, 1]} : vector<8x512xf32> to vector<8x128xf32>
    %102 = arith.negf %101 : vector<8x128xf32>
    %103 = math.exp %102 : vector<8x128xf32>
    %cst_36 = arith.constant 1.000000e+00 : f32
    %104 = vector.broadcast %cst_36 : f32 to vector<8x128xf32>
    %105 = arith.addf %104, %103 : vector<8x128xf32>
    %106 = arith.divf %104, %105 : vector<8x128xf32>
    %107 = vector.extract_strided_slice %100 {offsets = [0, 128], sizes = [8, 128], strides = [1, 1]} : vector<8x512xf32> to vector<8x128xf32>
    %108 = arith.negf %107 : vector<8x128xf32>
    %109 = math.exp %108 : vector<8x128xf32>
    %cst_37 = arith.constant 1.000000e+00 : f32
    %110 = vector.broadcast %cst_37 : f32 to vector<8x128xf32>
    %111 = arith.addf %110, %109 : vector<8x128xf32>
    %112 = arith.divf %110, %111 : vector<8x128xf32>
    %113 = vector.extract_strided_slice %100 {offsets = [0, 256], sizes = [8, 128], strides = [1, 1]} : vector<8x512xf32> to vector<8x128xf32>
    %114 = math.tanh %113 : vector<8x128xf32>
    %115 = vector.extract_strided_slice %100 {offsets = [0, 384], sizes = [8, 128], strides = [1, 1]} : vector<8x512xf32> to vector<8x128xf32>
    %116 = arith.negf %115 : vector<8x128xf32>
    %117 = math.exp %116 : vector<8x128xf32>
    %cst_38 = arith.constant 1.000000e+00 : f32
    %118 = vector.broadcast %cst_38 : f32 to vector<8x128xf32>
    %119 = arith.addf %118, %117 : vector<8x128xf32>
    %120 = arith.divf %118, %119 : vector<8x128xf32>
    %121 = arith.mulf %112, %94 : vector<8x128xf32>
    %122 = arith.mulf %106, %114 : vector<8x128xf32>
    %123 = arith.addf %121, %122 : vector<8x128xf32>
    %124 = math.tanh %123 : vector<8x128xf32>
    %125 = arith.mulf %120, %124 : vector<8x128xf32>
    %c32 = arith.constant 32 : index
    %c0_39 = arith.constant 0 : index
    %126 = vector.load %arg6[%c32, %c0_39] : memref<256x512xf32, #tpu.memory_space<vmem>>, vector<8x512xf32>
    %c0_40 = arith.constant 0 : index
    %c0_41 = arith.constant 0 : index
    %127 = vector.load %arg3[%c0_40, %c0_41] : memref<128x512xf32, #tpu.memory_space<vmem>>, vector<128x512xf32>
    %cst_42 = arith.constant dense<0.000000e+00> : vector<8x512xf32>
    %128 = tpu.matmul %125, %127, %cst_42 {dimension_numbers = #tpu.dot_dimension_numbers<[1], [0], [0], [1], [0, 0, 1, 1], [], []>} : vector<8x128xf32>, vector<128x512xf32>, vector<8x512xf32> -> vector<8x512xf32>
    %129 = arith.addf %126, %128 : vector<8x512xf32>
    %130 = vector.extract_strided_slice %129 {offsets = [0, 0], sizes = [8, 128], strides = [1, 1]} : vector<8x512xf32> to vector<8x128xf32>
    %131 = arith.negf %130 : vector<8x128xf32>
    %132 = math.exp %131 : vector<8x128xf32>
    %cst_43 = arith.constant 1.000000e+00 : f32
    %133 = vector.broadcast %cst_43 : f32 to vector<8x128xf32>
    %134 = arith.addf %133, %132 : vector<8x128xf32>
    %135 = arith.divf %133, %134 : vector<8x128xf32>
    %136 = vector.extract_strided_slice %129 {offsets = [0, 128], sizes = [8, 128], strides = [1, 1]} : vector<8x512xf32> to vector<8x128xf32>
    %137 = arith.negf %136 : vector<8x128xf32>
    %138 = math.exp %137 : vector<8x128xf32>
    %cst_44 = arith.constant 1.000000e+00 : f32
    %139 = vector.broadcast %cst_44 : f32 to vector<8x128xf32>
    %140 = arith.addf %139, %138 : vector<8x128xf32>
    %141 = arith.divf %139, %140 : vector<8x128xf32>
    %142 = vector.extract_strided_slice %129 {offsets = [0, 256], sizes = [8, 128], strides = [1, 1]} : vector<8x512xf32> to vector<8x128xf32>
    %143 = math.tanh %142 : vector<8x128xf32>
    %144 = vector.extract_strided_slice %129 {offsets = [0, 384], sizes = [8, 128], strides = [1, 1]} : vector<8x512xf32> to vector<8x128xf32>
    %145 = arith.negf %144 : vector<8x128xf32>
    %146 = math.exp %145 : vector<8x128xf32>
    %cst_45 = arith.constant 1.000000e+00 : f32
    %147 = vector.broadcast %cst_45 : f32 to vector<8x128xf32>
    %148 = arith.addf %147, %146 : vector<8x128xf32>
    %149 = arith.divf %147, %148 : vector<8x128xf32>
    %150 = arith.mulf %141, %123 : vector<8x128xf32>
    %151 = arith.mulf %135, %143 : vector<8x128xf32>
    %152 = arith.addf %150, %151 : vector<8x128xf32>
    %153 = math.tanh %152 : vector<8x128xf32>
    %154 = arith.mulf %149, %153 : vector<8x128xf32>
    %c40 = arith.constant 40 : index
    %c0_46 = arith.constant 0 : index
    %155 = vector.load %arg6[%c40, %c0_46] : memref<256x512xf32, #tpu.memory_space<vmem>>, vector<8x512xf32>
    %c0_47 = arith.constant 0 : index
    %c0_48 = arith.constant 0 : index
    %156 = vector.load %arg3[%c0_47, %c0_48] : memref<128x512xf32, #tpu.memory_space<vmem>>, vector<128x512xf32>
    %cst_49 = arith.constant dense<0.000000e+00> : vector<8x512xf32>
    %157 = tpu.matmul %154, %156, %cst_49 {dimension_numbers = #tpu.dot_dimension_numbers<[1], [0], [0], [1], [0, 0, 1, 1], [], []>} : vector<8x128xf32>, vector<128x512xf32>, vector<8x512xf32> -> vector<8x512xf32>
    %158 = arith.addf %155, %157 : vector<8x512xf32>
    %159 = vector.extract_strided_slice %158 {offsets = [0, 0], sizes = [8, 128], strides = [1, 1]} : vector<8x512xf32> to vector<8x128xf32>
    %160 = arith.negf %159 : vector<8x128xf32>
    %161 = math.exp %160 : vector<8x128xf32>
    %cst_50 = arith.constant 1.000000e+00 : f32
    %162 = vector.broadcast %cst_50 : f32 to vector<8x128xf32>
    %163 = arith.addf %162, %161 : vector<8x128xf32>
    %164 = arith.divf %162, %163 : vector<8x128xf32>
    %165 = vector.extract_strided_slice %158 {offsets = [0, 128], sizes = [8, 128], strides = [1, 1]} : vector<8x512xf32> to vector<8x128xf32>
    %166 = arith.negf %165 : vector<8x128xf32>
    %167 = math.exp %166 : vector<8x128xf32>
    %cst_51 = arith.constant 1.000000e+00 : f32
    %168 = vector.broadcast %cst_51 : f32 to vector<8x128xf32>
    %169 = arith.addf %168, %167 : vector<8x128xf32>
    %170 = arith.divf %168, %169 : vector<8x128xf32>
    %171 = vector.extract_strided_slice %158 {offsets = [0, 256], sizes = [8, 128], strides = [1, 1]} : vector<8x512xf32> to vector<8x128xf32>
    %172 = math.tanh %171 : vector<8x128xf32>
    %173 = vector.extract_strided_slice %158 {offsets = [0, 384], sizes = [8, 128], strides = [1, 1]} : vector<8x512xf32> to vector<8x128xf32>
    %174 = arith.negf %173 : vector<8x128xf32>
    %175 = math.exp %174 : vector<8x128xf32>
    %cst_52 = arith.constant 1.000000e+00 : f32
    %176 = vector.broadcast %cst_52 : f32 to vector<8x128xf32>
    %177 = arith.addf %176, %175 : vector<8x128xf32>
    %178 = arith.divf %176, %177 : vector<8x128xf32>
    %179 = arith.mulf %170, %152 : vector<8x128xf32>
    %180 = arith.mulf %164, %172 : vector<8x128xf32>
    %181 = arith.addf %179, %180 : vector<8x128xf32>
    %182 = math.tanh %181 : vector<8x128xf32>
    %183 = arith.mulf %178, %182 : vector<8x128xf32>
    %c48 = arith.constant 48 : index
    %c0_53 = arith.constant 0 : index
    %184 = vector.load %arg6[%c48, %c0_53] : memref<256x512xf32, #tpu.memory_space<vmem>>, vector<8x512xf32>
    %c0_54 = arith.constant 0 : index
    %c0_55 = arith.constant 0 : index
    %185 = vector.load %arg3[%c0_54, %c0_55] : memref<128x512xf32, #tpu.memory_space<vmem>>, vector<128x512xf32>
    %cst_56 = arith.constant dense<0.000000e+00> : vector<8x512xf32>
    %186 = tpu.matmul %183, %185, %cst_56 {dimension_numbers = #tpu.dot_dimension_numbers<[1], [0], [0], [1], [0, 0, 1, 1], [], []>} : vector<8x128xf32>, vector<128x512xf32>, vector<8x512xf32> -> vector<8x512xf32>
    %187 = arith.addf %184, %186 : vector<8x512xf32>
    %188 = vector.extract_strided_slice %187 {offsets = [0, 0], sizes = [8, 128], strides = [1, 1]} : vector<8x512xf32> to vector<8x128xf32>
    %189 = arith.negf %188 : vector<8x128xf32>
    %190 = math.exp %189 : vector<8x128xf32>
    %cst_57 = arith.constant 1.000000e+00 : f32
    %191 = vector.broadcast %cst_57 : f32 to vector<8x128xf32>
    %192 = arith.addf %191, %190 : vector<8x128xf32>
    %193 = arith.divf %191, %192 : vector<8x128xf32>
    %194 = vector.extract_strided_slice %187 {offsets = [0, 128], sizes = [8, 128], strides = [1, 1]} : vector<8x512xf32> to vector<8x128xf32>
    %195 = arith.negf %194 : vector<8x128xf32>
    %196 = math.exp %195 : vector<8x128xf32>
    %cst_58 = arith.constant 1.000000e+00 : f32
    %197 = vector.broadcast %cst_58 : f32 to vector<8x128xf32>
    %198 = arith.addf %197, %196 : vector<8x128xf32>
    %199 = arith.divf %197, %198 : vector<8x128xf32>
    %200 = vector.extract_strided_slice %187 {offsets = [0, 256], sizes = [8, 128], strides = [1, 1]} : vector<8x512xf32> to vector<8x128xf32>
    %201 = math.tanh %200 : vector<8x128xf32>
    %202 = vector.extract_strided_slice %187 {offsets = [0, 384], sizes = [8, 128], strides = [1, 1]} : vector<8x512xf32> to vector<8x128xf32>
    %203 = arith.negf %202 : vector<8x128xf32>
    %204 = math.exp %203 : vector<8x128xf32>
    %cst_59 = arith.constant 1.000000e+00 : f32
    %205 = vector.broadcast %cst_59 : f32 to vector<8x128xf32>
    %206 = arith.addf %205, %204 : vector<8x128xf32>
    %207 = arith.divf %205, %206 : vector<8x128xf32>
    %208 = arith.mulf %199, %181 : vector<8x128xf32>
    %209 = arith.mulf %193, %201 : vector<8x128xf32>
    %210 = arith.addf %208, %209 : vector<8x128xf32>
    %211 = math.tanh %210 : vector<8x128xf32>
    %212 = arith.mulf %207, %211 : vector<8x128xf32>
    %c56 = arith.constant 56 : index
    %c0_60 = arith.constant 0 : index
    %213 = vector.load %arg6[%c56, %c0_60] : memref<256x512xf32, #tpu.memory_space<vmem>>, vector<8x512xf32>
    %c0_61 = arith.constant 0 : index
    %c0_62 = arith.constant 0 : index
    %214 = vector.load %arg3[%c0_61, %c0_62] : memref<128x512xf32, #tpu.memory_space<vmem>>, vector<128x512xf32>
    %cst_63 = arith.constant dense<0.000000e+00> : vector<8x512xf32>
    %215 = tpu.matmul %212, %214, %cst_63 {dimension_numbers = #tpu.dot_dimension_numbers<[1], [0], [0], [1], [0, 0, 1, 1], [], []>} : vector<8x128xf32>, vector<128x512xf32>, vector<8x512xf32> -> vector<8x512xf32>
    %216 = arith.addf %213, %215 : vector<8x512xf32>
    %217 = vector.extract_strided_slice %216 {offsets = [0, 0], sizes = [8, 128], strides = [1, 1]} : vector<8x512xf32> to vector<8x128xf32>
    %218 = arith.negf %217 : vector<8x128xf32>
    %219 = math.exp %218 : vector<8x128xf32>
    %cst_64 = arith.constant 1.000000e+00 : f32
    %220 = vector.broadcast %cst_64 : f32 to vector<8x128xf32>
    %221 = arith.addf %220, %219 : vector<8x128xf32>
    %222 = arith.divf %220, %221 : vector<8x128xf32>
    %223 = vector.extract_strided_slice %216 {offsets = [0, 128], sizes = [8, 128], strides = [1, 1]} : vector<8x512xf32> to vector<8x128xf32>
    %224 = arith.negf %223 : vector<8x128xf32>
    %225 = math.exp %224 : vector<8x128xf32>
    %cst_65 = arith.constant 1.000000e+00 : f32
    %226 = vector.broadcast %cst_65 : f32 to vector<8x128xf32>
    %227 = arith.addf %226, %225 : vector<8x128xf32>
    %228 = arith.divf %226, %227 : vector<8x128xf32>
    %229 = vector.extract_strided_slice %216 {offsets = [0, 256], sizes = [8, 128], strides = [1, 1]} : vector<8x512xf32> to vector<8x128xf32>
    %230 = math.tanh %229 : vector<8x128xf32>
    %231 = vector.extract_strided_slice %216 {offsets = [0, 384], sizes = [8, 128], strides = [1, 1]} : vector<8x512xf32> to vector<8x128xf32>
    %232 = arith.negf %231 : vector<8x128xf32>
    %233 = math.exp %232 : vector<8x128xf32>
    %cst_66 = arith.constant 1.000000e+00 : f32
    %234 = vector.broadcast %cst_66 : f32 to vector<8x128xf32>
    %235 = arith.addf %234, %233 : vector<8x128xf32>
    %236 = arith.divf %234, %235 : vector<8x128xf32>
    %237 = arith.mulf %228, %210 : vector<8x128xf32>
    %238 = arith.mulf %222, %230 : vector<8x128xf32>
    %239 = arith.addf %237, %238 : vector<8x128xf32>
    %240 = math.tanh %239 : vector<8x128xf32>
    %241 = arith.mulf %236, %240 : vector<8x128xf32>
    %c64 = arith.constant 64 : index
    %c0_67 = arith.constant 0 : index
    %242 = vector.load %arg6[%c64, %c0_67] : memref<256x512xf32, #tpu.memory_space<vmem>>, vector<8x512xf32>
    %c0_68 = arith.constant 0 : index
    %c0_69 = arith.constant 0 : index
    %243 = vector.load %arg3[%c0_68, %c0_69] : memref<128x512xf32, #tpu.memory_space<vmem>>, vector<128x512xf32>
    %cst_70 = arith.constant dense<0.000000e+00> : vector<8x512xf32>
    %244 = tpu.matmul %241, %243, %cst_70 {dimension_numbers = #tpu.dot_dimension_numbers<[1], [0], [0], [1], [0, 0, 1, 1], [], []>} : vector<8x128xf32>, vector<128x512xf32>, vector<8x512xf32> -> vector<8x512xf32>
    %245 = arith.addf %242, %244 : vector<8x512xf32>
    %246 = vector.extract_strided_slice %245 {offsets = [0, 0], sizes = [8, 128], strides = [1, 1]} : vector<8x512xf32> to vector<8x128xf32>
    %247 = arith.negf %246 : vector<8x128xf32>
    %248 = math.exp %247 : vector<8x128xf32>
    %cst_71 = arith.constant 1.000000e+00 : f32
    %249 = vector.broadcast %cst_71 : f32 to vector<8x128xf32>
    %250 = arith.addf %249, %248 : vector<8x128xf32>
    %251 = arith.divf %249, %250 : vector<8x128xf32>
    %252 = vector.extract_strided_slice %245 {offsets = [0, 128], sizes = [8, 128], strides = [1, 1]} : vector<8x512xf32> to vector<8x128xf32>
    %253 = arith.negf %252 : vector<8x128xf32>
    %254 = math.exp %253 : vector<8x128xf32>
    %cst_72 = arith.constant 1.000000e+00 : f32
    %255 = vector.broadcast %cst_72 : f32 to vector<8x128xf32>
    %256 = arith.addf %255, %254 : vector<8x128xf32>
    %257 = arith.divf %255, %256 : vector<8x128xf32>
    %258 = vector.extract_strided_slice %245 {offsets = [0, 256], sizes = [8, 128], strides = [1, 1]} : vector<8x512xf32> to vector<8x128xf32>
    %259 = math.tanh %258 : vector<8x128xf32>
    %260 = vector.extract_strided_slice %245 {offsets = [0, 384], sizes = [8, 128], strides = [1, 1]} : vector<8x512xf32> to vector<8x128xf32>
    %261 = arith.negf %260 : vector<8x128xf32>
    %262 = math.exp %261 : vector<8x128xf32>
    %cst_73 = arith.constant 1.000000e+00 : f32
    %263 = vector.broadcast %cst_73 : f32 to vector<8x128xf32>
    %264 = arith.addf %263, %262 : vector<8x128xf32>
    %265 = arith.divf %263, %264 : vector<8x128xf32>
    %266 = arith.mulf %257, %239 : vector<8x128xf32>
    %267 = arith.mulf %251, %259 : vector<8x128xf32>
    %268 = arith.addf %266, %267 : vector<8x128xf32>
    %269 = math.tanh %268 : vector<8x128xf32>
    %270 = arith.mulf %265, %269 : vector<8x128xf32>
    %c72 = arith.constant 72 : index
    %c0_74 = arith.constant 0 : index
    %271 = vector.load %arg6[%c72, %c0_74] : memref<256x512xf32, #tpu.memory_space<vmem>>, vector<8x512xf32>
    %c0_75 = arith.constant 0 : index
    %c0_76 = arith.constant 0 : index
    %272 = vector.load %arg3[%c0_75, %c0_76] : memref<128x512xf32, #tpu.memory_space<vmem>>, vector<128x512xf32>
    %cst_77 = arith.constant dense<0.000000e+00> : vector<8x512xf32>
    %273 = tpu.matmul %270, %272, %cst_77 {dimension_numbers = #tpu.dot_dimension_numbers<[1], [0], [0], [1], [0, 0, 1, 1], [], []>} : vector<8x128xf32>, vector<128x512xf32>, vector<8x512xf32> -> vector<8x512xf32>
    %274 = arith.addf %271, %273 : vector<8x512xf32>
    %275 = vector.extract_strided_slice %274 {offsets = [0, 0], sizes = [8, 128], strides = [1, 1]} : vector<8x512xf32> to vector<8x128xf32>
    %276 = arith.negf %275 : vector<8x128xf32>
    %277 = math.exp %276 : vector<8x128xf32>
    %cst_78 = arith.constant 1.000000e+00 : f32
    %278 = vector.broadcast %cst_78 : f32 to vector<8x128xf32>
    %279 = arith.addf %278, %277 : vector<8x128xf32>
    %280 = arith.divf %278, %279 : vector<8x128xf32>
    %281 = vector.extract_strided_slice %274 {offsets = [0, 128], sizes = [8, 128], strides = [1, 1]} : vector<8x512xf32> to vector<8x128xf32>
    %282 = arith.negf %281 : vector<8x128xf32>
    %283 = math.exp %282 : vector<8x128xf32>
    %cst_79 = arith.constant 1.000000e+00 : f32
    %284 = vector.broadcast %cst_79 : f32 to vector<8x128xf32>
    %285 = arith.addf %284, %283 : vector<8x128xf32>
    %286 = arith.divf %284, %285 : vector<8x128xf32>
    %287 = vector.extract_strided_slice %274 {offsets = [0, 256], sizes = [8, 128], strides = [1, 1]} : vector<8x512xf32> to vector<8x128xf32>
    %288 = math.tanh %287 : vector<8x128xf32>
    %289 = vector.extract_strided_slice %274 {offsets = [0, 384], sizes = [8, 128], strides = [1, 1]} : vector<8x512xf32> to vector<8x128xf32>
    %290 = arith.negf %289 : vector<8x128xf32>
    %291 = math.exp %290 : vector<8x128xf32>
    %cst_80 = arith.constant 1.000000e+00 : f32
    %292 = vector.broadcast %cst_80 : f32 to vector<8x128xf32>
    %293 = arith.addf %292, %291 : vector<8x128xf32>
    %294 = arith.divf %292, %293 : vector<8x128xf32>
    %295 = arith.mulf %286, %268 : vector<8x128xf32>
    %296 = arith.mulf %280, %288 : vector<8x128xf32>
    %297 = arith.addf %295, %296 : vector<8x128xf32>
    %298 = math.tanh %297 : vector<8x128xf32>
    %299 = arith.mulf %294, %298 : vector<8x128xf32>
    %c80 = arith.constant 80 : index
    %c0_81 = arith.constant 0 : index
    %300 = vector.load %arg6[%c80, %c0_81] : memref<256x512xf32, #tpu.memory_space<vmem>>, vector<8x512xf32>
    %c0_82 = arith.constant 0 : index
    %c0_83 = arith.constant 0 : index
    %301 = vector.load %arg3[%c0_82, %c0_83] : memref<128x512xf32, #tpu.memory_space<vmem>>, vector<128x512xf32>
    %cst_84 = arith.constant dense<0.000000e+00> : vector<8x512xf32>
    %302 = tpu.matmul %299, %301, %cst_84 {dimension_numbers = #tpu.dot_dimension_numbers<[1], [0], [0], [1], [0, 0, 1, 1], [], []>} : vector<8x128xf32>, vector<128x512xf32>, vector<8x512xf32> -> vector<8x512xf32>
    %303 = arith.addf %300, %302 : vector<8x512xf32>
    %304 = vector.extract_strided_slice %303 {offsets = [0, 0], sizes = [8, 128], strides = [1, 1]} : vector<8x512xf32> to vector<8x128xf32>
    %305 = arith.negf %304 : vector<8x128xf32>
    %306 = math.exp %305 : vector<8x128xf32>
    %cst_85 = arith.constant 1.000000e+00 : f32
    %307 = vector.broadcast %cst_85 : f32 to vector<8x128xf32>
    %308 = arith.addf %307, %306 : vector<8x128xf32>
    %309 = arith.divf %307, %308 : vector<8x128xf32>
    %310 = vector.extract_strided_slice %303 {offsets = [0, 128], sizes = [8, 128], strides = [1, 1]} : vector<8x512xf32> to vector<8x128xf32>
    %311 = arith.negf %310 : vector<8x128xf32>
    %312 = math.exp %311 : vector<8x128xf32>
    %cst_86 = arith.constant 1.000000e+00 : f32
    %313 = vector.broadcast %cst_86 : f32 to vector<8x128xf32>
    %314 = arith.addf %313, %312 : vector<8x128xf32>
    %315 = arith.divf %313, %314 : vector<8x128xf32>
    %316 = vector.extract_strided_slice %303 {offsets = [0, 256], sizes = [8, 128], strides = [1, 1]} : vector<8x512xf32> to vector<8x128xf32>
    %317 = math.tanh %316 : vector<8x128xf32>
    %318 = vector.extract_strided_slice %303 {offsets = [0, 384], sizes = [8, 128], strides = [1, 1]} : vector<8x512xf32> to vector<8x128xf32>
    %319 = arith.negf %318 : vector<8x128xf32>
    %320 = math.exp %319 : vector<8x128xf32>
    %cst_87 = arith.constant 1.000000e+00 : f32
    %321 = vector.broadcast %cst_87 : f32 to vector<8x128xf32>
    %322 = arith.addf %321, %320 : vector<8x128xf32>
    %323 = arith.divf %321, %322 : vector<8x128xf32>
    %324 = arith.mulf %315, %297 : vector<8x128xf32>
    %325 = arith.mulf %309, %317 : vector<8x128xf32>
    %326 = arith.addf %324, %325 : vector<8x128xf32>
    %327 = math.tanh %326 : vector<8x128xf32>
    %328 = arith.mulf %323, %327 : vector<8x128xf32>
    %c88 = arith.constant 88 : index
    %c0_88 = arith.constant 0 : index
    %329 = vector.load %arg6[%c88, %c0_88] : memref<256x512xf32, #tpu.memory_space<vmem>>, vector<8x512xf32>
    %c0_89 = arith.constant 0 : index
    %c0_90 = arith.constant 0 : index
    %330 = vector.load %arg3[%c0_89, %c0_90] : memref<128x512xf32, #tpu.memory_space<vmem>>, vector<128x512xf32>
    %cst_91 = arith.constant dense<0.000000e+00> : vector<8x512xf32>
    %331 = tpu.matmul %328, %330, %cst_91 {dimension_numbers = #tpu.dot_dimension_numbers<[1], [0], [0], [1], [0, 0, 1, 1], [], []>} : vector<8x128xf32>, vector<128x512xf32>, vector<8x512xf32> -> vector<8x512xf32>
    %332 = arith.addf %329, %331 : vector<8x512xf32>
    %333 = vector.extract_strided_slice %332 {offsets = [0, 0], sizes = [8, 128], strides = [1, 1]} : vector<8x512xf32> to vector<8x128xf32>
    %334 = arith.negf %333 : vector<8x128xf32>
    %335 = math.exp %334 : vector<8x128xf32>
    %cst_92 = arith.constant 1.000000e+00 : f32
    %336 = vector.broadcast %cst_92 : f32 to vector<8x128xf32>
    %337 = arith.addf %336, %335 : vector<8x128xf32>
    %338 = arith.divf %336, %337 : vector<8x128xf32>
    %339 = vector.extract_strided_slice %332 {offsets = [0, 128], sizes = [8, 128], strides = [1, 1]} : vector<8x512xf32> to vector<8x128xf32>
    %340 = arith.negf %339 : vector<8x128xf32>
    %341 = math.exp %340 : vector<8x128xf32>
    %cst_93 = arith.constant 1.000000e+00 : f32
    %342 = vector.broadcast %cst_93 : f32 to vector<8x128xf32>
    %343 = arith.addf %342, %341 : vector<8x128xf32>
    %344 = arith.divf %342, %343 : vector<8x128xf32>
    %345 = vector.extract_strided_slice %332 {offsets = [0, 256], sizes = [8, 128], strides = [1, 1]} : vector<8x512xf32> to vector<8x128xf32>
    %346 = math.tanh %345 : vector<8x128xf32>
    %347 = vector.extract_strided_slice %332 {offsets = [0, 384], sizes = [8, 128], strides = [1, 1]} : vector<8x512xf32> to vector<8x128xf32>
    %348 = arith.negf %347 : vector<8x128xf32>
    %349 = math.exp %348 : vector<8x128xf32>
    %cst_94 = arith.constant 1.000000e+00 : f32
    %350 = vector.broadcast %cst_94 : f32 to vector<8x128xf32>
    %351 = arith.addf %350, %349 : vector<8x128xf32>
    %352 = arith.divf %350, %351 : vector<8x128xf32>
    %353 = arith.mulf %344, %326 : vector<8x128xf32>
    %354 = arith.mulf %338, %346 : vector<8x128xf32>
    %355 = arith.addf %353, %354 : vector<8x128xf32>
    %356 = math.tanh %355 : vector<8x128xf32>
    %357 = arith.mulf %352, %356 : vector<8x128xf32>
    %c96 = arith.constant 96 : index
    %c0_95 = arith.constant 0 : index
    %358 = vector.load %arg6[%c96, %c0_95] : memref<256x512xf32, #tpu.memory_space<vmem>>, vector<8x512xf32>
    %c0_96 = arith.constant 0 : index
    %c0_97 = arith.constant 0 : index
    %359 = vector.load %arg3[%c0_96, %c0_97] : memref<128x512xf32, #tpu.memory_space<vmem>>, vector<128x512xf32>
    %cst_98 = arith.constant dense<0.000000e+00> : vector<8x512xf32>
    %360 = tpu.matmul %357, %359, %cst_98 {dimension_numbers = #tpu.dot_dimension_numbers<[1], [0], [0], [1], [0, 0, 1, 1], [], []>} : vector<8x128xf32>, vector<128x512xf32>, vector<8x512xf32> -> vector<8x512xf32>
    %361 = arith.addf %358, %360 : vector<8x512xf32>
    %362 = vector.extract_strided_slice %361 {offsets = [0, 0], sizes = [8, 128], strides = [1, 1]} : vector<8x512xf32> to vector<8x128xf32>
    %363 = arith.negf %362 : vector<8x128xf32>
    %364 = math.exp %363 : vector<8x128xf32>
    %cst_99 = arith.constant 1.000000e+00 : f32
    %365 = vector.broadcast %cst_99 : f32 to vector<8x128xf32>
    %366 = arith.addf %365, %364 : vector<8x128xf32>
    %367 = arith.divf %365, %366 : vector<8x128xf32>
    %368 = vector.extract_strided_slice %361 {offsets = [0, 128], sizes = [8, 128], strides = [1, 1]} : vector<8x512xf32> to vector<8x128xf32>
    %369 = arith.negf %368 : vector<8x128xf32>
    %370 = math.exp %369 : vector<8x128xf32>
    %cst_100 = arith.constant 1.000000e+00 : f32
    %371 = vector.broadcast %cst_100 : f32 to vector<8x128xf32>
    %372 = arith.addf %371, %370 : vector<8x128xf32>
    %373 = arith.divf %371, %372 : vector<8x128xf32>
    %374 = vector.extract_strided_slice %361 {offsets = [0, 256], sizes = [8, 128], strides = [1, 1]} : vector<8x512xf32> to vector<8x128xf32>
    %375 = math.tanh %374 : vector<8x128xf32>
    %376 = vector.extract_strided_slice %361 {offsets = [0, 384], sizes = [8, 128], strides = [1, 1]} : vector<8x512xf32> to vector<8x128xf32>
    %377 = arith.negf %376 : vector<8x128xf32>
    %378 = math.exp %377 : vector<8x128xf32>
    %cst_101 = arith.constant 1.000000e+00 : f32
    %379 = vector.broadcast %cst_101 : f32 to vector<8x128xf32>
    %380 = arith.addf %379, %378 : vector<8x128xf32>
    %381 = arith.divf %379, %380 : vector<8x128xf32>
    %382 = arith.mulf %373, %355 : vector<8x128xf32>
    %383 = arith.mulf %367, %375 : vector<8x128xf32>
    %384 = arith.addf %382, %383 : vector<8x128xf32>
    %385 = math.tanh %384 : vector<8x128xf32>
    %386 = arith.mulf %381, %385 : vector<8x128xf32>
    %c104 = arith.constant 104 : index
    %c0_102 = arith.constant 0 : index
    %387 = vector.load %arg6[%c104, %c0_102] : memref<256x512xf32, #tpu.memory_space<vmem>>, vector<8x512xf32>
    %c0_103 = arith.constant 0 : index
    %c0_104 = arith.constant 0 : index
    %388 = vector.load %arg3[%c0_103, %c0_104] : memref<128x512xf32, #tpu.memory_space<vmem>>, vector<128x512xf32>
    %cst_105 = arith.constant dense<0.000000e+00> : vector<8x512xf32>
    %389 = tpu.matmul %386, %388, %cst_105 {dimension_numbers = #tpu.dot_dimension_numbers<[1], [0], [0], [1], [0, 0, 1, 1], [], []>} : vector<8x128xf32>, vector<128x512xf32>, vector<8x512xf32> -> vector<8x512xf32>
    %390 = arith.addf %387, %389 : vector<8x512xf32>
    %391 = vector.extract_strided_slice %390 {offsets = [0, 0], sizes = [8, 128], strides = [1, 1]} : vector<8x512xf32> to vector<8x128xf32>
    %392 = arith.negf %391 : vector<8x128xf32>
    %393 = math.exp %392 : vector<8x128xf32>
    %cst_106 = arith.constant 1.000000e+00 : f32
    %394 = vector.broadcast %cst_106 : f32 to vector<8x128xf32>
    %395 = arith.addf %394, %393 : vector<8x128xf32>
    %396 = arith.divf %394, %395 : vector<8x128xf32>
    %397 = vector.extract_strided_slice %390 {offsets = [0, 128], sizes = [8, 128], strides = [1, 1]} : vector<8x512xf32> to vector<8x128xf32>
    %398 = arith.negf %397 : vector<8x128xf32>
    %399 = math.exp %398 : vector<8x128xf32>
    %cst_107 = arith.constant 1.000000e+00 : f32
    %400 = vector.broadcast %cst_107 : f32 to vector<8x128xf32>
    %401 = arith.addf %400, %399 : vector<8x128xf32>
    %402 = arith.divf %400, %401 : vector<8x128xf32>
    %403 = vector.extract_strided_slice %390 {offsets = [0, 256], sizes = [8, 128], strides = [1, 1]} : vector<8x512xf32> to vector<8x128xf32>
    %404 = math.tanh %403 : vector<8x128xf32>
    %405 = vector.extract_strided_slice %390 {offsets = [0, 384], sizes = [8, 128], strides = [1, 1]} : vector<8x512xf32> to vector<8x128xf32>
    %406 = arith.negf %405 : vector<8x128xf32>
    %407 = math.exp %406 : vector<8x128xf32>
    %cst_108 = arith.constant 1.000000e+00 : f32
    %408 = vector.broadcast %cst_108 : f32 to vector<8x128xf32>
    %409 = arith.addf %408, %407 : vector<8x128xf32>
    %410 = arith.divf %408, %409 : vector<8x128xf32>
    %411 = arith.mulf %402, %384 : vector<8x128xf32>
    %412 = arith.mulf %396, %404 : vector<8x128xf32>
    %413 = arith.addf %411, %412 : vector<8x128xf32>
    %414 = math.tanh %413 : vector<8x128xf32>
    %415 = arith.mulf %410, %414 : vector<8x128xf32>
    %c112 = arith.constant 112 : index
    %c0_109 = arith.constant 0 : index
    %416 = vector.load %arg6[%c112, %c0_109] : memref<256x512xf32, #tpu.memory_space<vmem>>, vector<8x512xf32>
    %c0_110 = arith.constant 0 : index
    %c0_111 = arith.constant 0 : index
    %417 = vector.load %arg3[%c0_110, %c0_111] : memref<128x512xf32, #tpu.memory_space<vmem>>, vector<128x512xf32>
    %cst_112 = arith.constant dense<0.000000e+00> : vector<8x512xf32>
    %418 = tpu.matmul %415, %417, %cst_112 {dimension_numbers = #tpu.dot_dimension_numbers<[1], [0], [0], [1], [0, 0, 1, 1], [], []>} : vector<8x128xf32>, vector<128x512xf32>, vector<8x512xf32> -> vector<8x512xf32>
    %419 = arith.addf %416, %418 : vector<8x512xf32>
    %420 = vector.extract_strided_slice %419 {offsets = [0, 0], sizes = [8, 128], strides = [1, 1]} : vector<8x512xf32> to vector<8x128xf32>
    %421 = arith.negf %420 : vector<8x128xf32>
    %422 = math.exp %421 : vector<8x128xf32>
    %cst_113 = arith.constant 1.000000e+00 : f32
    %423 = vector.broadcast %cst_113 : f32 to vector<8x128xf32>
    %424 = arith.addf %423, %422 : vector<8x128xf32>
    %425 = arith.divf %423, %424 : vector<8x128xf32>
    %426 = vector.extract_strided_slice %419 {offsets = [0, 128], sizes = [8, 128], strides = [1, 1]} : vector<8x512xf32> to vector<8x128xf32>
    %427 = arith.negf %426 : vector<8x128xf32>
    %428 = math.exp %427 : vector<8x128xf32>
    %cst_114 = arith.constant 1.000000e+00 : f32
    %429 = vector.broadcast %cst_114 : f32 to vector<8x128xf32>
    %430 = arith.addf %429, %428 : vector<8x128xf32>
    %431 = arith.divf %429, %430 : vector<8x128xf32>
    %432 = vector.extract_strided_slice %419 {offsets = [0, 256], sizes = [8, 128], strides = [1, 1]} : vector<8x512xf32> to vector<8x128xf32>
    %433 = math.tanh %432 : vector<8x128xf32>
    %434 = vector.extract_strided_slice %419 {offsets = [0, 384], sizes = [8, 128], strides = [1, 1]} : vector<8x512xf32> to vector<8x128xf32>
    %435 = arith.negf %434 : vector<8x128xf32>
    %436 = math.exp %435 : vector<8x128xf32>
    %cst_115 = arith.constant 1.000000e+00 : f32
    %437 = vector.broadcast %cst_115 : f32 to vector<8x128xf32>
    %438 = arith.addf %437, %436 : vector<8x128xf32>
    %439 = arith.divf %437, %438 : vector<8x128xf32>
    %440 = arith.mulf %431, %413 : vector<8x128xf32>
    %441 = arith.mulf %425, %433 : vector<8x128xf32>
    %442 = arith.addf %440, %441 : vector<8x128xf32>
    %443 = math.tanh %442 : vector<8x128xf32>
    %444 = arith.mulf %439, %443 : vector<8x128xf32>
    %c120 = arith.constant 120 : index
    %c0_116 = arith.constant 0 : index
    %445 = vector.load %arg6[%c120, %c0_116] : memref<256x512xf32, #tpu.memory_space<vmem>>, vector<8x512xf32>
    %c0_117 = arith.constant 0 : index
    %c0_118 = arith.constant 0 : index
    %446 = vector.load %arg3[%c0_117, %c0_118] : memref<128x512xf32, #tpu.memory_space<vmem>>, vector<128x512xf32>
    %cst_119 = arith.constant dense<0.000000e+00> : vector<8x512xf32>
    %447 = tpu.matmul %444, %446, %cst_119 {dimension_numbers = #tpu.dot_dimension_numbers<[1], [0], [0], [1], [0, 0, 1, 1], [], []>} : vector<8x128xf32>, vector<128x512xf32>, vector<8x512xf32> -> vector<8x512xf32>
    %448 = arith.addf %445, %447 : vector<8x512xf32>
    %449 = vector.extract_strided_slice %448 {offsets = [0, 0], sizes = [8, 128], strides = [1, 1]} : vector<8x512xf32> to vector<8x128xf32>
    %450 = arith.negf %449 : vector<8x128xf32>
    %451 = math.exp %450 : vector<8x128xf32>
    %cst_120 = arith.constant 1.000000e+00 : f32
    %452 = vector.broadcast %cst_120 : f32 to vector<8x128xf32>
    %453 = arith.addf %452, %451 : vector<8x128xf32>
    %454 = arith.divf %452, %453 : vector<8x128xf32>
    %455 = vector.extract_strided_slice %448 {offsets = [0, 128], sizes = [8, 128], strides = [1, 1]} : vector<8x512xf32> to vector<8x128xf32>
    %456 = arith.negf %455 : vector<8x128xf32>
    %457 = math.exp %456 : vector<8x128xf32>
    %cst_121 = arith.constant 1.000000e+00 : f32
    %458 = vector.broadcast %cst_121 : f32 to vector<8x128xf32>
    %459 = arith.addf %458, %457 : vector<8x128xf32>
    %460 = arith.divf %458, %459 : vector<8x128xf32>
    %461 = vector.extract_strided_slice %448 {offsets = [0, 256], sizes = [8, 128], strides = [1, 1]} : vector<8x512xf32> to vector<8x128xf32>
    %462 = math.tanh %461 : vector<8x128xf32>
    %463 = vector.extract_strided_slice %448 {offsets = [0, 384], sizes = [8, 128], strides = [1, 1]} : vector<8x512xf32> to vector<8x128xf32>
    %464 = arith.negf %463 : vector<8x128xf32>
    %465 = math.exp %464 : vector<8x128xf32>
    %cst_122 = arith.constant 1.000000e+00 : f32
    %466 = vector.broadcast %cst_122 : f32 to vector<8x128xf32>
    %467 = arith.addf %466, %465 : vector<8x128xf32>
    %468 = arith.divf %466, %467 : vector<8x128xf32>
    %469 = arith.mulf %460, %442 : vector<8x128xf32>
    %470 = arith.mulf %454, %462 : vector<8x128xf32>
    %471 = arith.addf %469, %470 : vector<8x128xf32>
    %472 = math.tanh %471 : vector<8x128xf32>
    %473 = arith.mulf %468, %472 : vector<8x128xf32>
    %c128 = arith.constant 128 : index
    %c0_123 = arith.constant 0 : index
    %474 = vector.load %arg6[%c128, %c0_123] : memref<256x512xf32, #tpu.memory_space<vmem>>, vector<8x512xf32>
    %c0_124 = arith.constant 0 : index
    %c0_125 = arith.constant 0 : index
    %475 = vector.load %arg3[%c0_124, %c0_125] : memref<128x512xf32, #tpu.memory_space<vmem>>, vector<128x512xf32>
    %cst_126 = arith.constant dense<0.000000e+00> : vector<8x512xf32>
    %476 = tpu.matmul %473, %475, %cst_126 {dimension_numbers = #tpu.dot_dimension_numbers<[1], [0], [0], [1], [0, 0, 1, 1], [], []>} : vector<8x128xf32>, vector<128x512xf32>, vector<8x512xf32> -> vector<8x512xf32>
    %477 = arith.addf %474, %476 : vector<8x512xf32>
    %478 = vector.extract_strided_slice %477 {offsets = [0, 0], sizes = [8, 128], strides = [1, 1]} : vector<8x512xf32> to vector<8x128xf32>
    %479 = arith.negf %478 : vector<8x128xf32>
    %480 = math.exp %479 : vector<8x128xf32>
    %cst_127 = arith.constant 1.000000e+00 : f32
    %481 = vector.broadcast %cst_127 : f32 to vector<8x128xf32>
    %482 = arith.addf %481, %480 : vector<8x128xf32>
    %483 = arith.divf %481, %482 : vector<8x128xf32>
    %484 = vector.extract_strided_slice %477 {offsets = [0, 128], sizes = [8, 128], strides = [1, 1]} : vector<8x512xf32> to vector<8x128xf32>
    %485 = arith.negf %484 : vector<8x128xf32>
    %486 = math.exp %485 : vector<8x128xf32>
    %cst_128 = arith.constant 1.000000e+00 : f32
    %487 = vector.broadcast %cst_128 : f32 to vector<8x128xf32>
    %488 = arith.addf %487, %486 : vector<8x128xf32>
    %489 = arith.divf %487, %488 : vector<8x128xf32>
    %490 = vector.extract_strided_slice %477 {offsets = [0, 256], sizes = [8, 128], strides = [1, 1]} : vector<8x512xf32> to vector<8x128xf32>
    %491 = math.tanh %490 : vector<8x128xf32>
    %492 = vector.extract_strided_slice %477 {offsets = [0, 384], sizes = [8, 128], strides = [1, 1]} : vector<8x512xf32> to vector<8x128xf32>
    %493 = arith.negf %492 : vector<8x128xf32>
    %494 = math.exp %493 : vector<8x128xf32>
    %cst_129 = arith.constant 1.000000e+00 : f32
    %495 = vector.broadcast %cst_129 : f32 to vector<8x128xf32>
    %496 = arith.addf %495, %494 : vector<8x128xf32>
    %497 = arith.divf %495, %496 : vector<8x128xf32>
    %498 = arith.mulf %489, %471 : vector<8x128xf32>
    %499 = arith.mulf %483, %491 : vector<8x128xf32>
    %500 = arith.addf %498, %499 : vector<8x128xf32>
    %501 = math.tanh %500 : vector<8x128xf32>
    %502 = arith.mulf %497, %501 : vector<8x128xf32>
    %c136 = arith.constant 136 : index
    %c0_130 = arith.constant 0 : index
    %503 = vector.load %arg6[%c136, %c0_130] : memref<256x512xf32, #tpu.memory_space<vmem>>, vector<8x512xf32>
    %c0_131 = arith.constant 0 : index
    %c0_132 = arith.constant 0 : index
    %504 = vector.load %arg3[%c0_131, %c0_132] : memref<128x512xf32, #tpu.memory_space<vmem>>, vector<128x512xf32>
    %cst_133 = arith.constant dense<0.000000e+00> : vector<8x512xf32>
    %505 = tpu.matmul %502, %504, %cst_133 {dimension_numbers = #tpu.dot_dimension_numbers<[1], [0], [0], [1], [0, 0, 1, 1], [], []>} : vector<8x128xf32>, vector<128x512xf32>, vector<8x512xf32> -> vector<8x512xf32>
    %506 = arith.addf %503, %505 : vector<8x512xf32>
    %507 = vector.extract_strided_slice %506 {offsets = [0, 0], sizes = [8, 128], strides = [1, 1]} : vector<8x512xf32> to vector<8x128xf32>
    %508 = arith.negf %507 : vector<8x128xf32>
    %509 = math.exp %508 : vector<8x128xf32>
    %cst_134 = arith.constant 1.000000e+00 : f32
    %510 = vector.broadcast %cst_134 : f32 to vector<8x128xf32>
    %511 = arith.addf %510, %509 : vector<8x128xf32>
    %512 = arith.divf %510, %511 : vector<8x128xf32>
    %513 = vector.extract_strided_slice %506 {offsets = [0, 128], sizes = [8, 128], strides = [1, 1]} : vector<8x512xf32> to vector<8x128xf32>
    %514 = arith.negf %513 : vector<8x128xf32>
    %515 = math.exp %514 : vector<8x128xf32>
    %cst_135 = arith.constant 1.000000e+00 : f32
    %516 = vector.broadcast %cst_135 : f32 to vector<8x128xf32>
    %517 = arith.addf %516, %515 : vector<8x128xf32>
    %518 = arith.divf %516, %517 : vector<8x128xf32>
    %519 = vector.extract_strided_slice %506 {offsets = [0, 256], sizes = [8, 128], strides = [1, 1]} : vector<8x512xf32> to vector<8x128xf32>
    %520 = math.tanh %519 : vector<8x128xf32>
    %521 = vector.extract_strided_slice %506 {offsets = [0, 384], sizes = [8, 128], strides = [1, 1]} : vector<8x512xf32> to vector<8x128xf32>
    %522 = arith.negf %521 : vector<8x128xf32>
    %523 = math.exp %522 : vector<8x128xf32>
    %cst_136 = arith.constant 1.000000e+00 : f32
    %524 = vector.broadcast %cst_136 : f32 to vector<8x128xf32>
    %525 = arith.addf %524, %523 : vector<8x128xf32>
    %526 = arith.divf %524, %525 : vector<8x128xf32>
    %527 = arith.mulf %518, %500 : vector<8x128xf32>
    %528 = arith.mulf %512, %520 : vector<8x128xf32>
    %529 = arith.addf %527, %528 : vector<8x128xf32>
    %530 = math.tanh %529 : vector<8x128xf32>
    %531 = arith.mulf %526, %530 : vector<8x128xf32>
    %c144 = arith.constant 144 : index
    %c0_137 = arith.constant 0 : index
    %532 = vector.load %arg6[%c144, %c0_137] : memref<256x512xf32, #tpu.memory_space<vmem>>, vector<8x512xf32>
    %c0_138 = arith.constant 0 : index
    %c0_139 = arith.constant 0 : index
    %533 = vector.load %arg3[%c0_138, %c0_139] : memref<128x512xf32, #tpu.memory_space<vmem>>, vector<128x512xf32>
    %cst_140 = arith.constant dense<0.000000e+00> : vector<8x512xf32>
    %534 = tpu.matmul %531, %533, %cst_140 {dimension_numbers = #tpu.dot_dimension_numbers<[1], [0], [0], [1], [0, 0, 1, 1], [], []>} : vector<8x128xf32>, vector<128x512xf32>, vector<8x512xf32> -> vector<8x512xf32>
    %535 = arith.addf %532, %534 : vector<8x512xf32>
    %536 = vector.extract_strided_slice %535 {offsets = [0, 0], sizes = [8, 128], strides = [1, 1]} : vector<8x512xf32> to vector<8x128xf32>
    %537 = arith.negf %536 : vector<8x128xf32>
    %538 = math.exp %537 : vector<8x128xf32>
    %cst_141 = arith.constant 1.000000e+00 : f32
    %539 = vector.broadcast %cst_141 : f32 to vector<8x128xf32>
    %540 = arith.addf %539, %538 : vector<8x128xf32>
    %541 = arith.divf %539, %540 : vector<8x128xf32>
    %542 = vector.extract_strided_slice %535 {offsets = [0, 128], sizes = [8, 128], strides = [1, 1]} : vector<8x512xf32> to vector<8x128xf32>
    %543 = arith.negf %542 : vector<8x128xf32>
    %544 = math.exp %543 : vector<8x128xf32>
    %cst_142 = arith.constant 1.000000e+00 : f32
    %545 = vector.broadcast %cst_142 : f32 to vector<8x128xf32>
    %546 = arith.addf %545, %544 : vector<8x128xf32>
    %547 = arith.divf %545, %546 : vector<8x128xf32>
    %548 = vector.extract_strided_slice %535 {offsets = [0, 256], sizes = [8, 128], strides = [1, 1]} : vector<8x512xf32> to vector<8x128xf32>
    %549 = math.tanh %548 : vector<8x128xf32>
    %550 = vector.extract_strided_slice %535 {offsets = [0, 384], sizes = [8, 128], strides = [1, 1]} : vector<8x512xf32> to vector<8x128xf32>
    %551 = arith.negf %550 : vector<8x128xf32>
    %552 = math.exp %551 : vector<8x128xf32>
    %cst_143 = arith.constant 1.000000e+00 : f32
    %553 = vector.broadcast %cst_143 : f32 to vector<8x128xf32>
    %554 = arith.addf %553, %552 : vector<8x128xf32>
    %555 = arith.divf %553, %554 : vector<8x128xf32>
    %556 = arith.mulf %547, %529 : vector<8x128xf32>
    %557 = arith.mulf %541, %549 : vector<8x128xf32>
    %558 = arith.addf %556, %557 : vector<8x128xf32>
    %559 = math.tanh %558 : vector<8x128xf32>
    %560 = arith.mulf %555, %559 : vector<8x128xf32>
    %c152 = arith.constant 152 : index
    %c0_144 = arith.constant 0 : index
    %561 = vector.load %arg6[%c152, %c0_144] : memref<256x512xf32, #tpu.memory_space<vmem>>, vector<8x512xf32>
    %c0_145 = arith.constant 0 : index
    %c0_146 = arith.constant 0 : index
    %562 = vector.load %arg3[%c0_145, %c0_146] : memref<128x512xf32, #tpu.memory_space<vmem>>, vector<128x512xf32>
    %cst_147 = arith.constant dense<0.000000e+00> : vector<8x512xf32>
    %563 = tpu.matmul %560, %562, %cst_147 {dimension_numbers = #tpu.dot_dimension_numbers<[1], [0], [0], [1], [0, 0, 1, 1], [], []>} : vector<8x128xf32>, vector<128x512xf32>, vector<8x512xf32> -> vector<8x512xf32>
    %564 = arith.addf %561, %563 : vector<8x512xf32>
    %565 = vector.extract_strided_slice %564 {offsets = [0, 0], sizes = [8, 128], strides = [1, 1]} : vector<8x512xf32> to vector<8x128xf32>
    %566 = arith.negf %565 : vector<8x128xf32>
    %567 = math.exp %566 : vector<8x128xf32>
    %cst_148 = arith.constant 1.000000e+00 : f32
    %568 = vector.broadcast %cst_148 : f32 to vector<8x128xf32>
    %569 = arith.addf %568, %567 : vector<8x128xf32>
    %570 = arith.divf %568, %569 : vector<8x128xf32>
    %571 = vector.extract_strided_slice %564 {offsets = [0, 128], sizes = [8, 128], strides = [1, 1]} : vector<8x512xf32> to vector<8x128xf32>
    %572 = arith.negf %571 : vector<8x128xf32>
    %573 = math.exp %572 : vector<8x128xf32>
    %cst_149 = arith.constant 1.000000e+00 : f32
    %574 = vector.broadcast %cst_149 : f32 to vector<8x128xf32>
    %575 = arith.addf %574, %573 : vector<8x128xf32>
    %576 = arith.divf %574, %575 : vector<8x128xf32>
    %577 = vector.extract_strided_slice %564 {offsets = [0, 256], sizes = [8, 128], strides = [1, 1]} : vector<8x512xf32> to vector<8x128xf32>
    %578 = math.tanh %577 : vector<8x128xf32>
    %579 = vector.extract_strided_slice %564 {offsets = [0, 384], sizes = [8, 128], strides = [1, 1]} : vector<8x512xf32> to vector<8x128xf32>
    %580 = arith.negf %579 : vector<8x128xf32>
    %581 = math.exp %580 : vector<8x128xf32>
    %cst_150 = arith.constant 1.000000e+00 : f32
    %582 = vector.broadcast %cst_150 : f32 to vector<8x128xf32>
    %583 = arith.addf %582, %581 : vector<8x128xf32>
    %584 = arith.divf %582, %583 : vector<8x128xf32>
    %585 = arith.mulf %576, %558 : vector<8x128xf32>
    %586 = arith.mulf %570, %578 : vector<8x128xf32>
    %587 = arith.addf %585, %586 : vector<8x128xf32>
    %588 = math.tanh %587 : vector<8x128xf32>
    %589 = arith.mulf %584, %588 : vector<8x128xf32>
    %c160 = arith.constant 160 : index
    %c0_151 = arith.constant 0 : index
    %590 = vector.load %arg6[%c160, %c0_151] : memref<256x512xf32, #tpu.memory_space<vmem>>, vector<8x512xf32>
    %c0_152 = arith.constant 0 : index
    %c0_153 = arith.constant 0 : index
    %591 = vector.load %arg3[%c0_152, %c0_153] : memref<128x512xf32, #tpu.memory_space<vmem>>, vector<128x512xf32>
    %cst_154 = arith.constant dense<0.000000e+00> : vector<8x512xf32>
    %592 = tpu.matmul %589, %591, %cst_154 {dimension_numbers = #tpu.dot_dimension_numbers<[1], [0], [0], [1], [0, 0, 1, 1], [], []>} : vector<8x128xf32>, vector<128x512xf32>, vector<8x512xf32> -> vector<8x512xf32>
    %593 = arith.addf %590, %592 : vector<8x512xf32>
    %594 = vector.extract_strided_slice %593 {offsets = [0, 0], sizes = [8, 128], strides = [1, 1]} : vector<8x512xf32> to vector<8x128xf32>
    %595 = arith.negf %594 : vector<8x128xf32>
    %596 = math.exp %595 : vector<8x128xf32>
    %cst_155 = arith.constant 1.000000e+00 : f32
    %597 = vector.broadcast %cst_155 : f32 to vector<8x128xf32>
    %598 = arith.addf %597, %596 : vector<8x128xf32>
    %599 = arith.divf %597, %598 : vector<8x128xf32>
    %600 = vector.extract_strided_slice %593 {offsets = [0, 128], sizes = [8, 128], strides = [1, 1]} : vector<8x512xf32> to vector<8x128xf32>
    %601 = arith.negf %600 : vector<8x128xf32>
    %602 = math.exp %601 : vector<8x128xf32>
    %cst_156 = arith.constant 1.000000e+00 : f32
    %603 = vector.broadcast %cst_156 : f32 to vector<8x128xf32>
    %604 = arith.addf %603, %602 : vector<8x128xf32>
    %605 = arith.divf %603, %604 : vector<8x128xf32>
    %606 = vector.extract_strided_slice %593 {offsets = [0, 256], sizes = [8, 128], strides = [1, 1]} : vector<8x512xf32> to vector<8x128xf32>
    %607 = math.tanh %606 : vector<8x128xf32>
    %608 = vector.extract_strided_slice %593 {offsets = [0, 384], sizes = [8, 128], strides = [1, 1]} : vector<8x512xf32> to vector<8x128xf32>
    %609 = arith.negf %608 : vector<8x128xf32>
    %610 = math.exp %609 : vector<8x128xf32>
    %cst_157 = arith.constant 1.000000e+00 : f32
    %611 = vector.broadcast %cst_157 : f32 to vector<8x128xf32>
    %612 = arith.addf %611, %610 : vector<8x128xf32>
    %613 = arith.divf %611, %612 : vector<8x128xf32>
    %614 = arith.mulf %605, %587 : vector<8x128xf32>
    %615 = arith.mulf %599, %607 : vector<8x128xf32>
    %616 = arith.addf %614, %615 : vector<8x128xf32>
    %617 = math.tanh %616 : vector<8x128xf32>
    %618 = arith.mulf %613, %617 : vector<8x128xf32>
    %c168 = arith.constant 168 : index
    %c0_158 = arith.constant 0 : index
    %619 = vector.load %arg6[%c168, %c0_158] : memref<256x512xf32, #tpu.memory_space<vmem>>, vector<8x512xf32>
    %c0_159 = arith.constant 0 : index
    %c0_160 = arith.constant 0 : index
    %620 = vector.load %arg3[%c0_159, %c0_160] : memref<128x512xf32, #tpu.memory_space<vmem>>, vector<128x512xf32>
    %cst_161 = arith.constant dense<0.000000e+00> : vector<8x512xf32>
    %621 = tpu.matmul %618, %620, %cst_161 {dimension_numbers = #tpu.dot_dimension_numbers<[1], [0], [0], [1], [0, 0, 1, 1], [], []>} : vector<8x128xf32>, vector<128x512xf32>, vector<8x512xf32> -> vector<8x512xf32>
    %622 = arith.addf %619, %621 : vector<8x512xf32>
    %623 = vector.extract_strided_slice %622 {offsets = [0, 0], sizes = [8, 128], strides = [1, 1]} : vector<8x512xf32> to vector<8x128xf32>
    %624 = arith.negf %623 : vector<8x128xf32>
    %625 = math.exp %624 : vector<8x128xf32>
    %cst_162 = arith.constant 1.000000e+00 : f32
    %626 = vector.broadcast %cst_162 : f32 to vector<8x128xf32>
    %627 = arith.addf %626, %625 : vector<8x128xf32>
    %628 = arith.divf %626, %627 : vector<8x128xf32>
    %629 = vector.extract_strided_slice %622 {offsets = [0, 128], sizes = [8, 128], strides = [1, 1]} : vector<8x512xf32> to vector<8x128xf32>
    %630 = arith.negf %629 : vector<8x128xf32>
    %631 = math.exp %630 : vector<8x128xf32>
    %cst_163 = arith.constant 1.000000e+00 : f32
    %632 = vector.broadcast %cst_163 : f32 to vector<8x128xf32>
    %633 = arith.addf %632, %631 : vector<8x128xf32>
    %634 = arith.divf %632, %633 : vector<8x128xf32>
    %635 = vector.extract_strided_slice %622 {offsets = [0, 256], sizes = [8, 128], strides = [1, 1]} : vector<8x512xf32> to vector<8x128xf32>
    %636 = math.tanh %635 : vector<8x128xf32>
    %637 = vector.extract_strided_slice %622 {offsets = [0, 384], sizes = [8, 128], strides = [1, 1]} : vector<8x512xf32> to vector<8x128xf32>
    %638 = arith.negf %637 : vector<8x128xf32>
    %639 = math.exp %638 : vector<8x128xf32>
    %cst_164 = arith.constant 1.000000e+00 : f32
    %640 = vector.broadcast %cst_164 : f32 to vector<8x128xf32>
    %641 = arith.addf %640, %639 : vector<8x128xf32>
    %642 = arith.divf %640, %641 : vector<8x128xf32>
    %643 = arith.mulf %634, %616 : vector<8x128xf32>
    %644 = arith.mulf %628, %636 : vector<8x128xf32>
    %645 = arith.addf %643, %644 : vector<8x128xf32>
    %646 = math.tanh %645 : vector<8x128xf32>
    %647 = arith.mulf %642, %646 : vector<8x128xf32>
    %c176 = arith.constant 176 : index
    %c0_165 = arith.constant 0 : index
    %648 = vector.load %arg6[%c176, %c0_165] : memref<256x512xf32, #tpu.memory_space<vmem>>, vector<8x512xf32>
    %c0_166 = arith.constant 0 : index
    %c0_167 = arith.constant 0 : index
    %649 = vector.load %arg3[%c0_166, %c0_167] : memref<128x512xf32, #tpu.memory_space<vmem>>, vector<128x512xf32>
    %cst_168 = arith.constant dense<0.000000e+00> : vector<8x512xf32>
    %650 = tpu.matmul %647, %649, %cst_168 {dimension_numbers = #tpu.dot_dimension_numbers<[1], [0], [0], [1], [0, 0, 1, 1], [], []>} : vector<8x128xf32>, vector<128x512xf32>, vector<8x512xf32> -> vector<8x512xf32>
    %651 = arith.addf %648, %650 : vector<8x512xf32>
    %652 = vector.extract_strided_slice %651 {offsets = [0, 0], sizes = [8, 128], strides = [1, 1]} : vector<8x512xf32> to vector<8x128xf32>
    %653 = arith.negf %652 : vector<8x128xf32>
    %654 = math.exp %653 : vector<8x128xf32>
    %cst_169 = arith.constant 1.000000e+00 : f32
    %655 = vector.broadcast %cst_169 : f32 to vector<8x128xf32>
    %656 = arith.addf %655, %654 : vector<8x128xf32>
    %657 = arith.divf %655, %656 : vector<8x128xf32>
    %658 = vector.extract_strided_slice %651 {offsets = [0, 128], sizes = [8, 128], strides = [1, 1]} : vector<8x512xf32> to vector<8x128xf32>
    %659 = arith.negf %658 : vector<8x128xf32>
    %660 = math.exp %659 : vector<8x128xf32>
    %cst_170 = arith.constant 1.000000e+00 : f32
    %661 = vector.broadcast %cst_170 : f32 to vector<8x128xf32>
    %662 = arith.addf %661, %660 : vector<8x128xf32>
    %663 = arith.divf %661, %662 : vector<8x128xf32>
    %664 = vector.extract_strided_slice %651 {offsets = [0, 256], sizes = [8, 128], strides = [1, 1]} : vector<8x512xf32> to vector<8x128xf32>
    %665 = math.tanh %664 : vector<8x128xf32>
    %666 = vector.extract_strided_slice %651 {offsets = [0, 384], sizes = [8, 128], strides = [1, 1]} : vector<8x512xf32> to vector<8x128xf32>
    %667 = arith.negf %666 : vector<8x128xf32>
    %668 = math.exp %667 : vector<8x128xf32>
    %cst_171 = arith.constant 1.000000e+00 : f32
    %669 = vector.broadcast %cst_171 : f32 to vector<8x128xf32>
    %670 = arith.addf %669, %668 : vector<8x128xf32>
    %671 = arith.divf %669, %670 : vector<8x128xf32>
    %672 = arith.mulf %663, %645 : vector<8x128xf32>
    %673 = arith.mulf %657, %665 : vector<8x128xf32>
    %674 = arith.addf %672, %673 : vector<8x128xf32>
    %675 = math.tanh %674 : vector<8x128xf32>
    %676 = arith.mulf %671, %675 : vector<8x128xf32>
    %c184 = arith.constant 184 : index
    %c0_172 = arith.constant 0 : index
    %677 = vector.load %arg6[%c184, %c0_172] : memref<256x512xf32, #tpu.memory_space<vmem>>, vector<8x512xf32>
    %c0_173 = arith.constant 0 : index
    %c0_174 = arith.constant 0 : index
    %678 = vector.load %arg3[%c0_173, %c0_174] : memref<128x512xf32, #tpu.memory_space<vmem>>, vector<128x512xf32>
    %cst_175 = arith.constant dense<0.000000e+00> : vector<8x512xf32>
    %679 = tpu.matmul %676, %678, %cst_175 {dimension_numbers = #tpu.dot_dimension_numbers<[1], [0], [0], [1], [0, 0, 1, 1], [], []>} : vector<8x128xf32>, vector<128x512xf32>, vector<8x512xf32> -> vector<8x512xf32>
    %680 = arith.addf %677, %679 : vector<8x512xf32>
    %681 = vector.extract_strided_slice %680 {offsets = [0, 0], sizes = [8, 128], strides = [1, 1]} : vector<8x512xf32> to vector<8x128xf32>
    %682 = arith.negf %681 : vector<8x128xf32>
    %683 = math.exp %682 : vector<8x128xf32>
    %cst_176 = arith.constant 1.000000e+00 : f32
    %684 = vector.broadcast %cst_176 : f32 to vector<8x128xf32>
    %685 = arith.addf %684, %683 : vector<8x128xf32>
    %686 = arith.divf %684, %685 : vector<8x128xf32>
    %687 = vector.extract_strided_slice %680 {offsets = [0, 128], sizes = [8, 128], strides = [1, 1]} : vector<8x512xf32> to vector<8x128xf32>
    %688 = arith.negf %687 : vector<8x128xf32>
    %689 = math.exp %688 : vector<8x128xf32>
    %cst_177 = arith.constant 1.000000e+00 : f32
    %690 = vector.broadcast %cst_177 : f32 to vector<8x128xf32>
    %691 = arith.addf %690, %689 : vector<8x128xf32>
    %692 = arith.divf %690, %691 : vector<8x128xf32>
    %693 = vector.extract_strided_slice %680 {offsets = [0, 256], sizes = [8, 128], strides = [1, 1]} : vector<8x512xf32> to vector<8x128xf32>
    %694 = math.tanh %693 : vector<8x128xf32>
    %695 = vector.extract_strided_slice %680 {offsets = [0, 384], sizes = [8, 128], strides = [1, 1]} : vector<8x512xf32> to vector<8x128xf32>
    %696 = arith.negf %695 : vector<8x128xf32>
    %697 = math.exp %696 : vector<8x128xf32>
    %cst_178 = arith.constant 1.000000e+00 : f32
    %698 = vector.broadcast %cst_178 : f32 to vector<8x128xf32>
    %699 = arith.addf %698, %697 : vector<8x128xf32>
    %700 = arith.divf %698, %699 : vector<8x128xf32>
    %701 = arith.mulf %692, %674 : vector<8x128xf32>
    %702 = arith.mulf %686, %694 : vector<8x128xf32>
    %703 = arith.addf %701, %702 : vector<8x128xf32>
    %704 = math.tanh %703 : vector<8x128xf32>
    %705 = arith.mulf %700, %704 : vector<8x128xf32>
    %c192 = arith.constant 192 : index
    %c0_179 = arith.constant 0 : index
    %706 = vector.load %arg6[%c192, %c0_179] : memref<256x512xf32, #tpu.memory_space<vmem>>, vector<8x512xf32>
    %c0_180 = arith.constant 0 : index
    %c0_181 = arith.constant 0 : index
    %707 = vector.load %arg3[%c0_180, %c0_181] : memref<128x512xf32, #tpu.memory_space<vmem>>, vector<128x512xf32>
    %cst_182 = arith.constant dense<0.000000e+00> : vector<8x512xf32>
    %708 = tpu.matmul %705, %707, %cst_182 {dimension_numbers = #tpu.dot_dimension_numbers<[1], [0], [0], [1], [0, 0, 1, 1], [], []>} : vector<8x128xf32>, vector<128x512xf32>, vector<8x512xf32> -> vector<8x512xf32>
    %709 = arith.addf %706, %708 : vector<8x512xf32>
    %710 = vector.extract_strided_slice %709 {offsets = [0, 0], sizes = [8, 128], strides = [1, 1]} : vector<8x512xf32> to vector<8x128xf32>
    %711 = arith.negf %710 : vector<8x128xf32>
    %712 = math.exp %711 : vector<8x128xf32>
    %cst_183 = arith.constant 1.000000e+00 : f32
    %713 = vector.broadcast %cst_183 : f32 to vector<8x128xf32>
    %714 = arith.addf %713, %712 : vector<8x128xf32>
    %715 = arith.divf %713, %714 : vector<8x128xf32>
    %716 = vector.extract_strided_slice %709 {offsets = [0, 128], sizes = [8, 128], strides = [1, 1]} : vector<8x512xf32> to vector<8x128xf32>
    %717 = arith.negf %716 : vector<8x128xf32>
    %718 = math.exp %717 : vector<8x128xf32>
    %cst_184 = arith.constant 1.000000e+00 : f32
    %719 = vector.broadcast %cst_184 : f32 to vector<8x128xf32>
    %720 = arith.addf %719, %718 : vector<8x128xf32>
    %721 = arith.divf %719, %720 : vector<8x128xf32>
    %722 = vector.extract_strided_slice %709 {offsets = [0, 256], sizes = [8, 128], strides = [1, 1]} : vector<8x512xf32> to vector<8x128xf32>
    %723 = math.tanh %722 : vector<8x128xf32>
    %724 = vector.extract_strided_slice %709 {offsets = [0, 384], sizes = [8, 128], strides = [1, 1]} : vector<8x512xf32> to vector<8x128xf32>
    %725 = arith.negf %724 : vector<8x128xf32>
    %726 = math.exp %725 : vector<8x128xf32>
    %cst_185 = arith.constant 1.000000e+00 : f32
    %727 = vector.broadcast %cst_185 : f32 to vector<8x128xf32>
    %728 = arith.addf %727, %726 : vector<8x128xf32>
    %729 = arith.divf %727, %728 : vector<8x128xf32>
    %730 = arith.mulf %721, %703 : vector<8x128xf32>
    %731 = arith.mulf %715, %723 : vector<8x128xf32>
    %732 = arith.addf %730, %731 : vector<8x128xf32>
    %733 = math.tanh %732 : vector<8x128xf32>
    %734 = arith.mulf %729, %733 : vector<8x128xf32>
    %c200 = arith.constant 200 : index
    %c0_186 = arith.constant 0 : index
    %735 = vector.load %arg6[%c200, %c0_186] : memref<256x512xf32, #tpu.memory_space<vmem>>, vector<8x512xf32>
    %c0_187 = arith.constant 0 : index
    %c0_188 = arith.constant 0 : index
    %736 = vector.load %arg3[%c0_187, %c0_188] : memref<128x512xf32, #tpu.memory_space<vmem>>, vector<128x512xf32>
    %cst_189 = arith.constant dense<0.000000e+00> : vector<8x512xf32>
    %737 = tpu.matmul %734, %736, %cst_189 {dimension_numbers = #tpu.dot_dimension_numbers<[1], [0], [0], [1], [0, 0, 1, 1], [], []>} : vector<8x128xf32>, vector<128x512xf32>, vector<8x512xf32> -> vector<8x512xf32>
    %738 = arith.addf %735, %737 : vector<8x512xf32>
    %739 = vector.extract_strided_slice %738 {offsets = [0, 0], sizes = [8, 128], strides = [1, 1]} : vector<8x512xf32> to vector<8x128xf32>
    %740 = arith.negf %739 : vector<8x128xf32>
    %741 = math.exp %740 : vector<8x128xf32>
    %cst_190 = arith.constant 1.000000e+00 : f32
    %742 = vector.broadcast %cst_190 : f32 to vector<8x128xf32>
    %743 = arith.addf %742, %741 : vector<8x128xf32>
    %744 = arith.divf %742, %743 : vector<8x128xf32>
    %745 = vector.extract_strided_slice %738 {offsets = [0, 128], sizes = [8, 128], strides = [1, 1]} : vector<8x512xf32> to vector<8x128xf32>
    %746 = arith.negf %745 : vector<8x128xf32>
    %747 = math.exp %746 : vector<8x128xf32>
    %cst_191 = arith.constant 1.000000e+00 : f32
    %748 = vector.broadcast %cst_191 : f32 to vector<8x128xf32>
    %749 = arith.addf %748, %747 : vector<8x128xf32>
    %750 = arith.divf %748, %749 : vector<8x128xf32>
    %751 = vector.extract_strided_slice %738 {offsets = [0, 256], sizes = [8, 128], strides = [1, 1]} : vector<8x512xf32> to vector<8x128xf32>
    %752 = math.tanh %751 : vector<8x128xf32>
    %753 = vector.extract_strided_slice %738 {offsets = [0, 384], sizes = [8, 128], strides = [1, 1]} : vector<8x512xf32> to vector<8x128xf32>
    %754 = arith.negf %753 : vector<8x128xf32>
    %755 = math.exp %754 : vector<8x128xf32>
    %cst_192 = arith.constant 1.000000e+00 : f32
    %756 = vector.broadcast %cst_192 : f32 to vector<8x128xf32>
    %757 = arith.addf %756, %755 : vector<8x128xf32>
    %758 = arith.divf %756, %757 : vector<8x128xf32>
    %759 = arith.mulf %750, %732 : vector<8x128xf32>
    %760 = arith.mulf %744, %752 : vector<8x128xf32>
    %761 = arith.addf %759, %760 : vector<8x128xf32>
    %762 = math.tanh %761 : vector<8x128xf32>
    %763 = arith.mulf %758, %762 : vector<8x128xf32>
    %c208 = arith.constant 208 : index
    %c0_193 = arith.constant 0 : index
    %764 = vector.load %arg6[%c208, %c0_193] : memref<256x512xf32, #tpu.memory_space<vmem>>, vector<8x512xf32>
    %c0_194 = arith.constant 0 : index
    %c0_195 = arith.constant 0 : index
    %765 = vector.load %arg3[%c0_194, %c0_195] : memref<128x512xf32, #tpu.memory_space<vmem>>, vector<128x512xf32>
    %cst_196 = arith.constant dense<0.000000e+00> : vector<8x512xf32>
    %766 = tpu.matmul %763, %765, %cst_196 {dimension_numbers = #tpu.dot_dimension_numbers<[1], [0], [0], [1], [0, 0, 1, 1], [], []>} : vector<8x128xf32>, vector<128x512xf32>, vector<8x512xf32> -> vector<8x512xf32>
    %767 = arith.addf %764, %766 : vector<8x512xf32>
    %768 = vector.extract_strided_slice %767 {offsets = [0, 0], sizes = [8, 128], strides = [1, 1]} : vector<8x512xf32> to vector<8x128xf32>
    %769 = arith.negf %768 : vector<8x128xf32>
    %770 = math.exp %769 : vector<8x128xf32>
    %cst_197 = arith.constant 1.000000e+00 : f32
    %771 = vector.broadcast %cst_197 : f32 to vector<8x128xf32>
    %772 = arith.addf %771, %770 : vector<8x128xf32>
    %773 = arith.divf %771, %772 : vector<8x128xf32>
    %774 = vector.extract_strided_slice %767 {offsets = [0, 128], sizes = [8, 128], strides = [1, 1]} : vector<8x512xf32> to vector<8x128xf32>
    %775 = arith.negf %774 : vector<8x128xf32>
    %776 = math.exp %775 : vector<8x128xf32>
    %cst_198 = arith.constant 1.000000e+00 : f32
    %777 = vector.broadcast %cst_198 : f32 to vector<8x128xf32>
    %778 = arith.addf %777, %776 : vector<8x128xf32>
    %779 = arith.divf %777, %778 : vector<8x128xf32>
    %780 = vector.extract_strided_slice %767 {offsets = [0, 256], sizes = [8, 128], strides = [1, 1]} : vector<8x512xf32> to vector<8x128xf32>
    %781 = math.tanh %780 : vector<8x128xf32>
    %782 = vector.extract_strided_slice %767 {offsets = [0, 384], sizes = [8, 128], strides = [1, 1]} : vector<8x512xf32> to vector<8x128xf32>
    %783 = arith.negf %782 : vector<8x128xf32>
    %784 = math.exp %783 : vector<8x128xf32>
    %cst_199 = arith.constant 1.000000e+00 : f32
    %785 = vector.broadcast %cst_199 : f32 to vector<8x128xf32>
    %786 = arith.addf %785, %784 : vector<8x128xf32>
    %787 = arith.divf %785, %786 : vector<8x128xf32>
    %788 = arith.mulf %779, %761 : vector<8x128xf32>
    %789 = arith.mulf %773, %781 : vector<8x128xf32>
    %790 = arith.addf %788, %789 : vector<8x128xf32>
    %791 = math.tanh %790 : vector<8x128xf32>
    %792 = arith.mulf %787, %791 : vector<8x128xf32>
    %c216 = arith.constant 216 : index
    %c0_200 = arith.constant 0 : index
    %793 = vector.load %arg6[%c216, %c0_200] : memref<256x512xf32, #tpu.memory_space<vmem>>, vector<8x512xf32>
    %c0_201 = arith.constant 0 : index
    %c0_202 = arith.constant 0 : index
    %794 = vector.load %arg3[%c0_201, %c0_202] : memref<128x512xf32, #tpu.memory_space<vmem>>, vector<128x512xf32>
    %cst_203 = arith.constant dense<0.000000e+00> : vector<8x512xf32>
    %795 = tpu.matmul %792, %794, %cst_203 {dimension_numbers = #tpu.dot_dimension_numbers<[1], [0], [0], [1], [0, 0, 1, 1], [], []>} : vector<8x128xf32>, vector<128x512xf32>, vector<8x512xf32> -> vector<8x512xf32>
    %796 = arith.addf %793, %795 : vector<8x512xf32>
    %797 = vector.extract_strided_slice %796 {offsets = [0, 0], sizes = [8, 128], strides = [1, 1]} : vector<8x512xf32> to vector<8x128xf32>
    %798 = arith.negf %797 : vector<8x128xf32>
    %799 = math.exp %798 : vector<8x128xf32>
    %cst_204 = arith.constant 1.000000e+00 : f32
    %800 = vector.broadcast %cst_204 : f32 to vector<8x128xf32>
    %801 = arith.addf %800, %799 : vector<8x128xf32>
    %802 = arith.divf %800, %801 : vector<8x128xf32>
    %803 = vector.extract_strided_slice %796 {offsets = [0, 128], sizes = [8, 128], strides = [1, 1]} : vector<8x512xf32> to vector<8x128xf32>
    %804 = arith.negf %803 : vector<8x128xf32>
    %805 = math.exp %804 : vector<8x128xf32>
    %cst_205 = arith.constant 1.000000e+00 : f32
    %806 = vector.broadcast %cst_205 : f32 to vector<8x128xf32>
    %807 = arith.addf %806, %805 : vector<8x128xf32>
    %808 = arith.divf %806, %807 : vector<8x128xf32>
    %809 = vector.extract_strided_slice %796 {offsets = [0, 256], sizes = [8, 128], strides = [1, 1]} : vector<8x512xf32> to vector<8x128xf32>
    %810 = math.tanh %809 : vector<8x128xf32>
    %811 = vector.extract_strided_slice %796 {offsets = [0, 384], sizes = [8, 128], strides = [1, 1]} : vector<8x512xf32> to vector<8x128xf32>
    %812 = arith.negf %811 : vector<8x128xf32>
    %813 = math.exp %812 : vector<8x128xf32>
    %cst_206 = arith.constant 1.000000e+00 : f32
    %814 = vector.broadcast %cst_206 : f32 to vector<8x128xf32>
    %815 = arith.addf %814, %813 : vector<8x128xf32>
    %816 = arith.divf %814, %815 : vector<8x128xf32>
    %817 = arith.mulf %808, %790 : vector<8x128xf32>
    %818 = arith.mulf %802, %810 : vector<8x128xf32>
    %819 = arith.addf %817, %818 : vector<8x128xf32>
    %820 = math.tanh %819 : vector<8x128xf32>
    %821 = arith.mulf %816, %820 : vector<8x128xf32>
    %c224 = arith.constant 224 : index
    %c0_207 = arith.constant 0 : index
    %822 = vector.load %arg6[%c224, %c0_207] : memref<256x512xf32, #tpu.memory_space<vmem>>, vector<8x512xf32>
    %c0_208 = arith.constant 0 : index
    %c0_209 = arith.constant 0 : index
    %823 = vector.load %arg3[%c0_208, %c0_209] : memref<128x512xf32, #tpu.memory_space<vmem>>, vector<128x512xf32>
    %cst_210 = arith.constant dense<0.000000e+00> : vector<8x512xf32>
    %824 = tpu.matmul %821, %823, %cst_210 {dimension_numbers = #tpu.dot_dimension_numbers<[1], [0], [0], [1], [0, 0, 1, 1], [], []>} : vector<8x128xf32>, vector<128x512xf32>, vector<8x512xf32> -> vector<8x512xf32>
    %825 = arith.addf %822, %824 : vector<8x512xf32>
    %826 = vector.extract_strided_slice %825 {offsets = [0, 0], sizes = [8, 128], strides = [1, 1]} : vector<8x512xf32> to vector<8x128xf32>
    %827 = arith.negf %826 : vector<8x128xf32>
    %828 = math.exp %827 : vector<8x128xf32>
    %cst_211 = arith.constant 1.000000e+00 : f32
    %829 = vector.broadcast %cst_211 : f32 to vector<8x128xf32>
    %830 = arith.addf %829, %828 : vector<8x128xf32>
    %831 = arith.divf %829, %830 : vector<8x128xf32>
    %832 = vector.extract_strided_slice %825 {offsets = [0, 128], sizes = [8, 128], strides = [1, 1]} : vector<8x512xf32> to vector<8x128xf32>
    %833 = arith.negf %832 : vector<8x128xf32>
    %834 = math.exp %833 : vector<8x128xf32>
    %cst_212 = arith.constant 1.000000e+00 : f32
    %835 = vector.broadcast %cst_212 : f32 to vector<8x128xf32>
    %836 = arith.addf %835, %834 : vector<8x128xf32>
    %837 = arith.divf %835, %836 : vector<8x128xf32>
    %838 = vector.extract_strided_slice %825 {offsets = [0, 256], sizes = [8, 128], strides = [1, 1]} : vector<8x512xf32> to vector<8x128xf32>
    %839 = math.tanh %838 : vector<8x128xf32>
    %840 = vector.extract_strided_slice %825 {offsets = [0, 384], sizes = [8, 128], strides = [1, 1]} : vector<8x512xf32> to vector<8x128xf32>
    %841 = arith.negf %840 : vector<8x128xf32>
    %842 = math.exp %841 : vector<8x128xf32>
    %cst_213 = arith.constant 1.000000e+00 : f32
    %843 = vector.broadcast %cst_213 : f32 to vector<8x128xf32>
    %844 = arith.addf %843, %842 : vector<8x128xf32>
    %845 = arith.divf %843, %844 : vector<8x128xf32>
    %846 = arith.mulf %837, %819 : vector<8x128xf32>
    %847 = arith.mulf %831, %839 : vector<8x128xf32>
    %848 = arith.addf %846, %847 : vector<8x128xf32>
    %849 = math.tanh %848 : vector<8x128xf32>
    %850 = arith.mulf %845, %849 : vector<8x128xf32>
    %c232 = arith.constant 232 : index
    %c0_214 = arith.constant 0 : index
    %851 = vector.load %arg6[%c232, %c0_214] : memref<256x512xf32, #tpu.memory_space<vmem>>, vector<8x512xf32>
    %c0_215 = arith.constant 0 : index
    %c0_216 = arith.constant 0 : index
    %852 = vector.load %arg3[%c0_215, %c0_216] : memref<128x512xf32, #tpu.memory_space<vmem>>, vector<128x512xf32>
    %cst_217 = arith.constant dense<0.000000e+00> : vector<8x512xf32>
    %853 = tpu.matmul %850, %852, %cst_217 {dimension_numbers = #tpu.dot_dimension_numbers<[1], [0], [0], [1], [0, 0, 1, 1], [], []>} : vector<8x128xf32>, vector<128x512xf32>, vector<8x512xf32> -> vector<8x512xf32>
    %854 = arith.addf %851, %853 : vector<8x512xf32>
    %855 = vector.extract_strided_slice %854 {offsets = [0, 0], sizes = [8, 128], strides = [1, 1]} : vector<8x512xf32> to vector<8x128xf32>
    %856 = arith.negf %855 : vector<8x128xf32>
    %857 = math.exp %856 : vector<8x128xf32>
    %cst_218 = arith.constant 1.000000e+00 : f32
    %858 = vector.broadcast %cst_218 : f32 to vector<8x128xf32>
    %859 = arith.addf %858, %857 : vector<8x128xf32>
    %860 = arith.divf %858, %859 : vector<8x128xf32>
    %861 = vector.extract_strided_slice %854 {offsets = [0, 128], sizes = [8, 128], strides = [1, 1]} : vector<8x512xf32> to vector<8x128xf32>
    %862 = arith.negf %861 : vector<8x128xf32>
    %863 = math.exp %862 : vector<8x128xf32>
    %cst_219 = arith.constant 1.000000e+00 : f32
    %864 = vector.broadcast %cst_219 : f32 to vector<8x128xf32>
    %865 = arith.addf %864, %863 : vector<8x128xf32>
    %866 = arith.divf %864, %865 : vector<8x128xf32>
    %867 = vector.extract_strided_slice %854 {offsets = [0, 256], sizes = [8, 128], strides = [1, 1]} : vector<8x512xf32> to vector<8x128xf32>
    %868 = math.tanh %867 : vector<8x128xf32>
    %869 = vector.extract_strided_slice %854 {offsets = [0, 384], sizes = [8, 128], strides = [1, 1]} : vector<8x512xf32> to vector<8x128xf32>
    %870 = arith.negf %869 : vector<8x128xf32>
    %871 = math.exp %870 : vector<8x128xf32>
    %cst_220 = arith.constant 1.000000e+00 : f32
    %872 = vector.broadcast %cst_220 : f32 to vector<8x128xf32>
    %873 = arith.addf %872, %871 : vector<8x128xf32>
    %874 = arith.divf %872, %873 : vector<8x128xf32>
    %875 = arith.mulf %866, %848 : vector<8x128xf32>
    %876 = arith.mulf %860, %868 : vector<8x128xf32>
    %877 = arith.addf %875, %876 : vector<8x128xf32>
    %878 = math.tanh %877 : vector<8x128xf32>
    %879 = arith.mulf %874, %878 : vector<8x128xf32>
    %c240 = arith.constant 240 : index
    %c0_221 = arith.constant 0 : index
    %880 = vector.load %arg6[%c240, %c0_221] : memref<256x512xf32, #tpu.memory_space<vmem>>, vector<8x512xf32>
    %c0_222 = arith.constant 0 : index
    %c0_223 = arith.constant 0 : index
    %881 = vector.load %arg3[%c0_222, %c0_223] : memref<128x512xf32, #tpu.memory_space<vmem>>, vector<128x512xf32>
    %cst_224 = arith.constant dense<0.000000e+00> : vector<8x512xf32>
    %882 = tpu.matmul %879, %881, %cst_224 {dimension_numbers = #tpu.dot_dimension_numbers<[1], [0], [0], [1], [0, 0, 1, 1], [], []>} : vector<8x128xf32>, vector<128x512xf32>, vector<8x512xf32> -> vector<8x512xf32>
    %883 = arith.addf %880, %882 : vector<8x512xf32>
    %884 = vector.extract_strided_slice %883 {offsets = [0, 0], sizes = [8, 128], strides = [1, 1]} : vector<8x512xf32> to vector<8x128xf32>
    %885 = arith.negf %884 : vector<8x128xf32>
    %886 = math.exp %885 : vector<8x128xf32>
    %cst_225 = arith.constant 1.000000e+00 : f32
    %887 = vector.broadcast %cst_225 : f32 to vector<8x128xf32>
    %888 = arith.addf %887, %886 : vector<8x128xf32>
    %889 = arith.divf %887, %888 : vector<8x128xf32>
    %890 = vector.extract_strided_slice %883 {offsets = [0, 128], sizes = [8, 128], strides = [1, 1]} : vector<8x512xf32> to vector<8x128xf32>
    %891 = arith.negf %890 : vector<8x128xf32>
    %892 = math.exp %891 : vector<8x128xf32>
    %cst_226 = arith.constant 1.000000e+00 : f32
    %893 = vector.broadcast %cst_226 : f32 to vector<8x128xf32>
    %894 = arith.addf %893, %892 : vector<8x128xf32>
    %895 = arith.divf %893, %894 : vector<8x128xf32>
    %896 = vector.extract_strided_slice %883 {offsets = [0, 256], sizes = [8, 128], strides = [1, 1]} : vector<8x512xf32> to vector<8x128xf32>
    %897 = math.tanh %896 : vector<8x128xf32>
    %898 = vector.extract_strided_slice %883 {offsets = [0, 384], sizes = [8, 128], strides = [1, 1]} : vector<8x512xf32> to vector<8x128xf32>
    %899 = arith.negf %898 : vector<8x128xf32>
    %900 = math.exp %899 : vector<8x128xf32>
    %cst_227 = arith.constant 1.000000e+00 : f32
    %901 = vector.broadcast %cst_227 : f32 to vector<8x128xf32>
    %902 = arith.addf %901, %900 : vector<8x128xf32>
    %903 = arith.divf %901, %902 : vector<8x128xf32>
    %904 = arith.mulf %895, %877 : vector<8x128xf32>
    %905 = arith.mulf %889, %897 : vector<8x128xf32>
    %906 = arith.addf %904, %905 : vector<8x128xf32>
    %907 = math.tanh %906 : vector<8x128xf32>
    %908 = arith.mulf %903, %907 : vector<8x128xf32>
    %c248 = arith.constant 248 : index
    %c0_228 = arith.constant 0 : index
    %909 = vector.load %arg6[%c248, %c0_228] : memref<256x512xf32, #tpu.memory_space<vmem>>, vector<8x512xf32>
    %c0_229 = arith.constant 0 : index
    %c0_230 = arith.constant 0 : index
    %910 = vector.load %arg3[%c0_229, %c0_230] : memref<128x512xf32, #tpu.memory_space<vmem>>, vector<128x512xf32>
    %cst_231 = arith.constant dense<0.000000e+00> : vector<8x512xf32>
    %911 = tpu.matmul %908, %910, %cst_231 {dimension_numbers = #tpu.dot_dimension_numbers<[1], [0], [0], [1], [0, 0, 1, 1], [], []>} : vector<8x128xf32>, vector<128x512xf32>, vector<8x512xf32> -> vector<8x512xf32>
    %912 = arith.addf %909, %911 : vector<8x512xf32>
    %913 = vector.extract_strided_slice %912 {offsets = [0, 0], sizes = [8, 128], strides = [1, 1]} : vector<8x512xf32> to vector<8x128xf32>
    %914 = arith.negf %913 : vector<8x128xf32>
    %915 = math.exp %914 : vector<8x128xf32>
    %cst_232 = arith.constant 1.000000e+00 : f32
    %916 = vector.broadcast %cst_232 : f32 to vector<8x128xf32>
    %917 = arith.addf %916, %915 : vector<8x128xf32>
    %918 = arith.divf %916, %917 : vector<8x128xf32>
    %919 = vector.extract_strided_slice %912 {offsets = [0, 128], sizes = [8, 128], strides = [1, 1]} : vector<8x512xf32> to vector<8x128xf32>
    %920 = arith.negf %919 : vector<8x128xf32>
    %921 = math.exp %920 : vector<8x128xf32>
    %cst_233 = arith.constant 1.000000e+00 : f32
    %922 = vector.broadcast %cst_233 : f32 to vector<8x128xf32>
    %923 = arith.addf %922, %921 : vector<8x128xf32>
    %924 = arith.divf %922, %923 : vector<8x128xf32>
    %925 = vector.extract_strided_slice %912 {offsets = [0, 256], sizes = [8, 128], strides = [1, 1]} : vector<8x512xf32> to vector<8x128xf32>
    %926 = math.tanh %925 : vector<8x128xf32>
    %927 = vector.extract_strided_slice %912 {offsets = [0, 384], sizes = [8, 128], strides = [1, 1]} : vector<8x512xf32> to vector<8x128xf32>
    %928 = arith.negf %927 : vector<8x128xf32>
    %929 = math.exp %928 : vector<8x128xf32>
    %cst_234 = arith.constant 1.000000e+00 : f32
    %930 = vector.broadcast %cst_234 : f32 to vector<8x128xf32>
    %931 = arith.addf %930, %929 : vector<8x128xf32>
    %932 = arith.divf %930, %931 : vector<8x128xf32>
    %933 = arith.mulf %924, %906 : vector<8x128xf32>
    %934 = arith.mulf %918, %926 : vector<8x128xf32>
    %935 = arith.addf %933, %934 : vector<8x128xf32>
    %936 = math.tanh %935 : vector<8x128xf32>
    %937 = arith.mulf %932, %936 : vector<8x128xf32>
    %c0_235 = arith.constant 0 : index
    %c0_236 = arith.constant 0 : index
    %938 = vector.load %arg5[%c0_235, %c0_236] : memref<8x128xf32, #tpu.memory_space<vmem>>, vector<8x128xf32>
    tpu.vector_store %arg5[%c0_235, %c0_236], %937 {strides = array<i32>} : memref<8x128xf32, #tpu.memory_space<vmem>>, vector<8x128xf32>,
    return
  }
  func.func @transform_0(%arg0: i32) -> (i32, i32, i32) {
    %c0_i32 = arith.constant 0 : i32
    %c0_i32_0 = arith.constant 0 : i32
    %c0_i32_1 = arith.constant 0 : i32
    return %c0_i32, %arg0, %c0_i32_0 : i32, i32, i32
  }
  func.func @transform_1(%arg0: i32) -> (i32, i32) {
    %c0_i32 = arith.constant 0 : i32
    %c0_i32_0 = arith.constant 0 : i32
    %c0_i32_1 = arith.constant 0 : i32
    return %c0_i32, %c0_i32_0 : i32, i32
  }
  func.func @transform_2(%arg0: i32) -> (i32, i32) {
    %c0_i32 = arith.constant 0 : i32
    %c0_i32_0 = arith.constant 0 : i32
    %c0_i32_1 = arith.constant 0 : i32
    return %c0_i32, %c0_i32_0 : i32, i32
  }
  func.func @transform_3(%arg0: i32) -> (i32, i32) {
    %c0_i32 = arith.constant 0 : i32
    %c0_i32_0 = arith.constant 0 : i32
    %c0_i32_1 = arith.constant 0 : i32
    return %c0_i32, %c0_i32_0 : i32, i32
  }
  func.func @transform_4(%arg0: i32) -> (i32, i32) {
    %c0_i32 = arith.constant 0 : i32
    %c0_i32_0 = arith.constant 0 : i32
    return %arg0, %c0_i32 : i32, i32
  }
}

</mosaic_0001>

<llo_original>
// kernel: mlstm_fcn_forward.3
$region0: #{mlstm_fcn_forward.3}
  #allocation0 [shape = 'u32[]', space=smem, size = 0x4, offset = 0x4, fixed_abs, tag = 'smem constant byte address 0x4 - core index']
  #allocation1 [shape = 'u32[144,128]{1,0:T(1,128)}', space=vmem, size = 0x12000, scoped, tag = 'internal scratch']
  %s0 = inlined_call_operand.vmem [shape: f32[2,47,16], index: 0, kind: input, shape index: {}]
  %s1 = inlined_call_operand.vmem [shape: f32[128,128], index: 1, kind: input, shape index: {}]
  %s2 = inlined_call_operand.vmem [shape: f32[1,128], index: 2, kind: input, shape index: {}]
  %s3 = inlined_call_operand.vmem [shape: f32[1,128], index: 3, kind: input, shape index: {}]
  %s4 = inlined_call_operand.hbm [shape: f32[5,128,256], index: 4, kind: input, shape index: {}]
  %s5 = inlined_call_operand.vmem [shape: f32[1,256], index: 5, kind: input, shape index: {}]
  %s6 = inlined_call_operand.vmem [shape: f32[1,256], index: 6, kind: input, shape index: {}]
  %s7 = inlined_call_operand.hbm [shape: f32[3,256,128], index: 7, kind: input, shape index: {}]
  %s8 = inlined_call_operand.vmem [shape: f32[1,128], index: 8, kind: input, shape index: {}]
  %s9 = inlined_call_operand.vmem [shape: f32[1,128], index: 9, kind: input, shape index: {}]
  %s10 = inlined_call_operand.vmem [shape: f32[2,128], index: 10, kind: output, shape index: {}]
  %s11 = sld [smem:[#allocation0]]
  $region58: #{mlstm_fcn_forward.3} parent=0
    _
  %s13 = ssub.s32 1, %s11
  %s14 = scalar_select 0, %s13, %s11
  $region1: #{mlstm_fcn_forward.3} parent=0
    #allocation2 [shape = 'u8[655360]{0}', space=vmem, size = 0xa0000, scoped, tag = 'input window, operand 4, single buffered']
    #allocation3 [shape = 's32[1]{0}', space=sflag, size = 0x4, scoped, tag = 'scoped memory for mlstm_fcn_forward.3']
    #allocation4 [shape = 'u8[393216]{0}', space=vmem, size = 0x60000, scoped, tag = 'input window, operand 7, single buffered']
    #allocation5 [shape = 's32[1]{0}', space=sflag, size = 0x4, scoped, tag = 'scoped memory for mlstm_fcn_forward.3']
    %15 = vsyncpa [#allocation3], 0
    %16 = vsyncpa [#allocation5], 0
    // Predicated region
    $region2: #{mlstm_fcn_forward.3} parent=1 // pred_check
      _
    $region3: #{mlstm_fcn_forward.3} parent=1 // pred_check_branch
      %18 = sbr.rel (0) target = $region5
    $region4: #{mlstm_fcn_forward.3} parent=1 // pred_region
      _
    $region5: #{mlstm_fcn_forward.3} parent=1 // pred_fallthru
      _
    // Predicated region
    $region6: #{mlstm_fcn_forward.3} parent=1 // pred_check
      _
    $region7: #{mlstm_fcn_forward.3} parent=1 // pred_check_branch
      %20 = sbr.rel (0) target = $region9
    $region8: #{mlstm_fcn_forward.3} parent=1 // pred_region
      _
    $region9: #{mlstm_fcn_forward.3} parent=1 // pred_fallthru
      _
    // Predicated region
    $region10: #{mlstm_fcn_forward.3} parent=1 // pred_check
      _
    $region11: #{mlstm_fcn_forward.3} parent=1 // pred_check_branch
      %22 = sbr.rel (0) target = $region13
    $region12: #{mlstm_fcn_forward.3} parent=1 // pred_region
      _
    $region13: #{mlstm_fcn_forward.3} parent=1 // pred_fallthru
      _
    // Predicated region
    $region14: #{mlstm_fcn_forward.3} parent=1 // pred_check
      _
    $region15: #{mlstm_fcn_forward.3} parent=1 // pred_check_branch
      %24 = sbr.rel (0) target = $region17
    $region16: #{mlstm_fcn_forward.3} parent=1 // pred_region
      _
    $region17: #{mlstm_fcn_forward.3} parent=1 // pred_fallthru
      _
    // Predicated region
    $region18: #{mlstm_fcn_forward.3} parent=1 // pred_check
      _
    $region19: #{mlstm_fcn_forward.3} parent=1 // pred_check_branch
      %26 = sbr.rel (0) target = $region21
    $region20: #{mlstm_fcn_forward.3} parent=1 // pred_region
      %s28 = ssub.s32 20480, 20480
      %29 = vsyncadd [#allocation3], %s28
      %s30 = sshll.u32 [#allocation2], 4
      %s31 = int_to_ptr.vmem [resolvable:$true] %s30
      %36 = dma.hbm_to_vmem [thread:$0]  %s4, 20480, %s31, [#allocation3], 256, 256, 16
    $region21: #{mlstm_fcn_forward.3} parent=1 // pred_fallthru
      _
    // Predicated region
    $region22: #{mlstm_fcn_forward.3} parent=1 // pred_check
      _
    $region23: #{mlstm_fcn_forward.3} parent=1 // pred_check_branch
      %38 = sbr.rel (0) target = $region25
    $region24: #{mlstm_fcn_forward.3} parent=1 // pred_region
      _
    $region25: #{mlstm_fcn_forward.3} parent=1 // pred_fallthru
      _
    // Predicated region
    $region26: #{mlstm_fcn_forward.3} parent=1 // pred_check
      _
    $region27: #{mlstm_fcn_forward.3} parent=1 // pred_check_branch
      %40 = sbr.rel (0) target = $region29
    $region28: #{mlstm_fcn_forward.3} parent=1 // pred_region
      _
    $region29: #{mlstm_fcn_forward.3} parent=1 // pred_fallthru
      _
    // Predicated region
    $region30: #{mlstm_fcn_forward.3} parent=1 // pred_check
      _
    $region31: #{mlstm_fcn_forward.3} parent=1 // pred_check_branch
      %42 = sbr.rel (0) target = $region33
    $region32: #{mlstm_fcn_forward.3} parent=1 // pred_region
      %s44 = ssub.s32 12288, 12288
      %45 = vsyncadd [#allocation5], %s44
      %s46 = sshll.u32 [#allocation4], 4
      %s47 = int_to_ptr.vmem [resolvable:$true] %s46
      %52 = dma.hbm_to_vmem [thread:$0]  %s7, 12288, %s47, [#allocation5], 128, 128, 8
    $region33: #{mlstm_fcn_forward.3} parent=1 // pred_fallthru
      _
    // Predicated region
    $region34: #{mlstm_fcn_forward.3} parent=1 // pred_check
      _
    $region35: #{mlstm_fcn_forward.3} parent=1 // pred_check_branch
      %54 = sbr.rel (0) target = $region37
    $region36: #{mlstm_fcn_forward.3} parent=1 // pred_region
      _
    $region37: #{mlstm_fcn_forward.3} parent=1 // pred_fallthru
      _
    // Predicated region
    $region38: #{mlstm_fcn_forward.3} parent=1 // pred_check
      _
    $region39: #{mlstm_fcn_forward.3} parent=1 // pred_check_branch
      %56 = sbr.rel (0) target = $region41
    $region40: #{mlstm_fcn_forward.3} parent=1 // pred_region
      _
    $region41: #{mlstm_fcn_forward.3} parent=1 // pred_fallthru
      _
    // Predicated region
    $region42: #{mlstm_fcn_forward.3} parent=1 // pred_check
      _
    $region43: #{mlstm_fcn_forward.3} parent=1 // pred_check_branch
      %58 = sbr.rel (0) target = $region45
    $region44: #{mlstm_fcn_forward.3} parent=1 // pred_region
      %59 = dma.done [#allocation3], 20480
    $region45: #{mlstm_fcn_forward.3} parent=1 // pred_fallthru
      _
    // Predicated region
    $region46: #{mlstm_fcn_forward.3} parent=1 // pred_check
      _
    $region47: #{mlstm_fcn_forward.3} parent=1 // pred_check_branch
      %61 = sbr.rel (0) target = $region49
    $region48: #{mlstm_fcn_forward.3} parent=1 // pred_region
      %62 = dma.done [#allocation5], 12288
    $region49: #{mlstm_fcn_forward.3} parent=1 // pred_fallthru
      _
    %v63 = vld [vmem:[%s0] sm:$0xff]
    %v64 = vld [vmem:[%s0 + $0x8] sm:$0xff]
    %v65 = vld [vmem:[%s0 + $0x10] sm:$0xff]
    %v66 = vld [vmem:[%s0 + $0x18] sm:$0xff]
    %v67 = vld [vmem:[%s0 + $0x20] sm:$0xff]
    %v68 = vld [vmem:[%s0 + $0x28] sm:$0x7f]
    %v69 = vld [vmem:[%s0 + $0x30] sm:$0xff]
    %v70 = vld [vmem:[%s0 + $0x38] sm:$0xff]
    %v71 = vld [vmem:[%s0 + $0x40] sm:$0xff]
    %v72 = vld [vmem:[%s0 + $0x48] sm:$0xff]
    %v73 = vld [vmem:[%s0 + $0x50] sm:$0xff]
    %v74 = vld [vmem:[%s0 + $0x58] sm:$0x7f]
    %vm87 = vcmask 1046528
    %v88 = vrot.slane %v63, 1
    %v89 = vrot.slane %v64, 1
    %v90 = vsel %vm87, %v88, %v89
    %v91 = vrot.slane %v65, 1
    %v92 = vsel %vm87, %v89, %v91
    %v93 = vrot.slane %v66, 1
    %v94 = vsel %vm87, %v91, %v93
    %v95 = vrot.slane %v67, 1
    %v96 = vsel %vm87, %v93, %v95
    %v97 = vrot.slane %v68, 1
    %v98 = vsel %vm87, %v95, %v97
    %v99 = vrot.slane %v69, 1
    %v100 = vrot.slane %v70, 1
    %v101 = vsel %vm87, %v99, %v100
    %v102 = vrot.slane %v71, 1
    %v103 = vsel %vm87, %v100, %v102
    %v104 = vrot.slane %v72, 1
    %v105 = vsel %vm87, %v102, %v104
    %v106 = vrot.slane %v73, 1
    %v107 = vsel %vm87, %v104, %v106
    %v108 = vrot.slane %v74, 1
    %v109 = vsel %vm87, %v106, %v108
    %110 = vrot.lane.b32.xlu0 %v90, 16
    %v111 = vpop.permute.xlu0 %110
    %112 = vrot.lane.b32.xlu0 %v92, 16
    %v113 = vpop.permute.xlu0 %112
    %114 = vrot.lane.b32.xlu0 %v94, 16
    %v115 = vpop.permute.xlu0 %114
    %116 = vrot.lane.b32.xlu0 %v96, 16
    %v117 = vpop.permute.xlu0 %116
    %118 = vrot.lane.b32.xlu0 %v98, 16
    %v119 = vpop.permute.xlu0 %118
    %120 = vrot.lane.b32.xlu0 %v101, 16
    %v121 = vpop.permute.xlu0 %120
    %122 = vrot.lane.b32.xlu0 %v103, 16
    %v123 = vpop.permute.xlu0 %122
    %124 = vrot.lane.b32.xlu0 %v105, 16
    %v125 = vpop.permute.xlu0 %124
    %126 = vrot.lane.b32.xlu0 %v107, 16
    %v127 = vpop.permute.xlu0 %126
    %128 = vrot.lane.b32.xlu0 %v109, 16
    %v129 = vpop.permute.xlu0 %128
    %vm140 = vcmask 1045504
    %v141 = vrot.slane %v63, 2
    %v142 = vrot.slane %v64, 2
    %v143 = vsel %vm140, %v141, %v142
    %v144 = vrot.slane %v65, 2
    %v145 = vsel %vm140, %v142, %v144
    %v146 = vrot.slane %v66, 2
    %v147 = vsel %vm140, %v144, %v146
    %v148 = vrot.slane %v67, 2
    %v149 = vsel %vm140, %v146, %v148
    %v150 = vrot.slane %v68, 2
    %v151 = vsel %vm140, %v148, %v150
    %v152 = vrot.slane %v69, 2
    %v153 = vrot.slane %v70, 2
    %v154 = vsel %vm140, %v152, %v153
    %v155 = vrot.slane %v71, 2
    %v156 = vsel %vm140, %v153, %v155
    %v157 = vrot.slane %v72, 2
    %v158 = vsel %vm140, %v155, %v157
    %v159 = vrot.slane %v73, 2
    %v160 = vsel %vm140, %v157, %v159
    %v161 = vrot.slane %v74, 2
    %v162 = vsel %vm140, %v159, %v161
    %163 = vrot.lane.b32.xlu0 %v143, 32
    %v164 = vpop.permute.xlu0 %163
    %165 = vrot.lane.b32.xlu0 %v145, 32
    %v166 = vpop.permute.xlu0 %165
    %167 = vrot.lane.b32.xlu0 %v147, 32
    %v168 = vpop.permute.xlu0 %167
    %169 = vrot.lane.b32.xlu0 %v149, 32
    %v170 = vpop.permute.xlu0 %169
    %171 = vrot.lane.b32.xlu0 %v151, 32
    %v172 = vpop.permute.xlu0 %171
    %173 = vrot.lane.b32.xlu0 %v154, 32
    %v174 = vpop.permute.xlu0 %173
    %175 = vrot.lane.b32.xlu0 %v156, 32
    %v176 = vpop.permute.xlu0 %175
    %177 = vrot.lane.b32.xlu0 %v158, 32
    %v178 = vpop.permute.xlu0 %177
    %179 = vrot.lane.b32.xlu0 %v160, 32
    %v180 = vpop.permute.xlu0 %179
    %181 = vrot.lane.b32.xlu0 %v162, 32
    %v182 = vpop.permute.xlu0 %181
    %vm193 = vcmask 1044480
    %v194 = vrot.slane %v63, 3
    %v195 = vrot.slane %v64, 3
    %v196 = vsel %vm193, %v194, %v195
    %v197 = vrot.slane %v65, 3
    %v198 = vsel %vm193, %v195, %v197
    %v199 = vrot.slane %v66, 3
    %v200 = vsel %vm193, %v197, %v199
    %v201 = vrot.slane %v67, 3
    %v202 = vsel %vm193, %v199, %v201
    %v203 = vrot.slane %v68, 3
    %v204 = vsel %vm193, %v201, %v203
    %v205 = vrot.slane %v69, 3
    %v206 = vrot.slane %v70, 3
    %v207 = vsel %vm193, %v205, %v206
    %v208 = vrot.slane %v71, 3
    %v209 = vsel %vm193, %v206, %v208
    %v210 = vrot.slane %v72, 3
    %v211 = vsel %vm193, %v208, %v210
    %v212 = vrot.slane %v73, 3
    %v213 = vsel %vm193, %v210, %v212
    %v214 = vrot.slane %v74, 3
    %v215 = vsel %vm193, %v212, %v214
    %216 = vrot.lane.b32.xlu0 %v196, 48
    %v217 = vpop.permute.xlu0 %216
    %218 = vrot.lane.b32.xlu0 %v198, 48
    %v219 = vpop.permute.xlu0 %218
    %220 = vrot.lane.b32.xlu0 %v200, 48
    %v221 = vpop.permute.xlu0 %220
    %222 = vrot.lane.b32.xlu0 %v202, 48
    %v223 = vpop.permute.xlu0 %222
    %224 = vrot.lane.b32.xlu0 %v204, 48
    %v225 = vpop.permute.xlu0 %224
    %226 = vrot.lane.b32.xlu0 %v207, 48
    %v227 = vpop.permute.xlu0 %226
    %228 = vrot.lane.b32.xlu0 %v209, 48
    %v229 = vpop.permute.xlu0 %228
    %230 = vrot.lane.b32.xlu0 %v211, 48
    %v231 = vpop.permute.xlu0 %230
    %232 = vrot.lane.b32.xlu0 %v213, 48
    %v233 = vpop.permute.xlu0 %232
    %234 = vrot.lane.b32.xlu0 %v215, 48
    %v235 = vpop.permute.xlu0 %234
    %vm246 = vcmask 1043456
    %v247 = vrot.slane %v63, 4
    %v248 = vrot.slane %v64, 4
    %v249 = vsel %vm246, %v247, %v248
    %v250 = vrot.slane %v65, 4
    %v251 = vsel %vm246, %v248, %v250
    %v252 = vrot.slane %v66, 4
    %v253 = vsel %vm246, %v250, %v252
    %v254 = vrot.slane %v67, 4
    %v255 = vsel %vm246, %v252, %v254
    %v256 = vrot.slane %v68, 4
    %v257 = vsel %vm246, %v254, %v256
    %v258 = vrot.slane %v69, 4
    %v259 = vrot.slane %v70, 4
    %v260 = vsel %vm246, %v258, %v259
    %v261 = vrot.slane %v71, 4
    %v262 = vsel %vm246, %v259, %v261
    %v263 = vrot.slane %v72, 4
    %v264 = vsel %vm246, %v261, %v263
    %v265 = vrot.slane %v73, 4
    %v266 = vsel %vm246, %v263, %v265
    %v267 = vrot.slane %v74, 4
    %v268 = vsel %vm246, %v265, %v267
    %269 = vrot.lane.b32.xlu0 %v249, 64
    %v270 = vpop.permute.xlu0 %269
    %271 = vrot.lane.b32.xlu0 %v251, 64
    %v272 = vpop.permute.xlu0 %271
    %273 = vrot.lane.b32.xlu0 %v253, 64
    %v274 = vpop.permute.xlu0 %273
    %275 = vrot.lane.b32.xlu0 %v255, 64
    %v276 = vpop.permute.xlu0 %275
    %277 = vrot.lane.b32.xlu0 %v257, 64
    %v278 = vpop.permute.xlu0 %277
    %279 = vrot.lane.b32.xlu0 %v260, 64
    %v280 = vpop.permute.xlu0 %279
    %281 = vrot.lane.b32.xlu0 %v262, 64
    %v282 = vpop.permute.xlu0 %281
    %283 = vrot.lane.b32.xlu0 %v264, 64
    %v284 = vpop.permute.xlu0 %283
    %285 = vrot.lane.b32.xlu0 %v266, 64
    %v286 = vpop.permute.xlu0 %285
    %287 = vrot.lane.b32.xlu0 %v268, 64
    %v288 = vpop.permute.xlu0 %287
    %vm299 = vcmask 1042432
    %v300 = vrot.slane %v63, 5
    %v301 = vrot.slane %v64, 5
    %v302 = vsel %vm299, %v300, %v301
    %v303 = vrot.slane %v65, 5
    %v304 = vsel %vm299, %v301, %v303
    %v305 = vrot.slane %v66, 5
    %v306 = vsel %vm299, %v303, %v305
    %v307 = vrot.slane %v67, 5
    %v308 = vsel %vm299, %v305, %v307
    %v309 = vrot.slane %v68, 5
    %v310 = vsel %vm299, %v307, %v309
    %v311 = vrot.slane %v69, 5
    %v312 = vrot.slane %v70, 5
    %v313 = vsel %vm299, %v311, %v312
    %v314 = vrot.slane %v71, 5
    %v315 = vsel %vm299, %v312, %v314
    %v316 = vrot.slane %v72, 5
    %v317 = vsel %vm299, %v314, %v316
    %v318 = vrot.slane %v73, 5
    %v319 = vsel %vm299, %v316, %v318
    %v320 = vrot.slane %v74, 5
    %v321 = vsel %vm299, %v318, %v320
    %322 = vrot.lane.b32.xlu0 %v302, 80
    %v323 = vpop.permute.xlu0 %322
    %324 = vrot.lane.b32.xlu0 %v304, 80
    %v325 = vpop.permute.xlu0 %324
    %326 = vrot.lane.b32.xlu0 %v306, 80
    %v327 = vpop.permute.xlu0 %326
    %328 = vrot.lane.b32.xlu0 %v308, 80
    %v329 = vpop.permute.xlu0 %328
    %330 = vrot.lane.b32.xlu0 %v310, 80
    %v331 = vpop.permute.xlu0 %330
    %332 = vrot.lane.b32.xlu0 %v313, 80
    %v333 = vpop.permute.xlu0 %332
    %334 = vrot.lane.b32.xlu0 %v315, 80
    %v335 = vpop.permute.xlu0 %334
    %336 = vrot.lane.b32.xlu0 %v317, 80
    %v337 = vpop.permute.xlu0 %336
    %338 = vrot.lane.b32.xlu0 %v319, 80
    %v339 = vpop.permute.xlu0 %338
    %340 = vrot.lane.b32.xlu0 %v321, 80
    %v341 = vpop.permute.xlu0 %340
    %vm352 = vcmask 1041408
    %v353 = vrot.slane %v63, 6
    %v354 = vrot.slane %v64, 6
    %v355 = vsel %vm352, %v353, %v354
    %v356 = vrot.slane %v65, 6
    %v357 = vsel %vm352, %v354, %v356
    %v358 = vrot.slane %v66, 6
    %v359 = vsel %vm352, %v356, %v358
    %v360 = vrot.slane %v67, 6
    %v361 = vsel %vm352, %v358, %v360
    %v362 = vrot.slane %v68, 6
    %v363 = vsel %vm352, %v360, %v362
    %v364 = vrot.slane %v69, 6
    %v365 = vrot.slane %v70, 6
    %v366 = vsel %vm352, %v364, %v365
    %v367 = vrot.slane %v71, 6
    %v368 = vsel %vm352, %v365, %v367
    %v369 = vrot.slane %v72, 6
    %v370 = vsel %vm352, %v367, %v369
    %v371 = vrot.slane %v73, 6
    %v372 = vsel %vm352, %v369, %v371
    %v373 = vrot.slane %v74, 6
    %v374 = vsel %vm352, %v371, %v373
    %375 = vrot.lane.b32.xlu0 %v355, 96
    %v376 = vpop.permute.xlu0 %375
    %377 = vrot.lane.b32.xlu0 %v357, 96
    %v378 = vpop.permute.xlu0 %377
    %379 = vrot.lane.b32.xlu0 %v359, 96
    %v380 = vpop.permute.xlu0 %379
    %381 = vrot.lane.b32.xlu0 %v361, 96
    %v382 = vpop.permute.xlu0 %381
    %383 = vrot.lane.b32.xlu0 %v363, 96
    %v384 = vpop.permute.xlu0 %383
    %385 = vrot.lane.b32.xlu0 %v366, 96
    %v386 = vpop.permute.xlu0 %385
    %387 = vrot.lane.b32.xlu0 %v368, 96
    %v388 = vpop.permute.xlu0 %387
    %389 = vrot.lane.b32.xlu0 %v370, 96
    %v390 = vpop.permute.xlu0 %389
    %391 = vrot.lane.b32.xlu0 %v372, 96
    %v392 = vpop.permute.xlu0 %391
    %393 = vrot.lane.b32.xlu0 %v374, 96
    %v394 = vpop.permute.xlu0 %393
    %vm405 = vcmask 1040384
    %v406 = vrot.slane %v63, 7
    %v407 = vrot.slane %v64, 7
    %v408 = vsel %vm405, %v406, %v407
    %v409 = vrot.slane %v65, 7
    %v410 = vsel %vm405, %v407, %v409
    %v411 = vrot.slane %v66, 7
    %v412 = vsel %vm405, %v409, %v411
    %v413 = vrot.slane %v67, 7
    %v414 = vsel %vm405, %v411, %v413
    %v415 = vrot.slane %v68, 7
    %v416 = vsel %vm405, %v413, %v415
    %v417 = vrot.slane %v69, 7
    %v418 = vrot.slane %v70, 7
    %v419 = vsel %vm405, %v417, %v418
    %v420 = vrot.slane %v71, 7
    %v421 = vsel %vm405, %v418, %v420
    %v422 = vrot.slane %v72, 7
    %v423 = vsel %vm405, %v420, %v422
    %v424 = vrot.slane %v73, 7
    %v425 = vsel %vm405, %v422, %v424
    %v426 = vrot.slane %v74, 7
    %v427 = vsel %vm405, %v424, %v426
    %428 = vrot.lane.b32.xlu0 %v408, 112
    %v429 = vpop.permute.xlu0 %428
    %430 = vrot.lane.b32.xlu0 %v410, 112
    %v431 = vpop.permute.xlu0 %430
    %432 = vrot.lane.b32.xlu0 %v412, 112
    %v433 = vpop.permute.xlu0 %432
    %434 = vrot.lane.b32.xlu0 %v414, 112
    %v435 = vpop.permute.xlu0 %434
    %436 = vrot.lane.b32.xlu0 %v416, 112
    %v437 = vpop.permute.xlu0 %436
    %438 = vrot.lane.b32.xlu0 %v419, 112
    %v439 = vpop.permute.xlu0 %438
    %440 = vrot.lane.b32.xlu0 %v421, 112
    %v441 = vpop.permute.xlu0 %440
    %442 = vrot.lane.b32.xlu0 %v423, 112
    %v443 = vpop.permute.xlu0 %442
    %444 = vrot.lane.b32.xlu0 %v425, 112
    %v445 = vpop.permute.xlu0 %444
    %446 = vrot.lane.b32.xlu0 %v427, 112
    %v447 = vpop.permute.xlu0 %446
    %vm458 = vcmask 130048
    %v459 = vsel %vm458, %v63, %v111
    %v460 = vsel %vm458, %v64, %v113
    %v461 = vsel %vm458, %v65, %v115
    %v462 = vsel %vm458, %v66, %v117
    %v463 = vsel %vm458, %v67, %v119
    %v464 = vsel %vm458, %v69, %v121
    %v465 = vsel %vm458, %v70, %v123
    %v466 = vsel %vm458, %v71, %v125
    %v467 = vsel %vm458, %v72, %v127
    %v468 = vsel %vm458, %v73, %v129
    %vm469 = vcmask 261120
    %v470 = vsel %vm469, %v459, %v164
    %v471 = vsel %vm469, %v460, %v166
    %v472 = vsel %vm469, %v461, %v168
    %v473 = vsel %vm469, %v462, %v170
    %v474 = vsel %vm469, %v463, %v172
    %v475 = vsel %vm469, %v464, %v174
    %v476 = vsel %vm469, %v465, %v176
    %v477 = vsel %vm469, %v466, %v178
    %v478 = vsel %vm469, %v467, %v180
    %v479 = vsel %vm469, %v468, %v182
    %vm480 = vcmask 392192
    %v481 = vsel %vm480, %v470, %v217
    %v482 = vsel %vm480, %v471, %v219
    %v483 = vsel %vm480, %v472, %v221
    %v484 = vsel %vm480, %v473, %v223
    %v485 = vsel %vm480, %v474, %v225
    %v486 = vsel %vm480, %v475, %v227
    %v487 = vsel %vm480, %v476, %v229
    %v488 = vsel %vm480, %v477, %v231
    %v489 = vsel %vm480, %v478, %v233
    %v490 = vsel %vm480, %v479, %v235
    %vm491 = vcmask 523264
    %v492 = vsel %vm491, %v481, %v270
    %v493 = vsel %vm491, %v482, %v272
    %v494 = vsel %vm491, %v483, %v274
    %v495 = vsel %vm491, %v484, %v276
    %v496 = vsel %vm491, %v485, %v278
    %v497 = vsel %vm491, %v486, %v280
    %v498 = vsel %vm491, %v487, %v282
    %v499 = vsel %vm491, %v488, %v284
    %v500 = vsel %vm491, %v489, %v286
    %v501 = vsel %vm491, %v490, %v288
    %vm502 = vcmask 654336
    %v503 = vsel %vm502, %v492, %v323
    %v504 = vsel %vm502, %v493, %v325
    %v505 = vsel %vm502, %v494, %v327
    %v506 = vsel %vm502, %v495, %v329
    %v507 = vsel %vm502, %v496, %v331
    %v508 = vsel %vm502, %v497, %v333
    %v509 = vsel %vm502, %v498, %v335
    %v510 = vsel %vm502, %v499, %v337
    %v511 = vsel %vm502, %v500, %v339
    %v512 = vsel %vm502, %v501, %v341
    %vm513 = vcmask 785408
    %v514 = vsel %vm513, %v503, %v376
    %v515 = vsel %vm513, %v504, %v378
    %v516 = vsel %vm513, %v505, %v380
    %v517 = vsel %vm513, %v506, %v382
    %v518 = vsel %vm513, %v507, %v384
    %v519 = vsel %vm513, %v508, %v386
    %v520 = vsel %vm513, %v509, %v388
    %v521 = vsel %vm513, %v510, %v390
    %v522 = vsel %vm513, %v511, %v392
    %v523 = vsel %vm513, %v512, %v394
    %vm524 = vcmask 916480
    %v525 = vsel %vm524, %v514, %v429
    %v526 = vsel %vm524, %v515, %v431
    %v527 = vsel %vm524, %v516, %v433
    %v528 = vsel %vm524, %v517, %v435
    %v529 = vsel %vm524, %v518, %v437
    %v530 = vsel %vm524, %v519, %v439
    %v531 = vsel %vm524, %v520, %v441
    %v532 = vsel %vm524, %v521, %v443
    %v533 = vsel %vm524, %v522, %v445
    %v534 = vsel %vm524, %v523, %v447
    %v535 = vld [vmem:[%s1] sm:$0xff]
    %v536 = vld [vmem:[%s1 + $0x8] sm:$0xff]
    %v537 = vld [vmem:[%s1 + $0x10] sm:$0xff]
    %v538 = vld [vmem:[%s1 + $0x18] sm:$0xff]
    %v539 = vld [vmem:[%s1 + $0x20] sm:$0xff]
    %v540 = vld [vmem:[%s1 + $0x28] sm:$0xff]
    %v541 = vld [vmem:[%s1 + $0x30] sm:$0xff]
    %v542 = vld [vmem:[%s1 + $0x38] sm:$0xff]
    %v543 = vld [vmem:[%s1 + $0x40] sm:$0xff]
    %v544 = vld [vmem:[%s1 + $0x48] sm:$0xff]
    %v545 = vld [vmem:[%s1 + $0x50] sm:$0xff]
    %v546 = vld [vmem:[%s1 + $0x58] sm:$0xff]
    %v547 = vld [vmem:[%s1 + $0x60] sm:$0xff]
    %v548 = vld [vmem:[%s1 + $0x68] sm:$0xff]
    %v549 = vld [vmem:[%s1 + $0x70] sm:$0xff]
    %v550 = vld [vmem:[%s1 + $0x78] sm:$0xff]
    %551 = vmatprep.subr.mxu0 0.0
    %552 = vmatpush1.msra.mxu0 %v550
    %553 = vmatprep.subr.mxu0 0.0
    %554 = vmatpush1.msra.mxu0 %v549
    %555 = vmatprep.subr.mxu0 0.0
    %556 = vmatpush1.msra.mxu0 %v548
    %557 = vmatprep.subr.mxu0 0.0
    %558 = vmatpush1.msra.mxu0 %v547
    %559 = vmatprep.subr.mxu0 0.0
    %560 = vmatpush1.msra.mxu0 %v546
    %561 = vmatprep.subr.mxu0 0.0
    %562 = vmatpush1.msra.mxu0 %v545
    %563 = vmatprep.subr.mxu0 0.0
    %564 = vmatpush1.msra.mxu0 %v544
    %565 = vmatprep.subr.mxu0 0.0
    %566 = vmatpush1.msra.mxu0 %v543
    %567 = vmatprep.subr.mxu0 0.0
    %568 = vmatpush1.msra.mxu0 %v542
    %569 = vmatprep.subr.mxu0 0.0
    %570 = vmatpush1.msra.mxu0 %v541
    %571 = vmatprep.subr.mxu0 0.0
    %572 = vmatpush1.msra.mxu0 %v540
    %573 = vmatprep.subr.mxu0 0.0
    %574 = vmatpush1.msra.mxu0 %v539
    %575 = vmatprep.subr.mxu0 0.0
    %576 = vmatpush1.msra.mxu0 %v538
    %577 = vmatprep.subr.mxu0 0.0
    %578 = vmatpush1.msra.mxu0 %v537
    %579 = vmatprep.subr.mxu0 0.0
    %580 = vmatpush1.msra.mxu0 %v536
    %581 = vmatprep.subr.mxu0 0.0
    %582 = vmatpush1.msra.mxu0 %v535
    %583 = vmatprep.subr.mxu0 0.0
    %584 = vmatpush2.msra.mxu0 0.0
    %585 = vmatprep.subr.mxu0 0.0
    %586 = vmatpush2.msra.mxu0 0.0
    %587 = vmatprep.subr.mxu0 0.0
    %588 = vmatpush2.msra.mxu0 0.0
    %589 = vmatprep.subr.mxu0 0.0
    %590 = vmatpush2.msra.mxu0 0.0
    %591 = vmatprep.subr.mxu0 0.0
    %592 = vmatpush2.msra.mxu0 0.0
    %593 = vmatprep.subr.mxu0 0.0
    %594 = vmatpush2.msra.mxu0 0.0
    %595 = vmatprep.subr.mxu0 0.0
    %596 = vmatpush2.msra.mxu0 0.0
    %597 = vmatprep.subr.mxu0 0.0
    %598 = vmatpush2.msra.mxu0 0.0
    %599 = vmatprep.subr.mxu0 0.0
    %600 = vmatpush2.msra.mxu0 0.0
    %601 = vmatprep.subr.mxu0 0.0
    %602 = vmatpush2.msra.mxu0 0.0
    %603 = vmatprep.subr.mxu0 0.0
    %604 = vmatpush2.msra.mxu0 0.0
    %605 = vmatprep.subr.mxu0 0.0
    %606 = vmatpush2.msra.mxu0 0.0
    %607 = vmatprep.subr.mxu0 0.0
    %608 = vmatpush2.msra.mxu0 0.0
    %609 = vmatprep.subr.mxu0 0.0
    %610 = vmatpush2.msra.mxu0 0.0
    %611 = vmatprep.subr.mxu0 0.0
    %612 = vmatpush2.msra.mxu0 0.0
    %613 = vmatprep.subr.mxu0 0.0
    %614 = vmatpush2.msra.mxu0 0.0
    %615 = vmatprep.mubr.f32.mxu0 0.0
    %616 = vmatmul.mubr.f32.gmra.mxu0 %v525
    %v617 = vpop.f32.mrf.mxu0
    %v618 = vadd.f32 0.0, %v617
    %v619 = vpop.f32.mrf.mxu0
    %620 = vmatprep.mubr.f32.mxu0 0.0
    %621 = vmatmul.mubr.f32.gmra.mxu0 %v526
    %v622 = vpop.f32.mrf.mxu0
    %v623 = vadd.f32 0.0, %v622
    %v624 = vpop.f32.mrf.mxu0
    %625 = vmatprep.mubr.f32.mxu0 0.0
    %626 = vmatmul.mubr.f32.gmra.mxu0 %v527
    %v627 = vpop.f32.mrf.mxu0
    %v628 = vadd.f32 0.0, %v627
    %v629 = vpop.f32.mrf.mxu0
    %630 = vmatprep.mubr.f32.mxu0 0.0
    %631 = vmatmul.mubr.f32.gmra.mxu0 %v528
    %v632 = vpop.f32.mrf.mxu0
    %v633 = vadd.f32 0.0, %v632
    %v634 = vpop.f32.mrf.mxu0
    %635 = vmatprep.mubr.f32.mxu0 0.0
    %636 = vmatmul.mubr.f32.gmra.mxu0 %v529
    %v637 = vpop.f32.mrf.mxu0
    %v638 = vadd.f32 0.0, %v637
    %v639 = vpop.f32.mrf.mxu0
    %640 = vmatprep.mubr.f32.mxu0 0.0
    %641 = vmatmul.mubr.f32.gmra.mxu0 %v530
    %v642 = vpop.f32.mrf.mxu0
    %v643 = vadd.f32 0.0, %v642
    %v644 = vpop.f32.mrf.mxu0
    %645 = vmatprep.mubr.f32.mxu0 0.0
    %646 = vmatmul.mubr.f32.gmra.mxu0 %v531
    %v647 = vpop.f32.mrf.mxu0
    %v648 = vadd.f32 0.0, %v647
    %v649 = vpop.f32.mrf.mxu0
    %650 = vmatprep.mubr.f32.mxu0 0.0
    %651 = vmatmul.mubr.f32.gmra.mxu0 %v532
    %v652 = vpop.f32.mrf.mxu0
    %v653 = vadd.f32 0.0, %v652
    %v654 = vpop.f32.mrf.mxu0
    %655 = vmatprep.mubr.f32.mxu0 0.0
    %656 = vmatmul.mubr.f32.gmra.mxu0 %v533
    %v657 = vpop.f32.mrf.mxu0
    %v658 = vadd.f32 0.0, %v657
    %v659 = vpop.f32.mrf.mxu0
    %660 = vmatprep.mubr.f32.mxu0 0.0
    %661 = vmatmul.mubr.f32.gmra.mxu0 %v534
    %v662 = vpop.f32.mrf.mxu0
    %v663 = vadd.f32 0.0, %v662
    %v664 = vpop.f32.mrf.mxu0
    %665 = vdwg.mxu0
    %v666 = vld [vmem:[%s2] sm:$0x1]
    %v668 = vlaneseq
    %v669 = vshrl.u32 %v668, 7
    %v670 = vsub.s32 0, %v669
    %v671 = vrot.slane %v666, %v670
    %v673 = vmul.f32 %v618, %v671
    %v674 = vmul.f32 %v623, %v671
    %v675 = vmul.f32 %v628, %v671
    %v676 = vmul.f32 %v633, %v671
    %v677 = vmul.f32 %v638, %v671
    %v678 = vmul.f32 %v643, %v671
    %v679 = vmul.f32 %v648, %v671
    %v680 = vmul.f32 %v653, %v671
    %v681 = vmul.f32 %v658, %v671
    %v682 = vmul.f32 %v663, %v671
    %v683 = vld [vmem:[%s3] sm:$0x1]
    %v685 = vlaneseq
    %v686 = vshrl.u32 %v685, 7
    %v687 = vsub.s32 0, %v686
    %v688 = vrot.slane %v683, %v687
    %v690 = vadd.f32 %v673, %v688
    %v691 = vadd.f32 %v674, %v688
    %v692 = vadd.f32 %v675, %v688
    %v693 = vadd.f32 %v676, %v688
    %v694 = vadd.f32 %v677, %v688
    %v695 = vadd.f32 %v678, %v688
    %v696 = vadd.f32 %v679, %v688
    %v697 = vadd.f32 %v680, %v688
    %v698 = vadd.f32 %v681, %v688
    %v699 = vadd.f32 %v682, %v688
    %v700 = vmax.f32 %v690, 0.0
    %v701 = vmax.f32 %v691, 0.0
    %v702 = vmax.f32 %v692, 0.0
    %v703 = vmax.f32 %v693, 0.0
    %v704 = vmax.f32 %v694, 0.0
    %v705 = vmax.f32 %v695, 0.0
    %v706 = vmax.f32 %v696, 0.0
    %v707 = vmax.f32 %v697, 0.0
    %v708 = vmax.f32 %v698, 0.0
    %v709 = vmax.f32 %v699, 0.0
    %v710 = vld [vmem:[#allocation2] sm:$0xff]
    %v711 = vld [vmem:[#allocation2 + $0x8] sm:$0xff]
    %v712 = vld [vmem:[#allocation2 + $0x10] sm:$0xff]
    %v713 = vld [vmem:[#allocation2 + $0x18] sm:$0xff]
    %v714 = vld [vmem:[#allocation2 + $0x20] sm:$0xff]
    %v715 = vld [vmem:[#allocation2 + $0x28] sm:$0xff]
    %v716 = vld [vmem:[#allocation2 + $0x30] sm:$0xff]
    %v717 = vld [vmem:[#allocation2 + $0x38] sm:$0xff]
    %v718 = vld [vmem:[#allocation2 + $0x40] sm:$0xff]
    %v719 = vld [vmem:[#allocation2 + $0x48] sm:$0xff]
    %v720 = vld [vmem:[#allocation2 + $0x50] sm:$0xff]
    %v721 = vld [vmem:[#allocation2 + $0x58] sm:$0xff]
    %v722 = vld [vmem:[#allocation2 + $0x60] sm:$0xff]
    %v723 = vld [vmem:[#allocation2 + $0x68] sm:$0xff]
    %v724 = vld [vmem:[#allocation2 + $0x70] sm:$0xff]
    %v725 = vld [vmem:[#allocation2 + $0x78] sm:$0xff]
    %v726 = vld [vmem:[#allocation2 + $0x80] sm:$0xff]
    %v727 = vld [vmem:[#allocation2 + $0x88] sm:$0xff]
    %v728 = vld [vmem:[#allocation2 + $0x90] sm:$0xff]
    %v729 = vld [vmem:[#allocation2 + $0x98] sm:$0xff]
    %v730 = vld [vmem:[#allocation2 + $0xa0] sm:$0xff]
    %v731 = vld [vmem:[#allocation2 + $0xa8] sm:$0xff]
    %v732 = vld [vmem:[#allocation2 + $0xb0] sm:$0xff]
    %v733 = vld [vmem:[#allocation2 + $0xb8] sm:$0xff]
    %v734 = vld [vmem:[#allocation2 + $0xc0] sm:$0xff]
    %v735 = vld [vmem:[#allocation2 + $0xc8] sm:$0xff]
    %v736 = vld [vmem:[#allocation2 + $0xd0] sm:$0xff]
    %v737 = vld [vmem:[#allocation2 + $0xd8] sm:$0xff]
    %v738 = vld [vmem:[#allocation2 + $0xe0] sm:$0xff]
    %v739 = vld [vmem:[#allocation2 + $0xe8] sm:$0xff]
    %v740 = vld [vmem:[#allocation2 + $0xf0] sm:$0xff]
    %v741 = vld [vmem:[#allocation2 + $0xf8] sm:$0xff]
    %v752 = vrot.slane %v700, 1
    %v753 = vrot.slane %v701, 1
    %v754 = vsel %vm87, %v752, %v753
    %v755 = vrot.slane %v702, 1
    %v756 = vsel %vm87, %v753, %v755
    %v757 = vrot.slane %v703, 1
    %v758 = vsel %vm87, %v755, %v757
    %v759 = vrot.slane %v704, 1
    %v760 = vsel %vm87, %v757, %v759
    %v761 = vrot.slane %v705, 1
    %v762 = vrot.slane %v706, 1
    %v763 = vsel %vm87, %v761, %v762
    %v764 = vrot.slane %v707, 1
    %v765 = vsel %vm87, %v762, %v764
    %v766 = vrot.slane %v708, 1
    %v767 = vsel %vm87, %v764, %v766
    %v768 = vrot.slane %v709, 1
    %v769 = vsel %vm87, %v766, %v768
    %s778 = scalar_lea.vmem [#allocation2], 256
    %v779 = vld [vmem:[%s778] sm:$0xff]
    %v780 = vld [vmem:[%s778 + $0x8] sm:$0xff]
    %v781 = vld [vmem:[%s778 + $0x10] sm:$0xff]
    %v782 = vld [vmem:[%s778 + $0x18] sm:$0xff]
    %v783 = vld [vmem:[%s778 + $0x20] sm:$0xff]
    %v784 = vld [vmem:[%s778 + $0x28] sm:$0xff]
    %v785 = vld [vmem:[%s778 + $0x30] sm:$0xff]
    %v786 = vld [vmem:[%s778 + $0x38] sm:$0xff]
    %v787 = vld [vmem:[%s778 + $0x40] sm:$0xff]
    %v788 = vld [vmem:[%s778 + $0x48] sm:$0xff]
    %v789 = vld [vmem:[%s778 + $0x50] sm:$0xff]
    %v790 = vld [vmem:[%s778 + $0x58] sm:$0xff]
    %v791 = vld [vmem:[%s778 + $0x60] sm:$0xff]
    %v792 = vld [vmem:[%s778 + $0x68] sm:$0xff]
    %v793 = vld [vmem:[%s778 + $0x70] sm:$0xff]
    %v794 = vld [vmem:[%s778 + $0x78] sm:$0xff]
    %v795 = vld [vmem:[%s778 + $0x80] sm:$0xff]
    %v796 = vld [vmem:[%s778 + $0x88] sm:$0xff]
    %v797 = vld [vmem:[%s778 + $0x90] sm:$0xff]
    %v798 = vld [vmem:[%s778 + $0x98] sm:$0xff]
    %v799 = vld [vmem:[%s778 + $0xa0] sm:$0xff]
    %v800 = vld [vmem:[%s778 + $0xa8] sm:$0xff]
    %v801 = vld [vmem:[%s778 + $0xb0] sm:$0xff]
    %v802 = vld [vmem:[%s778 + $0xb8] sm:$0xff]
    %v803 = vld [vmem:[%s778 + $0xc0] sm:$0xff]
    %v804 = vld [vmem:[%s778 + $0xc8] sm:$0xff]
    %v805 = vld [vmem:[%s778 + $0xd0] sm:$0xff]
    %v806 = vld [vmem:[%s778 + $0xd8] sm:$0xff]
    %v807 = vld [vmem:[%s778 + $0xe0] sm:$0xff]
    %v808 = vld [vmem:[%s778 + $0xe8] sm:$0xff]
    %v809 = vld [vmem:[%s778 + $0xf0] sm:$0xff]
    %v810 = vld [vmem:[%s778 + $0xf8] sm:$0xff]
    %811 = vmatprep.subr.mxu0 %v810
    %812 = vmatpush1.msra.mxu0 %v809
    %813 = vmatprep.subr.mxu0 %v808
    %814 = vmatpush1.msra.mxu0 %v807
    %815 = vmatprep.subr.mxu0 %v806
    %816 = vmatpush1.msra.mxu0 %v805
    %817 = vmatprep.subr.mxu0 %v804
    %818 = vmatpush1.msra.mxu0 %v803
    %819 = vmatprep.subr.mxu0 %v802
    %820 = vmatpush1.msra.mxu0 %v801
    %821 = vmatprep.subr.mxu0 %v800
    %822 = vmatpush1.msra.mxu0 %v799
    %823 = vmatprep.subr.mxu0 %v798
    %824 = vmatpush1.msra.mxu0 %v797
    %825 = vmatprep.subr.mxu0 %v796
    %826 = vmatpush1.msra.mxu0 %v795
    %827 = vmatprep.subr.mxu0 %v794
    %828 = vmatpush1.msra.mxu0 %v793
    %829 = vmatprep.subr.mxu0 %v792
    %830 = vmatpush1.msra.mxu0 %v791
    %831 = vmatprep.subr.mxu0 %v790
    %832 = vmatpush1.msra.mxu0 %v789
    %833 = vmatprep.subr.mxu0 %v788
    %834 = vmatpush1.msra.mxu0 %v787
    %835 = vmatprep.subr.mxu0 %v786
    %836 = vmatpush1.msra.mxu0 %v785
    %837 = vmatprep.subr.mxu0 %v784
    %838 = vmatpush1.msra.mxu0 %v783
    %839 = vmatprep.subr.mxu0 %v782
    %840 = vmatpush1.msra.mxu0 %v781
    %841 = vmatprep.subr.mxu0 %v780
    %842 = vmatpush1.msra.mxu0 %v779
    %843 = vmatprep.subr.mxu0 0.0
    %844 = vmatpush2.msra.mxu0 0.0
    %845 = vmatprep.subr.mxu0 0.0
    %846 = vmatpush2.msra.mxu0 0.0
    %847 = vmatprep.subr.mxu0 0.0
    %848 = vmatpush2.msra.mxu0 0.0
    %849 = vmatprep.subr.mxu0 0.0
    %850 = vmatpush2.msra.mxu0 0.0
    %851 = vmatprep.subr.mxu0 0.0
    %852 = vmatpush2.msra.mxu0 0.0
    %853 = vmatprep.subr.mxu0 0.0
    %854 = vmatpush2.msra.mxu0 0.0
    %855 = vmatprep.subr.mxu0 0.0
    %856 = vmatpush2.msra.mxu0 0.0
    %857 = vmatprep.subr.mxu0 0.0
    %858 = vmatpush2.msra.mxu0 0.0
    %859 = vmatprep.subr.mxu0 0.0
    %860 = vmatpush2.msra.mxu0 0.0
    %861 = vmatprep.subr.mxu0 0.0
    %862 = vmatpush2.msra.mxu0 0.0
    %863 = vmatprep.subr.mxu0 0.0
    %864 = vmatpush2.msra.mxu0 0.0
    %865 = vmatprep.subr.mxu0 0.0
    %866 = vmatpush2.msra.mxu0 0.0
    %867 = vmatprep.subr.mxu0 0.0
    %868 = vmatpush2.msra.mxu0 0.0
    %869 = vmatprep.subr.mxu0 0.0
    %870 = vmatpush2.msra.mxu0 0.0
    %871 = vmatprep.subr.mxu0 0.0
    %872 = vmatpush2.msra.mxu0 0.0
    %873 = vmatprep.subr.mxu0 0.0
    %874 = vmatpush2.msra.mxu0 0.0
    %875 = vmatprep.mubr.f32.mxu0 0.0
    %876 = vmatmul.mubr.f32.gmra.mxu0 %v754
    %v877 = vpop.f32.mrf.mxu0
    %v878 = vadd.f32 0.0, %v877
    %v879 = vpop.f32.mrf.mxu0
    %v880 = vadd.f32 0.0, %v879
    %881 = vmatprep.mubr.f32.mxu0 0.0
    %882 = vmatmul.mubr.f32.gmra.mxu0 %v756
    %v883 = vpop.f32.mrf.mxu0
    %v884 = vadd.f32 0.0, %v883
    %v885 = vpop.f32.mrf.mxu0
    %v886 = vadd.f32 0.0, %v885
    %887 = vmatprep.mubr.f32.mxu0 0.0
    %888 = vmatmul.mubr.f32.gmra.mxu0 %v758
    %v889 = vpop.f32.mrf.mxu0
    %v890 = vadd.f32 0.0, %v889
    %v891 = vpop.f32.mrf.mxu0
    %v892 = vadd.f32 0.0, %v891
    %893 = vmatprep.mubr.f32.mxu0 0.0
    %894 = vmatmul.mubr.f32.gmra.mxu0 %v760
    %v895 = vpop.f32.mrf.mxu0
    %v896 = vadd.f32 0.0, %v895
    %v897 = vpop.f32.mrf.mxu0
    %v898 = vadd.f32 0.0, %v897
    %899 = vmatprep.mubr.f32.mxu0 0.0
    %900 = vmatmul.mubr.f32.gmra.mxu0 %v763
    %v901 = vpop.f32.mrf.mxu0
    %v902 = vadd.f32 0.0, %v901
    %v903 = vpop.f32.mrf.mxu0
    %v904 = vadd.f32 0.0, %v903
    %905 = vmatprep.mubr.f32.mxu0 0.0
    %906 = vmatmul.mubr.f32.gmra.mxu0 %v765
    %v907 = vpop.f32.mrf.mxu0
    %v908 = vadd.f32 0.0, %v907
    %v909 = vpop.f32.mrf.mxu0
    %v910 = vadd.f32 0.0, %v909
    %911 = vmatprep.mubr.f32.mxu0 0.0
    %912 = vmatmul.mubr.f32.gmra.mxu0 %v767
    %v913 = vpop.f32.mrf.mxu0
    %v914 = vadd.f32 0.0, %v913
    %v915 = vpop.f32.mrf.mxu0
    %v916 = vadd.f32 0.0, %v915
    %917 = vmatprep.mubr.f32.mxu0 0.0
    %918 = vmatmul.mubr.f32.gmra.mxu0 %v769
    %v919 = vpop.f32.mrf.mxu0
    %v920 = vadd.f32 0.0, %v919
    %v921 = vpop.f32.mrf.mxu0
    %v922 = vadd.f32 0.0, %v921
    %923 = vdwg.mxu0
    %924 = vmatprep.subr.mxu0 %v741
    %925 = vmatpush1.msra.mxu0 %v740
    %926 = vmatprep.subr.mxu0 %v739
    %927 = vmatpush1.msra.mxu0 %v738
    %928 = vmatprep.subr.mxu0 %v737
    %929 = vmatpush1.msra.mxu0 %v736
    %930 = vmatprep.subr.mxu0 %v735
    %931 = vmatpush1.msra.mxu0 %v734
    %932 = vmatprep.subr.mxu0 %v733
    %933 = vmatpush1.msra.mxu0 %v732
    %934 = vmatprep.subr.mxu0 %v731
    %935 = vmatpush1.msra.mxu0 %v730
    %936 = vmatprep.subr.mxu0 %v729
    %937 = vmatpush1.msra.mxu0 %v728
    %938 = vmatprep.subr.mxu0 %v727
    %939 = vmatpush1.msra.mxu0 %v726
    %940 = vmatprep.subr.mxu0 %v725
    %941 = vmatpush1.msra.mxu0 %v724
    %942 = vmatprep.subr.mxu0 %v723
    %943 = vmatpush1.msra.mxu0 %v722
    %944 = vmatprep.subr.mxu0 %v721
    %945 = vmatpush1.msra.mxu0 %v720
    %946 = vmatprep.subr.mxu0 %v719
    %947 = vmatpush1.msra.mxu0 %v718
    %948 = vmatprep.subr.mxu0 %v717
    %949 = vmatpush1.msra.mxu0 %v716
    %950 = vmatprep.subr.mxu0 %v715
    %951 = vmatpush1.msra.mxu0 %v714
    %952 = vmatprep.subr.mxu0 %v713
    %953 = vmatpush1.msra.mxu0 %v712
    %954 = vmatprep.subr.mxu0 %v711
    %955 = vmatpush1.msra.mxu0 %v710
    %956 = vmatprep.subr.mxu0 0.0
    %957 = vmatpush2.msra.mxu0 0.0
    %958 = vmatprep.subr.mxu0 0.0
    %959 = vmatpush2.msra.mxu0 0.0
    %960 = vmatprep.subr.mxu0 0.0
    %961 = vmatpush2.msra.mxu0 0.0
    %962 = vmatprep.subr.mxu0 0.0
    %963 = vmatpush2.msra.mxu0 0.0
    %964 = vmatprep.subr.mxu0 0.0
    %965 = vmatpush2.msra.mxu0 0.0
    %966 = vmatprep.subr.mxu0 0.0
    %967 = vmatpush2.msra.mxu0 0.0
    %968 = vmatprep.subr.mxu0 0.0
    %969 = vmatpush2.msra.mxu0 0.0
    %970 = vmatprep.subr.mxu0 0.0
    %971 = vmatpush2.msra.mxu0 0.0
    %972 = vmatprep.subr.mxu0 0.0
    %973 = vmatpush2.msra.mxu0 0.0
    %974 = vmatprep.subr.mxu0 0.0
    %975 = vmatpush2.msra.mxu0 0.0
    %976 = vmatprep.subr.mxu0 0.0
    %977 = vmatpush2.msra.mxu0 0.0
    %978 = vmatprep.subr.mxu0 0.0
    %979 = vmatpush2.msra.mxu0 0.0
    %980 = vmatprep.subr.mxu0 0.0
    %981 = vmatpush2.msra.mxu0 0.0
    %982 = vmatprep.subr.mxu0 0.0
    %983 = vmatpush2.msra.mxu0 0.0
    %984 = vmatprep.subr.mxu0 0.0
    %985 = vmatpush2.msra.mxu0 0.0
    %986 = vmatprep.subr.mxu0 0.0
    %987 = vmatpush2.msra.mxu0 0.0
    %988 = vmatprep.mubr.f32.mxu0 0.0
    %989 = vmatmul.mubr.f32.gmra.mxu0 %v700
    %v990 = vpop.f32.mrf.mxu0
    %v991 = vadd.f32 %v878, %v990
    %v992 = vpop.f32.mrf.mxu0
    %v993 = vadd.f32 %v880, %v992
    %994 = vmatprep.mubr.f32.mxu0 0.0
    %995 = vmatmul.mubr.f32.gmra.mxu0 %v701
    %v996 = vpop.f32.mrf.mxu0
    %v997 = vadd.f32 %v884, %v996
    %v998 = vpop.f32.mrf.mxu0
    %v999 = vadd.f32 %v886, %v998
    %1000 = vmatprep.mubr.f32.mxu0 0.0
    %1001 = vmatmul.mubr.f32.gmra.mxu0 %v702
    %v1002 = vpop.f32.mrf.mxu0
    %v1003 = vadd.f32 %v890, %v1002
    %v1004 = vpop.f32.mrf.mxu0
    %v1005 = vadd.f32 %v892, %v1004
    %1006 = vmatprep.mubr.f32.mxu0 0.0
    %1007 = vmatmul.mubr.f32.gmra.mxu0 %v703
    %v1008 = vpop.f32.mrf.mxu0
    %v1009 = vadd.f32 %v896, %v1008
    %v1010 = vpop.f32.mrf.mxu0
    %v1011 = vadd.f32 %v898, %v1010
    %1012 = vmatprep.mubr.f32.mxu0 0.0
    %1013 = vmatmul.mubr.f32.gmra.mxu0 %v705
    %v1014 = vpop.f32.mrf.mxu0
    %v1015 = vadd.f32 %v902, %v1014
    %v1016 = vpop.f32.mrf.mxu0
    %v1017 = vadd.f32 %v904, %v1016
    %1018 = vmatprep.mubr.f32.mxu0 0.0
    %1019 = vmatmul.mubr.f32.gmra.mxu0 %v706
    %v1020 = vpop.f32.mrf.mxu0
    %v1021 = vadd.f32 %v908, %v1020
    %v1022 = vpop.f32.mrf.mxu0
    %v1023 = vadd.f32 %v910, %v1022
    %1024 = vmatprep.mubr.f32.mxu0 0.0
    %1025 = vmatmul.mubr.f32.gmra.mxu0 %v707
    %v1026 = vpop.f32.mrf.mxu0
    %v1027 = vadd.f32 %v914, %v1026
    %v1028 = vpop.f32.mrf.mxu0
    %v1029 = vadd.f32 %v916, %v1028
    %1030 = vmatprep.mubr.f32.mxu0 0.0
    %1031 = vmatmul.mubr.f32.gmra.mxu0 %v708
    %v1032 = vpop.f32.mrf.mxu0
    %v1033 = vadd.f32 %v920, %v1032
    %v1034 = vpop.f32.mrf.mxu0
    %v1035 = vadd.f32 %v922, %v1034
    %1036 = vdwg.mxu0
    %v1037 = vrot.slane %v700, 2
    %v1038 = vrot.slane %v701, 2
    %v1039 = vsel %vm140, %v1037, %v1038
    %v1040 = vrot.slane %v702, 2
    %v1041 = vsel %vm140, %v1038, %v1040
    %v1042 = vrot.slane %v703, 2
    %v1043 = vsel %vm140, %v1040, %v1042
    %v1044 = vrot.slane %v704, 2
    %v1045 = vsel %vm140, %v1042, %v1044
    %v1046 = vrot.slane %v705, 2
    %v1047 = vrot.slane %v706, 2
    %v1048 = vsel %vm140, %v1046, %v1047
    %v1049 = vrot.slane %v707, 2
    %v1050 = vsel %vm140, %v1047, %v1049
    %v1051 = vrot.slane %v708, 2
    %v1052 = vsel %vm140, %v1049, %v1051
    %v1053 = vrot.slane %v709, 2
    %v1054 = vsel %vm140, %v1051, %v1053
    %s1063 = scalar_lea.vmem [#allocation2], 512
    %v1064 = vld [vmem:[%s1063] sm:$0xff]
    %v1065 = vld [vmem:[%s1063 + $0x8] sm:$0xff]
    %v1066 = vld [vmem:[%s1063 + $0x10] sm:$0xff]
    %v1067 = vld [vmem:[%s1063 + $0x18] sm:$0xff]
    %v1068 = vld [vmem:[%s1063 + $0x20] sm:$0xff]
    %v1069 = vld [vmem:[%s1063 + $0x28] sm:$0xff]
    %v1070 = vld [vmem:[%s1063 + $0x30] sm:$0xff]
    %v1071 = vld [vmem:[%s1063 + $0x38] sm:$0xff]
    %v1072 = vld [vmem:[%s1063 + $0x40] sm:$0xff]
    %v1073 = vld [vmem:[%s1063 + $0x48] sm:$0xff]
    %v1074 = vld [vmem:[%s1063 + $0x50] sm:$0xff]
    %v1075 = vld [vmem:[%s1063 + $0x58] sm:$0xff]
    %v1076 = vld [vmem:[%s1063 + $0x60] sm:$0xff]
    %v1077 = vld [vmem:[%s1063 + $0x68] sm:$0xff]
    %v1078 = vld [vmem:[%s1063 + $0x70] sm:$0xff]
    %v1079 = vld [vmem:[%s1063 + $0x78] sm:$0xff]
    %v1080 = vld [vmem:[%s1063 + $0x80] sm:$0xff]
    %v1081 = vld [vmem:[%s1063 + $0x88] sm:$0xff]
    %v1082 = vld [vmem:[%s1063 + $0x90] sm:$0xff]
    %v1083 = vld [vmem:[%s1063 + $0x98] sm:$0xff]
    %v1084 = vld [vmem:[%s1063 + $0xa0] sm:$0xff]
    %v1085 = vld [vmem:[%s1063 + $0xa8] sm:$0xff]
    %v1086 = vld [vmem:[%s1063 + $0xb0] sm:$0xff]
    %v1087 = vld [vmem:[%s1063 + $0xb8] sm:$0xff]
    %v1088 = vld [vmem:[%s1063 + $0xc0] sm:$0xff]
    %v1089 = vld [vmem:[%s1063 + $0xc8] sm:$0xff]
    %v1090 = vld [vmem:[%s1063 + $0xd0] sm:$0xff]
    %v1091 = vld [vmem:[%s1063 + $0xd8] sm:$0xff]
    %v1092 = vld [vmem:[%s1063 + $0xe0] sm:$0xff]
    %v1093 = vld [vmem:[%s1063 + $0xe8] sm:$0xff]
    %v1094 = vld [vmem:[%s1063 + $0xf0] sm:$0xff]
    %v1095 = vld [vmem:[%s1063 + $0xf8] sm:$0xff]
    %1096 = vmatprep.subr.mxu0 %v1095
    %1097 = vmatpush1.msra.mxu0 %v1094
    %1098 = vmatprep.subr.mxu0 %v1093
    %1099 = vmatpush1.msra.mxu0 %v1092
    %1100 = vmatprep.subr.mxu0 %v1091
    %1101 = vmatpush1.msra.mxu0 %v1090
    %1102 = vmatprep.subr.mxu0 %v1089
    %1103 = vmatpush1.msra.mxu0 %v1088
    %1104 = vmatprep.subr.mxu0 %v1087
    %1105 = vmatpush1.msra.mxu0 %v1086
    %1106 = vmatprep.subr.mxu0 %v1085
    %1107 = vmatpush1.msra.mxu0 %v1084
    %1108 = vmatprep.subr.mxu0 %v1083
    %1109 = vmatpush1.msra.mxu0 %v1082
    %1110 = vmatprep.subr.mxu0 %v1081
    %1111 = vmatpush1.msra.mxu0 %v1080
    %1112 = vmatprep.subr.mxu0 %v1079
    %1113 = vmatpush1.msra.mxu0 %v1078
    %1114 = vmatprep.subr.mxu0 %v1077
    %1115 = vmatpush1.msra.mxu0 %v1076
    %1116 = vmatprep.subr.mxu0 %v1075
    %1117 = vmatpush1.msra.mxu0 %v1074
    %1118 = vmatprep.subr.mxu0 %v1073
    %1119 = vmatpush1.msra.mxu0 %v1072
    %1120 = vmatprep.subr.mxu0 %v1071
    %1121 = vmatpush1.msra.mxu0 %v1070
    %1122 = vmatprep.subr.mxu0 %v1069
    %1123 = vmatpush1.msra.mxu0 %v1068
    %1124 = vmatprep.subr.mxu0 %v1067
    %1125 = vmatpush1.msra.mxu0 %v1066
    %1126 = vmatprep.subr.mxu0 %v1065
    %1127 = vmatpush1.msra.mxu0 %v1064
    %1128 = vmatprep.subr.mxu0 0.0
    %1129 = vmatpush2.msra.mxu0 0.0
    %1130 = vmatprep.subr.mxu0 0.0
    %1131 = vmatpush2.msra.mxu0 0.0
    %1132 = vmatprep.subr.mxu0 0.0
    %1133 = vmatpush2.msra.mxu0 0.0
    %1134 = vmatprep.subr.mxu0 0.0
    %1135 = vmatpush2.msra.mxu0 0.0
    %1136 = vmatprep.subr.mxu0 0.0
    %1137 = vmatpush2.msra.mxu0 0.0
    %1138 = vmatprep.subr.mxu0 0.0
    %1139 = vmatpush2.msra.mxu0 0.0
    %1140 = vmatprep.subr.mxu0 0.0
    %1141 = vmatpush2.msra.mxu0 0.0
    %1142 = vmatprep.subr.mxu0 0.0
    %1143 = vmatpush2.msra.mxu0 0.0
    %1144 = vmatprep.subr.mxu0 0.0
    %1145 = vmatpush2.msra.mxu0 0.0
    %1146 = vmatprep.subr.mxu0 0.0
    %1147 = vmatpush2.msra.mxu0 0.0
    %1148 = vmatprep.subr.mxu0 0.0
    %1149 = vmatpush2.msra.mxu0 0.0
    %1150 = vmatprep.subr.mxu0 0.0
    %1151 = vmatpush2.msra.mxu0 0.0
    %1152 = vmatprep.subr.mxu0 0.0
    %1153 = vmatpush2.msra.mxu0 0.0
    %1154 = vmatprep.subr.mxu0 0.0
    %1155 = vmatpush2.msra.mxu0 0.0
    %1156 = vmatprep.subr.mxu0 0.0
    %1157 = vmatpush2.msra.mxu0 0.0
    %1158 = vmatprep.subr.mxu0 0.0
    %1159 = vmatpush2.msra.mxu0 0.0
    %1160 = vmatprep.mubr.f32.mxu0 0.0
    %1161 = vmatmul.mubr.f32.gmra.mxu0 %v1039
    %v1162 = vpop.f32.mrf.mxu0
    %v1163 = vadd.f32 0.0, %v1162
    %v1164 = vpop.f32.mrf.mxu0
    %v1165 = vadd.f32 0.0, %v1164
    %1166 = vmatprep.mubr.f32.mxu0 0.0
    %1167 = vmatmul.mubr.f32.gmra.mxu0 %v1041
    %v1168 = vpop.f32.mrf.mxu0
    %v1169 = vadd.f32 0.0, %v1168
    %v1170 = vpop.f32.mrf.mxu0
    %v1171 = vadd.f32 0.0, %v1170
    %1172 = vmatprep.mubr.f32.mxu0 0.0
    %1173 = vmatmul.mubr.f32.gmra.mxu0 %v1043
    %v1174 = vpop.f32.mrf.mxu0
    %v1175 = vadd.f32 0.0, %v1174
    %v1176 = vpop.f32.mrf.mxu0
    %v1177 = vadd.f32 0.0, %v1176
    %1178 = vmatprep.mubr.f32.mxu0 0.0
    %1179 = vmatmul.mubr.f32.gmra.mxu0 %v1045
    %v1180 = vpop.f32.mrf.mxu0
    %v1181 = vadd.f32 0.0, %v1180
    %v1182 = vpop.f32.mrf.mxu0
    %v1183 = vadd.f32 0.0, %v1182
    %1184 = vmatprep.mubr.f32.mxu0 0.0
    %1185 = vmatmul.mubr.f32.gmra.mxu0 %v1048
    %v1186 = vpop.f32.mrf.mxu0
    %v1187 = vadd.f32 0.0, %v1186
    %v1188 = vpop.f32.mrf.mxu0
    %v1189 = vadd.f32 0.0, %v1188
    %1190 = vmatprep.mubr.f32.mxu0 0.0
    %1191 = vmatmul.mubr.f32.gmra.mxu0 %v1050
    %v1192 = vpop.f32.mrf.mxu0
    %v1193 = vadd.f32 0.0, %v1192
    %v1194 = vpop.f32.mrf.mxu0
    %v1195 = vadd.f32 0.0, %v1194
    %1196 = vmatprep.mubr.f32.mxu0 0.0
    %1197 = vmatmul.mubr.f32.gmra.mxu0 %v1052
    %v1198 = vpop.f32.mrf.mxu0
    %v1199 = vadd.f32 0.0, %v1198
    %v1200 = vpop.f32.mrf.mxu0
    %v1201 = vadd.f32 0.0, %v1200
    %1202 = vmatprep.mubr.f32.mxu0 0.0
    %1203 = vmatmul.mubr.f32.gmra.mxu0 %v1054
    %v1204 = vpop.f32.mrf.mxu0
    %v1205 = vadd.f32 0.0, %v1204
    %v1206 = vpop.f32.mrf.mxu0
    %v1207 = vadd.f32 0.0, %v1206
    %1208 = vdwg.mxu0
    %v1209 = vadd.f32 %v991, %v1163
    %v1210 = vadd.f32 %v993, %v1165
    %v1211 = vadd.f32 %v997, %v1169
    %v1212 = vadd.f32 %v999, %v1171
    %v1213 = vadd.f32 %v1003, %v1175
    %v1214 = vadd.f32 %v1005, %v1177
    %v1215 = vadd.f32 %v1009, %v1181
    %v1216 = vadd.f32 %v1011, %v1183
    %v1217 = vadd.f32 %v1015, %v1187
    %v1218 = vadd.f32 %v1017, %v1189
    %v1219 = vadd.f32 %v1021, %v1193
    %v1220 = vadd.f32 %v1023, %v1195
    %v1221 = vadd.f32 %v1027, %v1199
    %v1222 = vadd.f32 %v1029, %v1201
    %v1223 = vadd.f32 %v1033, %v1205
    %v1224 = vadd.f32 %v1035, %v1207
    %v1225 = vrot.slane %v700, 3
    %v1226 = vrot.slane %v701, 3
    %v1227 = vsel %vm193, %v1225, %v1226
    %v1228 = vrot.slane %v702, 3
    %v1229 = vsel %vm193, %v1226, %v1228
    %v1230 = vrot.slane %v703, 3
    %v1231 = vsel %vm193, %v1228, %v1230
    %v1232 = vrot.slane %v704, 3
    %v1233 = vsel %vm193, %v1230, %v1232
    %v1234 = vrot.slane %v705, 3
    %v1235 = vrot.slane %v706, 3
    %v1236 = vsel %vm193, %v1234, %v1235
    %v1237 = vrot.slane %v707, 3
    %v1238 = vsel %vm193, %v1235, %v1237
    %v1239 = vrot.slane %v708, 3
    %v1240 = vsel %vm193, %v1237, %v1239
    %v1241 = vrot.slane %v709, 3
    %v1242 = vsel %vm193, %v1239, %v1241
    %s1251 = scalar_lea.vmem [#allocation2], 768
    %v1252 = vld [vmem:[%s1251] sm:$0xff]
    %v1253 = vld [vmem:[%s1251 + $0x8] sm:$0xff]
    %v1254 = vld [vmem:[%s1251 + $0x10] sm:$0xff]
    %v1255 = vld [vmem:[%s1251 + $0x18] sm:$0xff]
    %v1256 = vld [vmem:[%s1251 + $0x20] sm:$0xff]
    %v1257 = vld [vmem:[%s1251 + $0x28] sm:$0xff]
    %v1258 = vld [vmem:[%s1251 + $0x30] sm:$0xff]
    %v1259 = vld [vmem:[%s1251 + $0x38] sm:$0xff]
    %v1260 = vld [vmem:[%s1251 + $0x40] sm:$0xff]
    %v1261 = vld [vmem:[%s1251 + $0x48] sm:$0xff]
    %v1262 = vld [vmem:[%s1251 + $0x50] sm:$0xff]
    %v1263 = vld [vmem:[%s1251 + $0x58] sm:$0xff]
    %v1264 = vld [vmem:[%s1251 + $0x60] sm:$0xff]
    %v1265 = vld [vmem:[%s1251 + $0x68] sm:$0xff]
    %v1266 = vld [vmem:[%s1251 + $0x70] sm:$0xff]
    %v1267 = vld [vmem:[%s1251 + $0x78] sm:$0xff]
    %v1268 = vld [vmem:[%s1251 + $0x80] sm:$0xff]
    %v1269 = vld [vmem:[%s1251 + $0x88] sm:$0xff]
    %v1270 = vld [vmem:[%s1251 + $0x90] sm:$0xff]
    %v1271 = vld [vmem:[%s1251 + $0x98] sm:$0xff]
    %v1272 = vld [vmem:[%s1251 + $0xa0] sm:$0xff]
    %v1273 = vld [vmem:[%s1251 + $0xa8] sm:$0xff]
    %v1274 = vld [vmem:[%s1251 + $0xb0] sm:$0xff]
    %v1275 = vld [vmem:[%s1251 + $0xb8] sm:$0xff]
    %v1276 = vld [vmem:[%s1251 + $0xc0] sm:$0xff]
    %v1277 = vld [vmem:[%s1251 + $0xc8] sm:$0xff]
    %v1278 = vld [vmem:[%s1251 + $0xd0] sm:$0xff]
    %v1279 = vld [vmem:[%s1251 + $0xd8] sm:$0xff]
    %v1280 = vld [vmem:[%s1251 + $0xe0] sm:$0xff]
    %v1281 = vld [vmem:[%s1251 + $0xe8] sm:$0xff]
    %v1282 = vld [vmem:[%s1251 + $0xf0] sm:$0xff]
    %v1283 = vld [vmem:[%s1251 + $0xf8] sm:$0xff]
    %1284 = vmatprep.subr.mxu0 %v1283
    %1285 = vmatpush1.msra.mxu0 %v1282
    %1286 = vmatprep.subr.mxu0 %v1281
    %1287 = vmatpush1.msra.mxu0 %v1280
    %1288 = vmatprep.subr.mxu0 %v1279
    %1289 = vmatpush1.msra.mxu0 %v1278
    %1290 = vmatprep.subr.mxu0 %v1277
    %1291 = vmatpush1.msra.mxu0 %v1276
    %1292 = vmatprep.subr.mxu0 %v1275
    %1293 = vmatpush1.msra.mxu0 %v1274
    %1294 = vmatprep.subr.mxu0 %v1273
    %1295 = vmatpush1.msra.mxu0 %v1272
    %1296 = vmatprep.subr.mxu0 %v1271
    %1297 = vmatpush1.msra.mxu0 %v1270
    %1298 = vmatprep.subr.mxu0 %v1269
    %1299 = vmatpush1.msra.mxu0 %v1268
    %1300 = vmatprep.subr.mxu0 %v1267
    %1301 = vmatpush1.msra.mxu0 %v1266
    %1302 = vmatprep.subr.mxu0 %v1265
    %1303 = vmatpush1.msra.mxu0 %v1264
    %1304 = vmatprep.subr.mxu0 %v1263
    %1305 = vmatpush1.msra.mxu0 %v1262
    %1306 = vmatprep.subr.mxu0 %v1261
    %1307 = vmatpush1.msra.mxu0 %v1260
    %1308 = vmatprep.subr.mxu0 %v1259
    %1309 = vmatpush1.msra.mxu0 %v1258
    %1310 = vmatprep.subr.mxu0 %v1257
    %1311 = vmatpush1.msra.mxu0 %v1256
    %1312 = vmatprep.subr.mxu0 %v1255
    %1313 = vmatpush1.msra.mxu0 %v1254
    %1314 = vmatprep.subr.mxu0 %v1253
    %1315 = vmatpush1.msra.mxu0 %v1252
    %1316 = vmatprep.subr.mxu0 0.0
    %1317 = vmatpush2.msra.mxu0 0.0
    %1318 = vmatprep.subr.mxu0 0.0
    %1319 = vmatpush2.msra.mxu0 0.0
    %1320 = vmatprep.subr.mxu0 0.0
    %1321 = vmatpush2.msra.mxu0 0.0
    %1322 = vmatprep.subr.mxu0 0.0
    %1323 = vmatpush2.msra.mxu0 0.0
    %1324 = vmatprep.subr.mxu0 0.0
    %1325 = vmatpush2.msra.mxu0 0.0
    %1326 = vmatprep.subr.mxu0 0.0
    %1327 = vmatpush2.msra.mxu0 0.0
    %1328 = vmatprep.subr.mxu0 0.0
    %1329 = vmatpush2.msra.mxu0 0.0
    %1330 = vmatprep.subr.mxu0 0.0
    %1331 = vmatpush2.msra.mxu0 0.0
    %1332 = vmatprep.subr.mxu0 0.0
    %1333 = vmatpush2.msra.mxu0 0.0
    %1334 = vmatprep.subr.mxu0 0.0
    %1335 = vmatpush2.msra.mxu0 0.0
    %1336 = vmatprep.subr.mxu0 0.0
    %1337 = vmatpush2.msra.mxu0 0.0
    %1338 = vmatprep.subr.mxu0 0.0
    %1339 = vmatpush2.msra.mxu0 0.0
    %1340 = vmatprep.subr.mxu0 0.0
    %1341 = vmatpush2.msra.mxu0 0.0
    %1342 = vmatprep.subr.mxu0 0.0
    %1343 = vmatpush2.msra.mxu0 0.0
    %1344 = vmatprep.subr.mxu0 0.0
    %1345 = vmatpush2.msra.mxu0 0.0
    %1346 = vmatprep.subr.mxu0 0.0
    %1347 = vmatpush2.msra.mxu0 0.0
    %1348 = vmatprep.mubr.f32.mxu0 0.0
    %1349 = vmatmul.mubr.f32.gmra.mxu0 %v1227
    %v1350 = vpop.f32.mrf.mxu0
    %v1351 = vadd.f32 0.0, %v1350
    %v1352 = vpop.f32.mrf.mxu0
    %v1353 = vadd.f32 0.0, %v1352
    %1354 = vmatprep.mubr.f32.mxu0 0.0
    %1355 = vmatmul.mubr.f32.gmra.mxu0 %v1229
    %v1356 = vpop.f32.mrf.mxu0
    %v1357 = vadd.f32 0.0, %v1356
    %v1358 = vpop.f32.mrf.mxu0
    %v1359 = vadd.f32 0.0, %v1358
    %1360 = vmatprep.mubr.f32.mxu0 0.0
    %1361 = vmatmul.mubr.f32.gmra.mxu0 %v1231
    %v1362 = vpop.f32.mrf.mxu0
    %v1363 = vadd.f32 0.0, %v1362
    %v1364 = vpop.f32.mrf.mxu0
    %v1365 = vadd.f32 0.0, %v1364
    %1366 = vmatprep.mubr.f32.mxu0 0.0
    %1367 = vmatmul.mubr.f32.gmra.mxu0 %v1233
    %v1368 = vpop.f32.mrf.mxu0
    %v1369 = vadd.f32 0.0, %v1368
    %v1370 = vpop.f32.mrf.mxu0
    %v1371 = vadd.f32 0.0, %v1370
    %1372 = vmatprep.mubr.f32.mxu0 0.0
    %1373 = vmatmul.mubr.f32.gmra.mxu0 %v1236
    %v1374 = vpop.f32.mrf.mxu0
    %v1375 = vadd.f32 0.0, %v1374
    %v1376 = vpop.f32.mrf.mxu0
    %v1377 = vadd.f32 0.0, %v1376
    %1378 = vmatprep.mubr.f32.mxu0 0.0
    %1379 = vmatmul.mubr.f32.gmra.mxu0 %v1238
    %v1380 = vpop.f32.mrf.mxu0
    %v1381 = vadd.f32 0.0, %v1380
    %v1382 = vpop.f32.mrf.mxu0
    %v1383 = vadd.f32 0.0, %v1382
    %1384 = vmatprep.mubr.f32.mxu0 0.0
    %1385 = vmatmul.mubr.f32.gmra.mxu0 %v1240
    %v1386 = vpop.f32.mrf.mxu0
    %v1387 = vadd.f32 0.0, %v1386
    %v1388 = vpop.f32.mrf.mxu0
    %v1389 = vadd.f32 0.0, %v1388
    %1390 = vmatprep.mubr.f32.mxu0 0.0
    %1391 = vmatmul.mubr.f32.gmra.mxu0 %v1242
    %v1392 = vpop.f32.mrf.mxu0
    %v1393 = vadd.f32 0.0, %v1392
    %v1394 = vpop.f32.mrf.mxu0
    %v1395 = vadd.f32 0.0, %v1394
    %1396 = vdwg.mxu0
    %v1397 = vadd.f32 %v1209, %v1351
    %v1398 = vadd.f32 %v1210, %v1353
    %v1399 = vadd.f32 %v1211, %v1357
    %v1400 = vadd.f32 %v1212, %v1359
    %v1401 = vadd.f32 %v1213, %v1363
    %v1402 = vadd.f32 %v1214, %v1365
    %v1403 = vadd.f32 %v1215, %v1369
    %v1404 = vadd.f32 %v1216, %v1371
    %v1405 = vadd.f32 %v1217, %v1375
    %v1406 = vadd.f32 %v1218, %v1377
    %v1407 = vadd.f32 %v1219, %v1381
    %v1408 = vadd.f32 %v1220, %v1383
    %v1409 = vadd.f32 %v1221, %v1387
    %v1410 = vadd.f32 %v1222, %v1389
    %v1411 = vadd.f32 %v1223, %v1393
    %v1412 = vadd.f32 %v1224, %v1395
    %v1413 = vrot.slane %v700, 4
    %v1414 = vrot.slane %v701, 4
    %v1415 = vsel %vm246, %v1413, %v1414
    %v1416 = vrot.slane %v702, 4
    %v1417 = vsel %vm246, %v1414, %v1416
    %v1418 = vrot.slane %v703, 4
    %v1419 = vsel %vm246, %v1416, %v1418
    %v1420 = vrot.slane %v704, 4
    %v1421 = vsel %vm246, %v1418, %v1420
    %v1422 = vrot.slane %v705, 4
    %v1423 = vrot.slane %v706, 4
    %v1424 = vsel %vm246, %v1422, %v1423
    %v1425 = vrot.slane %v707, 4
    %v1426 = vsel %vm246, %v1423, %v1425
    %v1427 = vrot.slane %v708, 4
    %v1428 = vsel %vm246, %v1425, %v1427
    %v1429 = vrot.slane %v709, 4
    %v1430 = vsel %vm246, %v1427, %v1429
    %s1439 = scalar_lea.vmem [#allocation2], 1024
    %v1440 = vld [vmem:[%s1439] sm:$0xff]
    %v1441 = vld [vmem:[%s1439 + $0x8] sm:$0xff]
    %v1442 = vld [vmem:[%s1439 + $0x10] sm:$0xff]
    %v1443 = vld [vmem:[%s1439 + $0x18] sm:$0xff]
    %v1444 = vld [vmem:[%s1439 + $0x20] sm:$0xff]
    %v1445 = vld [vmem:[%s1439 + $0x28] sm:$0xff]
    %v1446 = vld [vmem:[%s1439 + $0x30] sm:$0xff]
    %v1447 = vld [vmem:[%s1439 + $0x38] sm:$0xff]
    %v1448 = vld [vmem:[%s1439 + $0x40] sm:$0xff]
    %v1449 = vld [vmem:[%s1439 + $0x48] sm:$0xff]
    %v1450 = vld [vmem:[%s1439 + $0x50] sm:$0xff]
    %v1451 = vld [vmem:[%s1439 + $0x58] sm:$0xff]
    %v1452 = vld [vmem:[%s1439 + $0x60] sm:$0xff]
    %v1453 = vld [vmem:[%s1439 + $0x68] sm:$0xff]
    %v1454 = vld [vmem:[%s1439 + $0x70] sm:$0xff]
    %v1455 = vld [vmem:[%s1439 + $0x78] sm:$0xff]
    %v1456 = vld [vmem:[%s1439 + $0x80] sm:$0xff]
    %v1457 = vld [vmem:[%s1439 + $0x88] sm:$0xff]
    %v1458 = vld [vmem:[%s1439 + $0x90] sm:$0xff]
    %v1459 = vld [vmem:[%s1439 + $0x98] sm:$0xff]
    %v1460 = vld [vmem:[%s1439 + $0xa0] sm:$0xff]
    %v1461 = vld [vmem:[%s1439 + $0xa8] sm:$0xff]
    %v1462 = vld [vmem:[%s1439 + $0xb0] sm:$0xff]
    %v1463 = vld [vmem:[%s1439 + $0xb8] sm:$0xff]
    %v1464 = vld [vmem:[%s1439 + $0xc0] sm:$0xff]
    %v1465 = vld [vmem:[%s1439 + $0xc8] sm:$0xff]
    %v1466 = vld [vmem:[%s1439 + $0xd0] sm:$0xff]
    %v1467 = vld [vmem:[%s1439 + $0xd8] sm:$0xff]
    %v1468 = vld [vmem:[%s1439 + $0xe0] sm:$0xff]
    %v1469 = vld [vmem:[%s1439 + $0xe8] sm:$0xff]
    %v1470 = vld [vmem:[%s1439 + $0xf0] sm:$0xff]
    %v1471 = vld [vmem:[%s1439 + $0xf8] sm:$0xff]
    %1472 = vmatprep.subr.mxu0 %v1471
    %1473 = vmatpush1.msra.mxu0 %v1470
    %1474 = vmatprep.subr.mxu0 %v1469
    %1475 = vmatpush1.msra.mxu0 %v1468
    %1476 = vmatprep.subr.mxu0 %v1467
    %1477 = vmatpush1.msra.mxu0 %v1466
    %1478 = vmatprep.subr.mxu0 %v1465
    %1479 = vmatpush1.msra.mxu0 %v1464
    %1480 = vmatprep.subr.mxu0 %v1463
    %1481 = vmatpush1.msra.mxu0 %v1462
    %1482 = vmatprep.subr.mxu0 %v1461
    %1483 = vmatpush1.msra.mxu0 %v1460
    %1484 = vmatprep.subr.mxu0 %v1459
    %1485 = vmatpush1.msra.mxu0 %v1458
    %1486 = vmatprep.subr.mxu0 %v1457
    %1487 = vmatpush1.msra.mxu0 %v1456
    %1488 = vmatprep.subr.mxu0 %v1455
    %1489 = vmatpush1.msra.mxu0 %v1454
    %1490 = vmatprep.subr.mxu0 %v1453
    %1491 = vmatpush1.msra.mxu0 %v1452
    %1492 = vmatprep.subr.mxu0 %v1451
    %1493 = vmatpush1.msra.mxu0 %v1450
    %1494 = vmatprep.subr.mxu0 %v1449
    %1495 = vmatpush1.msra.mxu0 %v1448
    %1496 = vmatprep.subr.mxu0 %v1447
    %1497 = vmatpush1.msra.mxu0 %v1446
    %1498 = vmatprep.subr.mxu0 %v1445
    %1499 = vmatpush1.msra.mxu0 %v1444
    %1500 = vmatprep.subr.mxu0 %v1443
    %1501 = vmatpush1.msra.mxu0 %v1442
    %1502 = vmatprep.subr.mxu0 %v1441
    %1503 = vmatpush1.msra.mxu0 %v1440
    %1504 = vmatprep.subr.mxu0 0.0
    %1505 = vmatpush2.msra.mxu0 0.0
    %1506 = vmatprep.subr.mxu0 0.0
    %1507 = vmatpush2.msra.mxu0 0.0
    %1508 = vmatprep.subr.mxu0 0.0
    %1509 = vmatpush2.msra.mxu0 0.0
    %1510 = vmatprep.subr.mxu0 0.0
    %1511 = vmatpush2.msra.mxu0 0.0
    %1512 = vmatprep.subr.mxu0 0.0
    %1513 = vmatpush2.msra.mxu0 0.0
    %1514 = vmatprep.subr.mxu0 0.0
    %1515 = vmatpush2.msra.mxu0 0.0
    %1516 = vmatprep.subr.mxu0 0.0
    %1517 = vmatpush2.msra.mxu0 0.0
    %1518 = vmatprep.subr.mxu0 0.0
    %1519 = vmatpush2.msra.mxu0 0.0
    %1520 = vmatprep.subr.mxu0 0.0
    %1521 = vmatpush2.msra.mxu0 0.0
    %1522 = vmatprep.subr.mxu0 0.0
    %1523 = vmatpush2.msra.mxu0 0.0
    %1524 = vmatprep.subr.mxu0 0.0
    %1525 = vmatpush2.msra.mxu0 0.0
    %1526 = vmatprep.subr.mxu0 0.0
    %1527 = vmatpush2.msra.mxu0 0.0
    %1528 = vmatprep.subr.mxu0 0.0
    %1529 = vmatpush2.msra.mxu0 0.0
    %1530 = vmatprep.subr.mxu0 0.0
    %1531 = vmatpush2.msra.mxu0 0.0
    %1532 = vmatprep.subr.mxu0 0.0
    %1533 = vmatpush2.msra.mxu0 0.0
    %1534 = vmatprep.subr.mxu0 0.0
    %1535 = vmatpush2.msra.mxu0 0.0
    %1536 = vmatprep.mubr.f32.mxu0 0.0
    %1537 = vmatmul.mubr.f32.gmra.mxu0 %v1415
    %v1538 = vpop.f32.mrf.mxu0
    %v1539 = vadd.f32 0.0, %v1538
    %v1540 = vpop.f32.mrf.mxu0
    %v1541 = vadd.f32 0.0, %v1540
    %1542 = vmatprep.mubr.f32.mxu0 0.0
    %1543 = vmatmul.mubr.f32.gmra.mxu0 %v1417
    %v1544 = vpop.f32.mrf.mxu0
    %v1545 = vadd.f32 0.0, %v1544
    %v1546 = vpop.f32.mrf.mxu0
    %v1547 = vadd.f32 0.0, %v1546
    %1548 = vmatprep.mubr.f32.mxu0 0.0
    %1549 = vmatmul.mubr.f32.gmra.mxu0 %v1419
    %v1550 = vpop.f32.mrf.mxu0
    %v1551 = vadd.f32 0.0, %v1550
    %v1552 = vpop.f32.mrf.mxu0
    %v1553 = vadd.f32 0.0, %v1552
    %1554 = vmatprep.mubr.f32.mxu0 0.0
    %1555 = vmatmul.mubr.f32.gmra.mxu0 %v1421
    %v1556 = vpop.f32.mrf.mxu0
    %v1557 = vadd.f32 0.0, %v1556
    %v1558 = vpop.f32.mrf.mxu0
    %v1559 = vadd.f32 0.0, %v1558
    %1560 = vmatprep.mubr.f32.mxu0 0.0
    %1561 = vmatmul.mubr.f32.gmra.mxu0 %v1424
    %v1562 = vpop.f32.mrf.mxu0
    %v1563 = vadd.f32 0.0, %v1562
    %v1564 = vpop.f32.mrf.mxu0
    %v1565 = vadd.f32 0.0, %v1564
    %1566 = vmatprep.mubr.f32.mxu0 0.0
    %1567 = vmatmul.mubr.f32.gmra.mxu0 %v1426
    %v1568 = vpop.f32.mrf.mxu0
    %v1569 = vadd.f32 0.0, %v1568
    %v1570 = vpop.f32.mrf.mxu0
    %v1571 = vadd.f32 0.0, %v1570
    %1572 = vmatprep.mubr.f32.mxu0 0.0
    %1573 = vmatmul.mubr.f32.gmra.mxu0 %v1428
    %v1574 = vpop.f32.mrf.mxu0
    %v1575 = vadd.f32 0.0, %v1574
    %v1576 = vpop.f32.mrf.mxu0
    %v1577 = vadd.f32 0.0, %v1576
    %1578 = vmatprep.mubr.f32.mxu0 0.0
    %1579 = vmatmul.mubr.f32.gmra.mxu0 %v1430
    %v1580 = vpop.f32.mrf.mxu0
    %v1581 = vadd.f32 0.0, %v1580
    %v1582 = vpop.f32.mrf.mxu0
    %v1583 = vadd.f32 0.0, %v1582
    %1584 = vdwg.mxu0
    %v1585 = vadd.f32 %v1397, %v1539
    %v1586 = vadd.f32 %v1398, %v1541
    %v1587 = vadd.f32 %v1399, %v1545
    %v1588 = vadd.f32 %v1400, %v1547
    %v1589 = vadd.f32 %v1401, %v1551
    %v1590 = vadd.f32 %v1402, %v1553
    %v1591 = vadd.f32 %v1403, %v1557
    %v1592 = vadd.f32 %v1404, %v1559
    %v1593 = vadd.f32 %v1405, %v1563
    %v1594 = vadd.f32 %v1406, %v1565
    %v1595 = vadd.f32 %v1407, %v1569
    %v1596 = vadd.f32 %v1408, %v1571
    %v1597 = vadd.f32 %v1409, %v1575
    %v1598 = vadd.f32 %v1410, %v1577
    %v1599 = vadd.f32 %v1411, %v1581
    %v1600 = vadd.f32 %v1412, %v1583
    %v1601 = vld [vmem:[%s5] sm:$0x3]
    %v1603 = vlaneseq
    %v1604 = vshrl.u32 %v1603, 7
    %v1605 = vsub.s32 0, %v1604
    %v1606 = vrot.slane %v1601, %v1605
    %v1607 = vlaneseq
    %v1608 = vshrl.u32 %v1607, 7
    %v1609 = vsub.s32 1, %v1608
    %v1610 = vrot.slane %v1601, %v1609
    %v1613 = vmul.f32 %v1585, %v1606
    %v1614 = vmul.f32 %v1586, %v1610
    %v1615 = vmul.f32 %v1587, %v1606
    %v1616 = vmul.f32 %v1588, %v1610
    %v1617 = vmul.f32 %v1589, %v1606
    %v1618 = vmul.f32 %v1590, %v1610
    %v1619 = vmul.f32 %v1591, %v1606
    %v1620 = vmul.f32 %v1592, %v1610
    %v1621 = vmul.f32 %v1593, %v1606
    %v1622 = vmul.f32 %v1594, %v1610
    %v1623 = vmul.f32 %v1595, %v1606
    %v1624 = vmul.f32 %v1596, %v1610
    %v1625 = vmul.f32 %v1597, %v1606
    %v1626 = vmul.f32 %v1598, %v1610
    %v1627 = vmul.f32 %v1599, %v1606
    %v1628 = vmul.f32 %v1600, %v1610
    %v1629 = vld [vmem:[%s6] sm:$0x3]
    %v1631 = vlaneseq
    %v1632 = vshrl.u32 %v1631, 7
    %v1633 = vsub.s32 0, %v1632
    %v1634 = vrot.slane %v1629, %v1633
    %v1635 = vlaneseq
    %v1636 = vshrl.u32 %v1635, 7
    %v1637 = vsub.s32 1, %v1636
    %v1638 = vrot.slane %v1629, %v1637
    %v1641 = vadd.f32 %v1613, %v1634
    %v1642 = vadd.f32 %v1614, %v1638
    %v1643 = vadd.f32 %v1615, %v1634
    %v1644 = vadd.f32 %v1616, %v1638
    %v1645 = vadd.f32 %v1617, %v1634
    %v1646 = vadd.f32 %v1618, %v1638
    %v1647 = vadd.f32 %v1619, %v1634
    %v1648 = vadd.f32 %v1620, %v1638
    %v1649 = vadd.f32 %v1621, %v1634
    %v1650 = vadd.f32 %v1622, %v1638
    %v1651 = vadd.f32 %v1623, %v1634
    %v1652 = vadd.f32 %v1624, %v1638
    %v1653 = vadd.f32 %v1625, %v1634
    %v1654 = vadd.f32 %v1626, %v1638
    %v1655 = vadd.f32 %v1627, %v1634
    %v1656 = vadd.f32 %v1628, %v1638
    %v1657 = vmax.f32 %v1641, 0.0
    %v1658 = vmax.f32 %v1642, 0.0
    %v1659 = vmax.f32 %v1643, 0.0
    %v1660 = vmax.f32 %v1644, 0.0
    %v1661 = vmax.f32 %v1645, 0.0
    %v1662 = vmax.f32 %v1646, 0.0
    %v1663 = vmax.f32 %v1647, 0.0
    %v1664 = vmax.f32 %v1648, 0.0
    %v1665 = vmax.f32 %v1649, 0.0
    %v1666 = vmax.f32 %v1650, 0.0
    %v1667 = vmax.f32 %v1651, 0.0
    %v1668 = vmax.f32 %v1652, 0.0
    %v1669 = vmax.f32 %v1653, 0.0
    %v1670 = vmax.f32 %v1654, 0.0
    %v1671 = vmax.f32 %v1655, 0.0
    %v1672 = vmax.f32 %v1656, 0.0
    %v1673 = vld [vmem:[#allocation4] sm:$0xff]
    %v1674 = vld [vmem:[#allocation4 + $0x8] sm:$0xff]
    %v1675 = vld [vmem:[#allocation4 + $0x10] sm:$0xff]
    %v1676 = vld [vmem:[#allocation4 + $0x18] sm:$0xff]
    %v1677 = vld [vmem:[#allocation4 + $0x20] sm:$0xff]
    %v1678 = vld [vmem:[#allocation4 + $0x28] sm:$0xff]
    %v1679 = vld [vmem:[#allocation4 + $0x30] sm:$0xff]
    %v1680 = vld [vmem:[#allocation4 + $0x38] sm:$0xff]
    %v1681 = vld [vmem:[#allocation4 + $0x40] sm:$0xff]
    %v1682 = vld [vmem:[#allocation4 + $0x48] sm:$0xff]
    %v1683 = vld [vmem:[#allocation4 + $0x50] sm:$0xff]
    %v1684 = vld [vmem:[#allocation4 + $0x58] sm:$0xff]
    %v1685 = vld [vmem:[#allocation4 + $0x60] sm:$0xff]
    %v1686 = vld [vmem:[#allocation4 + $0x68] sm:$0xff]
    %v1687 = vld [vmem:[#allocation4 + $0x70] sm:$0xff]
    %v1688 = vld [vmem:[#allocation4 + $0x78] sm:$0xff]
    %v1689 = vld [vmem:[#allocation4 + $0x80] sm:$0xff]
    %v1690 = vld [vmem:[#allocation4 + $0x88] sm:$0xff]
    %v1691 = vld [vmem:[#allocation4 + $0x90] sm:$0xff]
    %v1692 = vld [vmem:[#allocation4 + $0x98] sm:$0xff]
    %v1693 = vld [vmem:[#allocation4 + $0xa0] sm:$0xff]
    %v1694 = vld [vmem:[#allocation4 + $0xa8] sm:$0xff]
    %v1695 = vld [vmem:[#allocation4 + $0xb0] sm:$0xff]
    %v1696 = vld [vmem:[#allocation4 + $0xb8] sm:$0xff]
    %v1697 = vld [vmem:[#allocation4 + $0xc0] sm:$0xff]
    %v1698 = vld [vmem:[#allocation4 + $0xc8] sm:$0xff]
    %v1699 = vld [vmem:[#allocation4 + $0xd0] sm:$0xff]
    %v1700 = vld [vmem:[#allocation4 + $0xd8] sm:$0xff]
    %v1701 = vld [vmem:[#allocation4 + $0xe0] sm:$0xff]
    %v1702 = vld [vmem:[#allocation4 + $0xe8] sm:$0xff]
    %v1703 = vld [vmem:[#allocation4 + $0xf0] sm:$0xff]
    %v1704 = vld [vmem:[#allocation4 + $0xf8] sm:$0xff]
    %v1721 = vrot.slane %v1657, 1
    %v1722 = vrot.slane %v1659, 1
    %v1723 = vsel %vm87, %v1721, %v1722
    %v1724 = vrot.slane %v1658, 1
    %v1725 = vrot.slane %v1660, 1
    %v1726 = vsel %vm87, %v1724, %v1725
    %v1727 = vrot.slane %v1661, 1
    %v1728 = vsel %vm87, %v1722, %v1727
    %v1729 = vrot.slane %v1662, 1
    %v1730 = vsel %vm87, %v1725, %v1729
    %v1731 = vrot.slane %v1663, 1
    %v1732 = vsel %vm87, %v1727, %v1731
    %v1733 = vrot.slane %v1664, 1
    %v1734 = vsel %vm87, %v1729, %v1733
    %v1735 = vrot.slane %v1665, 1
    %v1736 = vrot.slane %v1667, 1
    %v1737 = vsel %vm87, %v1735, %v1736
    %v1738 = vrot.slane %v1666, 1
    %v1739 = vrot.slane %v1668, 1
    %v1740 = vsel %vm87, %v1738, %v1739
    %v1741 = vrot.slane %v1669, 1
    %v1742 = vsel %vm87, %v1736, %v1741
    %v1743 = vrot.slane %v1670, 1
    %v1744 = vsel %vm87, %v1739, %v1743
    %v1745 = vrot.slane %v1671, 1
    %v1746 = vsel %vm87, %v1741, %v1745
    %v1747 = vrot.slane %v1672, 1
    %v1748 = vsel %vm87, %v1743, %v1747
    %s1761 = scalar_lea.vmem [#allocation4], 256
    %v1762 = vld [vmem:[%s1761] sm:$0xff]
    %v1763 = vld [vmem:[%s1761 + $0x8] sm:$0xff]
    %v1764 = vld [vmem:[%s1761 + $0x10] sm:$0xff]
    %v1765 = vld [vmem:[%s1761 + $0x18] sm:$0xff]
    %v1766 = vld [vmem:[%s1761 + $0x20] sm:$0xff]
    %v1767 = vld [vmem:[%s1761 + $0x28] sm:$0xff]
    %v1768 = vld [vmem:[%s1761 + $0x30] sm:$0xff]
    %v1769 = vld [vmem:[%s1761 + $0x38] sm:$0xff]
    %v1770 = vld [vmem:[%s1761 + $0x40] sm:$0xff]
    %v1771 = vld [vmem:[%s1761 + $0x48] sm:$0xff]
    %v1772 = vld [vmem:[%s1761 + $0x50] sm:$0xff]
    %v1773 = vld [vmem:[%s1761 + $0x58] sm:$0xff]
    %v1774 = vld [vmem:[%s1761 + $0x60] sm:$0xff]
    %v1775 = vld [vmem:[%s1761 + $0x68] sm:$0xff]
    %v1776 = vld [vmem:[%s1761 + $0x70] sm:$0xff]
    %v1777 = vld [vmem:[%s1761 + $0x78] sm:$0xff]
    %v1778 = vld [vmem:[%s1761 + $0x80] sm:$0xff]
    %v1779 = vld [vmem:[%s1761 + $0x88] sm:$0xff]
    %v1780 = vld [vmem:[%s1761 + $0x90] sm:$0xff]
    %v1781 = vld [vmem:[%s1761 + $0x98] sm:$0xff]
    %v1782 = vld [vmem:[%s1761 + $0xa0] sm:$0xff]
    %v1783 = vld [vmem:[%s1761 + $0xa8] sm:$0xff]
    %v1784 = vld [vmem:[%s1761 + $0xb0] sm:$0xff]
    %v1785 = vld [vmem:[%s1761 + $0xb8] sm:$0xff]
    %v1786 = vld [vmem:[%s1761 + $0xc0] sm:$0xff]
    %v1787 = vld [vmem:[%s1761 + $0xc8] sm:$0xff]
    %v1788 = vld [vmem:[%s1761 + $0xd0] sm:$0xff]
    %v1789 = vld [vmem:[%s1761 + $0xd8] sm:$0xff]
    %v1790 = vld [vmem:[%s1761 + $0xe0] sm:$0xff]
    %v1791 = vld [vmem:[%s1761 + $0xe8] sm:$0xff]
    %v1792 = vld [vmem:[%s1761 + $0xf0] sm:$0xff]
    %v1793 = vld [vmem:[%s1761 + $0xf8] sm:$0xff]
    %1794 = vmatprep.subr.mxu0 0.0
    %1795 = vmatpush1.msra.mxu0 %v1777
    %1796 = vmatprep.subr.mxu0 0.0
    %1797 = vmatpush1.msra.mxu0 %v1776
    %1798 = vmatprep.subr.mxu0 0.0
    %1799 = vmatpush1.msra.mxu0 %v1775
    %1800 = vmatprep.subr.mxu0 0.0
    %1801 = vmatpush1.msra.mxu0 %v1774
    %1802 = vmatprep.subr.mxu0 0.0
    %1803 = vmatpush1.msra.mxu0 %v1773
    %1804 = vmatprep.subr.mxu0 0.0
    %1805 = vmatpush1.msra.mxu0 %v1772
    %1806 = vmatprep.subr.mxu0 0.0
    %1807 = vmatpush1.msra.mxu0 %v1771
    %1808 = vmatprep.subr.mxu0 0.0
    %1809 = vmatpush1.msra.mxu0 %v1770
    %1810 = vmatprep.subr.mxu0 0.0
    %1811 = vmatpush1.msra.mxu0 %v1769
    %1812 = vmatprep.subr.mxu0 0.0
    %1813 = vmatpush1.msra.mxu0 %v1768
    %1814 = vmatprep.subr.mxu0 0.0
    %1815 = vmatpush1.msra.mxu0 %v1767
    %1816 = vmatprep.subr.mxu0 0.0
    %1817 = vmatpush1.msra.mxu0 %v1766
    %1818 = vmatprep.subr.mxu0 0.0
    %1819 = vmatpush1.msra.mxu0 %v1765
    %1820 = vmatprep.subr.mxu0 0.0
    %1821 = vmatpush1.msra.mxu0 %v1764
    %1822 = vmatprep.subr.mxu0 0.0
    %1823 = vmatpush1.msra.mxu0 %v1763
    %1824 = vmatprep.subr.mxu0 0.0
    %1825 = vmatpush1.msra.mxu0 %v1762
    %1826 = vmatprep.subr.mxu0 0.0
    %1827 = vmatpush2.msra.mxu0 %v1793
    %1828 = vmatprep.subr.mxu0 0.0
    %1829 = vmatpush2.msra.mxu0 %v1792
    %1830 = vmatprep.subr.mxu0 0.0
    %1831 = vmatpush2.msra.mxu0 %v1791
    %1832 = vmatprep.subr.mxu0 0.0
    %1833 = vmatpush2.msra.mxu0 %v1790
    %1834 = vmatprep.subr.mxu0 0.0
    %1835 = vmatpush2.msra.mxu0 %v1789
    %1836 = vmatprep.subr.mxu0 0.0
    %1837 = vmatpush2.msra.mxu0 %v1788
    %1838 = vmatprep.subr.mxu0 0.0
    %1839 = vmatpush2.msra.mxu0 %v1787
    %1840 = vmatprep.subr.mxu0 0.0
    %1841 = vmatpush2.msra.mxu0 %v1786
    %1842 = vmatprep.subr.mxu0 0.0
    %1843 = vmatpush2.msra.mxu0 %v1785
    %1844 = vmatprep.subr.mxu0 0.0
    %1845 = vmatpush2.msra.mxu0 %v1784
    %1846 = vmatprep.subr.mxu0 0.0
    %1847 = vmatpush2.msra.mxu0 %v1783
    %1848 = vmatprep.subr.mxu0 0.0
    %1849 = vmatpush2.msra.mxu0 %v1782
    %1850 = vmatprep.subr.mxu0 0.0
    %1851 = vmatpush2.msra.mxu0 %v1781
    %1852 = vmatprep.subr.mxu0 0.0
    %1853 = vmatpush2.msra.mxu0 %v1780
    %1854 = vmatprep.subr.mxu0 0.0
    %1855 = vmatpush2.msra.mxu0 %v1779
    %1856 = vmatprep.subr.mxu0 0.0
    %1857 = vmatpush2.msra.mxu0 %v1778
    %1858 = vmatprep.mubr.f32.mxu0 %v1726
    %1859 = vmatmul.mubr.f32.gmra.mxu0 %v1723
    %v1860 = vpop.f32.mrf.mxu0
    %v1861 = vadd.f32 0.0, %v1860
    %v1862 = vpop.f32.mrf.mxu0
    %1863 = vmatprep.mubr.f32.mxu0 %v1730
    %1864 = vmatmul.mubr.f32.gmra.mxu0 %v1728
    %v1865 = vpop.f32.mrf.mxu0
    %v1866 = vadd.f32 0.0, %v1865
    %v1867 = vpop.f32.mrf.mxu0
    %1868 = vmatprep.mubr.f32.mxu0 %v1734
    %1869 = vmatmul.mubr.f32.gmra.mxu0 %v1732
    %v1870 = vpop.f32.mrf.mxu0
    %v1871 = vadd.f32 0.0, %v1870
    %v1872 = vpop.f32.mrf.mxu0
    %1873 = vmatprep.mubr.f32.mxu0 %v1740
    %1874 = vmatmul.mubr.f32.gmra.mxu0 %v1737
    %v1875 = vpop.f32.mrf.mxu0
    %v1876 = vadd.f32 0.0, %v1875
    %v1877 = vpop.f32.mrf.mxu0
    %1878 = vmatprep.mubr.f32.mxu0 %v1744
    %1879 = vmatmul.mubr.f32.gmra.mxu0 %v1742
    %v1880 = vpop.f32.mrf.mxu0
    %v1881 = vadd.f32 0.0, %v1880
    %v1882 = vpop.f32.mrf.mxu0
    %1883 = vmatprep.mubr.f32.mxu0 %v1748
    %1884 = vmatmul.mubr.f32.gmra.mxu0 %v1746
    %v1885 = vpop.f32.mrf.mxu0
    %v1886 = vadd.f32 0.0, %v1885
    %v1887 = vpop.f32.mrf.mxu0
    %1888 = vdwg.mxu0
    %1889 = vmatprep.subr.mxu0 0.0
    %1890 = vmatpush1.msra.mxu0 %v1688
    %1891 = vmatprep.subr.mxu0 0.0
    %1892 = vmatpush1.msra.mxu0 %v1687
    %1893 = vmatprep.subr.mxu0 0.0
    %1894 = vmatpush1.msra.mxu0 %v1686
    %1895 = vmatprep.subr.mxu0 0.0
    %1896 = vmatpush1.msra.mxu0 %v1685
    %1897 = vmatprep.subr.mxu0 0.0
    %1898 = vmatpush1.msra.mxu0 %v1684
    %1899 = vmatprep.subr.mxu0 0.0
    %1900 = vmatpush1.msra.mxu0 %v1683
    %1901 = vmatprep.subr.mxu0 0.0
    %1902 = vmatpush1.msra.mxu0 %v1682
    %1903 = vmatprep.subr.mxu0 0.0
    %1904 = vmatpush1.msra.mxu0 %v1681
    %1905 = vmatprep.subr.mxu0 0.0
    %1906 = vmatpush1.msra.mxu0 %v1680
    %1907 = vmatprep.subr.mxu0 0.0
    %1908 = vmatpush1.msra.mxu0 %v1679
    %1909 = vmatprep.subr.mxu0 0.0
    %1910 = vmatpush1.msra.mxu0 %v1678
    %1911 = vmatprep.subr.mxu0 0.0
    %1912 = vmatpush1.msra.mxu0 %v1677
    %1913 = vmatprep.subr.mxu0 0.0
    %1914 = vmatpush1.msra.mxu0 %v1676
    %1915 = vmatprep.subr.mxu0 0.0
    %1916 = vmatpush1.msra.mxu0 %v1675
    %1917 = vmatprep.subr.mxu0 0.0
    %1918 = vmatpush1.msra.mxu0 %v1674
    %1919 = vmatprep.subr.mxu0 0.0
    %1920 = vmatpush1.msra.mxu0 %v1673
    %1921 = vmatprep.subr.mxu0 0.0
    %1922 = vmatpush2.msra.mxu0 %v1704
    %1923 = vmatprep.subr.mxu0 0.0
    %1924 = vmatpush2.msra.mxu0 %v1703
    %1925 = vmatprep.subr.mxu0 0.0
    %1926 = vmatpush2.msra.mxu0 %v1702
    %1927 = vmatprep.subr.mxu0 0.0
    %1928 = vmatpush2.msra.mxu0 %v1701
    %1929 = vmatprep.subr.mxu0 0.0
    %1930 = vmatpush2.msra.mxu0 %v1700
    %1931 = vmatprep.subr.mxu0 0.0
    %1932 = vmatpush2.msra.mxu0 %v1699
    %1933 = vmatprep.subr.mxu0 0.0
    %1934 = vmatpush2.msra.mxu0 %v1698
    %1935 = vmatprep.subr.mxu0 0.0
    %1936 = vmatpush2.msra.mxu0 %v1697
    %1937 = vmatprep.subr.mxu0 0.0
    %1938 = vmatpush2.msra.mxu0 %v1696
    %1939 = vmatprep.subr.mxu0 0.0
    %1940 = vmatpush2.msra.mxu0 %v1695
    %1941 = vmatprep.subr.mxu0 0.0
    %1942 = vmatpush2.msra.mxu0 %v1694
    %1943 = vmatprep.subr.mxu0 0.0
    %1944 = vmatpush2.msra.mxu0 %v1693
    %1945 = vmatprep.subr.mxu0 0.0
    %1946 = vmatpush2.msra.mxu0 %v1692
    %1947 = vmatprep.subr.mxu0 0.0
    %1948 = vmatpush2.msra.mxu0 %v1691
    %1949 = vmatprep.subr.mxu0 0.0
    %1950 = vmatpush2.msra.mxu0 %v1690
    %1951 = vmatprep.subr.mxu0 0.0
    %1952 = vmatpush2.msra.mxu0 %v1689
    %1953 = vmatprep.mubr.f32.mxu0 %v1658
    %1954 = vmatmul.mubr.f32.gmra.mxu0 %v1657
    %v1955 = vpop.f32.mrf.mxu0
    %v1956 = vadd.f32 %v1861, %v1955
    %v1957 = vpop.f32.mrf.mxu0
    %1958 = vmatprep.mubr.f32.mxu0 %v1660
    %1959 = vmatmul.mubr.f32.gmra.mxu0 %v1659
    %v1960 = vpop.f32.mrf.mxu0
    %v1961 = vadd.f32 %v1866, %v1960
    %v1962 = vpop.f32.mrf.mxu0
    %1963 = vmatprep.mubr.f32.mxu0 %v1662
    %1964 = vmatmul.mubr.f32.gmra.mxu0 %v1661
    %v1965 = vpop.f32.mrf.mxu0
    %v1966 = vadd.f32 %v1871, %v1965
    %v1967 = vpop.f32.mrf.mxu0
    %1968 = vmatprep.mubr.f32.mxu0 %v1666
    %1969 = vmatmul.mubr.f32.gmra.mxu0 %v1665
    %v1970 = vpop.f32.mrf.mxu0
    %v1971 = vadd.f32 %v1876, %v1970
    %v1972 = vpop.f32.mrf.mxu0
    %1973 = vmatprep.mubr.f32.mxu0 %v1668
    %1974 = vmatmul.mubr.f32.gmra.mxu0 %v1667
    %v1975 = vpop.f32.mrf.mxu0
    %v1976 = vadd.f32 %v1881, %v1975
    %v1977 = vpop.f32.mrf.mxu0
    %1978 = vmatprep.mubr.f32.mxu0 %v1670
    %1979 = vmatmul.mubr.f32.gmra.mxu0 %v1669
    %v1980 = vpop.f32.mrf.mxu0
    %v1981 = vadd.f32 %v1886, %v1980
    %v1982 = vpop.f32.mrf.mxu0
    %1983 = vdwg.mxu0
    %v1984 = vrot.slane %v1657, 2
    %v1985 = vrot.slane %v1659, 2
    %v1986 = vsel %vm140, %v1984, %v1985
    %v1987 = vrot.slane %v1658, 2
    %v1988 = vrot.slane %v1660, 2
    %v1989 = vsel %vm140, %v1987, %v1988
    %v1990 = vrot.slane %v1661, 2
    %v1991 = vsel %vm140, %v1985, %v1990
    %v1992 = vrot.slane %v1662, 2
    %v1993 = vsel %vm140, %v1988, %v1992
    %v1994 = vrot.slane %v1663, 2
    %v1995 = vsel %vm140, %v1990, %v1994
    %v1996 = vrot.slane %v1664, 2
    %v1997 = vsel %vm140, %v1992, %v1996
    %v1998 = vrot.slane %v1665, 2
    %v1999 = vrot.slane %v1667, 2
    %v2000 = vsel %vm140, %v1998, %v1999
    %v2001 = vrot.slane %v1666, 2
    %v2002 = vrot.slane %v1668, 2
    %v2003 = vsel %vm140, %v2001, %v2002
    %v2004 = vrot.slane %v1669, 2
    %v2005 = vsel %vm140, %v1999, %v2004
    %v2006 = vrot.slane %v1670, 2
    %v2007 = vsel %vm140, %v2002, %v2006
    %v2008 = vrot.slane %v1671, 2
    %v2009 = vsel %vm140, %v2004, %v2008
    %v2010 = vrot.slane %v1672, 2
    %v2011 = vsel %vm140, %v2006, %v2010
    %s2024 = scalar_lea.vmem [#allocation4], 512
    %v2025 = vld [vmem:[%s2024] sm:$0xff]
    %v2026 = vld [vmem:[%s2024 + $0x8] sm:$0xff]
    %v2027 = vld [vmem:[%s2024 + $0x10] sm:$0xff]
    %v2028 = vld [vmem:[%s2024 + $0x18] sm:$0xff]
    %v2029 = vld [vmem:[%s2024 + $0x20] sm:$0xff]
    %v2030 = vld [vmem:[%s2024 + $0x28] sm:$0xff]
    %v2031 = vld [vmem:[%s2024 + $0x30] sm:$0xff]
    %v2032 = vld [vmem:[%s2024 + $0x38] sm:$0xff]
    %v2033 = vld [vmem:[%s2024 + $0x40] sm:$0xff]
    %v2034 = vld [vmem:[%s2024 + $0x48] sm:$0xff]
    %v2035 = vld [vmem:[%s2024 + $0x50] sm:$0xff]
    %v2036 = vld [vmem:[%s2024 + $0x58] sm:$0xff]
    %v2037 = vld [vmem:[%s2024 + $0x60] sm:$0xff]
    %v2038 = vld [vmem:[%s2024 + $0x68] sm:$0xff]
    %v2039 = vld [vmem:[%s2024 + $0x70] sm:$0xff]
    %v2040 = vld [vmem:[%s2024 + $0x78] sm:$0xff]
    %v2041 = vld [vmem:[%s2024 + $0x80] sm:$0xff]
    %v2042 = vld [vmem:[%s2024 + $0x88] sm:$0xff]
    %v2043 = vld [vmem:[%s2024 + $0x90] sm:$0xff]
    %v2044 = vld [vmem:[%s2024 + $0x98] sm:$0xff]
    %v2045 = vld [vmem:[%s2024 + $0xa0] sm:$0xff]
    %v2046 = vld [vmem:[%s2024 + $0xa8] sm:$0xff]
    %v2047 = vld [vmem:[%s2024 + $0xb0] sm:$0xff]
    %v2048 = vld [vmem:[%s2024 + $0xb8] sm:$0xff]
    %v2049 = vld [vmem:[%s2024 + $0xc0] sm:$0xff]
    %v2050 = vld [vmem:[%s2024 + $0xc8] sm:$0xff]
    %v2051 = vld [vmem:[%s2024 + $0xd0] sm:$0xff]
    %v2052 = vld [vmem:[%s2024 + $0xd8] sm:$0xff]
    %v2053 = vld [vmem:[%s2024 + $0xe0] sm:$0xff]
    %v2054 = vld [vmem:[%s2024 + $0xe8] sm:$0xff]
    %v2055 = vld [vmem:[%s2024 + $0xf0] sm:$0xff]
    %v2056 = vld [vmem:[%s2024 + $0xf8] sm:$0xff]
    %2057 = vmatprep.subr.mxu0 0.0
    %2058 = vmatpush1.msra.mxu0 %v2040
    %2059 = vmatprep.subr.mxu0 0.0
    %2060 = vmatpush1.msra.mxu0 %v2039
    %2061 = vmatprep.subr.mxu0 0.0
    %2062 = vmatpush1.msra.mxu0 %v2038
    %2063 = vmatprep.subr.mxu0 0.0
    %2064 = vmatpush1.msra.mxu0 %v2037
    %2065 = vmatprep.subr.mxu0 0.0
    %2066 = vmatpush1.msra.mxu0 %v2036
    %2067 = vmatprep.subr.mxu0 0.0
    %2068 = vmatpush1.msra.mxu0 %v2035
    %2069 = vmatprep.subr.mxu0 0.0
    %2070 = vmatpush1.msra.mxu0 %v2034
    %2071 = vmatprep.subr.mxu0 0.0
    %2072 = vmatpush1.msra.mxu0 %v2033
    %2073 = vmatprep.subr.mxu0 0.0
    %2074 = vmatpush1.msra.mxu0 %v2032
    %2075 = vmatprep.subr.mxu0 0.0
    %2076 = vmatpush1.msra.mxu0 %v2031
    %2077 = vmatprep.subr.mxu0 0.0
    %2078 = vmatpush1.msra.mxu0 %v2030
    %2079 = vmatprep.subr.mxu0 0.0
    %2080 = vmatpush1.msra.mxu0 %v2029
    %2081 = vmatprep.subr.mxu0 0.0
    %2082 = vmatpush1.msra.mxu0 %v2028
    %2083 = vmatprep.subr.mxu0 0.0
    %2084 = vmatpush1.msra.mxu0 %v2027
    %2085 = vmatprep.subr.mxu0 0.0
    %2086 = vmatpush1.msra.mxu0 %v2026
    %2087 = vmatprep.subr.mxu0 0.0
    %2088 = vmatpush1.msra.mxu0 %v2025
    %2089 = vmatprep.subr.mxu0 0.0
    %2090 = vmatpush2.msra.mxu0 %v2056
    %2091 = vmatprep.subr.mxu0 0.0
    %2092 = vmatpush2.msra.mxu0 %v2055
    %2093 = vmatprep.subr.mxu0 0.0
    %2094 = vmatpush2.msra.mxu0 %v2054
    %2095 = vmatprep.subr.mxu0 0.0
    %2096 = vmatpush2.msra.mxu0 %v2053
    %2097 = vmatprep.subr.mxu0 0.0
    %2098 = vmatpush2.msra.mxu0 %v2052
    %2099 = vmatprep.subr.mxu0 0.0
    %2100 = vmatpush2.msra.mxu0 %v2051
    %2101 = vmatprep.subr.mxu0 0.0
    %2102 = vmatpush2.msra.mxu0 %v2050
    %2103 = vmatprep.subr.mxu0 0.0
    %2104 = vmatpush2.msra.mxu0 %v2049
    %2105 = vmatprep.subr.mxu0 0.0
    %2106 = vmatpush2.msra.mxu0 %v2048
    %2107 = vmatprep.subr.mxu0 0.0
    %2108 = vmatpush2.msra.mxu0 %v2047
    %2109 = vmatprep.subr.mxu0 0.0
    %2110 = vmatpush2.msra.mxu0 %v2046
    %2111 = vmatprep.subr.mxu0 0.0
    %2112 = vmatpush2.msra.mxu0 %v2045
    %2113 = vmatprep.subr.mxu0 0.0
    %2114 = vmatpush2.msra.mxu0 %v2044
    %2115 = vmatprep.subr.mxu0 0.0
    %2116 = vmatpush2.msra.mxu0 %v2043
    %2117 = vmatprep.subr.mxu0 0.0
    %2118 = vmatpush2.msra.mxu0 %v2042
    %2119 = vmatprep.subr.mxu0 0.0
    %2120 = vmatpush2.msra.mxu0 %v2041
    %2121 = vmatprep.mubr.f32.mxu0 %v1989
    %2122 = vmatmul.mubr.f32.gmra.mxu0 %v1986
    %v2123 = vpop.f32.mrf.mxu0
    %v2124 = vadd.f32 0.0, %v2123
    %v2125 = vpop.f32.mrf.mxu0
    %2126 = vmatprep.mubr.f32.mxu0 %v1993
    %2127 = vmatmul.mubr.f32.gmra.mxu0 %v1991
    %v2128 = vpop.f32.mrf.mxu0
    %v2129 = vadd.f32 0.0, %v2128
    %v2130 = vpop.f32.mrf.mxu0
    %2131 = vmatprep.mubr.f32.mxu0 %v1997
    %2132 = vmatmul.mubr.f32.gmra.mxu0 %v1995
    %v2133 = vpop.f32.mrf.mxu0
    %v2134 = vadd.f32 0.0, %v2133
    %v2135 = vpop.f32.mrf.mxu0
    %2136 = vmatprep.mubr.f32.mxu0 %v2003
    %2137 = vmatmul.mubr.f32.gmra.mxu0 %v2000
    %v2138 = vpop.f32.mrf.mxu0
    %v2139 = vadd.f32 0.0, %v2138
    %v2140 = vpop.f32.mrf.mxu0
    %2141 = vmatprep.mubr.f32.mxu0 %v2007
    %2142 = vmatmul.mubr.f32.gmra.mxu0 %v2005
    %v2143 = vpop.f32.mrf.mxu0
    %v2144 = vadd.f32 0.0, %v2143
    %v2145 = vpop.f32.mrf.mxu0
    %2146 = vmatprep.mubr.f32.mxu0 %v2011
    %2147 = vmatmul.mubr.f32.gmra.mxu0 %v2009
    %v2148 = vpop.f32.mrf.mxu0
    %v2149 = vadd.f32 0.0, %v2148
    %v2150 = vpop.f32.mrf.mxu0
    %2151 = vdwg.mxu0
    %v2152 = vadd.f32 %v1956, %v2124
    %v2153 = vadd.f32 %v1961, %v2129
    %v2154 = vadd.f32 %v1966, %v2134
    %v2155 = vadd.f32 %v1971, %v2139
    %v2156 = vadd.f32 %v1976, %v2144
    %v2157 = vadd.f32 %v1981, %v2149
    %v2158 = vld [vmem:[%s8] sm:$0x1]
    %v2160 = vlaneseq
    %v2161 = vshrl.u32 %v2160, 7
    %v2162 = vsub.s32 0, %v2161
    %v2163 = vrot.slane %v2158, %v2162
    %v2165 = vmul.f32 %v2152, %v2163
    %v2166 = vmul.f32 %v2153, %v2163
    %v2167 = vmul.f32 %v2154, %v2163
    %v2168 = vmul.f32 %v2155, %v2163
    %v2169 = vmul.f32 %v2156, %v2163
    %v2170 = vmul.f32 %v2157, %v2163
    %v2171 = vld [vmem:[%s9] sm:$0x1]
    %v2173 = vlaneseq
    %v2174 = vshrl.u32 %v2173, 7
    %v2175 = vsub.s32 0, %v2174
    %v2176 = vrot.slane %v2171, %v2175
    %v2178 = vadd.f32 %v2165, %v2176
    %v2179 = vadd.f32 %v2166, %v2176
    %v2180 = vadd.f32 %v2167, %v2176
    %v2181 = vadd.f32 %v2168, %v2176
    %v2182 = vadd.f32 %v2169, %v2176
    %v2183 = vadd.f32 %v2170, %v2176
    %v2184 = vmax.f32 %v2178, 0.0
    %v2185 = vmax.f32 %v2179, 0.0
    %v2186 = vmax.f32 %v2180, 0.0
    %v2187 = vmax.f32 %v2181, 0.0
    %v2188 = vmax.f32 %v2182, 0.0
    %v2189 = vmax.f32 %v2183, 0.0
    %v2190 = vadd.f32 %v2184, %v2185
    %v2191 = vsel %vm299, %v2186, 0.0
    %v2192 = vadd.f32 %v2190, %v2191
    %v2193 = vrot.slane %v2192, 4
    %v2194 = vadd.f32 %v2192, %v2193
    %v2195 = vrot.slane %v2194, 2
    %v2196 = vadd.f32 %v2194, %v2195
    %v2197 = vrot.slane %v2196, 1
    %v2198 = vadd.f32 %v2196, %v2197
    %v2199 = vadd.f32 %v2187, %v2188
    %v2200 = vsel %vm299, %v2189, 0.0
    %v2201 = vadd.f32 %v2199, %v2200
    %v2202 = vrot.slane %v2201, 4
    %v2203 = vadd.f32 %v2201, %v2202
    %v2204 = vrot.slane %v2203, 2
    %v2205 = vadd.f32 %v2203, %v2204
    %v2206 = vrot.slane %v2205, 1
    %v2207 = vadd.f32 %v2205, %v2206
    %v2208 = vmul.f32 %v2198, 0.05263158
    %v2209 = vmul.f32 %v2207, 0.05263158
    %vm2212 = vcmask 1041409
    %v2213 = vsel %vm2212, %v2209, %v2208
    %2215 = vst [vmem:[%s10] sm:$0x3] %v2213
    // Predicated region
    $region50: #{mlstm_fcn_forward.3} parent=1 // pred_check
      _
    $region51: #{mlstm_fcn_forward.3} parent=1 // pred_check_branch
      %2217 = sbr.rel (0) target = $region53
    $region52: #{mlstm_fcn_forward.3} parent=1 // pred_region
      _
    $region53: #{mlstm_fcn_forward.3} parent=1 // pred_fallthru
      _
    // Predicated region
    $region54: #{mlstm_fcn_forward.3} parent=1 // pred_check
      _
    $region55: #{mlstm_fcn_forward.3} parent=1 // pred_check_branch
      %2219 = sbr.rel (0) target = $region57
    $region56: #{mlstm_fcn_forward.3} parent=1 // pred_region
      _
    $region57: #{mlstm_fcn_forward.3} parent=1 // pred_fallthru
      _
    %2220 = vsyncpa [#allocation3], 1
    %2221 = vsyncpa [#allocation5], 1

// kernel: mlstm_fcn_forward.2
$region0: #{mlstm_fcn_forward.2}
  #allocation0 [shape = 'u32[]', space=smem, size = 0x4, offset = 0x4, fixed_abs, tag = 'smem constant byte address 0x4 - core index']
  #allocation1 [shape = 'u32[144,128]{1,0:T(1,128)}', space=vmem, size = 0x12000, scoped, tag = 'internal scratch']
  #allocation2 [shape = 'f32[256,512]{1,0:T(8,128)}', space=vmem, size = 0x80000, scoped, tag = 'scratch operand']
  %s0 = inlined_call_operand.vmem [shape: f32[32,8,16], index: 0, kind: input, shape index: {}]
  %s1 = inlined_call_operand.vmem [shape: f32[16,512], index: 1, kind: input, shape index: {}]
  %s2 = inlined_call_operand.vmem [shape: f32[128,512], index: 2, kind: input, shape index: {}]
  %s3 = inlined_call_operand.vmem [shape: f32[1,512], index: 3, kind: input, shape index: {}]
  %s4 = inlined_call_operand.vmem [shape: f32[8,128], index: 4, kind: output, shape index: {}]
  %s5 = sld [smem:[#allocation0]]
  $region26: #{mlstm_fcn_forward.2} parent=0
    _
  %s7 = ssub.s32 1, %s5
  %s8 = scalar_select 0, %s7, %s5
  // Predicated region
  $region2: #{mlstm_fcn_forward.2} parent=0 // pred_check
    _
  $region3: #{mlstm_fcn_forward.2} parent=0 // pred_check_branch
    %10 = sbr.rel (0) target = $region5
  $region4: #{mlstm_fcn_forward.2} parent=0 // pred_region
    _
  $region5: #{mlstm_fcn_forward.2} parent=0 // pred_fallthru
    _
  // Predicated region
  $region6: #{mlstm_fcn_forward.2} parent=0 // pred_check
    _
  $region7: #{mlstm_fcn_forward.2} parent=0 // pred_check_branch
    %12 = sbr.rel (0) target = $region9
  $region8: #{mlstm_fcn_forward.2} parent=0 // pred_region
    _
  $region9: #{mlstm_fcn_forward.2} parent=0 // pred_fallthru
    _
  // Predicated region
  $region10: #{mlstm_fcn_forward.2} parent=0 // pred_check
    _
  $region11: #{mlstm_fcn_forward.2} parent=0 // pred_check_branch
    %14 = sbr.rel (0) target = $region13
  $region12: #{mlstm_fcn_forward.2} parent=0 // pred_region
    _
  $region13: #{mlstm_fcn_forward.2} parent=0 // pred_fallthru
    _
  // Predicated region
  $region14: #{mlstm_fcn_forward.2} parent=0 // pred_check
    _
  $region15: #{mlstm_fcn_forward.2} parent=0 // pred_check_branch
    %16 = sbr.rel (0) target = $region17
  $region16: #{mlstm_fcn_forward.2} parent=0 // pred_region
    _
  $region17: #{mlstm_fcn_forward.2} parent=0 // pred_fallthru
    _
  %v17 = vld [vmem:[%s0] sm:$0xff]
  %v18 = vld [vmem:[%s0 + $0x8] sm:$0xff]
  %v19 = vld [vmem:[%s0 + $0x10] sm:$0xff]
  %v20 = vld [vmem:[%s0 + $0x18] sm:$0xff]
  %v21 = vld [vmem:[%s0 + $0x20] sm:$0xff]
  %v22 = vld [vmem:[%s0 + $0x28] sm:$0xff]
  %v23 = vld [vmem:[%s0 + $0x30] sm:$0xff]
  %v24 = vld [vmem:[%s0 + $0x38] sm:$0xff]
  %v25 = vld [vmem:[%s0 + $0x40] sm:$0xff]
  %v26 = vld [vmem:[%s0 + $0x48] sm:$0xff]
  %v27 = vld [vmem:[%s0 + $0x50] sm:$0xff]
  %v28 = vld [vmem:[%s0 + $0x58] sm:$0xff]
  %v29 = vld [vmem:[%s0 + $0x60] sm:$0xff]
  %v30 = vld [vmem:[%s0 + $0x68] sm:$0xff]
  %v31 = vld [vmem:[%s0 + $0x70] sm:$0xff]
  %v32 = vld [vmem:[%s0 + $0x78] sm:$0xff]
  %v33 = vld [vmem:[%s0 + $0x80] sm:$0xff]
  %v34 = vld [vmem:[%s0 + $0x88] sm:$0xff]
  %v35 = vld [vmem:[%s0 + $0x90] sm:$0xff]
  %v36 = vld [vmem:[%s0 + $0x98] sm:$0xff]
  %v37 = vld [vmem:[%s0 + $0xa0] sm:$0xff]
  %v38 = vld [vmem:[%s0 + $0xa8] sm:$0xff]
  %v39 = vld [vmem:[%s0 + $0xb0] sm:$0xff]
  %v40 = vld [vmem:[%s0 + $0xb8] sm:$0xff]
  %v41 = vld [vmem:[%s0 + $0xc0] sm:$0xff]
  %v42 = vld [vmem:[%s0 + $0xc8] sm:$0xff]
  %v43 = vld [vmem:[%s0 + $0xd0] sm:$0xff]
  %v44 = vld [vmem:[%s0 + $0xd8] sm:$0xff]
  %v45 = vld [vmem:[%s0 + $0xe0] sm:$0xff]
  %v46 = vld [vmem:[%s0 + $0xe8] sm:$0xff]
  %v47 = vld [vmem:[%s0 + $0xf0] sm:$0xff]
  %v48 = vld [vmem:[%s0 + $0xf8] sm:$0xff]
  %v49 = vld [vmem:[%s1] sm:$0xff]
  %v50 = vld [vmem:[%s1 + $0x8] sm:$0xff]
  %v51 = vld [vmem:[%s1 + $0x10] sm:$0xff]
  %v52 = vld [vmem:[%s1 + $0x18] sm:$0xff]
  %v53 = vld [vmem:[%s1 + $0x20] sm:$0xff]
  %v54 = vld [vmem:[%s1 + $0x28] sm:$0xff]
  %v55 = vld [vmem:[%s1 + $0x30] sm:$0xff]
  %v56 = vld [vmem:[%s1 + $0x38] sm:$0xff]
  %v57 = vld [vmem:[%s3] sm:$0xf]
  %v59 = vlaneseq
  %v60 = vshrl.u32 %v59, 7
  %v61 = vsub.s32 0, %v60
  %v62 = vrot.slane %v57, %v61
  %v63 = vlaneseq
  %v64 = vshrl.u32 %v63, 7
  %v65 = vsub.s32 1, %v64
  %v66 = vrot.slane %v57, %v65
  %v67 = vlaneseq
  %v68 = vshrl.u32 %v67, 7
  %v69 = vsub.s32 2, %v68
  %v70 = vrot.slane %v57, %v69
  %v71 = vlaneseq
  %v72 = vshrl.u32 %v71, 7
  %v73 = vsub.s32 3, %v72
  %v74 = vrot.slane %v57, %v73
  %vm79 = vcmask 130048
  %v81 = vsel %vm79, %v17, 0
  %v84 = vsel %vm79, %v18, 0
  %v87 = vsel %vm79, %v19, 0
  %v90 = vsel %vm79, %v20, 0
  %v93 = vsel %vm79, %v21, 0
  %v96 = vsel %vm79, %v22, 0
  %v99 = vsel %vm79, %v23, 0
  %v102 = vsel %vm79, %v24, 0
  %v105 = vsel %vm79, %v25, 0
  %v108 = vsel %vm79, %v26, 0
  %v111 = vsel %vm79, %v27, 0
  %v114 = vsel %vm79, %v28, 0
  %v117 = vsel %vm79, %v29, 0
  %v120 = vsel %vm79, %v30, 0
  %v123 = vsel %vm79, %v31, 0
  %v126 = vsel %vm79, %v32, 0
  %v129 = vsel %vm79, %v33, 0
  %v132 = vsel %vm79, %v34, 0
  %v135 = vsel %vm79, %v35, 0
  %v138 = vsel %vm79, %v36, 0
  %v141 = vsel %vm79, %v37, 0
  %v144 = vsel %vm79, %v38, 0
  %v147 = vsel %vm79, %v39, 0
  %v150 = vsel %vm79, %v40, 0
  %v153 = vsel %vm79, %v41, 0
  %v156 = vsel %vm79, %v42, 0
  %v159 = vsel %vm79, %v43, 0
  %v162 = vsel %vm79, %v44, 0
  %v165 = vsel %vm79, %v45, 0
  %v168 = vsel %vm79, %v46, 0
  %v171 = vsel %vm79, %v47, 0
  %v174 = vsel %vm79, %v48, 0
  %176 = vmatprep.subr.mxu0 0.0
  %177 = vmatpush1.msra.mxu0 0.0
  %178 = vmatprep.subr.mxu0 0.0
  %179 = vmatpush1.msra.mxu0 0.0
  %180 = vmatprep.subr.mxu0 0.0
  %181 = vmatpush1.msra.mxu0 0.0
  %182 = vmatprep.subr.mxu0 0.0
  %183 = vmatpush1.msra.mxu0 0.0
  %184 = vmatprep.subr.mxu0 0.0
  %185 = vmatpush1.msra.mxu0 0.0
  %186 = vmatprep.subr.mxu0 0.0
  %187 = vmatpush1.msra.mxu0 0.0
  %188 = vmatprep.subr.mxu0 0.0
  %189 = vmatpush1.msra.mxu0 0.0
  %190 = vmatprep.subr.mxu0 0.0
  %191 = vmatpush1.msra.mxu0 0.0
  %192 = vmatprep.subr.mxu0 0.0
  %193 = vmatpush1.msra.mxu0 0.0
  %194 = vmatprep.subr.mxu0 0.0
  %195 = vmatpush1.msra.mxu0 0.0
  %196 = vmatprep.subr.mxu0 0.0
  %197 = vmatpush1.msra.mxu0 0.0
  %198 = vmatprep.subr.mxu0 0.0
  %199 = vmatpush1.msra.mxu0 0.0
  %200 = vmatprep.subr.mxu0 0.0
  %201 = vmatpush1.msra.mxu0 0.0
  %202 = vmatprep.subr.mxu0 0.0
  %203 = vmatpush1.msra.mxu0 0.0
  %204 = vmatprep.subr.mxu0 %v54
  %205 = vmatpush1.msra.mxu0 %v53
  %206 = vmatprep.subr.mxu0 %v50
  %207 = vmatpush1.msra.mxu0 %v49
  %208 = vmatprep.subr.mxu0 0.0
  %209 = vmatpush2.msra.mxu0 0.0
  %210 = vmatprep.subr.mxu0 0.0
  %211 = vmatpush2.msra.mxu0 0.0
  %212 = vmatprep.subr.mxu0 0.0
  %213 = vmatpush2.msra.mxu0 0.0
  %214 = vmatprep.subr.mxu0 0.0
  %215 = vmatpush2.msra.mxu0 0.0
  %216 = vmatprep.subr.mxu0 0.0
  %217 = vmatpush2.msra.mxu0 0.0
  %218 = vmatprep.subr.mxu0 0.0
  %219 = vmatpush2.msra.mxu0 0.0
  %220 = vmatprep.subr.mxu0 0.0
  %221 = vmatpush2.msra.mxu0 0.0
  %222 = vmatprep.subr.mxu0 0.0
  %223 = vmatpush2.msra.mxu0 0.0
  %224 = vmatprep.subr.mxu0 0.0
  %225 = vmatpush2.msra.mxu0 0.0
  %226 = vmatprep.subr.mxu0 0.0
  %227 = vmatpush2.msra.mxu0 0.0
  %228 = vmatprep.subr.mxu0 0.0
  %229 = vmatpush2.msra.mxu0 0.0
  %230 = vmatprep.subr.mxu0 0.0
  %231 = vmatpush2.msra.mxu0 0.0
  %232 = vmatprep.subr.mxu0 0.0
  %233 = vmatpush2.msra.mxu0 0.0
  %234 = vmatprep.subr.mxu0 0.0
  %235 = vmatpush2.msra.mxu0 0.0
  %236 = vmatprep.subr.mxu0 0.0
  %237 = vmatpush2.msra.mxu0 0.0
  %238 = vmatprep.subr.mxu0 0.0
  %239 = vmatpush2.msra.mxu0 0.0
  %240 = vmatprep.mubr.f32.mxu0 0.0
  %241 = vmatmul.mubr.f32.gmra.mxu0 %v81
  %v242 = vpop.f32.mrf.mxu0
  %v243 = vadd.f32 %v62, %v242
  %v244 = vpop.f32.mrf.mxu0
  %v245 = vadd.f32 %v66, %v244
  %246 = vmatprep.mubr.f32.mxu0 0.0
  %247 = vmatmul.mubr.f32.gmra.mxu0 %v84
  %v248 = vpop.f32.mrf.mxu0
  %v249 = vadd.f32 %v62, %v248
  %v250 = vpop.f32.mrf.mxu0
  %v251 = vadd.f32 %v66, %v250
  %252 = vmatprep.mubr.f32.mxu0 0.0
  %253 = vmatmul.mubr.f32.gmra.mxu0 %v87
  %v254 = vpop.f32.mrf.mxu0
  %v255 = vadd.f32 %v62, %v254
  %v256 = vpop.f32.mrf.mxu0
  %v257 = vadd.f32 %v66, %v256
  %258 = vmatprep.mubr.f32.mxu0 0.0
  %259 = vmatmul.mubr.f32.gmra.mxu0 %v90
  %v260 = vpop.f32.mrf.mxu0
  %v261 = vadd.f32 %v62, %v260
  %v262 = vpop.f32.mrf.mxu0
  %v263 = vadd.f32 %v66, %v262
  %264 = vmatprep.mubr.f32.mxu0 0.0
  %265 = vmatmul.mubr.f32.gmra.mxu0 %v93
  %v266 = vpop.f32.mrf.mxu0
  %v267 = vadd.f32 %v62, %v266
  %v268 = vpop.f32.mrf.mxu0
  %v269 = vadd.f32 %v66, %v268
  %270 = vmatprep.mubr.f32.mxu0 0.0
  %271 = vmatmul.mubr.f32.gmra.mxu0 %v96
  %v272 = vpop.f32.mrf.mxu0
  %v273 = vadd.f32 %v62, %v272
  %v274 = vpop.f32.mrf.mxu0
  %v275 = vadd.f32 %v66, %v274
  %276 = vmatprep.mubr.f32.mxu0 0.0
  %277 = vmatmul.mubr.f32.gmra.mxu0 %v99
  %v278 = vpop.f32.mrf.mxu0
  %v279 = vadd.f32 %v62, %v278
  %v280 = vpop.f32.mrf.mxu0
  %v281 = vadd.f32 %v66, %v280
  %282 = vmatprep.mubr.f32.mxu0 0.0
  %283 = vmatmul.mubr.f32.gmra.mxu0 %v102
  %v284 = vpop.f32.mrf.mxu0
  %v285 = vadd.f32 %v62, %v284
  %v286 = vpop.f32.mrf.mxu0
  %v287 = vadd.f32 %v66, %v286
  %288 = vmatprep.mubr.f32.mxu0 0.0
  %289 = vmatmul.mubr.f32.gmra.mxu0 %v105
  %v290 = vpop.f32.mrf.mxu0
  %v291 = vadd.f32 %v62, %v290
  %v292 = vpop.f32.mrf.mxu0
  %v293 = vadd.f32 %v66, %v292
  %294 = vmatprep.mubr.f32.mxu0 0.0
  %295 = vmatmul.mubr.f32.gmra.mxu0 %v108
  %v296 = vpop.f32.mrf.mxu0
  %v297 = vadd.f32 %v62, %v296
  %v298 = vpop.f32.mrf.mxu0
  %v299 = vadd.f32 %v66, %v298
  %300 = vmatprep.mubr.f32.mxu0 0.0
  %301 = vmatmul.mubr.f32.gmra.mxu0 %v111
  %v302 = vpop.f32.mrf.mxu0
  %v303 = vadd.f32 %v62, %v302
  %v304 = vpop.f32.mrf.mxu0
  %v305 = vadd.f32 %v66, %v304
  %306 = vmatprep.mubr.f32.mxu0 0.0
  %307 = vmatmul.mubr.f32.gmra.mxu0 %v114
  %v308 = vpop.f32.mrf.mxu0
  %v309 = vadd.f32 %v62, %v308
  %v310 = vpop.f32.mrf.mxu0
  %v311 = vadd.f32 %v66, %v310
  %312 = vmatprep.mubr.f32.mxu0 0.0
  %313 = vmatmul.mubr.f32.gmra.mxu0 %v117
  %v314 = vpop.f32.mrf.mxu0
  %v315 = vadd.f32 %v62, %v314
  %v316 = vpop.f32.mrf.mxu0
  %v317 = vadd.f32 %v66, %v316
  %318 = vmatprep.mubr.f32.mxu0 0.0
  %319 = vmatmul.mubr.f32.gmra.mxu0 %v120
  %v320 = vpop.f32.mrf.mxu0
  %v321 = vadd.f32 %v62, %v320
  %v322 = vpop.f32.mrf.mxu0
  %v323 = vadd.f32 %v66, %v322
  %324 = vmatprep.mubr.f32.mxu0 0.0
  %325 = vmatmul.mubr.f32.gmra.mxu0 %v123
  %v326 = vpop.f32.mrf.mxu0
  %v327 = vadd.f32 %v62, %v326
  %v328 = vpop.f32.mrf.mxu0
  %v329 = vadd.f32 %v66, %v328
  %330 = vmatprep.mubr.f32.mxu0 0.0
  %331 = vmatmul.mubr.f32.gmra.mxu0 %v126
  %v332 = vpop.f32.mrf.mxu0
  %v333 = vadd.f32 %v62, %v332
  %v334 = vpop.f32.mrf.mxu0
  %v335 = vadd.f32 %v66, %v334
  %336 = vmatprep.mubr.f32.mxu0 0.0
  %337 = vmatmul.mubr.f32.gmra.mxu0 %v129
  %v338 = vpop.f32.mrf.mxu0
  %v339 = vadd.f32 %v62, %v338
  %v340 = vpop.f32.mrf.mxu0
  %v341 = vadd.f32 %v66, %v340
  %342 = vmatprep.mubr.f32.mxu0 0.0
  %343 = vmatmul.mubr.f32.gmra.mxu0 %v132
  %v344 = vpop.f32.mrf.mxu0
  %v345 = vadd.f32 %v62, %v344
  %v346 = vpop.f32.mrf.mxu0
  %v347 = vadd.f32 %v66, %v346
  %348 = vmatprep.mubr.f32.mxu0 0.0
  %349 = vmatmul.mubr.f32.gmra.mxu0 %v135
  %v350 = vpop.f32.mrf.mxu0
  %v351 = vadd.f32 %v62, %v350
  %v352 = vpop.f32.mrf.mxu0
  %v353 = vadd.f32 %v66, %v352
  %354 = vmatprep.mubr.f32.mxu0 0.0
  %355 = vmatmul.mubr.f32.gmra.mxu0 %v138
  %v356 = vpop.f32.mrf.mxu0
  %v357 = vadd.f32 %v62, %v356
  %v358 = vpop.f32.mrf.mxu0
  %v359 = vadd.f32 %v66, %v358
  %360 = vmatprep.mubr.f32.mxu0 0.0
  %361 = vmatmul.mubr.f32.gmra.mxu0 %v141
  %v362 = vpop.f32.mrf.mxu0
  %v363 = vadd.f32 %v62, %v362
  %v364 = vpop.f32.mrf.mxu0
  %v365 = vadd.f32 %v66, %v364
  %366 = vmatprep.mubr.f32.mxu0 0.0
  %367 = vmatmul.mubr.f32.gmra.mxu0 %v144
  %v368 = vpop.f32.mrf.mxu0
  %v369 = vadd.f32 %v62, %v368
  %v370 = vpop.f32.mrf.mxu0
  %v371 = vadd.f32 %v66, %v370
  %372 = vmatprep.mubr.f32.mxu0 0.0
  %373 = vmatmul.mubr.f32.gmra.mxu0 %v147
  %v374 = vpop.f32.mrf.mxu0
  %v375 = vadd.f32 %v62, %v374
  %v376 = vpop.f32.mrf.mxu0
  %v377 = vadd.f32 %v66, %v376
  %378 = vmatprep.mubr.f32.mxu0 0.0
  %379 = vmatmul.mubr.f32.gmra.mxu0 %v150
  %v380 = vpop.f32.mrf.mxu0
  %v381 = vadd.f32 %v62, %v380
  %v382 = vpop.f32.mrf.mxu0
  %v383 = vadd.f32 %v66, %v382
  %384 = vmatprep.mubr.f32.mxu0 0.0
  %385 = vmatmul.mubr.f32.gmra.mxu0 %v153
  %v386 = vpop.f32.mrf.mxu0
  %v387 = vadd.f32 %v62, %v386
  %v388 = vpop.f32.mrf.mxu0
  %v389 = vadd.f32 %v66, %v388
  %390 = vmatprep.mubr.f32.mxu0 0.0
  %391 = vmatmul.mubr.f32.gmra.mxu0 %v156
  %v392 = vpop.f32.mrf.mxu0
  %v393 = vadd.f32 %v62, %v392
  %v394 = vpop.f32.mrf.mxu0
  %v395 = vadd.f32 %v66, %v394
  %396 = vmatprep.mubr.f32.mxu0 0.0
  %397 = vmatmul.mubr.f32.gmra.mxu0 %v159
  %v398 = vpop.f32.mrf.mxu0
  %v399 = vadd.f32 %v62, %v398
  %v400 = vpop.f32.mrf.mxu0
  %v401 = vadd.f32 %v66, %v400
  %402 = vmatprep.mubr.f32.mxu0 0.0
  %403 = vmatmul.mubr.f32.gmra.mxu0 %v162
  %v404 = vpop.f32.mrf.mxu0
  %v405 = vadd.f32 %v62, %v404
  %v406 = vpop.f32.mrf.mxu0
  %v407 = vadd.f32 %v66, %v406
  %408 = vmatprep.mubr.f32.mxu0 0.0
  %409 = vmatmul.mubr.f32.gmra.mxu0 %v165
  %v410 = vpop.f32.mrf.mxu0
  %v411 = vadd.f32 %v62, %v410
  %v412 = vpop.f32.mrf.mxu0
  %v413 = vadd.f32 %v66, %v412
  %414 = vmatprep.mubr.f32.mxu0 0.0
  %415 = vmatmul.mubr.f32.gmra.mxu0 %v168
  %v416 = vpop.f32.mrf.mxu0
  %v417 = vadd.f32 %v62, %v416
  %v418 = vpop.f32.mrf.mxu0
  %v419 = vadd.f32 %v66, %v418
  %420 = vmatprep.mubr.f32.mxu0 0.0
  %421 = vmatmul.mubr.f32.gmra.mxu0 %v171
  %v422 = vpop.f32.mrf.mxu0
  %v423 = vadd.f32 %v62, %v422
  %v424 = vpop.f32.mrf.mxu0
  %v425 = vadd.f32 %v66, %v424
  %426 = vmatprep.mubr.f32.mxu0 0.0
  %427 = vmatmul.mubr.f32.gmra.mxu0 %v174
  %v428 = vpop.f32.mrf.mxu0
  %v429 = vadd.f32 %v62, %v428
  %v430 = vpop.f32.mrf.mxu0
  %v431 = vadd.f32 %v66, %v430
  %432 = vdwg.mxu0
  %433 = vmatprep.subr.mxu0 0.0
  %434 = vmatpush1.msra.mxu0 0.0
  %435 = vmatprep.subr.mxu0 0.0
  %436 = vmatpush1.msra.mxu0 0.0
  %437 = vmatprep.subr.mxu0 0.0
  %438 = vmatpush1.msra.mxu0 0.0
  %439 = vmatprep.subr.mxu0 0.0
  %440 = vmatpush1.msra.mxu0 0.0
  %441 = vmatprep.subr.mxu0 0.0
  %442 = vmatpush1.msra.mxu0 0.0
  %443 = vmatprep.subr.mxu0 0.0
  %444 = vmatpush1.msra.mxu0 0.0
  %445 = vmatprep.subr.mxu0 0.0
  %446 = vmatpush1.msra.mxu0 0.0
  %447 = vmatprep.subr.mxu0 0.0
  %448 = vmatpush1.msra.mxu0 0.0
  %449 = vmatprep.subr.mxu0 0.0
  %450 = vmatpush1.msra.mxu0 0.0
  %451 = vmatprep.subr.mxu0 0.0
  %452 = vmatpush1.msra.mxu0 0.0
  %453 = vmatprep.subr.mxu0 0.0
  %454 = vmatpush1.msra.mxu0 0.0
  %455 = vmatprep.subr.mxu0 0.0
  %456 = vmatpush1.msra.mxu0 0.0
  %457 = vmatprep.subr.mxu0 0.0
  %458 = vmatpush1.msra.mxu0 0.0
  %459 = vmatprep.subr.mxu0 0.0
  %460 = vmatpush1.msra.mxu0 0.0
  %461 = vmatprep.subr.mxu0 %v56
  %462 = vmatpush1.msra.mxu0 %v55
  %463 = vmatprep.subr.mxu0 %v52
  %464 = vmatpush1.msra.mxu0 %v51
  %465 = vmatprep.subr.mxu0 0.0
  %466 = vmatpush2.msra.mxu0 0.0
  %467 = vmatprep.subr.mxu0 0.0
  %468 = vmatpush2.msra.mxu0 0.0
  %469 = vmatprep.subr.mxu0 0.0
  %470 = vmatpush2.msra.mxu0 0.0
  %471 = vmatprep.subr.mxu0 0.0
  %472 = vmatpush2.msra.mxu0 0.0
  %473 = vmatprep.subr.mxu0 0.0
  %474 = vmatpush2.msra.mxu0 0.0
  %475 = vmatprep.subr.mxu0 0.0
  %476 = vmatpush2.msra.mxu0 0.0
  %477 = vmatprep.subr.mxu0 0.0
  %478 = vmatpush2.msra.mxu0 0.0
  %479 = vmatprep.subr.mxu0 0.0
  %480 = vmatpush2.msra.mxu0 0.0
  %481 = vmatprep.subr.mxu0 0.0
  %482 = vmatpush2.msra.mxu0 0.0
  %483 = vmatprep.subr.mxu0 0.0
  %484 = vmatpush2.msra.mxu0 0.0
  %485 = vmatprep.subr.mxu0 0.0
  %486 = vmatpush2.msra.mxu0 0.0
  %487 = vmatprep.subr.mxu0 0.0
  %488 = vmatpush2.msra.mxu0 0.0
  %489 = vmatprep.subr.mxu0 0.0
  %490 = vmatpush2.msra.mxu0 0.0
  %491 = vmatprep.subr.mxu0 0.0
  %492 = vmatpush2.msra.mxu0 0.0
  %493 = vmatprep.subr.mxu0 0.0
  %494 = vmatpush2.msra.mxu0 0.0
  %495 = vmatprep.subr.mxu0 0.0
  %496 = vmatpush2.msra.mxu0 0.0
  %497 = vmatprep.mubr.f32.mxu0 0.0
  %498 = vmatmul.mubr.f32.gmra.mxu0 %v81
  %v499 = vpop.f32.mrf.mxu0
  %v500 = vadd.f32 %v70, %v499
  %v501 = vpop.f32.mrf.mxu0
  %v502 = vadd.f32 %v74, %v501
  %503 = vmatprep.mubr.f32.mxu0 0.0
  %504 = vmatmul.mubr.f32.gmra.mxu0 %v84
  %v505 = vpop.f32.mrf.mxu0
  %v506 = vadd.f32 %v70, %v505
  %v507 = vpop.f32.mrf.mxu0
  %v508 = vadd.f32 %v74, %v507
  %509 = vmatprep.mubr.f32.mxu0 0.0
  %510 = vmatmul.mubr.f32.gmra.mxu0 %v87
  %v511 = vpop.f32.mrf.mxu0
  %v512 = vadd.f32 %v70, %v511
  %v513 = vpop.f32.mrf.mxu0
  %v514 = vadd.f32 %v74, %v513
  %515 = vmatprep.mubr.f32.mxu0 0.0
  %516 = vmatmul.mubr.f32.gmra.mxu0 %v90
  %v517 = vpop.f32.mrf.mxu0
  %v518 = vadd.f32 %v70, %v517
  %v519 = vpop.f32.mrf.mxu0
  %v520 = vadd.f32 %v74, %v519
  %521 = vmatprep.mubr.f32.mxu0 0.0
  %522 = vmatmul.mubr.f32.gmra.mxu0 %v93
  %v523 = vpop.f32.mrf.mxu0
  %v524 = vadd.f32 %v70, %v523
  %v525 = vpop.f32.mrf.mxu0
  %v526 = vadd.f32 %v74, %v525
  %527 = vmatprep.mubr.f32.mxu0 0.0
  %528 = vmatmul.mubr.f32.gmra.mxu0 %v96
  %v529 = vpop.f32.mrf.mxu0
  %v530 = vadd.f32 %v70, %v529
  %v531 = vpop.f32.mrf.mxu0
  %v532 = vadd.f32 %v74, %v531
  %533 = vmatprep.mubr.f32.mxu0 0.0
  %534 = vmatmul.mubr.f32.gmra.mxu0 %v99
  %v535 = vpop.f32.mrf.mxu0
  %v536 = vadd.f32 %v70, %v535
  %v537 = vpop.f32.mrf.mxu0
  %v538 = vadd.f32 %v74, %v537
  %539 = vmatprep.mubr.f32.mxu0 0.0
  %540 = vmatmul.mubr.f32.gmra.mxu0 %v102
  %v541 = vpop.f32.mrf.mxu0
  %v542 = vadd.f32 %v70, %v541
  %v543 = vpop.f32.mrf.mxu0
  %v544 = vadd.f32 %v74, %v543
  %545 = vmatprep.mubr.f32.mxu0 0.0
  %546 = vmatmul.mubr.f32.gmra.mxu0 %v105
  %v547 = vpop.f32.mrf.mxu0
  %v548 = vadd.f32 %v70, %v547
  %v549 = vpop.f32.mrf.mxu0
  %v550 = vadd.f32 %v74, %v549
  %551 = vmatprep.mubr.f32.mxu0 0.0
  %552 = vmatmul.mubr.f32.gmra.mxu0 %v108
  %v553 = vpop.f32.mrf.mxu0
  %v554 = vadd.f32 %v70, %v553
  %v555 = vpop.f32.mrf.mxu0
  %v556 = vadd.f32 %v74, %v555
  %557 = vmatprep.mubr.f32.mxu0 0.0
  %558 = vmatmul.mubr.f32.gmra.mxu0 %v111
  %v559 = vpop.f32.mrf.mxu0
  %v560 = vadd.f32 %v70, %v559
  %v561 = vpop.f32.mrf.mxu0
  %v562 = vadd.f32 %v74, %v561
  %563 = vmatprep.mubr.f32.mxu0 0.0
  %564 = vmatmul.mubr.f32.gmra.mxu0 %v114
  %v565 = vpop.f32.mrf.mxu0
  %v566 = vadd.f32 %v70, %v565
  %v567 = vpop.f32.mrf.mxu0
  %v568 = vadd.f32 %v74, %v567
  %569 = vmatprep.mubr.f32.mxu0 0.0
  %570 = vmatmul.mubr.f32.gmra.mxu0 %v117
  %v571 = vpop.f32.mrf.mxu0
  %v572 = vadd.f32 %v70, %v571
  %v573 = vpop.f32.mrf.mxu0
  %v574 = vadd.f32 %v74, %v573
  %575 = vmatprep.mubr.f32.mxu0 0.0
  %576 = vmatmul.mubr.f32.gmra.mxu0 %v120
  %v577 = vpop.f32.mrf.mxu0
  %v578 = vadd.f32 %v70, %v577
  %v579 = vpop.f32.mrf.mxu0
  %v580 = vadd.f32 %v74, %v579
  %581 = vmatprep.mubr.f32.mxu0 0.0
  %582 = vmatmul.mubr.f32.gmra.mxu0 %v123
  %v583 = vpop.f32.mrf.mxu0
  %v584 = vadd.f32 %v70, %v583
  %v585 = vpop.f32.mrf.mxu0
  %v586 = vadd.f32 %v74, %v585
  %587 = vmatprep.mubr.f32.mxu0 0.0
  %588 = vmatmul.mubr.f32.gmra.mxu0 %v126
  %v589 = vpop.f32.mrf.mxu0
  %v590 = vadd.f32 %v70, %v589
  %v591 = vpop.f32.mrf.mxu0
  %v592 = vadd.f32 %v74, %v591
  %593 = vmatprep.mubr.f32.mxu0 0.0
  %594 = vmatmul.mubr.f32.gmra.mxu0 %v129
  %v595 = vpop.f32.mrf.mxu0
  %v596 = vadd.f32 %v70, %v595
  %v597 = vpop.f32.mrf.mxu0
  %v598 = vadd.f32 %v74, %v597
  %599 = vmatprep.mubr.f32.mxu0 0.0
  %600 = vmatmul.mubr.f32.gmra.mxu0 %v132
  %v601 = vpop.f32.mrf.mxu0
  %v602 = vadd.f32 %v70, %v601
  %v603 = vpop.f32.mrf.mxu0
  %v604 = vadd.f32 %v74, %v603
  %605 = vmatprep.mubr.f32.mxu0 0.0
  %606 = vmatmul.mubr.f32.gmra.mxu0 %v135
  %v607 = vpop.f32.mrf.mxu0
  %v608 = vadd.f32 %v70, %v607
  %v609 = vpop.f32.mrf.mxu0
  %v610 = vadd.f32 %v74, %v609
  %611 = vmatprep.mubr.f32.mxu0 0.0
  %612 = vmatmul.mubr.f32.gmra.mxu0 %v138
  %v613 = vpop.f32.mrf.mxu0
  %v614 = vadd.f32 %v70, %v613
  %v615 = vpop.f32.mrf.mxu0
  %v616 = vadd.f32 %v74, %v615
  %617 = vmatprep.mubr.f32.mxu0 0.0
  %618 = vmatmul.mubr.f32.gmra.mxu0 %v141
  %v619 = vpop.f32.mrf.mxu0
  %v620 = vadd.f32 %v70, %v619
  %v621 = vpop.f32.mrf.mxu0
  %v622 = vadd.f32 %v74, %v621
  %623 = vmatprep.mubr.f32.mxu0 0.0
  %624 = vmatmul.mubr.f32.gmra.mxu0 %v144
  %v625 = vpop.f32.mrf.mxu0
  %v626 = vadd.f32 %v70, %v625
  %v627 = vpop.f32.mrf.mxu0
  %v628 = vadd.f32 %v74, %v627
  %629 = vmatprep.mubr.f32.mxu0 0.0
  %630 = vmatmul.mubr.f32.gmra.mxu0 %v147
  %v631 = vpop.f32.mrf.mxu0
  %v632 = vadd.f32 %v70, %v631
  %v633 = vpop.f32.mrf.mxu0
  %v634 = vadd.f32 %v74, %v633
  %635 = vmatprep.mubr.f32.mxu0 0.0
  %636 = vmatmul.mubr.f32.gmra.mxu0 %v150
  %v637 = vpop.f32.mrf.mxu0
  %v638 = vadd.f32 %v70, %v637
  %v639 = vpop.f32.mrf.mxu0
  %v640 = vadd.f32 %v74, %v639
  %641 = vmatprep.mubr.f32.mxu0 0.0
  %642 = vmatmul.mubr.f32.gmra.mxu0 %v153
  %v643 = vpop.f32.mrf.mxu0
  %v644 = vadd.f32 %v70, %v643
  %v645 = vpop.f32.mrf.mxu0
  %v646 = vadd.f32 %v74, %v645
  %647 = vmatprep.mubr.f32.mxu0 0.0
  %648 = vmatmul.mubr.f32.gmra.mxu0 %v156
  %v649 = vpop.f32.mrf.mxu0
  %v650 = vadd.f32 %v70, %v649
  %v651 = vpop.f32.mrf.mxu0
  %v652 = vadd.f32 %v74, %v651
  %653 = vmatprep.mubr.f32.mxu0 0.0
  %654 = vmatmul.mubr.f32.gmra.mxu0 %v159
  %v655 = vpop.f32.mrf.mxu0
  %v656 = vadd.f32 %v70, %v655
  %v657 = vpop.f32.mrf.mxu0
  %v658 = vadd.f32 %v74, %v657
  %659 = vmatprep.mubr.f32.mxu0 0.0
  %660 = vmatmul.mubr.f32.gmra.mxu0 %v162
  %v661 = vpop.f32.mrf.mxu0
  %v662 = vadd.f32 %v70, %v661
  %v663 = vpop.f32.mrf.mxu0
  %v664 = vadd.f32 %v74, %v663
  %665 = vmatprep.mubr.f32.mxu0 0.0
  %666 = vmatmul.mubr.f32.gmra.mxu0 %v165
  %v667 = vpop.f32.mrf.mxu0
  %v668 = vadd.f32 %v70, %v667
  %v669 = vpop.f32.mrf.mxu0
  %v670 = vadd.f32 %v74, %v669
  %671 = vmatprep.mubr.f32.mxu0 0.0
  %672 = vmatmul.mubr.f32.gmra.mxu0 %v168
  %v673 = vpop.f32.mrf.mxu0
  %v674 = vadd.f32 %v70, %v673
  %v675 = vpop.f32.mrf.mxu0
  %v676 = vadd.f32 %v74, %v675
  %677 = vmatprep.mubr.f32.mxu0 0.0
  %678 = vmatmul.mubr.f32.gmra.mxu0 %v171
  %v679 = vpop.f32.mrf.mxu0
  %v680 = vadd.f32 %v70, %v679
  %v681 = vpop.f32.mrf.mxu0
  %v682 = vadd.f32 %v74, %v681
  %683 = vmatprep.mubr.f32.mxu0 0.0
  %684 = vmatmul.mubr.f32.gmra.mxu0 %v174
  %v685 = vpop.f32.mrf.mxu0
  %v686 = vadd.f32 %v70, %v685
  %v687 = vpop.f32.mrf.mxu0
  %v688 = vadd.f32 %v74, %v687
  %689 = vdwg.mxu0
  %690 = vst [vmem:[#allocation2] sm:$0xff] %v243
  %691 = vst [vmem:[#allocation2 + $0x8] sm:$0xff] %v245
  %692 = vst [vmem:[#allocation2 + $0x10] sm:$0xff] %v500
  %693 = vst [vmem:[#allocation2 + $0x18] sm:$0xff] %v502
  %694 = vst [vmem:[#allocation2 + $0x20] sm:$0xff] %v249
  %695 = vst [vmem:[#allocation2 + $0x28] sm:$0xff] %v251
  %696 = vst [vmem:[#allocation2 + $0x30] sm:$0xff] %v506
  %697 = vst [vmem:[#allocation2 + $0x38] sm:$0xff] %v508
  %698 = vst [vmem:[#allocation2 + $0x40] sm:$0xff] %v255
  %699 = vst [vmem:[#allocation2 + $0x48] sm:$0xff] %v257
  %700 = vst [vmem:[#allocation2 + $0x50] sm:$0xff] %v512
  %701 = vst [vmem:[#allocation2 + $0x58] sm:$0xff] %v514
  %702 = vst [vmem:[#allocation2 + $0x60] sm:$0xff] %v261
  %703 = vst [vmem:[#allocation2 + $0x68] sm:$0xff] %v263
  %704 = vst [vmem:[#allocation2 + $0x70] sm:$0xff] %v518
  %705 = vst [vmem:[#allocation2 + $0x78] sm:$0xff] %v520
  %706 = vst [vmem:[#allocation2 + $0x80] sm:$0xff] %v267
  %707 = vst [vmem:[#allocation2 + $0x88] sm:$0xff] %v269
  %708 = vst [vmem:[#allocation2 + $0x90] sm:$0xff] %v524
  %709 = vst [vmem:[#allocation2 + $0x98] sm:$0xff] %v526
  %710 = vst [vmem:[#allocation2 + $0xa0] sm:$0xff] %v273
  %711 = vst [vmem:[#allocation2 + $0xa8] sm:$0xff] %v275
  %712 = vst [vmem:[#allocation2 + $0xb0] sm:$0xff] %v530
  %713 = vst [vmem:[#allocation2 + $0xb8] sm:$0xff] %v532
  %714 = vst [vmem:[#allocation2 + $0xc0] sm:$0xff] %v279
  %715 = vst [vmem:[#allocation2 + $0xc8] sm:$0xff] %v281
  %716 = vst [vmem:[#allocation2 + $0xd0] sm:$0xff] %v536
  %717 = vst [vmem:[#allocation2 + $0xd8] sm:$0xff] %v538
  %718 = vst [vmem:[#allocation2 + $0xe0] sm:$0xff] %v285
  %719 = vst [vmem:[#allocation2 + $0xe8] sm:$0xff] %v287
  %720 = vst [vmem:[#allocation2 + $0xf0] sm:$0xff] %v542
  %721 = vst [vmem:[#allocation2 + $0xf8] sm:$0xff] %v544
  %722 = vst [vmem:[#allocation2 + $0x100] sm:$0xff] %v291
  %723 = vst [vmem:[#allocation2 + $0x108] sm:$0xff] %v293
  %724 = vst [vmem:[#allocation2 + $0x110] sm:$0xff] %v548
  %725 = vst [vmem:[#allocation2 + $0x118] sm:$0xff] %v550
  %726 = vst [vmem:[#allocation2 + $0x120] sm:$0xff] %v297
  %727 = vst [vmem:[#allocation2 + $0x128] sm:$0xff] %v299
  %728 = vst [vmem:[#allocation2 + $0x130] sm:$0xff] %v554
  %729 = vst [vmem:[#allocation2 + $0x138] sm:$0xff] %v556
  %730 = vst [vmem:[#allocation2 + $0x140] sm:$0xff] %v303
  %731 = vst [vmem:[#allocation2 + $0x148] sm:$0xff] %v305
  %732 = vst [vmem:[#allocation2 + $0x150] sm:$0xff] %v560
  %733 = vst [vmem:[#allocation2 + $0x158] sm:$0xff] %v562
  %734 = vst [vmem:[#allocation2 + $0x160] sm:$0xff] %v309
  %735 = vst [vmem:[#allocation2 + $0x168] sm:$0xff] %v311
  %736 = vst [vmem:[#allocation2 + $0x170] sm:$0xff] %v566
  %737 = vst [vmem:[#allocation2 + $0x178] sm:$0xff] %v568
  %738 = vst [vmem:[#allocation2 + $0x180] sm:$0xff] %v315
  %739 = vst [vmem:[#allocation2 + $0x188] sm:$0xff] %v317
  %740 = vst [vmem:[#allocation2 + $0x190] sm:$0xff] %v572
  %741 = vst [vmem:[#allocation2 + $0x198] sm:$0xff] %v574
  %742 = vst [vmem:[#allocation2 + $0x1a0] sm:$0xff] %v321
  %743 = vst [vmem:[#allocation2 + $0x1a8] sm:$0xff] %v323
  %744 = vst [vmem:[#allocation2 + $0x1b0] sm:$0xff] %v578
  %745 = vst [vmem:[#allocation2 + $0x1b8] sm:$0xff] %v580
  %746 = vst [vmem:[#allocation2 + $0x1c0] sm:$0xff] %v327
  %747 = vst [vmem:[#allocation2 + $0x1c8] sm:$0xff] %v329
  %748 = vst [vmem:[#allocation2 + $0x1d0] sm:$0xff] %v584
  %749 = vst [vmem:[#allocation2 + $0x1d8] sm:$0xff] %v586
  %750 = vst [vmem:[#allocation2 + $0x1e0] sm:$0xff] %v333
  %751 = vst [vmem:[#allocation2 + $0x1e8] sm:$0xff] %v335
  %752 = vst [vmem:[#allocation2 + $0x1f0] sm:$0xff] %v590
  %753 = vst [vmem:[#allocation2 + $0x1f8] sm:$0xff] %v592
  %754 = vst [vmem:[#allocation2 + $0x200] sm:$0xff] %v339
  %755 = vst [vmem:[#allocation2 + $0x208] sm:$0xff] %v341
  %756 = vst [vmem:[#allocation2 + $0x210] sm:$0xff] %v596
  %757 = vst [vmem:[#allocation2 + $0x218] sm:$0xff] %v598
  %758 = vst [vmem:[#allocation2 + $0x220] sm:$0xff] %v345
  %759 = vst [vmem:[#allocation2 + $0x228] sm:$0xff] %v347
  %760 = vst [vmem:[#allocation2 + $0x230] sm:$0xff] %v602
  %761 = vst [vmem:[#allocation2 + $0x238] sm:$0xff] %v604
  %762 = vst [vmem:[#allocation2 + $0x240] sm:$0xff] %v351
  %763 = vst [vmem:[#allocation2 + $0x248] sm:$0xff] %v353
  %764 = vst [vmem:[#allocation2 + $0x250] sm:$0xff] %v608
  %765 = vst [vmem:[#allocation2 + $0x258] sm:$0xff] %v610
  %766 = vst [vmem:[#allocation2 + $0x260] sm:$0xff] %v357
  %767 = vst [vmem:[#allocation2 + $0x268] sm:$0xff] %v359
  %768 = vst [vmem:[#allocation2 + $0x270] sm:$0xff] %v614
  %769 = vst [vmem:[#allocation2 + $0x278] sm:$0xff] %v616
  %770 = vst [vmem:[#allocation2 + $0x280] sm:$0xff] %v363
  %771 = vst [vmem:[#allocation2 + $0x288] sm:$0xff] %v365
  %772 = vst [vmem:[#allocation2 + $0x290] sm:$0xff] %v620
  %773 = vst [vmem:[#allocation2 + $0x298] sm:$0xff] %v622
  %774 = vst [vmem:[#allocation2 + $0x2a0] sm:$0xff] %v369
  %775 = vst [vmem:[#allocation2 + $0x2a8] sm:$0xff] %v371
  %776 = vst [vmem:[#allocation2 + $0x2b0] sm:$0xff] %v626
  %777 = vst [vmem:[#allocation2 + $0x2b8] sm:$0xff] %v628
  %778 = vst [vmem:[#allocation2 + $0x2c0] sm:$0xff] %v375
  %779 = vst [vmem:[#allocation2 + $0x2c8] sm:$0xff] %v377
  %780 = vst [vmem:[#allocation2 + $0x2d0] sm:$0xff] %v632
  %781 = vst [vmem:[#allocation2 + $0x2d8] sm:$0xff] %v634
  %782 = vst [vmem:[#allocation2 + $0x2e0] sm:$0xff] %v381
  %783 = vst [vmem:[#allocation2 + $0x2e8] sm:$0xff] %v383
  %784 = vst [vmem:[#allocation2 + $0x2f0] sm:$0xff] %v638
  %785 = vst [vmem:[#allocation2 + $0x2f8] sm:$0xff] %v640
  %786 = vst [vmem:[#allocation2 + $0x300] sm:$0xff] %v387
  %787 = vst [vmem:[#allocation2 + $0x308] sm:$0xff] %v389
  %788 = vst [vmem:[#allocation2 + $0x310] sm:$0xff] %v644
  %789 = vst [vmem:[#allocation2 + $0x318] sm:$0xff] %v646
  %790 = vst [vmem:[#allocation2 + $0x320] sm:$0xff] %v393
  %791 = vst [vmem:[#allocation2 + $0x328] sm:$0xff] %v395
  %792 = vst [vmem:[#allocation2 + $0x330] sm:$0xff] %v650
  %793 = vst [vmem:[#allocation2 + $0x338] sm:$0xff] %v652
  %794 = vst [vmem:[#allocation2 + $0x340] sm:$0xff] %v399
  %795 = vst [vmem:[#allocation2 + $0x348] sm:$0xff] %v401
  %796 = vst [vmem:[#allocation2 + $0x350] sm:$0xff] %v656
  %797 = vst [vmem:[#allocation2 + $0x358] sm:$0xff] %v658
  %798 = vst [vmem:[#allocation2 + $0x360] sm:$0xff] %v405
  %799 = vst [vmem:[#allocation2 + $0x368] sm:$0xff] %v407
  %800 = vst [vmem:[#allocation2 + $0x370] sm:$0xff] %v662
  %801 = vst [vmem:[#allocation2 + $0x378] sm:$0xff] %v664
  %802 = vst [vmem:[#allocation2 + $0x380] sm:$0xff] %v411
  %803 = vst [vmem:[#allocation2 + $0x388] sm:$0xff] %v413
  %804 = vst [vmem:[#allocation2 + $0x390] sm:$0xff] %v668
  %805 = vst [vmem:[#allocation2 + $0x398] sm:$0xff] %v670
  %806 = vst [vmem:[#allocation2 + $0x3a0] sm:$0xff] %v417
  %807 = vst [vmem:[#allocation2 + $0x3a8] sm:$0xff] %v419
  %808 = vst [vmem:[#allocation2 + $0x3b0] sm:$0xff] %v674
  %809 = vst [vmem:[#allocation2 + $0x3b8] sm:$0xff] %v676
  %810 = vst [vmem:[#allocation2 + $0x3c0] sm:$0xff] %v423
  %811 = vst [vmem:[#allocation2 + $0x3c8] sm:$0xff] %v425
  %812 = vst [vmem:[#allocation2 + $0x3d0] sm:$0xff] %v680
  %813 = vst [vmem:[#allocation2 + $0x3d8] sm:$0xff] %v682
  %814 = vst [vmem:[#allocation2 + $0x3e0] sm:$0xff] %v429
  %815 = vst [vmem:[#allocation2 + $0x3e8] sm:$0xff] %v431
  %816 = vst [vmem:[#allocation2 + $0x3f0] sm:$0xff] %v686
  %817 = vst [vmem:[#allocation2 + $0x3f8] sm:$0xff] %v688
  %v818 = vld [vmem:[#allocation2] sm:$0xff]
  %v819 = vld [vmem:[#allocation2 + $0x8] sm:$0xff]
  %v820 = vld [vmem:[#allocation2 + $0x10] sm:$0xff]
  %v821 = vld [vmem:[#allocation2 + $0x18] sm:$0xff]
  %v822 = vld [vmem:[%s2] sm:$0xff]
  %v823 = vld [vmem:[%s2 + $0x8] sm:$0xff]
  %v824 = vld [vmem:[%s2 + $0x10] sm:$0xff]
  %v825 = vld [vmem:[%s2 + $0x18] sm:$0xff]
  %v826 = vld [vmem:[%s2 + $0x20] sm:$0xff]
  %v827 = vld [vmem:[%s2 + $0x28] sm:$0xff]
  %v828 = vld [vmem:[%s2 + $0x30] sm:$0xff]
  %v829 = vld [vmem:[%s2 + $0x38] sm:$0xff]
  %v830 = vld [vmem:[%s2 + $0x40] sm:$0xff]
  %v831 = vld [vmem:[%s2 + $0x48] sm:$0xff]
  %v832 = vld [vmem:[%s2 + $0x50] sm:$0xff]
  %v833 = vld [vmem:[%s2 + $0x58] sm:$0xff]
  %v834 = vld [vmem:[%s2 + $0x60] sm:$0xff]
  %v835 = vld [vmem:[%s2 + $0x68] sm:$0xff]
  %v836 = vld [vmem:[%s2 + $0x70] sm:$0xff]
  %v837 = vld [vmem:[%s2 + $0x78] sm:$0xff]
  %v838 = vld [vmem:[%s2 + $0x80] sm:$0xff]
  %v839 = vld [vmem:[%s2 + $0x88] sm:$0xff]
  %v840 = vld [vmem:[%s2 + $0x90] sm:$0xff]
  %v841 = vld [vmem:[%s2 + $0x98] sm:$0xff]
  %v842 = vld [vmem:[%s2 + $0xa0] sm:$0xff]
  %v843 = vld [vmem:[%s2 + $0xa8] sm:$0xff]
  %v844 = vld [vmem:[%s2 + $0xb0] sm:$0xff]
  %v845 = vld [vmem:[%s2 + $0xb8] sm:$0xff]
  %v846 = vld [vmem:[%s2 + $0xc0] sm:$0xff]
  %v847 = vld [vmem:[%s2 + $0xc8] sm:$0xff]
  %v848 = vld [vmem:[%s2 + $0xd0] sm:$0xff]
  %v849 = vld [vmem:[%s2 + $0xd8] sm:$0xff]
  %v850 = vld [vmem:[%s2 + $0xe0] sm:$0xff]
  %v851 = vld [vmem:[%s2 + $0xe8] sm:$0xff]
  %v852 = vld [vmem:[%s2 + $0xf0] sm:$0xff]
  %v853 = vld [vmem:[%s2 + $0xf8] sm:$0xff]
  %v854 = vld [vmem:[%s2 + $0x100] sm:$0xff]
  %v855 = vld [vmem:[%s2 + $0x108] sm:$0xff]
  %v856 = vld [vmem:[%s2 + $0x110] sm:$0xff]
  %v857 = vld [vmem:[%s2 + $0x118] sm:$0xff]
  %v858 = vld [vmem:[%s2 + $0x120] sm:$0xff]
  %v859 = vld [vmem:[%s2 + $0x128] sm:$0xff]
  %v860 = vld [vmem:[%s2 + $0x130] sm:$0xff]
  %v861 = vld [vmem:[%s2 + $0x138] sm:$0xff]
  %v862 = vld [vmem:[%s2 + $0x140] sm:$0xff]
  %v863 = vld [vmem:[%s2 + $0x148] sm:$0xff]
  %v864 = vld [vmem:[%s2 + $0x150] sm:$0xff]
  %v865 = vld [vmem:[%s2 + $0x158] sm:$0xff]
  %v866 = vld [vmem:[%s2 + $0x160] sm:$0xff]
  %v867 = vld [vmem:[%s2 + $0x168] sm:$0xff]
  %v868 = vld [vmem:[%s2 + $0x170] sm:$0xff]
  %v869 = vld [vmem:[%s2 + $0x178] sm:$0xff]
  %v870 = vld [vmem:[%s2 + $0x180] sm:$0xff]
  %v871 = vld [vmem:[%s2 + $0x188] sm:$0xff]
  %v872 = vld [vmem:[%s2 + $0x190] sm:$0xff]
  %v873 = vld [vmem:[%s2 + $0x198] sm:$0xff]
  %v874 = vld [vmem:[%s2 + $0x1a0] sm:$0xff]
  %v875 = vld [vmem:[%s2 + $0x1a8] sm:$0xff]
  %v876 = vld [vmem:[%s2 + $0x1b0] sm:$0xff]
  %v877 = vld [vmem:[%s2 + $0x1b8] sm:$0xff]
  %v878 = vld [vmem:[%s2 + $0x1c0] sm:$0xff]
  %v879 = vld [vmem:[%s2 + $0x1c8] sm:$0xff]
  %v880 = vld [vmem:[%s2 + $0x1d0] sm:$0xff]
  %v881 = vld [vmem:[%s2 + $0x1d8] sm:$0xff]
  %v882 = vld [vmem:[%s2 + $0x1e0] sm:$0xff]
  %v883 = vld [vmem:[%s2 + $0x1e8] sm:$0xff]
  %v884 = vld [vmem:[%s2 + $0x1f0] sm:$0xff]
  %v885 = vld [vmem:[%s2 + $0x1f8] sm:$0xff]
  %886 = vmatprep.subr.mxu0 %v883
  %887 = vmatpush1.msra.mxu0 %v882
  %888 = vmatprep.subr.mxu0 %v879
  %889 = vmatpush1.msra.mxu0 %v878
  %890 = vmatprep.subr.mxu0 %v875
  %891 = vmatpush1.msra.mxu0 %v874
  %892 = vmatprep.subr.mxu0 %v871
  %893 = vmatpush1.msra.mxu0 %v870
  %894 = vmatprep.subr.mxu0 %v867
  %895 = vmatpush1.msra.mxu0 %v866
  %896 = vmatprep.subr.mxu0 %v863
  %897 = vmatpush1.msra.mxu0 %v862
  %898 = vmatprep.subr.mxu0 %v859
  %899 = vmatpush1.msra.mxu0 %v858
  %900 = vmatprep.subr.mxu0 %v855
  %901 = vmatpush1.msra.mxu0 %v854
  %902 = vmatprep.subr.mxu0 %v851
  %903 = vmatpush1.msra.mxu0 %v850
  %904 = vmatprep.subr.mxu0 %v847
  %905 = vmatpush1.msra.mxu0 %v846
  %906 = vmatprep.subr.mxu0 %v843
  %907 = vmatpush1.msra.mxu0 %v842
  %908 = vmatprep.subr.mxu0 %v839
  %909 = vmatpush1.msra.mxu0 %v838
  %910 = vmatprep.subr.mxu0 %v835
  %911 = vmatpush1.msra.mxu0 %v834
  %912 = vmatprep.subr.mxu0 %v831
  %913 = vmatpush1.msra.mxu0 %v830
  %914 = vmatprep.subr.mxu0 %v827
  %915 = vmatpush1.msra.mxu0 %v826
  %916 = vmatprep.subr.mxu0 %v823
  %917 = vmatpush1.msra.mxu0 %v822
  %918 = vmatprep.subr.mxu0 0.0
  %919 = vmatpush2.msra.mxu0 0.0
  %920 = vmatprep.subr.mxu0 0.0
  %921 = vmatpush2.msra.mxu0 0.0
  %922 = vmatprep.subr.mxu0 0.0
  %923 = vmatpush2.msra.mxu0 0.0
  %924 = vmatprep.subr.mxu0 0.0
  %925 = vmatpush2.msra.mxu0 0.0
  %926 = vmatprep.subr.mxu0 0.0
  %927 = vmatpush2.msra.mxu0 0.0
  %928 = vmatprep.subr.mxu0 0.0
  %929 = vmatpush2.msra.mxu0 0.0
  %930 = vmatprep.subr.mxu0 0.0
  %931 = vmatpush2.msra.mxu0 0.0
  %932 = vmatprep.subr.mxu0 0.0
  %933 = vmatpush2.msra.mxu0 0.0
  %934 = vmatprep.subr.mxu0 0.0
  %935 = vmatpush2.msra.mxu0 0.0
  %936 = vmatprep.subr.mxu0 0.0
  %937 = vmatpush2.msra.mxu0 0.0
  %938 = vmatprep.subr.mxu0 0.0
  %939 = vmatpush2.msra.mxu0 0.0
  %940 = vmatprep.subr.mxu0 0.0
  %941 = vmatpush2.msra.mxu0 0.0
  %942 = vmatprep.subr.mxu0 0.0
  %943 = vmatpush2.msra.mxu0 0.0
  %944 = vmatprep.subr.mxu0 0.0
  %945 = vmatpush2.msra.mxu0 0.0
  %946 = vmatprep.subr.mxu0 0.0
  %947 = vmatpush2.msra.mxu0 0.0
  %948 = vmatprep.subr.mxu0 0.0
  %949 = vmatpush2.msra.mxu0 0.0
  %950 = vmatprep.mubr.f32.mxu0 0.0
  %951 = vmatmul.mubr.f32.gmra.mxu0 0.0
  %v952 = vpop.f32.mrf.mxu0
  %v953 = vadd.f32 0.0, %v952
  %v954 = vpop.f32.mrf.mxu0
  %v955 = vadd.f32 0.0, %v954
  %956 = vdwg.mxu0
  %957 = vmatprep.subr.mxu0 %v885
  %958 = vmatpush1.msra.mxu0 %v884
  %959 = vmatprep.subr.mxu0 %v881
  %960 = vmatpush1.msra.mxu0 %v880
  %961 = vmatprep.subr.mxu0 %v877
  %962 = vmatpush1.msra.mxu0 %v876
  %963 = vmatprep.subr.mxu0 %v873
  %964 = vmatpush1.msra.mxu0 %v872
  %965 = vmatprep.subr.mxu0 %v869
  %966 = vmatpush1.msra.mxu0 %v868
  %967 = vmatprep.subr.mxu0 %v865
  %968 = vmatpush1.msra.mxu0 %v864
  %969 = vmatprep.subr.mxu0 %v861
  %970 = vmatpush1.msra.mxu0 %v860
  %971 = vmatprep.subr.mxu0 %v857
  %972 = vmatpush1.msra.mxu0 %v856
  %973 = vmatprep.subr.mxu0 %v853
  %974 = vmatpush1.msra.mxu0 %v852
  %975 = vmatprep.subr.mxu0 %v849
  %976 = vmatpush1.msra.mxu0 %v848
  %977 = vmatprep.subr.mxu0 %v845
  %978 = vmatpush1.msra.mxu0 %v844
  %979 = vmatprep.subr.mxu0 %v841
  %980 = vmatpush1.msra.mxu0 %v840
  %981 = vmatprep.subr.mxu0 %v837
  %982 = vmatpush1.msra.mxu0 %v836
  %983 = vmatprep.subr.mxu0 %v833
  %984 = vmatpush1.msra.mxu0 %v832
  %985 = vmatprep.subr.mxu0 %v829
  %986 = vmatpush1.msra.mxu0 %v828
  %987 = vmatprep.subr.mxu0 %v825
  %988 = vmatpush1.msra.mxu0 %v824
  %989 = vmatprep.subr.mxu0 0.0
  %990 = vmatpush2.msra.mxu0 0.0
  %991 = vmatprep.subr.mxu0 0.0
  %992 = vmatpush2.msra.mxu0 0.0
  %993 = vmatprep.subr.mxu0 0.0
  %994 = vmatpush2.msra.mxu0 0.0
  %995 = vmatprep.subr.mxu0 0.0
  %996 = vmatpush2.msra.mxu0 0.0
  %997 = vmatprep.subr.mxu0 0.0
  %998 = vmatpush2.msra.mxu0 0.0
  %999 = vmatprep.subr.mxu0 0.0
  %1000 = vmatpush2.msra.mxu0 0.0
  %1001 = vmatprep.subr.mxu0 0.0
  %1002 = vmatpush2.msra.mxu0 0.0
  %1003 = vmatprep.subr.mxu0 0.0
  %1004 = vmatpush2.msra.mxu0 0.0
  %1005 = vmatprep.subr.mxu0 0.0
  %1006 = vmatpush2.msra.mxu0 0.0
  %1007 = vmatprep.subr.mxu0 0.0
  %1008 = vmatpush2.msra.mxu0 0.0
  %1009 = vmatprep.subr.mxu0 0.0
  %1010 = vmatpush2.msra.mxu0 0.0
  %1011 = vmatprep.subr.mxu0 0.0
  %1012 = vmatpush2.msra.mxu0 0.0
  %1013 = vmatprep.subr.mxu0 0.0
  %1014 = vmatpush2.msra.mxu0 0.0
  %1015 = vmatprep.subr.mxu0 0.0
  %1016 = vmatpush2.msra.mxu0 0.0
  %1017 = vmatprep.subr.mxu0 0.0
  %1018 = vmatpush2.msra.mxu0 0.0
  %1019 = vmatprep.subr.mxu0 0.0
  %1020 = vmatpush2.msra.mxu0 0.0
  %1021 = vmatprep.mubr.f32.mxu0 0.0
  %1022 = vmatmul.mubr.f32.gmra.mxu0 0.0
  %v1023 = vpop.f32.mrf.mxu0
  %v1024 = vadd.f32 0.0, %v1023
  %v1025 = vpop.f32.mrf.mxu0
  %v1026 = vadd.f32 0.0, %v1025
  %1027 = vdwg.mxu0
  %v1028 = vadd.f32 %v818, %v953
  %v1029 = vadd.f32 %v819, %v955
  %v1030 = vadd.f32 %v820, %v1024
  %v1031 = vadd.f32 %v821, %v1026
  %v1032 = vxor.u32 %v1028, 2147483648
  %v1033 = vmul.f32 %v1032, 1.442695
  %v1034 = vpow.pop %v1033
  %v1035 = vadd.f32 %v1034, 1.0
  %v1036 = vrcp.pop %v1035
  %v1037 = vmul.f32 1.0, %v1036
  %v1038 = vxor.u32 %v1029, 2147483648
  %v1039 = vmul.f32 %v1038, 1.442695
  %v1040 = vpow.pop %v1039
  %v1041 = vadd.f32 %v1040, 1.0
  %v1042 = vrcp.pop %v1041
  %v1043 = vmul.f32 1.0, %v1042
  %v1044 = vtanh.pop %v1030
  %v1045 = vxor.u32 %v1031, 2147483648
  %v1046 = vmul.f32 %v1045, 1.442695
  %v1047 = vpow.pop %v1046
  %v1048 = vadd.f32 %v1047, 1.0
  %v1049 = vrcp.pop %v1048
  %v1050 = vmul.f32 1.0, %v1049
  %v1051 = vmul.f32 %v1043, 0.0
  %v1052 = vmul.f32 %v1037, %v1044
  %v1053 = vadd.f32 %v1051, %v1052
  %v1054 = vtanh.pop %v1053
  %v1055 = vmul.f32 %v1050, %v1054
  %v1056 = vld [vmem:[#allocation2 + $0x20] sm:$0xff]
  %v1057 = vld [vmem:[#allocation2 + $0x28] sm:$0xff]
  %v1058 = vld [vmem:[#allocation2 + $0x30] sm:$0xff]
  %v1059 = vld [vmem:[#allocation2 + $0x38] sm:$0xff]
  %1060 = vmatprep.subr.mxu0 %v883
  %1061 = vmatpush1.msra.mxu0 %v882
  %1062 = vmatprep.subr.mxu0 %v879
  %1063 = vmatpush1.msra.mxu0 %v878
  %1064 = vmatprep.subr.mxu0 %v875
  %1065 = vmatpush1.msra.mxu0 %v874
  %1066 = vmatprep.subr.mxu0 %v871
  %1067 = vmatpush1.msra.mxu0 %v870
  %1068 = vmatprep.subr.mxu0 %v867
  %1069 = vmatpush1.msra.mxu0 %v866
  %1070 = vmatprep.subr.mxu0 %v863
  %1071 = vmatpush1.msra.mxu0 %v862
  %1072 = vmatprep.subr.mxu0 %v859
  %1073 = vmatpush1.msra.mxu0 %v858
  %1074 = vmatprep.subr.mxu0 %v855
  %1075 = vmatpush1.msra.mxu0 %v854
  %1076 = vmatprep.subr.mxu0 %v851
  %1077 = vmatpush1.msra.mxu0 %v850
  %1078 = vmatprep.subr.mxu0 %v847
  %1079 = vmatpush1.msra.mxu0 %v846
  %1080 = vmatprep.subr.mxu0 %v843
  %1081 = vmatpush1.msra.mxu0 %v842
  %1082 = vmatprep.subr.mxu0 %v839
  %1083 = vmatpush1.msra.mxu0 %v838
  %1084 = vmatprep.subr.mxu0 %v835
  %1085 = vmatpush1.msra.mxu0 %v834
  %1086 = vmatprep.subr.mxu0 %v831
  %1087 = vmatpush1.msra.mxu0 %v830
  %1088 = vmatprep.subr.mxu0 %v827
  %1089 = vmatpush1.msra.mxu0 %v826
  %1090 = vmatprep.subr.mxu0 %v823
  %1091 = vmatpush1.msra.mxu0 %v822
  %1092 = vmatprep.subr.mxu0 0.0
  %1093 = vmatpush2.msra.mxu0 0.0
  %1094 = vmatprep.subr.mxu0 0.0
  %1095 = vmatpush2.msra.mxu0 0.0
  %1096 = vmatprep.subr.mxu0 0.0
  %1097 = vmatpush2.msra.mxu0 0.0
  %1098 = vmatprep.subr.mxu0 0.0
  %1099 = vmatpush2.msra.mxu0 0.0
  %1100 = vmatprep.subr.mxu0 0.0
  %1101 = vmatpush2.msra.mxu0 0.0
  %1102 = vmatprep.subr.mxu0 0.0
  %1103 = vmatpush2.msra.mxu0 0.0
  %1104 = vmatprep.subr.mxu0 0.0
  %1105 = vmatpush2.msra.mxu0 0.0
  %1106 = vmatprep.subr.mxu0 0.0
  %1107 = vmatpush2.msra.mxu0 0.0
  %1108 = vmatprep.subr.mxu0 0.0
  %1109 = vmatpush2.msra.mxu0 0.0
  %1110 = vmatprep.subr.mxu0 0.0
  %1111 = vmatpush2.msra.mxu0 0.0
  %1112 = vmatprep.subr.mxu0 0.0
  %1113 = vmatpush2.msra.mxu0 0.0
  %1114 = vmatprep.subr.mxu0 0.0
  %1115 = vmatpush2.msra.mxu0 0.0
  %1116 = vmatprep.subr.mxu0 0.0
  %1117 = vmatpush2.msra.mxu0 0.0
  %1118 = vmatprep.subr.mxu0 0.0
  %1119 = vmatpush2.msra.mxu0 0.0
  %1120 = vmatprep.subr.mxu0 0.0
  %1121 = vmatpush2.msra.mxu0 0.0
  %1122 = vmatprep.subr.mxu0 0.0
  %1123 = vmatpush2.msra.mxu0 0.0
  %1124 = vmatprep.mubr.f32.mxu0 0.0
  %1125 = vmatmul.mubr.f32.gmra.mxu0 %v1055
  %v1126 = vpop.f32.mrf.mxu0
  %v1127 = vadd.f32 0.0, %v1126
  %v1128 = vpop.f32.mrf.mxu0
  %v1129 = vadd.f32 0.0, %v1128
  %1130 = vdwg.mxu0
  %1131 = vmatprep.subr.mxu0 %v885
  %1132 = vmatpush1.msra.mxu0 %v884
  %1133 = vmatprep.subr.mxu0 %v881
  %1134 = vmatpush1.msra.mxu0 %v880
  %1135 = vmatprep.subr.mxu0 %v877
  %1136 = vmatpush1.msra.mxu0 %v876
  %1137 = vmatprep.subr.mxu0 %v873
  %1138 = vmatpush1.msra.mxu0 %v872
  %1139 = vmatprep.subr.mxu0 %v869
  %1140 = vmatpush1.msra.mxu0 %v868
  %1141 = vmatprep.subr.mxu0 %v865
  %1142 = vmatpush1.msra.mxu0 %v864
  %1143 = vmatprep.subr.mxu0 %v861
  %1144 = vmatpush1.msra.mxu0 %v860
  %1145 = vmatprep.subr.mxu0 %v857
  %1146 = vmatpush1.msra.mxu0 %v856
  %1147 = vmatprep.subr.mxu0 %v853
  %1148 = vmatpush1.msra.mxu0 %v852
  %1149 = vmatprep.subr.mxu0 %v849
  %1150 = vmatpush1.msra.mxu0 %v848
  %1151 = vmatprep.subr.mxu0 %v845
  %1152 = vmatpush1.msra.mxu0 %v844
  %1153 = vmatprep.subr.mxu0 %v841
  %1154 = vmatpush1.msra.mxu0 %v840
  %1155 = vmatprep.subr.mxu0 %v837
  %1156 = vmatpush1.msra.mxu0 %v836
  %1157 = vmatprep.subr.mxu0 %v833
  %1158 = vmatpush1.msra.mxu0 %v832
  %1159 = vmatprep.subr.mxu0 %v829
  %1160 = vmatpush1.msra.mxu0 %v828
  %1161 = vmatprep.subr.mxu0 %v825
  %1162 = vmatpush1.msra.mxu0 %v824
  %1163 = vmatprep.subr.mxu0 0.0
  %1164 = vmatpush2.msra.mxu0 0.0
  %1165 = vmatprep.subr.mxu0 0.0
  %1166 = vmatpush2.msra.mxu0 0.0
  %1167 = vmatprep.subr.mxu0 0.0
  %1168 = vmatpush2.msra.mxu0 0.0
  %1169 = vmatprep.subr.mxu0 0.0
  %1170 = vmatpush2.msra.mxu0 0.0
  %1171 = vmatprep.subr.mxu0 0.0
  %1172 = vmatpush2.msra.mxu0 0.0
  %1173 = vmatprep.subr.mxu0 0.0
  %1174 = vmatpush2.msra.mxu0 0.0
  %1175 = vmatprep.subr.mxu0 0.0
  %1176 = vmatpush2.msra.mxu0 0.0
  %1177 = vmatprep.subr.mxu0 0.0
  %1178 = vmatpush2.msra.mxu0 0.0
  %1179 = vmatprep.subr.mxu0 0.0
  %1180 = vmatpush2.msra.mxu0 0.0
  %1181 = vmatprep.subr.mxu0 0.0
  %1182 = vmatpush2.msra.mxu0 0.0
  %1183 = vmatprep.subr.mxu0 0.0
  %1184 = vmatpush2.msra.mxu0 0.0
  %1185 = vmatprep.subr.mxu0 0.0
  %1186 = vmatpush2.msra.mxu0 0.0
  %1187 = vmatprep.subr.mxu0 0.0
  %1188 = vmatpush2.msra.mxu0 0.0
  %1189 = vmatprep.subr.mxu0 0.0
  %1190 = vmatpush2.msra.mxu0 0.0
  %1191 = vmatprep.subr.mxu0 0.0
  %1192 = vmatpush2.msra.mxu0 0.0
  %1193 = vmatprep.subr.mxu0 0.0
  %1194 = vmatpush2.msra.mxu0 0.0
  %1195 = vmatprep.mubr.f32.mxu0 0.0
  %1196 = vmatmul.mubr.f32.gmra.mxu0 %v1055
  %v1197 = vpop.f32.mrf.mxu0
  %v1198 = vadd.f32 0.0, %v1197
  %v1199 = vpop.f32.mrf.mxu0
  %v1200 = vadd.f32 0.0, %v1199
  %1201 = vdwg.mxu0
  %v1202 = vadd.f32 %v1056, %v1127
  %v1203 = vadd.f32 %v1057, %v1129
  %v1204 = vadd.f32 %v1058, %v1198
  %v1205 = vadd.f32 %v1059, %v1200
  %v1206 = vxor.u32 %v1202, 2147483648
  %v1207 = vmul.f32 %v1206, 1.442695
  %v1208 = vpow.pop %v1207
  %v1209 = vadd.f32 %v1208, 1.0
  %v1210 = vrcp.pop %v1209
  %v1211 = vmul.f32 1.0, %v1210
  %v1212 = vxor.u32 %v1203, 2147483648
  %v1213 = vmul.f32 %v1212, 1.442695
  %v1214 = vpow.pop %v1213
  %v1215 = vadd.f32 %v1214, 1.0
  %v1216 = vrcp.pop %v1215
  %v1217 = vmul.f32 1.0, %v1216
  %v1218 = vtanh.pop %v1204
  %v1219 = vxor.u32 %v1205, 2147483648
  %v1220 = vmul.f32 %v1219, 1.442695
  %v1221 = vpow.pop %v1220
  %v1222 = vadd.f32 %v1221, 1.0
  %v1223 = vrcp.pop %v1222
  %v1224 = vmul.f32 1.0, %v1223
  %v1225 = vmul.f32 %v1217, %v1053
  %v1226 = vmul.f32 %v1211, %v1218
  %v1227 = vadd.f32 %v1225, %v1226
  %v1228 = vtanh.pop %v1227
  %v1229 = vmul.f32 %v1224, %v1228
  %v1230 = vld [vmem:[#allocation2 + $0x40] sm:$0xff]
  %v1231 = vld [vmem:[#allocation2 + $0x48] sm:$0xff]
  %v1232 = vld [vmem:[#allocation2 + $0x50] sm:$0xff]
  %v1233 = vld [vmem:[#allocation2 + $0x58] sm:$0xff]
  %1234 = vmatprep.subr.mxu0 %v883
  %1235 = vmatpush1.msra.mxu0 %v882
  %1236 = vmatprep.subr.mxu0 %v879
  %1237 = vmatpush1.msra.mxu0 %v878
  %1238 = vmatprep.subr.mxu0 %v875
  %1239 = vmatpush1.msra.mxu0 %v874
  %1240 = vmatprep.subr.mxu0 %v871
  %1241 = vmatpush1.msra.mxu0 %v870
  %1242 = vmatprep.subr.mxu0 %v867
  %1243 = vmatpush1.msra.mxu0 %v866
  %1244 = vmatprep.subr.mxu0 %v863
  %1245 = vmatpush1.msra.mxu0 %v862
  %1246 = vmatprep.subr.mxu0 %v859
  %1247 = vmatpush1.msra.mxu0 %v858
  %1248 = vmatprep.subr.mxu0 %v855
  %1249 = vmatpush1.msra.mxu0 %v854
  %1250 = vmatprep.subr.mxu0 %v851
  %1251 = vmatpush1.msra.mxu0 %v850
  %1252 = vmatprep.subr.mxu0 %v847
  %1253 = vmatpush1.msra.mxu0 %v846
  %1254 = vmatprep.subr.mxu0 %v843
  %1255 = vmatpush1.msra.mxu0 %v842
  %1256 = vmatprep.subr.mxu0 %v839
  %1257 = vmatpush1.msra.mxu0 %v838
  %1258 = vmatprep.subr.mxu0 %v835
  %1259 = vmatpush1.msra.mxu0 %v834
  %1260 = vmatprep.subr.mxu0 %v831
  %1261 = vmatpush1.msra.mxu0 %v830
  %1262 = vmatprep.subr.mxu0 %v827
  %1263 = vmatpush1.msra.mxu0 %v826
  %1264 = vmatprep.subr.mxu0 %v823
  %1265 = vmatpush1.msra.mxu0 %v822
  %1266 = vmatprep.subr.mxu0 0.0
  %1267 = vmatpush2.msra.mxu0 0.0
  %1268 = vmatprep.subr.mxu0 0.0
  %1269 = vmatpush2.msra.mxu0 0.0
  %1270 = vmatprep.subr.mxu0 0.0
  %1271 = vmatpush2.msra.mxu0 0.0
  %1272 = vmatprep.subr.mxu0 0.0
  %1273 = vmatpush2.msra.mxu0 0.0
  %1274 = vmatprep.subr.mxu0 0.0
  %1275 = vmatpush2.msra.mxu0 0.0
  %1276 = vmatprep.subr.mxu0 0.0
  %1277 = vmatpush2.msra.mxu0 0.0
  %1278 = vmatprep.subr.mxu0 0.0
  %1279 = vmatpush2.msra.mxu0 0.0
  %1280 = vmatprep.subr.mxu0 0.0
  %1281 = vmatpush2.msra.mxu0 0.0
  %1282 = vmatprep.subr.mxu0 0.0
  %1283 = vmatpush2.msra.mxu0 0.0
  %1284 = vmatprep.subr.mxu0 0.0
  %1285 = vmatpush2.msra.mxu0 0.0
  %1286 = vmatprep.subr.mxu0 0.0
  %1287 = vmatpush2.msra.mxu0 0.0
  %1288 = vmatprep.subr.mxu0 0.0
  %1289 = vmatpush2.msra.mxu0 0.0
  %1290 = vmatprep.subr.mxu0 0.0
  %1291 = vmatpush2.msra.mxu0 0.0
  %1292 = vmatprep.subr.mxu0 0.0
  %1293 = vmatpush2.msra.mxu0 0.0
  %1294 = vmatprep.subr.mxu0 0.0
  %1295 = vmatpush2.msra.mxu0 0.0
  %1296 = vmatprep.subr.mxu0 0.0
  %1297 = vmatpush2.msra.mxu0 0.0
  %1298 = vmatprep.mubr.f32.mxu0 0.0
  %1299 = vmatmul.mubr.f32.gmra.mxu0 %v1229
  %v1300 = vpop.f32.mrf.mxu0
  %v1301 = vadd.f32 0.0, %v1300
  %v1302 = vpop.f32.mrf.mxu0
  %v1303 = vadd.f32 0.0, %v1302
  %1304 = vdwg.mxu0
  %1305 = vmatprep.subr.mxu0 %v885
  %1306 = vmatpush1.msra.mxu0 %v884
  %1307 = vmatprep.subr.mxu0 %v881
  %1308 = vmatpush1.msra.mxu0 %v880
  %1309 = vmatprep.subr.mxu0 %v877
  %1310 = vmatpush1.msra.mxu0 %v876
  %1311 = vmatprep.subr.mxu0 %v873
  %1312 = vmatpush1.msra.mxu0 %v872
  %1313 = vmatprep.subr.mxu0 %v869
  %1314 = vmatpush1.msra.mxu0 %v868
  %1315 = vmatprep.subr.mxu0 %v865
  %1316 = vmatpush1.msra.mxu0 %v864
  %1317 = vmatprep.subr.mxu0 %v861
  %1318 = vmatpush1.msra.mxu0 %v860
  %1319 = vmatprep.subr.mxu0 %v857
  %1320 = vmatpush1.msra.mxu0 %v856
  %1321 = vmatprep.subr.mxu0 %v853
  %1322 = vmatpush1.msra.mxu0 %v852
  %1323 = vmatprep.subr.mxu0 %v849
  %1324 = vmatpush1.msra.mxu0 %v848
  %1325 = vmatprep.subr.mxu0 %v845
  %1326 = vmatpush1.msra.mxu0 %v844
  %1327 = vmatprep.subr.mxu0 %v841
  %1328 = vmatpush1.msra.mxu0 %v840
  %1329 = vmatprep.subr.mxu0 %v837
  %1330 = vmatpush1.msra.mxu0 %v836
  %1331 = vmatprep.subr.mxu0 %v833
  %1332 = vmatpush1.msra.mxu0 %v832
  %1333 = vmatprep.subr.mxu0 %v829
  %1334 = vmatpush1.msra.mxu0 %v828
  %1335 = vmatprep.subr.mxu0 %v825
  %1336 = vmatpush1.msra.mxu0 %v824
  %1337 = vmatprep.subr.mxu0 0.0
  %1338 = vmatpush2.msra.mxu0 0.0
  %1339 = vmatprep.subr.mxu0 0.0
  %1340 = vmatpush2.msra.mxu0 0.0
  %1341 = vmatprep.subr.mxu0 0.0
  %1342 = vmatpush2.msra.mxu0 0.0
  %1343 = vmatprep.subr.mxu0 0.0
  %1344 = vmatpush2.msra.mxu0 0.0
  %1345 = vmatprep.subr.mxu0 0.0
  %1346 = vmatpush2.msra.mxu0 0.0
  %1347 = vmatprep.subr.mxu0 0.0
  %1348 = vmatpush2.msra.mxu0 0.0
  %1349 = vmatprep.subr.mxu0 0.0
  %1350 = vmatpush2.msra.mxu0 0.0
  %1351 = vmatprep.subr.mxu0 0.0
  %1352 = vmatpush2.msra.mxu0 0.0
  %1353 = vmatprep.subr.mxu0 0.0
  %1354 = vmatpush2.msra.mxu0 0.0
  %1355 = vmatprep.subr.mxu0 0.0
  %1356 = vmatpush2.msra.mxu0 0.0
  %1357 = vmatprep.subr.mxu0 0.0
  %1358 = vmatpush2.msra.mxu0 0.0
  %1359 = vmatprep.subr.mxu0 0.0
  %1360 = vmatpush2.msra.mxu0 0.0
  %1361 = vmatprep.subr.mxu0 0.0
  %1362 = vmatpush2.msra.mxu0 0.0
  %1363 = vmatprep.subr.mxu0 0.0
  %1364 = vmatpush2.msra.mxu0 0.0
  %1365 = vmatprep.subr.mxu0 0.0
  %1366 = vmatpush2.msra.mxu0 0.0
  %1367 = vmatprep.subr.mxu0 0.0
  %1368 = vmatpush2.msra.mxu0 0.0
  %1369 = vmatprep.mubr.f32.mxu0 0.0
  %1370 = vmatmul.mubr.f32.gmra.mxu0 %v1229
  %v1371 = vpop.f32.mrf.mxu0
  %v1372 = vadd.f32 0.0, %v1371
  %v1373 = vpop.f32.mrf.mxu0
  %v1374 = vadd.f32 0.0, %v1373
  %1375 = vdwg.mxu0
  %v1376 = vadd.f32 %v1230, %v1301
  %v1377 = vadd.f32 %v1231, %v1303
  %v1378 = vadd.f32 %v1232, %v1372
  %v1379 = vadd.f32 %v1233, %v1374
  %v1380 = vxor.u32 %v1376, 2147483648
  %v1381 = vmul.f32 %v1380, 1.442695
  %v1382 = vpow.pop %v1381
  %v1383 = vadd.f32 %v1382, 1.0
  %v1384 = vrcp.pop %v1383
  %v1385 = vmul.f32 1.0, %v1384
  %v1386 = vxor.u32 %v1377, 2147483648
  %v1387 = vmul.f32 %v1386, 1.442695
  %v1388 = vpow.pop %v1387
  %v1389 = vadd.f32 %v1388, 1.0
  %v1390 = vrcp.pop %v1389
  %v1391 = vmul.f32 1.0, %v1390
  %v1392 = vtanh.pop %v1378
  %v1393 = vxor.u32 %v1379, 2147483648
  %v1394 = vmul.f32 %v1393, 1.442695
  %v1395 = vpow.pop %v1394
  %v1396 = vadd.f32 %v1395, 1.0
  %v1397 = vrcp.pop %v1396
  %v1398 = vmul.f32 1.0, %v1397
  %v1399 = vmul.f32 %v1391, %v1227
  %v1400 = vmul.f32 %v1385, %v1392
  %v1401 = vadd.f32 %v1399, %v1400
  %v1402 = vtanh.pop %v1401
  %v1403 = vmul.f32 %v1398, %v1402
  %v1404 = vld [vmem:[#allocation2 + $0x60] sm:$0xff]
  %v1405 = vld [vmem:[#allocation2 + $0x68] sm:$0xff]
  %v1406 = vld [vmem:[#allocation2 + $0x70] sm:$0xff]
  %v1407 = vld [vmem:[#allocation2 + $0x78] sm:$0xff]
  %1408 = vmatprep.subr.mxu0 %v883
  %1409 = vmatpush1.msra.mxu0 %v882
  %1410 = vmatprep.subr.mxu0 %v879
  %1411 = vmatpush1.msra.mxu0 %v878
  %1412 = vmatprep.subr.mxu0 %v875
  %1413 = vmatpush1.msra.mxu0 %v874
  %1414 = vmatprep.subr.mxu0 %v871
  %1415 = vmatpush1.msra.mxu0 %v870
  %1416 = vmatprep.subr.mxu0 %v867
  %1417 = vmatpush1.msra.mxu0 %v866
  %1418 = vmatprep.subr.mxu0 %v863
  %1419 = vmatpush1.msra.mxu0 %v862
  %1420 = vmatprep.subr.mxu0 %v859
  %1421 = vmatpush1.msra.mxu0 %v858
  %1422 = vmatprep.subr.mxu0 %v855
  %1423 = vmatpush1.msra.mxu0 %v854
  %1424 = vmatprep.subr.mxu0 %v851
  %1425 = vmatpush1.msra.mxu0 %v850
  %1426 = vmatprep.subr.mxu0 %v847
  %1427 = vmatpush1.msra.mxu0 %v846
  %1428 = vmatprep.subr.mxu0 %v843
  %1429 = vmatpush1.msra.mxu0 %v842
  %1430 = vmatprep.subr.mxu0 %v839
  %1431 = vmatpush1.msra.mxu0 %v838
  %1432 = vmatprep.subr.mxu0 %v835
  %1433 = vmatpush1.msra.mxu0 %v834
  %1434 = vmatprep.subr.mxu0 %v831
  %1435 = vmatpush1.msra.mxu0 %v830
  %1436 = vmatprep.subr.mxu0 %v827
  %1437 = vmatpush1.msra.mxu0 %v826
  %1438 = vmatprep.subr.mxu0 %v823
  %1439 = vmatpush1.msra.mxu0 %v822
  %1440 = vmatprep.subr.mxu0 0.0
  %1441 = vmatpush2.msra.mxu0 0.0
  %1442 = vmatprep.subr.mxu0 0.0
  %1443 = vmatpush2.msra.mxu0 0.0
  %1444 = vmatprep.subr.mxu0 0.0
  %1445 = vmatpush2.msra.mxu0 0.0
  %1446 = vmatprep.subr.mxu0 0.0
  %1447 = vmatpush2.msra.mxu0 0.0
  %1448 = vmatprep.subr.mxu0 0.0
  %1449 = vmatpush2.msra.mxu0 0.0
  %1450 = vmatprep.subr.mxu0 0.0
  %1451 = vmatpush2.msra.mxu0 0.0
  %1452 = vmatprep.subr.mxu0 0.0
  %1453 = vmatpush2.msra.mxu0 0.0
  %1454 = vmatprep.subr.mxu0 0.0
  %1455 = vmatpush2.msra.mxu0 0.0
  %1456 = vmatprep.subr.mxu0 0.0
  %1457 = vmatpush2.msra.mxu0 0.0
  %1458 = vmatprep.subr.mxu0 0.0
  %1459 = vmatpush2.msra.mxu0 0.0
  %1460 = vmatprep.subr.mxu0 0.0
  %1461 = vmatpush2.msra.mxu0 0.0
  %1462 = vmatprep.subr.mxu0 0.0
  %1463 = vmatpush2.msra.mxu0 0.0
  %1464 = vmatprep.subr.mxu0 0.0
  %1465 = vmatpush2.msra.mxu0 0.0
  %1466 = vmatprep.subr.mxu0 0.0
  %1467 = vmatpush2.msra.mxu0 0.0
  %1468 = vmatprep.subr.mxu0 0.0
  %1469 = vmatpush2.msra.mxu0 0.0
  %1470 = vmatprep.subr.mxu0 0.0
  %1471 = vmatpush2.msra.mxu0 0.0
  %1472 = vmatprep.mubr.f32.mxu0 0.0
  %1473 = vmatmul.mubr.f32.gmra.mxu0 %v1403
  %v1474 = vpop.f32.mrf.mxu0
  %v1475 = vadd.f32 0.0, %v1474
  %v1476 = vpop.f32.mrf.mxu0
  %v1477 = vadd.f32 0.0, %v1476
  %1478 = vdwg.mxu0
  %1479 = vmatprep.subr.mxu0 %v885
  %1480 = vmatpush1.msra.mxu0 %v884
  %1481 = vmatprep.subr.mxu0 %v881
  %1482 = vmatpush1.msra.mxu0 %v880
  %1483 = vmatprep.subr.mxu0 %v877
  %1484 = vmatpush1.msra.mxu0 %v876
  %1485 = vmatprep.subr.mxu0 %v873
  %1486 = vmatpush1.msra.mxu0 %v872
  %1487 = vmatprep.subr.mxu0 %v869
  %1488 = vmatpush1.msra.mxu0 %v868
  %1489 = vmatprep.subr.mxu0 %v865
  %1490 = vmatpush1.msra.mxu0 %v864
  %1491 = vmatprep.subr.mxu0 %v861
  %1492 = vmatpush1.msra.mxu0 %v860
  %1493 = vmatprep.subr.mxu0 %v857
  %1494 = vmatpush1.msra.mxu0 %v856
  %1495 = vmatprep.subr.mxu0 %v853
  %1496 = vmatpush1.msra.mxu0 %v852
  %1497 = vmatprep.subr.mxu0 %v849
  %1498 = vmatpush1.msra.mxu0 %v848
  %1499 = vmatprep.subr.mxu0 %v845
  %1500 = vmatpush1.msra.mxu0 %v844
  %1501 = vmatprep.subr.mxu0 %v841
  %1502 = vmatpush1.msra.mxu0 %v840
  %1503 = vmatprep.subr.mxu0 %v837
  %1504 = vmatpush1.msra.mxu0 %v836
  %1505 = vmatprep.subr.mxu0 %v833
  %1506 = vmatpush1.msra.mxu0 %v832
  %1507 = vmatprep.subr.mxu0 %v829
  %1508 = vmatpush1.msra.mxu0 %v828
  %1509 = vmatprep.subr.mxu0 %v825
  %1510 = vmatpush1.msra.mxu0 %v824
  %1511 = vmatprep.subr.mxu0 0.0
  %1512 = vmatpush2.msra.mxu0 0.0
  %1513 = vmatprep.subr.mxu0 0.0
  %1514 = vmatpush2.msra.mxu0 0.0
  %1515 = vmatprep.subr.mxu0 0.0
  %1516 = vmatpush2.msra.mxu0 0.0
  %1517 = vmatprep.subr.mxu0 0.0
  %1518 = vmatpush2.msra.mxu0 0.0
  %1519 = vmatprep.subr.mxu0 0.0
  %1520 = vmatpush2.msra.mxu0 0.0
  %1521 = vmatprep.subr.mxu0 0.0
  %1522 = vmatpush2.msra.mxu0 0.0
  %1523 = vmatprep.subr.mxu0 0.0
  %1524 = vmatpush2.msra.mxu0 0.0
  %1525 = vmatprep.subr.mxu0 0.0
  %1526 = vmatpush2.msra.mxu0 0.0
  %1527 = vmatprep.subr.mxu0 0.0
  %1528 = vmatpush2.msra.mxu0 0.0
  %1529 = vmatprep.subr.mxu0 0.0
  %1530 = vmatpush2.msra.mxu0 0.0
  %1531 = vmatprep.subr.mxu0 0.0
  %1532 = vmatpush2.msra.mxu0 0.0
  %1533 = vmatprep.subr.mxu0 0.0
  %1534 = vmatpush2.msra.mxu0 0.0
  %1535 = vmatprep.subr.mxu0 0.0
  %1536 = vmatpush2.msra.mxu0 0.0
  %1537 = vmatprep.subr.mxu0 0.0
  %1538 = vmatpush2.msra.mxu0 0.0
  %1539 = vmatprep.subr.mxu0 0.0
  %1540 = vmatpush2.msra.mxu0 0.0
  %1541 = vmatprep.subr.mxu0 0.0
  %1542 = vmatpush2.msra.mxu0 0.0
  %1543 = vmatprep.mubr.f32.mxu0 0.0
  %1544 = vmatmul.mubr.f32.gmra.mxu0 %v1403
  %v1545 = vpop.f32.mrf.mxu0
  %v1546 = vadd.f32 0.0, %v1545
  %v1547 = vpop.f32.mrf.mxu0
  %v1548 = vadd.f32 0.0, %v1547
  %1549 = vdwg.mxu0
  %v1550 = vadd.f32 %v1404, %v1475
  %v1551 = vadd.f32 %v1405, %v1477
  %v1552 = vadd.f32 %v1406, %v1546
  %v1553 = vadd.f32 %v1407, %v1548
  %v1554 = vxor.u32 %v1550, 2147483648
  %v1555 = vmul.f32 %v1554, 1.442695
  %v1556 = vpow.pop %v1555
  %v1557 = vadd.f32 %v1556, 1.0
  %v1558 = vrcp.pop %v1557
  %v1559 = vmul.f32 1.0, %v1558
  %v1560 = vxor.u32 %v1551, 2147483648
  %v1561 = vmul.f32 %v1560, 1.442695
  %v1562 = vpow.pop %v1561
  %v1563 = vadd.f32 %v1562, 1.0
  %v1564 = vrcp.pop %v1563
  %v1565 = vmul.f32 1.0, %v1564
  %v1566 = vtanh.pop %v1552
  %v1567 = vxor.u32 %v1553, 2147483648
  %v1568 = vmul.f32 %v1567, 1.442695
  %v1569 = vpow.pop %v1568
  %v1570 = vadd.f32 %v1569, 1.0
  %v1571 = vrcp.pop %v1570
  %v1572 = vmul.f32 1.0, %v1571
  %v1573 = vmul.f32 %v1565, %v1401
  %v1574 = vmul.f32 %v1559, %v1566
  %v1575 = vadd.f32 %v1573, %v1574
  %v1576 = vtanh.pop %v1575
  %v1577 = vmul.f32 %v1572, %v1576
  %v1578 = vld [vmem:[#allocation2 + $0x80] sm:$0xff]
  %v1579 = vld [vmem:[#allocation2 + $0x88] sm:$0xff]
  %v1580 = vld [vmem:[#allocation2 + $0x90] sm:$0xff]
  %v1581 = vld [vmem:[#allocation2 + $0x98] sm:$0xff]
  %1582 = vmatprep.subr.mxu0 %v883
  %1583 = vmatpush1.msra.mxu0 %v882
  %1584 = vmatprep.subr.mxu0 %v879
  %1585 = vmatpush1.msra.mxu0 %v878
  %1586 = vmatprep.subr.mxu0 %v875
  %1587 = vmatpush1.msra.mxu0 %v874
  %1588 = vmatprep.subr.mxu0 %v871
  %1589 = vmatpush1.msra.mxu0 %v870
  %1590 = vmatprep.subr.mxu0 %v867
  %1591 = vmatpush1.msra.mxu0 %v866
  %1592 = vmatprep.subr.mxu0 %v863
  %1593 = vmatpush1.msra.mxu0 %v862
  %1594 = vmatprep.subr.mxu0 %v859
  %1595 = vmatpush1.msra.mxu0 %v858
  %1596 = vmatprep.subr.mxu0 %v855
  %1597 = vmatpush1.msra.mxu0 %v854
  %1598 = vmatprep.subr.mxu0 %v851
  %1599 = vmatpush1.msra.mxu0 %v850
  %1600 = vmatprep.subr.mxu0 %v847
  %1601 = vmatpush1.msra.mxu0 %v846
  %1602 = vmatprep.subr.mxu0 %v843
  %1603 = vmatpush1.msra.mxu0 %v842
  %1604 = vmatprep.subr.mxu0 %v839
  %1605 = vmatpush1.msra.mxu0 %v838
  %1606 = vmatprep.subr.mxu0 %v835
  %1607 = vmatpush1.msra.mxu0 %v834
  %1608 = vmatprep.subr.mxu0 %v831
  %1609 = vmatpush1.msra.mxu0 %v830
  %1610 = vmatprep.subr.mxu0 %v827
  %1611 = vmatpush1.msra.mxu0 %v826
  %1612 = vmatprep.subr.mxu0 %v823
  %1613 = vmatpush1.msra.mxu0 %v822
  %1614 = vmatprep.subr.mxu0 0.0
  %1615 = vmatpush2.msra.mxu0 0.0
  %1616 = vmatprep.subr.mxu0 0.0
  %1617 = vmatpush2.msra.mxu0 0.0
  %1618 = vmatprep.subr.mxu0 0.0
  %1619 = vmatpush2.msra.mxu0 0.0
  %1620 = vmatprep.subr.mxu0 0.0
  %1621 = vmatpush2.msra.mxu0 0.0
  %1622 = vmatprep.subr.mxu0 0.0
  %1623 = vmatpush2.msra.mxu0 0.0
  %1624 = vmatprep.subr.mxu0 0.0
  %1625 = vmatpush2.msra.mxu0 0.0
  %1626 = vmatprep.subr.mxu0 0.0
  %1627 = vmatpush2.msra.mxu0 0.0
  %1628 = vmatprep.subr.mxu0 0.0
  %1629 = vmatpush2.msra.mxu0 0.0
  %1630 = vmatprep.subr.mxu0 0.0
  %1631 = vmatpush2.msra.mxu0 0.0
  %1632 = vmatprep.subr.mxu0 0.0
  %1633 = vmatpush2.msra.mxu0 0.0
  %1634 = vmatprep.subr.mxu0 0.0
  %1635 = vmatpush2.msra.mxu0 0.0
  %1636 = vmatprep.subr.mxu0 0.0
  %1637 = vmatpush2.msra.mxu0 0.0
  %1638 = vmatprep.subr.mxu0 0.0
  %1639 = vmatpush2.msra.mxu0 0.0
  %1640 = vmatprep.subr.mxu0 0.0
  %1641 = vmatpush2.msra.mxu0 0.0
  %1642 = vmatprep.subr.mxu0 0.0
  %1643 = vmatpush2.msra.mxu0 0.0
  %1644 = vmatprep.subr.mxu0 0.0
  %1645 = vmatpush2.msra.mxu0 0.0
  %1646 = vmatprep.mubr.f32.mxu0 0.0
  %1647 = vmatmul.mubr.f32.gmra.mxu0 %v1577
  %v1648 = vpop.f32.mrf.mxu0
  %v1649 = vadd.f32 0.0, %v1648
  %v1650 = vpop.f32.mrf.mxu0
  %v1651 = vadd.f32 0.0, %v1650
  %1652 = vdwg.mxu0
  %1653 = vmatprep.subr.mxu0 %v885
  %1654 = vmatpush1.msra.mxu0 %v884
  %1655 = vmatprep.subr.mxu0 %v881
  %1656 = vmatpush1.msra.mxu0 %v880
  %1657 = vmatprep.subr.mxu0 %v877
  %1658 = vmatpush1.msra.mxu0 %v876
  %1659 = vmatprep.subr.mxu0 %v873
  %1660 = vmatpush1.msra.mxu0 %v872
  %1661 = vmatprep.subr.mxu0 %v869
  %1662 = vmatpush1.msra.mxu0 %v868
  %1663 = vmatprep.subr.mxu0 %v865
  %1664 = vmatpush1.msra.mxu0 %v864
  %1665 = vmatprep.subr.mxu0 %v861
  %1666 = vmatpush1.msra.mxu0 %v860
  %1667 = vmatprep.subr.mxu0 %v857
  %1668 = vmatpush1.msra.mxu0 %v856
  %1669 = vmatprep.subr.mxu0 %v853
  %1670 = vmatpush1.msra.mxu0 %v852
  %1671 = vmatprep.subr.mxu0 %v849
  %1672 = vmatpush1.msra.mxu0 %v848
  %1673 = vmatprep.subr.mxu0 %v845
  %1674 = vmatpush1.msra.mxu0 %v844
  %1675 = vmatprep.subr.mxu0 %v841
  %1676 = vmatpush1.msra.mxu0 %v840
  %1677 = vmatprep.subr.mxu0 %v837
  %1678 = vmatpush1.msra.mxu0 %v836
  %1679 = vmatprep.subr.mxu0 %v833
  %1680 = vmatpush1.msra.mxu0 %v832
  %1681 = vmatprep.subr.mxu0 %v829
  %1682 = vmatpush1.msra.mxu0 %v828
  %1683 = vmatprep.subr.mxu0 %v825
  %1684 = vmatpush1.msra.mxu0 %v824
  %1685 = vmatprep.subr.mxu0 0.0
  %1686 = vmatpush2.msra.mxu0 0.0
  %1687 = vmatprep.subr.mxu0 0.0
  %1688 = vmatpush2.msra.mxu0 0.0
  %1689 = vmatprep.subr.mxu0 0.0
  %1690 = vmatpush2.msra.mxu0 0.0
  %1691 = vmatprep.subr.mxu0 0.0
  %1692 = vmatpush2.msra.mxu0 0.0
  %1693 = vmatprep.subr.mxu0 0.0
  %1694 = vmatpush2.msra.mxu0 0.0
  %1695 = vmatprep.subr.mxu0 0.0
  %1696 = vmatpush2.msra.mxu0 0.0
  %1697 = vmatprep.subr.mxu0 0.0
  %1698 = vmatpush2.msra.mxu0 0.0
  %1699 = vmatprep.subr.mxu0 0.0
  %1700 = vmatpush2.msra.mxu0 0.0
  %1701 = vmatprep.subr.mxu0 0.0
  %1702 = vmatpush2.msra.mxu0 0.0
  %1703 = vmatprep.subr.mxu0 0.0
  %1704 = vmatpush2.msra.mxu0 0.0
  %1705 = vmatprep.subr.mxu0 0.0
  %1706 = vmatpush2.msra.mxu0 0.0
  %1707 = vmatprep.subr.mxu0 0.0
  %1708 = vmatpush2.msra.mxu0 0.0
  %1709 = vmatprep.subr.mxu0 0.0
  %1710 = vmatpush2.msra.mxu0 0.0
  %1711 = vmatprep.subr.mxu0 0.0
  %1712 = vmatpush2.msra.mxu0 0.0
  %1713 = vmatprep.subr.mxu0 0.0
  %1714 = vmatpush2.msra.mxu0 0.0
  %1715 = vmatprep.subr.mxu0 0.0
  %1716 = vmatpush2.msra.mxu0 0.0
  %1717 = vmatprep.mubr.f32.mxu0 0.0
  %1718 = vmatmul.mubr.f32.gmra.mxu0 %v1577
  %v1719 = vpop.f32.mrf.mxu0
  %v1720 = vadd.f32 0.0, %v1719
  %v1721 = vpop.f32.mrf.mxu0
  %v1722 = vadd.f32 0.0, %v1721
  %1723 = vdwg.mxu0
  %v1724 = vadd.f32 %v1578, %v1649
  %v1725 = vadd.f32 %v1579, %v1651
  %v1726 = vadd.f32 %v1580, %v1720
  %v1727 = vadd.f32 %v1581, %v1722
  %v1728 = vxor.u32 %v1724, 2147483648
  %v1729 = vmul.f32 %v1728, 1.442695
  %v1730 = vpow.pop %v1729
  %v1731 = vadd.f32 %v1730, 1.0
  %v1732 = vrcp.pop %v1731
  %v1733 = vmul.f32 1.0, %v1732
  %v1734 = vxor.u32 %v1725, 2147483648
  %v1735 = vmul.f32 %v1734, 1.442695
  %v1736 = vpow.pop %v1735
  %v1737 = vadd.f32 %v1736, 1.0
  %v1738 = vrcp.pop %v1737
  %v1739 = vmul.f32 1.0, %v1738
  %v1740 = vtanh.pop %v1726
  %v1741 = vxor.u32 %v1727, 2147483648
  %v1742 = vmul.f32 %v1741, 1.442695
  %v1743 = vpow.pop %v1742
  %v1744 = vadd.f32 %v1743, 1.0
  %v1745 = vrcp.pop %v1744
  %v1746 = vmul.f32 1.0, %v1745
  %v1747 = vmul.f32 %v1739, %v1575
  %v1748 = vmul.f32 %v1733, %v1740
  %v1749 = vadd.f32 %v1747, %v1748
  %v1750 = vtanh.pop %v1749
  %v1751 = vmul.f32 %v1746, %v1750
  %v1752 = vld [vmem:[#allocation2 + $0xa0] sm:$0xff]
  %v1753 = vld [vmem:[#allocation2 + $0xa8] sm:$0xff]
  %v1754 = vld [vmem:[#allocation2 + $0xb0] sm:$0xff]
  %v1755 = vld [vmem:[#allocation2 + $0xb8] sm:$0xff]
  %1756 = vmatprep.subr.mxu0 %v883
  %1757 = vmatpush1.msra.mxu0 %v882
  %1758 = vmatprep.subr.mxu0 %v879
  %1759 = vmatpush1.msra.mxu0 %v878
  %1760 = vmatprep.subr.mxu0 %v875
  %1761 = vmatpush1.msra.mxu0 %v874
  %1762 = vmatprep.subr.mxu0 %v871
  %1763 = vmatpush1.msra.mxu0 %v870
  %1764 = vmatprep.subr.mxu0 %v867
  %1765 = vmatpush1.msra.mxu0 %v866
  %1766 = vmatprep.subr.mxu0 %v863
  %1767 = vmatpush1.msra.mxu0 %v862
  %1768 = vmatprep.subr.mxu0 %v859
  %1769 = vmatpush1.msra.mxu0 %v858
  %1770 = vmatprep.subr.mxu0 %v855
  %1771 = vmatpush1.msra.mxu0 %v854
  %1772 = vmatprep.subr.mxu0 %v851
  %1773 = vmatpush1.msra.mxu0 %v850
  %1774 = vmatprep.subr.mxu0 %v847
  %1775 = vmatpush1.msra.mxu0 %v846
  %1776 = vmatprep.subr.mxu0 %v843
  %1777 = vmatpush1.msra.mxu0 %v842
  %1778 = vmatprep.subr.mxu0 %v839
  %1779 = vmatpush1.msra.mxu0 %v838
  %1780 = vmatprep.subr.mxu0 %v835
  %1781 = vmatpush1.msra.mxu0 %v834
  %1782 = vmatprep.subr.mxu0 %v831
  %1783 = vmatpush1.msra.mxu0 %v830
  %1784 = vmatprep.subr.mxu0 %v827
  %1785 = vmatpush1.msra.mxu0 %v826
  %1786 = vmatprep.subr.mxu0 %v823
  %1787 = vmatpush1.msra.mxu0 %v822
  %1788 = vmatprep.subr.mxu0 0.0
  %1789 = vmatpush2.msra.mxu0 0.0
  %1790 = vmatprep.subr.mxu0 0.0
  %1791 = vmatpush2.msra.mxu0 0.0
  %1792 = vmatprep.subr.mxu0 0.0
  %1793 = vmatpush2.msra.mxu0 0.0
  %1794 = vmatprep.subr.mxu0 0.0
  %1795 = vmatpush2.msra.mxu0 0.0
  %1796 = vmatprep.subr.mxu0 0.0
  %1797 = vmatpush2.msra.mxu0 0.0
  %1798 = vmatprep.subr.mxu0 0.0
  %1799 = vmatpush2.msra.mxu0 0.0
  %1800 = vmatprep.subr.mxu0 0.0
  %1801 = vmatpush2.msra.mxu0 0.0
  %1802 = vmatprep.subr.mxu0 0.0
  %1803 = vmatpush2.msra.mxu0 0.0
  %1804 = vmatprep.subr.mxu0 0.0
  %1805 = vmatpush2.msra.mxu0 0.0
  %1806 = vmatprep.subr.mxu0 0.0
  %1807 = vmatpush2.msra.mxu0 0.0
  %1808 = vmatprep.subr.mxu0 0.0
  %1809 = vmatpush2.msra.mxu0 0.0
  %1810 = vmatprep.subr.mxu0 0.0
  %1811 = vmatpush2.msra.mxu0 0.0
  %1812 = vmatprep.subr.mxu0 0.0
  %1813 = vmatpush2.msra.mxu0 0.0
  %1814 = vmatprep.subr.mxu0 0.0
  %1815 = vmatpush2.msra.mxu0 0.0
  %1816 = vmatprep.subr.mxu0 0.0
  %1817 = vmatpush2.msra.mxu0 0.0
  %1818 = vmatprep.subr.mxu0 0.0
  %1819 = vmatpush2.msra.mxu0 0.0
  %1820 = vmatprep.mubr.f32.mxu0 0.0
  %1821 = vmatmul.mubr.f32.gmra.mxu0 %v1751
  %v1822 = vpop.f32.mrf.mxu0
  %v1823 = vadd.f32 0.0, %v1822
  %v1824 = vpop.f32.mrf.mxu0
  %v1825 = vadd.f32 0.0, %v1824
  %1826 = vdwg.mxu0
  %1827 = vmatprep.subr.mxu0 %v885
  %1828 = vmatpush1.msra.mxu0 %v884
  %1829 = vmatprep.subr.mxu0 %v881
  %1830 = vmatpush1.msra.mxu0 %v880
  %1831 = vmatprep.subr.mxu0 %v877
  %1832 = vmatpush1.msra.mxu0 %v876
  %1833 = vmatprep.subr.mxu0 %v873
  %1834 = vmatpush1.msra.mxu0 %v872
  %1835 = vmatprep.subr.mxu0 %v869
  %1836 = vmatpush1.msra.mxu0 %v868
  %1837 = vmatprep.subr.mxu0 %v865
  %1838 = vmatpush1.msra.mxu0 %v864
  %1839 = vmatprep.subr.mxu0 %v861
  %1840 = vmatpush1.msra.mxu0 %v860
  %1841 = vmatprep.subr.mxu0 %v857
  %1842 = vmatpush1.msra.mxu0 %v856
  %1843 = vmatprep.subr.mxu0 %v853
  %1844 = vmatpush1.msra.mxu0 %v852
  %1845 = vmatprep.subr.mxu0 %v849
  %1846 = vmatpush1.msra.mxu0 %v848
  %1847 = vmatprep.subr.mxu0 %v845
  %1848 = vmatpush1.msra.mxu0 %v844
  %1849 = vmatprep.subr.mxu0 %v841
  %1850 = vmatpush1.msra.mxu0 %v840
  %1851 = vmatprep.subr.mxu0 %v837
  %1852 = vmatpush1.msra.mxu0 %v836
  %1853 = vmatprep.subr.mxu0 %v833
  %1854 = vmatpush1.msra.mxu0 %v832
  %1855 = vmatprep.subr.mxu0 %v829
  %1856 = vmatpush1.msra.mxu0 %v828
  %1857 = vmatprep.subr.mxu0 %v825
  %1858 = vmatpush1.msra.mxu0 %v824
  %1859 = vmatprep.subr.mxu0 0.0
  %1860 = vmatpush2.msra.mxu0 0.0
  %1861 = vmatprep.subr.mxu0 0.0
  %1862 = vmatpush2.msra.mxu0 0.0
  %1863 = vmatprep.subr.mxu0 0.0
  %1864 = vmatpush2.msra.mxu0 0.0
  %1865 = vmatprep.subr.mxu0 0.0
  %1866 = vmatpush2.msra.mxu0 0.0
  %1867 = vmatprep.subr.mxu0 0.0
  %1868 = vmatpush2.msra.mxu0 0.0
  %1869 = vmatprep.subr.mxu0 0.0
  %1870 = vmatpush2.msra.mxu0 0.0
  %1871 = vmatprep.subr.mxu0 0.0
  %1872 = vmatpush2.msra.mxu0 0.0
  %1873 = vmatprep.subr.mxu0 0.0
  %1874 = vmatpush2.msra.mxu0 0.0
  %1875 = vmatprep.subr.mxu0 0.0
  %1876 = vmatpush2.msra.mxu0 0.0
  %1877 = vmatprep.subr.mxu0 0.0
  %1878 = vmatpush2.msra.mxu0 0.0
  %1879 = vmatprep.subr.mxu0 0.0
  %1880 = vmatpush2.msra.mxu0 0.0
  %1881 = vmatprep.subr.mxu0 0.0
  %1882 = vmatpush2.msra.mxu0 0.0
  %1883 = vmatprep.subr.mxu0 0.0
  %1884 = vmatpush2.msra.mxu0 0.0
  %1885 = vmatprep.subr.mxu0 0.0
  %1886 = vmatpush2.msra.mxu0 0.0
  %1887 = vmatprep.subr.mxu0 0.0
  %1888 = vmatpush2.msra.mxu0 0.0
  %1889 = vmatprep.subr.mxu0 0.0
  %1890 = vmatpush2.msra.mxu0 0.0
  %1891 = vmatprep.mubr.f32.mxu0 0.0
  %1892 = vmatmul.mubr.f32.gmra.mxu0 %v1751
  %v1893 = vpop.f32.mrf.mxu0
  %v1894 = vadd.f32 0.0, %v1893
  %v1895 = vpop.f32.mrf.mxu0
  %v1896 = vadd.f32 0.0, %v1895
  %1897 = vdwg.mxu0
  %v1898 = vadd.f32 %v1752, %v1823
  %v1899 = vadd.f32 %v1753, %v1825
  %v1900 = vadd.f32 %v1754, %v1894
  %v1901 = vadd.f32 %v1755, %v1896
  %v1902 = vxor.u32 %v1898, 2147483648
  %v1903 = vmul.f32 %v1902, 1.442695
  %v1904 = vpow.pop %v1903
  %v1905 = vadd.f32 %v1904, 1.0
  %v1906 = vrcp.pop %v1905
  %v1907 = vmul.f32 1.0, %v1906
  %v1908 = vxor.u32 %v1899, 2147483648
  %v1909 = vmul.f32 %v1908, 1.442695
  %v1910 = vpow.pop %v1909
  %v1911 = vadd.f32 %v1910, 1.0
  %v1912 = vrcp.pop %v1911
  %v1913 = vmul.f32 1.0, %v1912
  %v1914 = vtanh.pop %v1900
  %v1915 = vxor.u32 %v1901, 2147483648
  %v1916 = vmul.f32 %v1915, 1.442695
  %v1917 = vpow.pop %v1916
  %v1918 = vadd.f32 %v1917, 1.0
  %v1919 = vrcp.pop %v1918
  %v1920 = vmul.f32 1.0, %v1919
  %v1921 = vmul.f32 %v1913, %v1749
  %v1922 = vmul.f32 %v1907, %v1914
  %v1923 = vadd.f32 %v1921, %v1922
  %v1924 = vtanh.pop %v1923
  %v1925 = vmul.f32 %v1920, %v1924
  %v1926 = vld [vmem:[#allocation2 + $0xc0] sm:$0xff]
  %v1927 = vld [vmem:[#allocation2 + $0xc8] sm:$0xff]
  %v1928 = vld [vmem:[#allocation2 + $0xd0] sm:$0xff]
  %v1929 = vld [vmem:[#allocation2 + $0xd8] sm:$0xff]
  %1930 = vmatprep.subr.mxu0 %v883
  %1931 = vmatpush1.msra.mxu0 %v882
  %1932 = vmatprep.subr.mxu0 %v879
  %1933 = vmatpush1.msra.mxu0 %v878
  %1934 = vmatprep.subr.mxu0 %v875
  %1935 = vmatpush1.msra.mxu0 %v874
  %1936 = vmatprep.subr.mxu0 %v871
  %1937 = vmatpush1.msra.mxu0 %v870
  %1938 = vmatprep.subr.mxu0 %v867
  %1939 = vmatpush1.msra.mxu0 %v866
  %1940 = vmatprep.subr.mxu0 %v863
  %1941 = vmatpush1.msra.mxu0 %v862
  %1942 = vmatprep.subr.mxu0 %v859
  %1943 = vmatpush1.msra.mxu0 %v858
  %1944 = vmatprep.subr.mxu0 %v855
  %1945 = vmatpush1.msra.mxu0 %v854
  %1946 = vmatprep.subr.mxu0 %v851
  %1947 = vmatpush1.msra.mxu0 %v850
  %1948 = vmatprep.subr.mxu0 %v847
  %1949 = vmatpush1.msra.mxu0 %v846
  %1950 = vmatprep.subr.mxu0 %v843
  %1951 = vmatpush1.msra.mxu0 %v842
  %1952 = vmatprep.subr.mxu0 %v839
  %1953 = vmatpush1.msra.mxu0 %v838
  %1954 = vmatprep.subr.mxu0 %v835
  %1955 = vmatpush1.msra.mxu0 %v834
  %1956 = vmatprep.subr.mxu0 %v831
  %1957 = vmatpush1.msra.mxu0 %v830
  %1958 = vmatprep.subr.mxu0 %v827
  %1959 = vmatpush1.msra.mxu0 %v826
  %1960 = vmatprep.subr.mxu0 %v823
  %1961 = vmatpush1.msra.mxu0 %v822
  %1962 = vmatprep.subr.mxu0 0.0
  %1963 = vmatpush2.msra.mxu0 0.0
  %1964 = vmatprep.subr.mxu0 0.0
  %1965 = vmatpush2.msra.mxu0 0.0
  %1966 = vmatprep.subr.mxu0 0.0
  %1967 = vmatpush2.msra.mxu0 0.0
  %1968 = vmatprep.subr.mxu0 0.0
  %1969 = vmatpush2.msra.mxu0 0.0
  %1970 = vmatprep.subr.mxu0 0.0
  %1971 = vmatpush2.msra.mxu0 0.0
  %1972 = vmatprep.subr.mxu0 0.0
  %1973 = vmatpush2.msra.mxu0 0.0
  %1974 = vmatprep.subr.mxu0 0.0
  %1975 = vmatpush2.msra.mxu0 0.0
  %1976 = vmatprep.subr.mxu0 0.0
  %1977 = vmatpush2.msra.mxu0 0.0
  %1978 = vmatprep.subr.mxu0 0.0
  %1979 = vmatpush2.msra.mxu0 0.0
  %1980 = vmatprep.subr.mxu0 0.0
  %1981 = vmatpush2.msra.mxu0 0.0
  %1982 = vmatprep.subr.mxu0 0.0
  %1983 = vmatpush2.msra.mxu0 0.0
  %1984 = vmatprep.subr.mxu0 0.0
  %1985 = vmatpush2.msra.mxu0 0.0
  %1986 = vmatprep.subr.mxu0 0.0
  %1987 = vmatpush2.msra.mxu0 0.0
  %1988 = vmatprep.subr.mxu0 0.0
  %1989 = vmatpush2.msra.mxu0 0.0
  %1990 = vmatprep.subr.mxu0 0.0
  %1991 = vmatpush2.msra.mxu0 0.0
  %1992 = vmatprep.subr.mxu0 0.0
  %1993 = vmatpush2.msra.mxu0 0.0
  %1994 = vmatprep.mubr.f32.mxu0 0.0
  %1995 = vmatmul.mubr.f32.gmra.mxu0 %v1925
  %v1996 = vpop.f32.mrf.mxu0
  %v1997 = vadd.f32 0.0, %v1996
  %v1998 = vpop.f32.mrf.mxu0
  %v1999 = vadd.f32 0.0, %v1998
  %2000 = vdwg.mxu0
  %2001 = vmatprep.subr.mxu0 %v885
  %2002 = vmatpush1.msra.mxu0 %v884
  %2003 = vmatprep.subr.mxu0 %v881
  %2004 = vmatpush1.msra.mxu0 %v880
  %2005 = vmatprep.subr.mxu0 %v877
  %2006 = vmatpush1.msra.mxu0 %v876
  %2007 = vmatprep.subr.mxu0 %v873
  %2008 = vmatpush1.msra.mxu0 %v872
  %2009 = vmatprep.subr.mxu0 %v869
  %2010 = vmatpush1.msra.mxu0 %v868
  %2011 = vmatprep.subr.mxu0 %v865
  %2012 = vmatpush1.msra.mxu0 %v864
  %2013 = vmatprep.subr.mxu0 %v861
  %2014 = vmatpush1.msra.mxu0 %v860
  %2015 = vmatprep.subr.mxu0 %v857
  %2016 = vmatpush1.msra.mxu0 %v856
  %2017 = vmatprep.subr.mxu0 %v853
  %2018 = vmatpush1.msra.mxu0 %v852
  %2019 = vmatprep.subr.mxu0 %v849
  %2020 = vmatpush1.msra.mxu0 %v848
  %2021 = vmatprep.subr.mxu0 %v845
  %2022 = vmatpush1.msra.mxu0 %v844
  %2023 = vmatprep.subr.mxu0 %v841
  %2024 = vmatpush1.msra.mxu0 %v840
  %2025 = vmatprep.subr.mxu0 %v837
  %2026 = vmatpush1.msra.mxu0 %v836
  %2027 = vmatprep.subr.mxu0 %v833
  %2028 = vmatpush1.msra.mxu0 %v832
  %2029 = vmatprep.subr.mxu0 %v829
  %2030 = vmatpush1.msra.mxu0 %v828
  %2031 = vmatprep.subr.mxu0 %v825
  %2032 = vmatpush1.msra.mxu0 %v824
  %2033 = vmatprep.subr.mxu0 0.0
  %2034 = vmatpush2.msra.mxu0 0.0
  %2035 = vmatprep.subr.mxu0 0.0
  %2036 = vmatpush2.msra.mxu0 0.0
  %2037 = vmatprep.subr.mxu0 0.0
  %2038 = vmatpush2.msra.mxu0 0.0
  %2039 = vmatprep.subr.mxu0 0.0
  %2040 = vmatpush2.msra.mxu0 0.0
  %2041 = vmatprep.subr.mxu0 0.0
  %2042 = vmatpush2.msra.mxu0 0.0
  %2043 = vmatprep.subr.mxu0 0.0
  %2044 = vmatpush2.msra.mxu0 0.0
  %2045 = vmatprep.subr.mxu0 0.0
  %2046 = vmatpush2.msra.mxu0 0.0
  %2047 = vmatprep.subr.mxu0 0.0
  %2048 = vmatpush2.msra.mxu0 0.0
  %2049 = vmatprep.subr.mxu0 0.0
  %2050 = vmatpush2.msra.mxu0 0.0
  %2051 = vmatprep.subr.mxu0 0.0
  %2052 = vmatpush2.msra.mxu0 0.0
  %2053 = vmatprep.subr.mxu0 0.0
  %2054 = vmatpush2.msra.mxu0 0.0
  %2055 = vmatprep.subr.mxu0 0.0
  %2056 = vmatpush2.msra.mxu0 0.0
  %2057 = vmatprep.subr.mxu0 0.0
  %2058 = vmatpush2.msra.mxu0 0.0
  %2059 = vmatprep.subr.mxu0 0.0
  %2060 = vmatpush2.msra.mxu0 0.0
  %2061 = vmatprep.subr.mxu0 0.0
  %2062 = vmatpush2.msra.mxu0 0.0
  %2063 = vmatprep.subr.mxu0 0.0
  %2064 = vmatpush2.msra.mxu0 0.0
  %2065 = vmatprep.mubr.f32.mxu0 0.0
  %2066 = vmatmul.mubr.f32.gmra.mxu0 %v1925
  %v2067 = vpop.f32.mrf.mxu0
  %v2068 = vadd.f32 0.0, %v2067
  %v2069 = vpop.f32.mrf.mxu0
  %v2070 = vadd.f32 0.0, %v2069
  %2071 = vdwg.mxu0
  %v2072 = vadd.f32 %v1926, %v1997
  %v2073 = vadd.f32 %v1927, %v1999
  %v2074 = vadd.f32 %v1928, %v2068
  %v2075 = vadd.f32 %v1929, %v2070
  %v2076 = vxor.u32 %v2072, 2147483648
  %v2077 = vmul.f32 %v2076, 1.442695
  %v2078 = vpow.pop %v2077
  %v2079 = vadd.f32 %v2078, 1.0
  %v2080 = vrcp.pop %v2079
  %v2081 = vmul.f32 1.0, %v2080
  %v2082 = vxor.u32 %v2073, 2147483648
  %v2083 = vmul.f32 %v2082, 1.442695
  %v2084 = vpow.pop %v2083
  %v2085 = vadd.f32 %v2084, 1.0
  %v2086 = vrcp.pop %v2085
  %v2087 = vmul.f32 1.0, %v2086
  %v2088 = vtanh.pop %v2074
  %v2089 = vxor.u32 %v2075, 2147483648
  %v2090 = vmul.f32 %v2089, 1.442695
  %v2091 = vpow.pop %v2090
  %v2092 = vadd.f32 %v2091, 1.0
  %v2093 = vrcp.pop %v2092
  %v2094 = vmul.f32 1.0, %v2093
  %v2095 = vmul.f32 %v2087, %v1923
  %v2096 = vmul.f32 %v2081, %v2088
  %v2097 = vadd.f32 %v2095, %v2096
  %v2098 = vtanh.pop %v2097
  %v2099 = vmul.f32 %v2094, %v2098
  %v2100 = vld [vmem:[#allocation2 + $0xe0] sm:$0xff]
  %v2101 = vld [vmem:[#allocation2 + $0xe8] sm:$0xff]
  %v2102 = vld [vmem:[#allocation2 + $0xf0] sm:$0xff]
  %v2103 = vld [vmem:[#allocation2 + $0xf8] sm:$0xff]
  %2104 = vmatprep.subr.mxu0 %v883
  %2105 = vmatpush1.msra.mxu0 %v882
  %2106 = vmatprep.subr.mxu0 %v879
  %2107 = vmatpush1.msra.mxu0 %v878
  %2108 = vmatprep.subr.mxu0 %v875
  %2109 = vmatpush1.msra.mxu0 %v874
  %2110 = vmatprep.subr.mxu0 %v871
  %2111 = vmatpush1.msra.mxu0 %v870
  %2112 = vmatprep.subr.mxu0 %v867
  %2113 = vmatpush1.msra.mxu0 %v866
  %2114 = vmatprep.subr.mxu0 %v863
  %2115 = vmatpush1.msra.mxu0 %v862
  %2116 = vmatprep.subr.mxu0 %v859
  %2117 = vmatpush1.msra.mxu0 %v858
  %2118 = vmatprep.subr.mxu0 %v855
  %2119 = vmatpush1.msra.mxu0 %v854
  %2120 = vmatprep.subr.mxu0 %v851
  %2121 = vmatpush1.msra.mxu0 %v850
  %2122 = vmatprep.subr.mxu0 %v847
  %2123 = vmatpush1.msra.mxu0 %v846
  %2124 = vmatprep.subr.mxu0 %v843
  %2125 = vmatpush1.msra.mxu0 %v842
  %2126 = vmatprep.subr.mxu0 %v839
  %2127 = vmatpush1.msra.mxu0 %v838
  %2128 = vmatprep.subr.mxu0 %v835
  %2129 = vmatpush1.msra.mxu0 %v834
  %2130 = vmatprep.subr.mxu0 %v831
  %2131 = vmatpush1.msra.mxu0 %v830
  %2132 = vmatprep.subr.mxu0 %v827
  %2133 = vmatpush1.msra.mxu0 %v826
  %2134 = vmatprep.subr.mxu0 %v823
  %2135 = vmatpush1.msra.mxu0 %v822
  %2136 = vmatprep.subr.mxu0 0.0
  %2137 = vmatpush2.msra.mxu0 0.0
  %2138 = vmatprep.subr.mxu0 0.0
  %2139 = vmatpush2.msra.mxu0 0.0
  %2140 = vmatprep.subr.mxu0 0.0
  %2141 = vmatpush2.msra.mxu0 0.0
  %2142 = vmatprep.subr.mxu0 0.0
  %2143 = vmatpush2.msra.mxu0 0.0
  %2144 = vmatprep.subr.mxu0 0.0
  %2145 = vmatpush2.msra.mxu0 0.0
  %2146 = vmatprep.subr.mxu0 0.0
  %2147 = vmatpush2.msra.mxu0 0.0
  %2148 = vmatprep.subr.mxu0 0.0
  %2149 = vmatpush2.msra.mxu0 0.0
  %2150 = vmatprep.subr.mxu0 0.0
  %2151 = vmatpush2.msra.mxu0 0.0
  %2152 = vmatprep.subr.mxu0 0.0
  %2153 = vmatpush2.msra.mxu0 0.0
  %2154 = vmatprep.subr.mxu0 0.0
  %2155 = vmatpush2.msra.mxu0 0.0
  %2156 = vmatprep.subr.mxu0 0.0
  %2157 = vmatpush2.msra.mxu0 0.0
  %2158 = vmatprep.subr.mxu0 0.0
  %2159 = vmatpush2.msra.mxu0 0.0
  %2160 = vmatprep.subr.mxu0 0.0
  %2161 = vmatpush2.msra.mxu0 0.0
  %2162 = vmatprep.subr.mxu0 0.0
  %2163 = vmatpush2.msra.mxu0 0.0
  %2164 = vmatprep.subr.mxu0 0.0
  %2165 = vmatpush2.msra.mxu0 0.0
  %2166 = vmatprep.subr.mxu0 0.0
  %2167 = vmatpush2.msra.mxu0 0.0
  %2168 = vmatprep.mubr.f32.mxu0 0.0
  %2169 = vmatmul.mubr.f32.gmra.mxu0 %v2099
  %v2170 = vpop.f32.mrf.mxu0
  %v2171 = vadd.f32 0.0, %v2170
  %v2172 = vpop.f32.mrf.mxu0
  %v2173 = vadd.f32 0.0, %v2172
  %2174 = vdwg.mxu0
  %2175 = vmatprep.subr.mxu0 %v885
  %2176 = vmatpush1.msra.mxu0 %v884
  %2177 = vmatprep.subr.mxu0 %v881
  %2178 = vmatpush1.msra.mxu0 %v880
  %2179 = vmatprep.subr.mxu0 %v877
  %2180 = vmatpush1.msra.mxu0 %v876
  %2181 = vmatprep.subr.mxu0 %v873
  %2182 = vmatpush1.msra.mxu0 %v872
  %2183 = vmatprep.subr.mxu0 %v869
  %2184 = vmatpush1.msra.mxu0 %v868
  %2185 = vmatprep.subr.mxu0 %v865
  %2186 = vmatpush1.msra.mxu0 %v864
  %2187 = vmatprep.subr.mxu0 %v861
  %2188 = vmatpush1.msra.mxu0 %v860
  %2189 = vmatprep.subr.mxu0 %v857
  %2190 = vmatpush1.msra.mxu0 %v856
  %2191 = vmatprep.subr.mxu0 %v853
  %2192 = vmatpush1.msra.mxu0 %v852
  %2193 = vmatprep.subr.mxu0 %v849
  %2194 = vmatpush1.msra.mxu0 %v848
  %2195 = vmatprep.subr.mxu0 %v845
  %2196 = vmatpush1.msra.mxu0 %v844
  %2197 = vmatprep.subr.mxu0 %v841
  %2198 = vmatpush1.msra.mxu0 %v840
  %2199 = vmatprep.subr.mxu0 %v837
  %2200 = vmatpush1.msra.mxu0 %v836
  %2201 = vmatprep.subr.mxu0 %v833
  %2202 = vmatpush1.msra.mxu0 %v832
  %2203 = vmatprep.subr.mxu0 %v829
  %2204 = vmatpush1.msra.mxu0 %v828
  %2205 = vmatprep.subr.mxu0 %v825
  %2206 = vmatpush1.msra.mxu0 %v824
  %2207 = vmatprep.subr.mxu0 0.0
  %2208 = vmatpush2.msra.mxu0 0.0
  %2209 = vmatprep.subr.mxu0 0.0
  %2210 = vmatpush2.msra.mxu0 0.0
  %2211 = vmatprep.subr.mxu0 0.0
  %2212 = vmatpush2.msra.mxu0 0.0
  %2213 = vmatprep.subr.mxu0 0.0
  %2214 = vmatpush2.msra.mxu0 0.0
  %2215 = vmatprep.subr.mxu0 0.0
  %2216 = vmatpush2.msra.mxu0 0.0
  %2217 = vmatprep.subr.mxu0 0.0
  %2218 = vmatpush2.msra.mxu0 0.0
  %2219 = vmatprep.subr.mxu0 0.0
  %2220 = vmatpush2.msra.mxu0 0.0
  %2221 = vmatprep.subr.mxu0 0.0
  %2222 = vmatpush2.msra.mxu0 0.0
  %2223 = vmatprep.subr.mxu0 0.0
  %2224 = vmatpush2.msra.mxu0 0.0
  %2225 = vmatprep.subr.mxu0 0.0
  %2226 = vmatpush2.msra.mxu0 0.0
  %2227 = vmatprep.subr.mxu0 0.0
  %2228 = vmatpush2.msra.mxu0 0.0
  %2229 = vmatprep.subr.mxu0 0.0
  %2230 = vmatpush2.msra.mxu0 0.0
  %2231 = vmatprep.subr.mxu0 0.0
  %2232 = vmatpush2.msra.mxu0 0.0
  %2233 = vmatprep.subr.mxu0 0.0
  %2234 = vmatpush2.msra.mxu0 0.0
  %2235 = vmatprep.subr.mxu0 0.0
  %2236 = vmatpush2.msra.mxu0 0.0
  %2237 = vmatprep.subr.mxu0 0.0
  %2238 = vmatpush2.msra.mxu0 0.0
  %2239 = vmatprep.mubr.f32.mxu0 0.0
  %2240 = vmatmul.mubr.f32.gmra.mxu0 %v2099
  %v2241 = vpop.f32.mrf.mxu0
  %v2242 = vadd.f32 0.0, %v2241
  %v2243 = vpop.f32.mrf.mxu0
  %v2244 = vadd.f32 0.0, %v2243
  %2245 = vdwg.mxu0
  %v2246 = vadd.f32 %v2100, %v2171
  %v2247 = vadd.f32 %v2101, %v2173
  %v2248 = vadd.f32 %v2102, %v2242
  %v2249 = vadd.f32 %v2103, %v2244
  %v2250 = vxor.u32 %v2246, 2147483648
  %v2251 = vmul.f32 %v2250, 1.442695
  %v2252 = vpow.pop %v2251
  %v2253 = vadd.f32 %v2252, 1.0
  %v2254 = vrcp.pop %v2253
  %v2255 = vmul.f32 1.0, %v2254
  %v2256 = vxor.u32 %v2247, 2147483648
  %v2257 = vmul.f32 %v2256, 1.442695
  %v2258 = vpow.pop %v2257
  %v2259 = vadd.f32 %v2258, 1.0
  %v2260 = vrcp.pop %v2259
  %v2261 = vmul.f32 1.0, %v2260
  %v2262 = vtanh.pop %v2248
  %v2263 = vxor.u32 %v2249, 2147483648
  %v2264 = vmul.f32 %v2263, 1.442695
  %v2265 = vpow.pop %v2264
  %v2266 = vadd.f32 %v2265, 1.0
  %v2267 = vrcp.pop %v2266
  %v2268 = vmul.f32 1.0, %v2267
  %v2269 = vmul.f32 %v2261, %v2097
  %v2270 = vmul.f32 %v2255, %v2262
  %v2271 = vadd.f32 %v2269, %v2270
  %v2272 = vtanh.pop %v2271
  %v2273 = vmul.f32 %v2268, %v2272
  %v2274 = vld [vmem:[#allocation2 + $0x100] sm:$0xff]
  %v2275 = vld [vmem:[#allocation2 + $0x108] sm:$0xff]
  %v2276 = vld [vmem:[#allocation2 + $0x110] sm:$0xff]
  %v2277 = vld [vmem:[#allocation2 + $0x118] sm:$0xff]
  %2278 = vmatprep.subr.mxu0 %v883
  %2279 = vmatpush1.msra.mxu0 %v882
  %2280 = vmatprep.subr.mxu0 %v879
  %2281 = vmatpush1.msra.mxu0 %v878
  %2282 = vmatprep.subr.mxu0 %v875
  %2283 = vmatpush1.msra.mxu0 %v874
  %2284 = vmatprep.subr.mxu0 %v871
  %2285 = vmatpush1.msra.mxu0 %v870
  %2286 = vmatprep.subr.mxu0 %v867
  %2287 = vmatpush1.msra.mxu0 %v866
  %2288 = vmatprep.subr.mxu0 %v863
  %2289 = vmatpush1.msra.mxu0 %v862
  %2290 = vmatprep.subr.mxu0 %v859
  %2291 = vmatpush1.msra.mxu0 %v858
  %2292 = vmatprep.subr.mxu0 %v855
  %2293 = vmatpush1.msra.mxu0 %v854
  %2294 = vmatprep.subr.mxu0 %v851
  %2295 = vmatpush1.msra.mxu0 %v850
  %2296 = vmatprep.subr.mxu0 %v847
  %2297 = vmatpush1.msra.mxu0 %v846
  %2298 = vmatprep.subr.mxu0 %v843
  %2299 = vmatpush1.msra.mxu0 %v842
  %2300 = vmatprep.subr.mxu0 %v839
  %2301 = vmatpush1.msra.mxu0 %v838
  %2302 = vmatprep.subr.mxu0 %v835
  %2303 = vmatpush1.msra.mxu0 %v834
  %2304 = vmatprep.subr.mxu0 %v831
  %2305 = vmatpush1.msra.mxu0 %v830
  %2306 = vmatprep.subr.mxu0 %v827
  %2307 = vmatpush1.msra.mxu0 %v826
  %2308 = vmatprep.subr.mxu0 %v823
  %2309 = vmatpush1.msra.mxu0 %v822
  %2310 = vmatprep.subr.mxu0 0.0
  %2311 = vmatpush2.msra.mxu0 0.0
  %2312 = vmatprep.subr.mxu0 0.0
  %2313 = vmatpush2.msra.mxu0 0.0
  %2314 = vmatprep.subr.mxu0 0.0
  %2315 = vmatpush2.msra.mxu0 0.0
  %2316 = vmatprep.subr.mxu0 0.0
  %2317 = vmatpush2.msra.mxu0 0.0
  %2318 = vmatprep.subr.mxu0 0.0
  %2319 = vmatpush2.msra.mxu0 0.0
  %2320 = vmatprep.subr.mxu0 0.0
  %2321 = vmatpush2.msra.mxu0 0.0
  %2322 = vmatprep.subr.mxu0 0.0
  %2323 = vmatpush2.msra.mxu0 0.0
  %2324 = vmatprep.subr.mxu0 0.0
  %2325 = vmatpush2.msra.mxu0 0.0
  %2326 = vmatprep.subr.mxu0 0.0
  %2327 = vmatpush2.msra.mxu0 0.0
  %2328 = vmatprep.subr.mxu0 0.0
  %2329 = vmatpush2.msra.mxu0 0.0
  %2330 = vmatprep.subr.mxu0 0.0
  %2331 = vmatpush2.msra.mxu0 0.0
  %2332 = vmatprep.subr.mxu0 0.0
  %2333 = vmatpush2.msra.mxu0 0.0
  %2334 = vmatprep.subr.mxu0 0.0
  %2335 = vmatpush2.msra.mxu0 0.0
  %2336 = vmatprep.subr.mxu0 0.0
  %2337 = vmatpush2.msra.mxu0 0.0
  %2338 = vmatprep.subr.mxu0 0.0
  %2339 = vmatpush2.msra.mxu0 0.0
  %2340 = vmatprep.subr.mxu0 0.0
  %2341 = vmatpush2.msra.mxu0 0.0
  %2342 = vmatprep.mubr.f32.mxu0 0.0
  %2343 = vmatmul.mubr.f32.gmra.mxu0 %v2273
  %v2344 = vpop.f32.mrf.mxu0
  %v2345 = vadd.f32 0.0, %v2344
  %v2346 = vpop.f32.mrf.mxu0
  %v2347 = vadd.f32 0.0, %v2346
  %2348 = vdwg.mxu0
  %2349 = vmatprep.subr.mxu0 %v885
  %2350 = vmatpush1.msra.mxu0 %v884
  %2351 = vmatprep.subr.mxu0 %v881
  %2352 = vmatpush1.msra.mxu0 %v880
  %2353 = vmatprep.subr.mxu0 %v877
  %2354 = vmatpush1.msra.mxu0 %v876
  %2355 = vmatprep.subr.mxu0 %v873
  %2356 = vmatpush1.msra.mxu0 %v872
  %2357 = vmatprep.subr.mxu0 %v869
  %2358 = vmatpush1.msra.mxu0 %v868
  %2359 = vmatprep.subr.mxu0 %v865
  %2360 = vmatpush1.msra.mxu0 %v864
  %2361 = vmatprep.subr.mxu0 %v861
  %2362 = vmatpush1.msra.mxu0 %v860
  %2363 = vmatprep.subr.mxu0 %v857
  %2364 = vmatpush1.msra.mxu0 %v856
  %2365 = vmatprep.subr.mxu0 %v853
  %2366 = vmatpush1.msra.mxu0 %v852
  %2367 = vmatprep.subr.mxu0 %v849
  %2368 = vmatpush1.msra.mxu0 %v848
  %2369 = vmatprep.subr.mxu0 %v845
  %2370 = vmatpush1.msra.mxu0 %v844
  %2371 = vmatprep.subr.mxu0 %v841
  %2372 = vmatpush1.msra.mxu0 %v840
  %2373 = vmatprep.subr.mxu0 %v837
  %2374 = vmatpush1.msra.mxu0 %v836
  %2375 = vmatprep.subr.mxu0 %v833
  %2376 = vmatpush1.msra.mxu0 %v832
  %2377 = vmatprep.subr.mxu0 %v829
  %2378 = vmatpush1.msra.mxu0 %v828
  %2379 = vmatprep.subr.mxu0 %v825
  %2380 = vmatpush1.msra.mxu0 %v824
  %2381 = vmatprep.subr.mxu0 0.0
  %2382 = vmatpush2.msra.mxu0 0.0
  %2383 = vmatprep.subr.mxu0 0.0
  %2384 = vmatpush2.msra.mxu0 0.0
  %2385 = vmatprep.subr.mxu0 0.0
  %2386 = vmatpush2.msra.mxu0 0.0
  %2387 = vmatprep.subr.mxu0 0.0
  %2388 = vmatpush2.msra.mxu0 0.0
  %2389 = vmatprep.subr.mxu0 0.0
  %2390 = vmatpush2.msra.mxu0 0.0
  %2391 = vmatprep.subr.mxu0 0.0
  %2392 = vmatpush2.msra.mxu0 0.0
  %2393 = vmatprep.subr.mxu0 0.0
  %2394 = vmatpush2.msra.mxu0 0.0
  %2395 = vmatprep.subr.mxu0 0.0
  %2396 = vmatpush2.msra.mxu0 0.0
  %2397 = vmatprep.subr.mxu0 0.0
  %2398 = vmatpush2.msra.mxu0 0.0
  %2399 = vmatprep.subr.mxu0 0.0
  %2400 = vmatpush2.msra.mxu0 0.0
  %2401 = vmatprep.subr.mxu0 0.0
  %2402 = vmatpush2.msra.mxu0 0.0
  %2403 = vmatprep.subr.mxu0 0.0
  %2404 = vmatpush2.msra.mxu0 0.0
  %2405 = vmatprep.subr.mxu0 0.0
  %2406 = vmatpush2.msra.mxu0 0.0
  %2407 = vmatprep.subr.mxu0 0.0
  %2408 = vmatpush2.msra.mxu0 0.0
  %2409 = vmatprep.subr.mxu0 0.0
  %2410 = vmatpush2.msra.mxu0 0.0
  %2411 = vmatprep.subr.mxu0 0.0
  %2412 = vmatpush2.msra.mxu0 0.0
  %2413 = vmatprep.mubr.f32.mxu0 0.0
  %2414 = vmatmul.mubr.f32.gmra.mxu0 %v2273
  %v2415 = vpop.f32.mrf.mxu0
  %v2416 = vadd.f32 0.0, %v2415
  %v2417 = vpop.f32.mrf.mxu0
  %v2418 = vadd.f32 0.0, %v2417
  %2419 = vdwg.mxu0
  %v2420 = vadd.f32 %v2274, %v2345
  %v2421 = vadd.f32 %v2275, %v2347
  %v2422 = vadd.f32 %v2276, %v2416
  %v2423 = vadd.f32 %v2277, %v2418
  %v2424 = vxor.u32 %v2420, 2147483648
  %v2425 = vmul.f32 %v2424, 1.442695
  %v2426 = vpow.pop %v2425
  %v2427 = vadd.f32 %v2426, 1.0
  %v2428 = vrcp.pop %v2427
  %v2429 = vmul.f32 1.0, %v2428
  %v2430 = vxor.u32 %v2421, 2147483648
  %v2431 = vmul.f32 %v2430, 1.442695
  %v2432 = vpow.pop %v2431
  %v2433 = vadd.f32 %v2432, 1.0
  %v2434 = vrcp.pop %v2433
  %v2435 = vmul.f32 1.0, %v2434
  %v2436 = vtanh.pop %v2422
  %v2437 = vxor.u32 %v2423, 2147483648
  %v2438 = vmul.f32 %v2437, 1.442695
  %v2439 = vpow.pop %v2438
  %v2440 = vadd.f32 %v2439, 1.0
  %v2441 = vrcp.pop %v2440
  %v2442 = vmul.f32 1.0, %v2441
  %v2443 = vmul.f32 %v2435, %v2271
  %v2444 = vmul.f32 %v2429, %v2436
  %v2445 = vadd.f32 %v2443, %v2444
  %v2446 = vtanh.pop %v2445
  %v2447 = vmul.f32 %v2442, %v2446
  %v2448 = vld [vmem:[#allocation2 + $0x120] sm:$0xff]
  %v2449 = vld [vmem:[#allocation2 + $0x128] sm:$0xff]
  %v2450 = vld [vmem:[#allocation2 + $0x130] sm:$0xff]
  %v2451 = vld [vmem:[#allocation2 + $0x138] sm:$0xff]
  %2452 = vmatprep.subr.mxu0 %v883
  %2453 = vmatpush1.msra.mxu0 %v882
  %2454 = vmatprep.subr.mxu0 %v879
  %2455 = vmatpush1.msra.mxu0 %v878
  %2456 = vmatprep.subr.mxu0 %v875
  %2457 = vmatpush1.msra.mxu0 %v874
  %2458 = vmatprep.subr.mxu0 %v871
  %2459 = vmatpush1.msra.mxu0 %v870
  %2460 = vmatprep.subr.mxu0 %v867
  %2461 = vmatpush1.msra.mxu0 %v866
  %2462 = vmatprep.subr.mxu0 %v863
  %2463 = vmatpush1.msra.mxu0 %v862
  %2464 = vmatprep.subr.mxu0 %v859
  %2465 = vmatpush1.msra.mxu0 %v858
  %2466 = vmatprep.subr.mxu0 %v855
  %2467 = vmatpush1.msra.mxu0 %v854
  %2468 = vmatprep.subr.mxu0 %v851
  %2469 = vmatpush1.msra.mxu0 %v850
  %2470 = vmatprep.subr.mxu0 %v847
  %2471 = vmatpush1.msra.mxu0 %v846
  %2472 = vmatprep.subr.mxu0 %v843
  %2473 = vmatpush1.msra.mxu0 %v842
  %2474 = vmatprep.subr.mxu0 %v839
  %2475 = vmatpush1.msra.mxu0 %v838
  %2476 = vmatprep.subr.mxu0 %v835
  %2477 = vmatpush1.msra.mxu0 %v834
  %2478 = vmatprep.subr.mxu0 %v831
  %2479 = vmatpush1.msra.mxu0 %v830
  %2480 = vmatprep.subr.mxu0 %v827
  %2481 = vmatpush1.msra.mxu0 %v826
  %2482 = vmatprep.subr.mxu0 %v823
  %2483 = vmatpush1.msra.mxu0 %v822
  %2484 = vmatprep.subr.mxu0 0.0
  %2485 = vmatpush2.msra.mxu0 0.0
  %2486 = vmatprep.subr.mxu0 0.0
  %2487 = vmatpush2.msra.mxu0 0.0
  %2488 = vmatprep.subr.mxu0 0.0
  %2489 = vmatpush2.msra.mxu0 0.0
  %2490 = vmatprep.subr.mxu0 0.0
  %2491 = vmatpush2.msra.mxu0 0.0
  %2492 = vmatprep.subr.mxu0 0.0
  %2493 = vmatpush2.msra.mxu0 0.0
  %2494 = vmatprep.subr.mxu0 0.0
  %2495 = vmatpush2.msra.mxu0 0.0
  %2496 = vmatprep.subr.mxu0 0.0
  %2497 = vmatpush2.msra.mxu0 0.0
  %2498 = vmatprep.subr.mxu0 0.0
  %2499 = vmatpush2.msra.mxu0 0.0
  %2500 = vmatprep.subr.mxu0 0.0
  %2501 = vmatpush2.msra.mxu0 0.0
  %2502 = vmatprep.subr.mxu0 0.0
  %2503 = vmatpush2.msra.mxu0 0.0
  %2504 = vmatprep.subr.mxu0 0.0
  %2505 = vmatpush2.msra.mxu0 0.0
  %2506 = vmatprep.subr.mxu0 0.0
  %2507 = vmatpush2.msra.mxu0 0.0
  %2508 = vmatprep.subr.mxu0 0.0
  %2509 = vmatpush2.msra.mxu0 0.0
  %2510 = vmatprep.subr.mxu0 0.0
  %2511 = vmatpush2.msra.mxu0 0.0
  %2512 = vmatprep.subr.mxu0 0.0
  %2513 = vmatpush2.msra.mxu0 0.0
  %2514 = vmatprep.subr.mxu0 0.0
  %2515 = vmatpush2.msra.mxu0 0.0
  %2516 = vmatprep.mubr.f32.mxu0 0.0
  %2517 = vmatmul.mubr.f32.gmra.mxu0 %v2447
  %v2518 = vpop.f32.mrf.mxu0
  %v2519 = vadd.f32 0.0, %v2518
  %v2520 = vpop.f32.mrf.mxu0
  %v2521 = vadd.f32 0.0, %v2520
  %2522 = vdwg.mxu0
  %2523 = vmatprep.subr.mxu0 %v885
  %2524 = vmatpush1.msra.mxu0 %v884
  %2525 = vmatprep.subr.mxu0 %v881
  %2526 = vmatpush1.msra.mxu0 %v880
  %2527 = vmatprep.subr.mxu0 %v877
  %2528 = vmatpush1.msra.mxu0 %v876
  %2529 = vmatprep.subr.mxu0 %v873
  %2530 = vmatpush1.msra.mxu0 %v872
  %2531 = vmatprep.subr.mxu0 %v869
  %2532 = vmatpush1.msra.mxu0 %v868
  %2533 = vmatprep.subr.mxu0 %v865
  %2534 = vmatpush1.msra.mxu0 %v864
  %2535 = vmatprep.subr.mxu0 %v861
  %2536 = vmatpush1.msra.mxu0 %v860
  %2537 = vmatprep.subr.mxu0 %v857
  %2538 = vmatpush1.msra.mxu0 %v856
  %2539 = vmatprep.subr.mxu0 %v853
  %2540 = vmatpush1.msra.mxu0 %v852
  %2541 = vmatprep.subr.mxu0 %v849
  %2542 = vmatpush1.msra.mxu0 %v848
  %2543 = vmatprep.subr.mxu0 %v845
  %2544 = vmatpush1.msra.mxu0 %v844
  %2545 = vmatprep.subr.mxu0 %v841
  %2546 = vmatpush1.msra.mxu0 %v840
  %2547 = vmatprep.subr.mxu0 %v837
  %2548 = vmatpush1.msra.mxu0 %v836
  %2549 = vmatprep.subr.mxu0 %v833
  %2550 = vmatpush1.msra.mxu0 %v832
  %2551 = vmatprep.subr.mxu0 %v829
  %2552 = vmatpush1.msra.mxu0 %v828
  %2553 = vmatprep.subr.mxu0 %v825
  %2554 = vmatpush1.msra.mxu0 %v824
  %2555 = vmatprep.subr.mxu0 0.0
  %2556 = vmatpush2.msra.mxu0 0.0
  %2557 = vmatprep.subr.mxu0 0.0
  %2558 = vmatpush2.msra.mxu0 0.0
  %2559 = vmatprep.subr.mxu0 0.0
  %2560 = vmatpush2.msra.mxu0 0.0
  %2561 = vmatprep.subr.mxu0 0.0
  %2562 = vmatpush2.msra.mxu0 0.0
  %2563 = vmatprep.subr.mxu0 0.0
  %2564 = vmatpush2.msra.mxu0 0.0
  %2565 = vmatprep.subr.mxu0 0.0
  %2566 = vmatpush2.msra.mxu0 0.0
  %2567 = vmatprep.subr.mxu0 0.0
  %2568 = vmatpush2.msra.mxu0 0.0
  %2569 = vmatprep.subr.mxu0 0.0
  %2570 = vmatpush2.msra.mxu0 0.0
  %2571 = vmatprep.subr.mxu0 0.0
  %2572 = vmatpush2.msra.mxu0 0.0
  %2573 = vmatprep.subr.mxu0 0.0
  %2574 = vmatpush2.msra.mxu0 0.0
  %2575 = vmatprep.subr.mxu0 0.0
  %2576 = vmatpush2.msra.mxu0 0.0
  %2577 = vmatprep.subr.mxu0 0.0
  %2578 = vmatpush2.msra.mxu0 0.0
  %2579 = vmatprep.subr.mxu0 0.0
  %2580 = vmatpush2.msra.mxu0 0.0
  %2581 = vmatprep.subr.mxu0 0.0
  %2582 = vmatpush2.msra.mxu0 0.0
  %2583 = vmatprep.subr.mxu0 0.0
  %2584 = vmatpush2.msra.mxu0 0.0
  %2585 = vmatprep.subr.mxu0 0.0
  %2586 = vmatpush2.msra.mxu0 0.0
  %2587 = vmatprep.mubr.f32.mxu0 0.0
  %2588 = vmatmul.mubr.f32.gmra.mxu0 %v2447
  %v2589 = vpop.f32.mrf.mxu0
  %v2590 = vadd.f32 0.0, %v2589
  %v2591 = vpop.f32.mrf.mxu0
  %v2592 = vadd.f32 0.0, %v2591
  %2593 = vdwg.mxu0
  %v2594 = vadd.f32 %v2448, %v2519
  %v2595 = vadd.f32 %v2449, %v2521
  %v2596 = vadd.f32 %v2450, %v2590
  %v2597 = vadd.f32 %v2451, %v2592
  %v2598 = vxor.u32 %v2594, 2147483648
  %v2599 = vmul.f32 %v2598, 1.442695
  %v2600 = vpow.pop %v2599
  %v2601 = vadd.f32 %v2600, 1.0
  %v2602 = vrcp.pop %v2601
  %v2603 = vmul.f32 1.0, %v2602
  %v2604 = vxor.u32 %v2595, 2147483648
  %v2605 = vmul.f32 %v2604, 1.442695
  %v2606 = vpow.pop %v2605
  %v2607 = vadd.f32 %v2606, 1.0
  %v2608 = vrcp.pop %v2607
  %v2609 = vmul.f32 1.0, %v2608
  %v2610 = vtanh.pop %v2596
  %v2611 = vxor.u32 %v2597, 2147483648
  %v2612 = vmul.f32 %v2611, 1.442695
  %v2613 = vpow.pop %v2612
  %v2614 = vadd.f32 %v2613, 1.0
  %v2615 = vrcp.pop %v2614
  %v2616 = vmul.f32 1.0, %v2615
  %v2617 = vmul.f32 %v2609, %v2445
  %v2618 = vmul.f32 %v2603, %v2610
  %v2619 = vadd.f32 %v2617, %v2618
  %v2620 = vtanh.pop %v2619
  %v2621 = vmul.f32 %v2616, %v2620
  %v2622 = vld [vmem:[#allocation2 + $0x140] sm:$0xff]
  %v2623 = vld [vmem:[#allocation2 + $0x148] sm:$0xff]
  %v2624 = vld [vmem:[#allocation2 + $0x150] sm:$0xff]
  %v2625 = vld [vmem:[#allocation2 + $0x158] sm:$0xff]
  %2626 = vmatprep.subr.mxu0 %v883
  %2627 = vmatpush1.msra.mxu0 %v882
  %2628 = vmatprep.subr.mxu0 %v879
  %2629 = vmatpush1.msra.mxu0 %v878
  %2630 = vmatprep.subr.mxu0 %v875
  %2631 = vmatpush1.msra.mxu0 %v874
  %2632 = vmatprep.subr.mxu0 %v871
  %2633 = vmatpush1.msra.mxu0 %v870
  %2634 = vmatprep.subr.mxu0 %v867
  %2635 = vmatpush1.msra.mxu0 %v866
  %2636 = vmatprep.subr.mxu0 %v863
  %2637 = vmatpush1.msra.mxu0 %v862
  %2638 = vmatprep.subr.mxu0 %v859
  %2639 = vmatpush1.msra.mxu0 %v858
  %2640 = vmatprep.subr.mxu0 %v855
  %2641 = vmatpush1.msra.mxu0 %v854
  %2642 = vmatprep.subr.mxu0 %v851
  %2643 = vmatpush1.msra.mxu0 %v850
  %2644 = vmatprep.subr.mxu0 %v847
  %2645 = vmatpush1.msra.mxu0 %v846
  %2646 = vmatprep.subr.mxu0 %v843
  %2647 = vmatpush1.msra.mxu0 %v842
  %2648 = vmatprep.subr.mxu0 %v839
  %2649 = vmatpush1.msra.mxu0 %v838
  %2650 = vmatprep.subr.mxu0 %v835
  %2651 = vmatpush1.msra.mxu0 %v834
  %2652 = vmatprep.subr.mxu0 %v831
  %2653 = vmatpush1.msra.mxu0 %v830
  %2654 = vmatprep.subr.mxu0 %v827
  %2655 = vmatpush1.msra.mxu0 %v826
  %2656 = vmatprep.subr.mxu0 %v823
  %2657 = vmatpush1.msra.mxu0 %v822
  %2658 = vmatprep.subr.mxu0 0.0
  %2659 = vmatpush2.msra.mxu0 0.0
  %2660 = vmatprep.subr.mxu0 0.0
  %2661 = vmatpush2.msra.mxu0 0.0
  %2662 = vmatprep.subr.mxu0 0.0
  %2663 = vmatpush2.msra.mxu0 0.0
  %2664 = vmatprep.subr.mxu0 0.0
  %2665 = vmatpush2.msra.mxu0 0.0
  %2666 = vmatprep.subr.mxu0 0.0
  %2667 = vmatpush2.msra.mxu0 0.0
  %2668 = vmatprep.subr.mxu0 0.0
  %2669 = vmatpush2.msra.mxu0 0.0
  %2670 = vmatprep.subr.mxu0 0.0
  %2671 = vmatpush2.msra.mxu0 0.0
  %2672 = vmatprep.subr.mxu0 0.0
  %2673 = vmatpush2.msra.mxu0 0.0
  %2674 = vmatprep.subr.mxu0 0.0
  %2675 = vmatpush2.msra.mxu0 0.0
  %2676 = vmatprep.subr.mxu0 0.0
  %2677 = vmatpush2.msra.mxu0 0.0
  %2678 = vmatprep.subr.mxu0 0.0
  %2679 = vmatpush2.msra.mxu0 0.0
  %2680 = vmatprep.subr.mxu0 0.0
  %2681 = vmatpush2.msra.mxu0 0.0
  %2682 = vmatprep.subr.mxu0 0.0
  %2683 = vmatpush2.msra.mxu0 0.0
  %2684 = vmatprep.subr.mxu0 0.0
  %2685 = vmatpush2.msra.mxu0 0.0
  %2686 = vmatprep.subr.mxu0 0.0
  %2687 = vmatpush2.msra.mxu0 0.0
  %2688 = vmatprep.subr.mxu0 0.0
  %2689 = vmatpush2.msra.mxu0 0.0
  %2690 = vmatprep.mubr.f32.mxu0 0.0
  %2691 = vmatmul.mubr.f32.gmra.mxu0 %v2621
  %v2692 = vpop.f32.mrf.mxu0
  %v2693 = vadd.f32 0.0, %v2692
  %v2694 = vpop.f32.mrf.mxu0
  %v2695 = vadd.f32 0.0, %v2694
  %2696 = vdwg.mxu0
  %2697 = vmatprep.subr.mxu0 %v885
  %2698 = vmatpush1.msra.mxu0 %v884
  %2699 = vmatprep.subr.mxu0 %v881
  %2700 = vmatpush1.msra.mxu0 %v880
  %2701 = vmatprep.subr.mxu0 %v877
  %2702 = vmatpush1.msra.mxu0 %v876
  %2703 = vmatprep.subr.mxu0 %v873
  %2704 = vmatpush1.msra.mxu0 %v872
  %2705 = vmatprep.subr.mxu0 %v869
  %2706 = vmatpush1.msra.mxu0 %v868
  %2707 = vmatprep.subr.mxu0 %v865
  %2708 = vmatpush1.msra.mxu0 %v864
  %2709 = vmatprep.subr.mxu0 %v861
  %2710 = vmatpush1.msra.mxu0 %v860
  %2711 = vmatprep.subr.mxu0 %v857
  %2712 = vmatpush1.msra.mxu0 %v856
  %2713 = vmatprep.subr.mxu0 %v853
  %2714 = vmatpush1.msra.mxu0 %v852
  %2715 = vmatprep.subr.mxu0 %v849
  %2716 = vmatpush1.msra.mxu0 %v848
  %2717 = vmatprep.subr.mxu0 %v845
  %2718 = vmatpush1.msra.mxu0 %v844
  %2719 = vmatprep.subr.mxu0 %v841
  %2720 = vmatpush1.msra.mxu0 %v840
  %2721 = vmatprep.subr.mxu0 %v837
  %2722 = vmatpush1.msra.mxu0 %v836
  %2723 = vmatprep.subr.mxu0 %v833
  %2724 = vmatpush1.msra.mxu0 %v832
  %2725 = vmatprep.subr.mxu0 %v829
  %2726 = vmatpush1.msra.mxu0 %v828
  %2727 = vmatprep.subr.mxu0 %v825
  %2728 = vmatpush1.msra.mxu0 %v824
  %2729 = vmatprep.subr.mxu0 0.0
  %2730 = vmatpush2.msra.mxu0 0.0
  %2731 = vmatprep.subr.mxu0 0.0
  %2732 = vmatpush2.msra.mxu0 0.0
  %2733 = vmatprep.subr.mxu0 0.0
  %2734 = vmatpush2.msra.mxu0 0.0
  %2735 = vmatprep.subr.mxu0 0.0
  %2736 = vmatpush2.msra.mxu0 0.0
  %2737 = vmatprep.subr.mxu0 0.0
  %2738 = vmatpush2.msra.mxu0 0.0
  %2739 = vmatprep.subr.mxu0 0.0
  %2740 = vmatpush2.msra.mxu0 0.0
  %2741 = vmatprep.subr.mxu0 0.0
  %2742 = vmatpush2.msra.mxu0 0.0
  %2743 = vmatprep.subr.mxu0 0.0
  %2744 = vmatpush2.msra.mxu0 0.0
  %2745 = vmatprep.subr.mxu0 0.0
  %2746 = vmatpush2.msra.mxu0 0.0
  %2747 = vmatprep.subr.mxu0 0.0
  %2748 = vmatpush2.msra.mxu0 0.0
  %2749 = vmatprep.subr.mxu0 0.0
  %2750 = vmatpush2.msra.mxu0 0.0
  %2751 = vmatprep.subr.mxu0 0.0
  %2752 = vmatpush2.msra.mxu0 0.0
  %2753 = vmatprep.subr.mxu0 0.0
  %2754 = vmatpush2.msra.mxu0 0.0
  %2755 = vmatprep.subr.mxu0 0.0
  %2756 = vmatpush2.msra.mxu0 0.0
  %2757 = vmatprep.subr.mxu0 0.0
  %2758 = vmatpush2.msra.mxu0 0.0
  %2759 = vmatprep.subr.mxu0 0.0
  %2760 = vmatpush2.msra.mxu0 0.0
  %2761 = vmatprep.mubr.f32.mxu0 0.0
  %2762 = vmatmul.mubr.f32.gmra.mxu0 %v2621
  %v2763 = vpop.f32.mrf.mxu0
  %v2764 = vadd.f32 0.0, %v2763
  %v2765 = vpop.f32.mrf.mxu0
  %v2766 = vadd.f32 0.0, %v2765
  %2767 = vdwg.mxu0
  %v2768 = vadd.f32 %v2622, %v2693
  %v2769 = vadd.f32 %v2623, %v2695
  %v2770 = vadd.f32 %v2624, %v2764
  %v2771 = vadd.f32 %v2625, %v2766
  %v2772 = vxor.u32 %v2768, 2147483648
  %v2773 = vmul.f32 %v2772, 1.442695
  %v2774 = vpow.pop %v2773
  %v2775 = vadd.f32 %v2774, 1.0
  %v2776 = vrcp.pop %v2775
  %v2777 = vmul.f32 1.0, %v2776
  %v2778 = vxor.u32 %v2769, 2147483648
  %v2779 = vmul.f32 %v2778, 1.442695
  %v2780 = vpow.pop %v2779
  %v2781 = vadd.f32 %v2780, 1.0
  %v2782 = vrcp.pop %v2781
  %v2783 = vmul.f32 1.0, %v2782
  %v2784 = vtanh.pop %v2770
  %v2785 = vxor.u32 %v2771, 2147483648
  %v2786 = vmul.f32 %v2785, 1.442695
  %v2787 = vpow.pop %v2786
  %v2788 = vadd.f32 %v2787, 1.0
  %v2789 = vrcp.pop %v2788
  %v2790 = vmul.f32 1.0, %v2789
  %v2791 = vmul.f32 %v2783, %v2619
  %v2792 = vmul.f32 %v2777, %v2784
  %v2793 = vadd.f32 %v2791, %v2792
  %v2794 = vtanh.pop %v2793
  %v2795 = vmul.f32 %v2790, %v2794
  %v2796 = vld [vmem:[#allocation2 + $0x160] sm:$0xff]
  %v2797 = vld [vmem:[#allocation2 + $0x168] sm:$0xff]
  %v2798 = vld [vmem:[#allocation2 + $0x170] sm:$0xff]
  %v2799 = vld [vmem:[#allocation2 + $0x178] sm:$0xff]
  %2800 = vmatprep.subr.mxu0 %v883
  %2801 = vmatpush1.msra.mxu0 %v882
  %2802 = vmatprep.subr.mxu0 %v879
  %2803 = vmatpush1.msra.mxu0 %v878
  %2804 = vmatprep.subr.mxu0 %v875
  %2805 = vmatpush1.msra.mxu0 %v874
  %2806 = vmatprep.subr.mxu0 %v871
  %2807 = vmatpush1.msra.mxu0 %v870
  %2808 = vmatprep.subr.mxu0 %v867
  %2809 = vmatpush1.msra.mxu0 %v866
  %2810 = vmatprep.subr.mxu0 %v863
  %2811 = vmatpush1.msra.mxu0 %v862
  %2812 = vmatprep.subr.mxu0 %v859
  %2813 = vmatpush1.msra.mxu0 %v858
  %2814 = vmatprep.subr.mxu0 %v855
  %2815 = vmatpush1.msra.mxu0 %v854
  %2816 = vmatprep.subr.mxu0 %v851
  %2817 = vmatpush1.msra.mxu0 %v850
  %2818 = vmatprep.subr.mxu0 %v847
  %2819 = vmatpush1.msra.mxu0 %v846
  %2820 = vmatprep.subr.mxu0 %v843
  %2821 = vmatpush1.msra.mxu0 %v842
  %2822 = vmatprep.subr.mxu0 %v839
  %2823 = vmatpush1.msra.mxu0 %v838
  %2824 = vmatprep.subr.mxu0 %v835
  %2825 = vmatpush1.msra.mxu0 %v834
  %2826 = vmatprep.subr.mxu0 %v831
  %2827 = vmatpush1.msra.mxu0 %v830
  %2828 = vmatprep.subr.mxu0 %v827
  %2829 = vmatpush1.msra.mxu0 %v826
  %2830 = vmatprep.subr.mxu0 %v823
  %2831 = vmatpush1.msra.mxu0 %v822
  %2832 = vmatprep.subr.mxu0 0.0
  %2833 = vmatpush2.msra.mxu0 0.0
  %2834 = vmatprep.subr.mxu0 0.0
  %2835 = vmatpush2.msra.mxu0 0.0
  %2836 = vmatprep.subr.mxu0 0.0
  %2837 = vmatpush2.msra.mxu0 0.0
  %2838 = vmatprep.subr.mxu0 0.0
  %2839 = vmatpush2.msra.mxu0 0.0
  %2840 = vmatprep.subr.mxu0 0.0
  %2841 = vmatpush2.msra.mxu0 0.0
  %2842 = vmatprep.subr.mxu0 0.0
  %2843 = vmatpush2.msra.mxu0 0.0
  %2844 = vmatprep.subr.mxu0 0.0
  %2845 = vmatpush2.msra.mxu0 0.0
  %2846 = vmatprep.subr.mxu0 0.0
  %2847 = vmatpush2.msra.mxu0 0.0
  %2848 = vmatprep.subr.mxu0 0.0
  %2849 = vmatpush2.msra.mxu0 0.0
  %2850 = vmatprep.subr.mxu0 0.0
  %2851 = vmatpush2.msra.mxu0 0.0
  %2852 = vmatprep.subr.mxu0 0.0
  %2853 = vmatpush2.msra.mxu0 0.0
  %2854 = vmatprep.subr.mxu0 0.0
  %2855 = vmatpush2.msra.mxu0 0.0
  %2856 = vmatprep.subr.mxu0 0.0
  %2857 = vmatpush2.msra.mxu0 0.0
  %2858 = vmatprep.subr.mxu0 0.0
  %2859 = vmatpush2.msra.mxu0 0.0
  %2860 = vmatprep.subr.mxu0 0.0
  %2861 = vmatpush2.msra.mxu0 0.0
  %2862 = vmatprep.subr.mxu0 0.0
  %2863 = vmatpush2.msra.mxu0 0.0
  %2864 = vmatprep.mubr.f32.mxu0 0.0
  %2865 = vmatmul.mubr.f32.gmra.mxu0 %v2795
  %v2866 = vpop.f32.mrf.mxu0
  %v2867 = vadd.f32 0.0, %v2866
  %v2868 = vpop.f32.mrf.mxu0
  %v2869 = vadd.f32 0.0, %v2868
  %2870 = vdwg.mxu0
  %2871 = vmatprep.subr.mxu0 %v885
  %2872 = vmatpush1.msra.mxu0 %v884
  %2873 = vmatprep.subr.mxu0 %v881
  %2874 = vmatpush1.msra.mxu0 %v880
  %2875 = vmatprep.subr.mxu0 %v877
  %2876 = vmatpush1.msra.mxu0 %v876
  %2877 = vmatprep.subr.mxu0 %v873
  %2878 = vmatpush1.msra.mxu0 %v872
  %2879 = vmatprep.subr.mxu0 %v869
  %2880 = vmatpush1.msra.mxu0 %v868
  %2881 = vmatprep.subr.mxu0 %v865
  %2882 = vmatpush1.msra.mxu0 %v864
  %2883 = vmatprep.subr.mxu0 %v861
  %2884 = vmatpush1.msra.mxu0 %v860
  %2885 = vmatprep.subr.mxu0 %v857
  %2886 = vmatpush1.msra.mxu0 %v856
  %2887 = vmatprep.subr.mxu0 %v853
  %2888 = vmatpush1.msra.mxu0 %v852
  %2889 = vmatprep.subr.mxu0 %v849
  %2890 = vmatpush1.msra.mxu0 %v848
  %2891 = vmatprep.subr.mxu0 %v845
  %2892 = vmatpush1.msra.mxu0 %v844
  %2893 = vmatprep.subr.mxu0 %v841
  %2894 = vmatpush1.msra.mxu0 %v840
  %2895 = vmatprep.subr.mxu0 %v837
  %2896 = vmatpush1.msra.mxu0 %v836
  %2897 = vmatprep.subr.mxu0 %v833
  %2898 = vmatpush1.msra.mxu0 %v832
  %2899 = vmatprep.subr.mxu0 %v829
  %2900 = vmatpush1.msra.mxu0 %v828
  %2901 = vmatprep.subr.mxu0 %v825
  %2902 = vmatpush1.msra.mxu0 %v824
  %2903 = vmatprep.subr.mxu0 0.0
  %2904 = vmatpush2.msra.mxu0 0.0
  %2905 = vmatprep.subr.mxu0 0.0
  %2906 = vmatpush2.msra.mxu0 0.0
  %2907 = vmatprep.subr.mxu0 0.0
  %2908 = vmatpush2.msra.mxu0 0.0
  %2909 = vmatprep.subr.mxu0 0.0
  %2910 = vmatpush2.msra.mxu0 0.0
  %2911 = vmatprep.subr.mxu0 0.0
  %2912 = vmatpush2.msra.mxu0 0.0
  %2913 = vmatprep.subr.mxu0 0.0
  %2914 = vmatpush2.msra.mxu0 0.0
  %2915 = vmatprep.subr.mxu0 0.0
  %2916 = vmatpush2.msra.mxu0 0.0
  %2917 = vmatprep.subr.mxu0 0.0
  %2918 = vmatpush2.msra.mxu0 0.0
  %2919 = vmatprep.subr.mxu0 0.0
  %2920 = vmatpush2.msra.mxu0 0.0
  %2921 = vmatprep.subr.mxu0 0.0
  %2922 = vmatpush2.msra.mxu0 0.0
  %2923 = vmatprep.subr.mxu0 0.0
  %2924 = vmatpush2.msra.mxu0 0.0
  %2925 = vmatprep.subr.mxu0 0.0
  %2926 = vmatpush2.msra.mxu0 0.0
  %2927 = vmatprep.subr.mxu0 0.0
  %2928 = vmatpush2.msra.mxu0 0.0
  %2929 = vmatprep.subr.mxu0 0.0
  %2930 = vmatpush2.msra.mxu0 0.0
  %2931 = vmatprep.subr.mxu0 0.0
  %2932 = vmatpush2.msra.mxu0 0.0
  %2933 = vmatprep.subr.mxu0 0.0
  %2934 = vmatpush2.msra.mxu0 0.0
  %2935 = vmatprep.mubr.f32.mxu0 0.0
  %2936 = vmatmul.mubr.f32.gmra.mxu0 %v2795
  %v2937 = vpop.f32.mrf.mxu0
  %v2938 = vadd.f32 0.0, %v2937
  %v2939 = vpop.f32.mrf.mxu0
  %v2940 = vadd.f32 0.0, %v2939
  %2941 = vdwg.mxu0
  %v2942 = vadd.f32 %v2796, %v2867
  %v2943 = vadd.f32 %v2797, %v2869
  %v2944 = vadd.f32 %v2798, %v2938
  %v2945 = vadd.f32 %v2799, %v2940
  %v2946 = vxor.u32 %v2942, 2147483648
  %v2947 = vmul.f32 %v2946, 1.442695
  %v2948 = vpow.pop %v2947
  %v2949 = vadd.f32 %v2948, 1.0
  %v2950 = vrcp.pop %v2949
  %v2951 = vmul.f32 1.0, %v2950
  %v2952 = vxor.u32 %v2943, 2147483648
  %v2953 = vmul.f32 %v2952, 1.442695
  %v2954 = vpow.pop %v2953
  %v2955 = vadd.f32 %v2954, 1.0
  %v2956 = vrcp.pop %v2955
  %v2957 = vmul.f32 1.0, %v2956
  %v2958 = vtanh.pop %v2944
  %v2959 = vxor.u32 %v2945, 2147483648
  %v2960 = vmul.f32 %v2959, 1.442695
  %v2961 = vpow.pop %v2960
  %v2962 = vadd.f32 %v2961, 1.0
  %v2963 = vrcp.pop %v2962
  %v2964 = vmul.f32 1.0, %v2963
  %v2965 = vmul.f32 %v2957, %v2793
  %v2966 = vmul.f32 %v2951, %v2958
  %v2967 = vadd.f32 %v2965, %v2966
  %v2968 = vtanh.pop %v2967
  %v2969 = vmul.f32 %v2964, %v2968
  %v2970 = vld [vmem:[#allocation2 + $0x180] sm:$0xff]
  %v2971 = vld [vmem:[#allocation2 + $0x188] sm:$0xff]
  %v2972 = vld [vmem:[#allocation2 + $0x190] sm:$0xff]
  %v2973 = vld [vmem:[#allocation2 + $0x198] sm:$0xff]
  %2974 = vmatprep.subr.mxu0 %v883
  %2975 = vmatpush1.msra.mxu0 %v882
  %2976 = vmatprep.subr.mxu0 %v879
  %2977 = vmatpush1.msra.mxu0 %v878
  %2978 = vmatprep.subr.mxu0 %v875
  %2979 = vmatpush1.msra.mxu0 %v874
  %2980 = vmatprep.subr.mxu0 %v871
  %2981 = vmatpush1.msra.mxu0 %v870
  %2982 = vmatprep.subr.mxu0 %v867
  %2983 = vmatpush1.msra.mxu0 %v866
  %2984 = vmatprep.subr.mxu0 %v863
  %2985 = vmatpush1.msra.mxu0 %v862
  %2986 = vmatprep.subr.mxu0 %v859
  %2987 = vmatpush1.msra.mxu0 %v858
  %2988 = vmatprep.subr.mxu0 %v855
  %2989 = vmatpush1.msra.mxu0 %v854
  %2990 = vmatprep.subr.mxu0 %v851
  %2991 = vmatpush1.msra.mxu0 %v850
  %2992 = vmatprep.subr.mxu0 %v847
  %2993 = vmatpush1.msra.mxu0 %v846
  %2994 = vmatprep.subr.mxu0 %v843
  %2995 = vmatpush1.msra.mxu0 %v842
  %2996 = vmatprep.subr.mxu0 %v839
  %2997 = vmatpush1.msra.mxu0 %v838
  %2998 = vmatprep.subr.mxu0 %v835
  %2999 = vmatpush1.msra.mxu0 %v834
  %3000 = vmatprep.subr.mxu0 %v831
  %3001 = vmatpush1.msra.mxu0 %v830
  %3002 = vmatprep.subr.mxu0 %v827
  %3003 = vmatpush1.msra.mxu0 %v826
  %3004 = vmatprep.subr.mxu0 %v823
  %3005 = vmatpush1.msra.mxu0 %v822
  %3006 = vmatprep.subr.mxu0 0.0
  %3007 = vmatpush2.msra.mxu0 0.0
  %3008 = vmatprep.subr.mxu0 0.0
  %3009 = vmatpush2.msra.mxu0 0.0
  %3010 = vmatprep.subr.mxu0 0.0
  %3011 = vmatpush2.msra.mxu0 0.0
  %3012 = vmatprep.subr.mxu0 0.0
  %3013 = vmatpush2.msra.mxu0 0.0
  %3014 = vmatprep.subr.mxu0 0.0
  %3015 = vmatpush2.msra.mxu0 0.0
  %3016 = vmatprep.subr.mxu0 0.0
  %3017 = vmatpush2.msra.mxu0 0.0
  %3018 = vmatprep.subr.mxu0 0.0
  %3019 = vmatpush2.msra.mxu0 0.0
  %3020 = vmatprep.subr.mxu0 0.0
  %3021 = vmatpush2.msra.mxu0 0.0
  %3022 = vmatprep.subr.mxu0 0.0
  %3023 = vmatpush2.msra.mxu0 0.0
  %3024 = vmatprep.subr.mxu0 0.0
  %3025 = vmatpush2.msra.mxu0 0.0
  %3026 = vmatprep.subr.mxu0 0.0
  %3027 = vmatpush2.msra.mxu0 0.0
  %3028 = vmatprep.subr.mxu0 0.0
  %3029 = vmatpush2.msra.mxu0 0.0
  %3030 = vmatprep.subr.mxu0 0.0
  %3031 = vmatpush2.msra.mxu0 0.0
  %3032 = vmatprep.subr.mxu0 0.0
  %3033 = vmatpush2.msra.mxu0 0.0
  %3034 = vmatprep.subr.mxu0 0.0
  %3035 = vmatpush2.msra.mxu0 0.0
  %3036 = vmatprep.subr.mxu0 0.0
  %3037 = vmatpush2.msra.mxu0 0.0
  %3038 = vmatprep.mubr.f32.mxu0 0.0
  %3039 = vmatmul.mubr.f32.gmra.mxu0 %v2969
  %v3040 = vpop.f32.mrf.mxu0
  %v3041 = vadd.f32 0.0, %v3040
  %v3042 = vpop.f32.mrf.mxu0
  %v3043 = vadd.f32 0.0, %v3042
  %3044 = vdwg.mxu0
  %3045 = vmatprep.subr.mxu0 %v885
  %3046 = vmatpush1.msra.mxu0 %v884
  %3047 = vmatprep.subr.mxu0 %v881
  %3048 = vmatpush1.msra.mxu0 %v880
  %3049 = vmatprep.subr.mxu0 %v877
  %3050 = vmatpush1.msra.mxu0 %v876
  %3051 = vmatprep.subr.mxu0 %v873
  %3052 = vmatpush1.msra.mxu0 %v872
  %3053 = vmatprep.subr.mxu0 %v869
  %3054 = vmatpush1.msra.mxu0 %v868
  %3055 = vmatprep.subr.mxu0 %v865
  %3056 = vmatpush1.msra.mxu0 %v864
  %3057 = vmatprep.subr.mxu0 %v861
  %3058 = vmatpush1.msra.mxu0 %v860
  %3059 = vmatprep.subr.mxu0 %v857
  %3060 = vmatpush1.msra.mxu0 %v856
  %3061 = vmatprep.subr.mxu0 %v853
  %3062 = vmatpush1.msra.mxu0 %v852
  %3063 = vmatprep.subr.mxu0 %v849
  %3064 = vmatpush1.msra.mxu0 %v848
  %3065 = vmatprep.subr.mxu0 %v845
  %3066 = vmatpush1.msra.mxu0 %v844
  %3067 = vmatprep.subr.mxu0 %v841
  %3068 = vmatpush1.msra.mxu0 %v840
  %3069 = vmatprep.subr.mxu0 %v837
  %3070 = vmatpush1.msra.mxu0 %v836
  %3071 = vmatprep.subr.mxu0 %v833
  %3072 = vmatpush1.msra.mxu0 %v832
  %3073 = vmatprep.subr.mxu0 %v829
  %3074 = vmatpush1.msra.mxu0 %v828
  %3075 = vmatprep.subr.mxu0 %v825
  %3076 = vmatpush1.msra.mxu0 %v824
  %3077 = vmatprep.subr.mxu0 0.0
  %3078 = vmatpush2.msra.mxu0 0.0
  %3079 = vmatprep.subr.mxu0 0.0
  %3080 = vmatpush2.msra.mxu0 0.0
  %3081 = vmatprep.subr.mxu0 0.0
  %3082 = vmatpush2.msra.mxu0 0.0
  %3083 = vmatprep.subr.mxu0 0.0
  %3084 = vmatpush2.msra.mxu0 0.0
  %3085 = vmatprep.subr.mxu0 0.0
  %3086 = vmatpush2.msra.mxu0 0.0
  %3087 = vmatprep.subr.mxu0 0.0
  %3088 = vmatpush2.msra.mxu0 0.0
  %3089 = vmatprep.subr.mxu0 0.0
  %3090 = vmatpush2.msra.mxu0 0.0
  %3091 = vmatprep.subr.mxu0 0.0
  %3092 = vmatpush2.msra.mxu0 0.0
  %3093 = vmatprep.subr.mxu0 0.0
  %3094 = vmatpush2.msra.mxu0 0.0
  %3095 = vmatprep.subr.mxu0 0.0
  %3096 = vmatpush2.msra.mxu0 0.0
  %3097 = vmatprep.subr.mxu0 0.0
  %3098 = vmatpush2.msra.mxu0 0.0
  %3099 = vmatprep.subr.mxu0 0.0
  %3100 = vmatpush2.msra.mxu0 0.0
  %3101 = vmatprep.subr.mxu0 0.0
  %3102 = vmatpush2.msra.mxu0 0.0
  %3103 = vmatprep.subr.mxu0 0.0
  %3104 = vmatpush2.msra.mxu0 0.0
  %3105 = vmatprep.subr.mxu0 0.0
  %3106 = vmatpush2.msra.mxu0 0.0
  %3107 = vmatprep.subr.mxu0 0.0
  %3108 = vmatpush2.msra.mxu0 0.0
  %3109 = vmatprep.mubr.f32.mxu0 0.0
  %3110 = vmatmul.mubr.f32.gmra.mxu0 %v2969
  %v3111 = vpop.f32.mrf.mxu0
  %v3112 = vadd.f32 0.0, %v3111
  %v3113 = vpop.f32.mrf.mxu0
  %v3114 = vadd.f32 0.0, %v3113
  %3115 = vdwg.mxu0
  %v3116 = vadd.f32 %v2970, %v3041
  %v3117 = vadd.f32 %v2971, %v3043
  %v3118 = vadd.f32 %v2972, %v3112
  %v3119 = vadd.f32 %v2973, %v3114
  %v3120 = vxor.u32 %v3116, 2147483648
  %v3121 = vmul.f32 %v3120, 1.442695
  %v3122 = vpow.pop %v3121
  %v3123 = vadd.f32 %v3122, 1.0
  %v3124 = vrcp.pop %v3123
  %v3125 = vmul.f32 1.0, %v3124
  %v3126 = vxor.u32 %v3117, 2147483648
  %v3127 = vmul.f32 %v3126, 1.442695
  %v3128 = vpow.pop %v3127
  %v3129 = vadd.f32 %v3128, 1.0
  %v3130 = vrcp.pop %v3129
  %v3131 = vmul.f32 1.0, %v3130
  %v3132 = vtanh.pop %v3118
  %v3133 = vxor.u32 %v3119, 2147483648
  %v3134 = vmul.f32 %v3133, 1.442695
  %v3135 = vpow.pop %v3134
  %v3136 = vadd.f32 %v3135, 1.0
  %v3137 = vrcp.pop %v3136
  %v3138 = vmul.f32 1.0, %v3137
  %v3139 = vmul.f32 %v3131, %v2967
  %v3140 = vmul.f32 %v3125, %v3132
  %v3141 = vadd.f32 %v3139, %v3140
  %v3142 = vtanh.pop %v3141
  %v3143 = vmul.f32 %v3138, %v3142
  %v3144 = vld [vmem:[#allocation2 + $0x1a0] sm:$0xff]
  %v3145 = vld [vmem:[#allocation2 + $0x1a8] sm:$0xff]
  %v3146 = vld [vmem:[#allocation2 + $0x1b0] sm:$0xff]
  %v3147 = vld [vmem:[#allocation2 + $0x1b8] sm:$0xff]
  %3148 = vmatprep.subr.mxu0 %v883
  %3149 = vmatpush1.msra.mxu0 %v882
  %3150 = vmatprep.subr.mxu0 %v879
  %3151 = vmatpush1.msra.mxu0 %v878
  %3152 = vmatprep.subr.mxu0 %v875
  %3153 = vmatpush1.msra.mxu0 %v874
  %3154 = vmatprep.subr.mxu0 %v871
  %3155 = vmatpush1.msra.mxu0 %v870
  %3156 = vmatprep.subr.mxu0 %v867
  %3157 = vmatpush1.msra.mxu0 %v866
  %3158 = vmatprep.subr.mxu0 %v863
  %3159 = vmatpush1.msra.mxu0 %v862
  %3160 = vmatprep.subr.mxu0 %v859
  %3161 = vmatpush1.msra.mxu0 %v858
  %3162 = vmatprep.subr.mxu0 %v855
  %3163 = vmatpush1.msra.mxu0 %v854
  %3164 = vmatprep.subr.mxu0 %v851
  %3165 = vmatpush1.msra.mxu0 %v850
  %3166 = vmatprep.subr.mxu0 %v847
  %3167 = vmatpush1.msra.mxu0 %v846
  %3168 = vmatprep.subr.mxu0 %v843
  %3169 = vmatpush1.msra.mxu0 %v842
  %3170 = vmatprep.subr.mxu0 %v839
  %3171 = vmatpush1.msra.mxu0 %v838
  %3172 = vmatprep.subr.mxu0 %v835
  %3173 = vmatpush1.msra.mxu0 %v834
  %3174 = vmatprep.subr.mxu0 %v831
  %3175 = vmatpush1.msra.mxu0 %v830
  %3176 = vmatprep.subr.mxu0 %v827
  %3177 = vmatpush1.msra.mxu0 %v826
  %3178 = vmatprep.subr.mxu0 %v823
  %3179 = vmatpush1.msra.mxu0 %v822
  %3180 = vmatprep.subr.mxu0 0.0
  %3181 = vmatpush2.msra.mxu0 0.0
  %3182 = vmatprep.subr.mxu0 0.0
  %3183 = vmatpush2.msra.mxu0 0.0
  %3184 = vmatprep.subr.mxu0 0.0
  %3185 = vmatpush2.msra.mxu0 0.0
  %3186 = vmatprep.subr.mxu0 0.0
  %3187 = vmatpush2.msra.mxu0 0.0
  %3188 = vmatprep.subr.mxu0 0.0
  %3189 = vmatpush2.msra.mxu0 0.0
  %3190 = vmatprep.subr.mxu0 0.0
  %3191 = vmatpush2.msra.mxu0 0.0
  %3192 = vmatprep.subr.mxu0 0.0
  %3193 = vmatpush2.msra.mxu0 0.0
  %3194 = vmatprep.subr.mxu0 0.0
  %3195 = vmatpush2.msra.mxu0 0.0
  %3196 = vmatprep.subr.mxu0 0.0
  %3197 = vmatpush2.msra.mxu0 0.0
  %3198 = vmatprep.subr.mxu0 0.0
  %3199 = vmatpush2.msra.mxu0 0.0
  %3200 = vmatprep.subr.mxu0 0.0
  %3201 = vmatpush2.msra.mxu0 0.0
  %3202 = vmatprep.subr.mxu0 0.0
  %3203 = vmatpush2.msra.mxu0 0.0
  %3204 = vmatprep.subr.mxu0 0.0
  %3205 = vmatpush2.msra.mxu0 0.0
  %3206 = vmatprep.subr.mxu0 0.0
  %3207 = vmatpush2.msra.mxu0 0.0
  %3208 = vmatprep.subr.mxu0 0.0
  %3209 = vmatpush2.msra.mxu0 0.0
  %3210 = vmatprep.subr.mxu0 0.0
  %3211 = vmatpush2.msra.mxu0 0.0
  %3212 = vmatprep.mubr.f32.mxu0 0.0
  %3213 = vmatmul.mubr.f32.gmra.mxu0 %v3143
  %v3214 = vpop.f32.mrf.mxu0
  %v3215 = vadd.f32 0.0, %v3214
  %v3216 = vpop.f32.mrf.mxu0
  %v3217 = vadd.f32 0.0, %v3216
  %3218 = vdwg.mxu0
  %3219 = vmatprep.subr.mxu0 %v885
  %3220 = vmatpush1.msra.mxu0 %v884
  %3221 = vmatprep.subr.mxu0 %v881
  %3222 = vmatpush1.msra.mxu0 %v880
  %3223 = vmatprep.subr.mxu0 %v877
  %3224 = vmatpush1.msra.mxu0 %v876
  %3225 = vmatprep.subr.mxu0 %v873
  %3226 = vmatpush1.msra.mxu0 %v872
  %3227 = vmatprep.subr.mxu0 %v869
  %3228 = vmatpush1.msra.mxu0 %v868
  %3229 = vmatprep.subr.mxu0 %v865
  %3230 = vmatpush1.msra.mxu0 %v864
  %3231 = vmatprep.subr.mxu0 %v861
  %3232 = vmatpush1.msra.mxu0 %v860
  %3233 = vmatprep.subr.mxu0 %v857
  %3234 = vmatpush1.msra.mxu0 %v856
  %3235 = vmatprep.subr.mxu0 %v853
  %3236 = vmatpush1.msra.mxu0 %v852
  %3237 = vmatprep.subr.mxu0 %v849
  %3238 = vmatpush1.msra.mxu0 %v848
  %3239 = vmatprep.subr.mxu0 %v845
  %3240 = vmatpush1.msra.mxu0 %v844
  %3241 = vmatprep.subr.mxu0 %v841
  %3242 = vmatpush1.msra.mxu0 %v840
  %3243 = vmatprep.subr.mxu0 %v837
  %3244 = vmatpush1.msra.mxu0 %v836
  %3245 = vmatprep.subr.mxu0 %v833
  %3246 = vmatpush1.msra.mxu0 %v832
  %3247 = vmatprep.subr.mxu0 %v829
  %3248 = vmatpush1.msra.mxu0 %v828
  %3249 = vmatprep.subr.mxu0 %v825
  %3250 = vmatpush1.msra.mxu0 %v824
  %3251 = vmatprep.subr.mxu0 0.0
  %3252 = vmatpush2.msra.mxu0 0.0
  %3253 = vmatprep.subr.mxu0 0.0
  %3254 = vmatpush2.msra.mxu0 0.0
  %3255 = vmatprep.subr.mxu0 0.0
  %3256 = vmatpush2.msra.mxu0 0.0
  %3257 = vmatprep.subr.mxu0 0.0
  %3258 = vmatpush2.msra.mxu0 0.0
  %3259 = vmatprep.subr.mxu0 0.0
  %3260 = vmatpush2.msra.mxu0 0.0
  %3261 = vmatprep.subr.mxu0 0.0
  %3262 = vmatpush2.msra.mxu0 0.0
  %3263 = vmatprep.subr.mxu0 0.0
  %3264 = vmatpush2.msra.mxu0 0.0
  %3265 = vmatprep.subr.mxu0 0.0
  %3266 = vmatpush2.msra.mxu0 0.0
  %3267 = vmatprep.subr.mxu0 0.0
  %3268 = vmatpush2.msra.mxu0 0.0
  %3269 = vmatprep.subr.mxu0 0.0
  %3270 = vmatpush2.msra.mxu0 0.0
  %3271 = vmatprep.subr.mxu0 0.0
  %3272 = vmatpush2.msra.mxu0 0.0
  %3273 = vmatprep.subr.mxu0 0.0
  %3274 = vmatpush2.msra.mxu0 0.0
  %3275 = vmatprep.subr.mxu0 0.0
  %3276 = vmatpush2.msra.mxu0 0.0
  %3277 = vmatprep.subr.mxu0 0.0
  %3278 = vmatpush2.msra.mxu0 0.0
  %3279 = vmatprep.subr.mxu0 0.0
  %3280 = vmatpush2.msra.mxu0 0.0
  %3281 = vmatprep.subr.mxu0 0.0
  %3282 = vmatpush2.msra.mxu0 0.0
  %3283 = vmatprep.mubr.f32.mxu0 0.0
  %3284 = vmatmul.mubr.f32.gmra.mxu0 %v3143
  %v3285 = vpop.f32.mrf.mxu0
  %v3286 = vadd.f32 0.0, %v3285
  %v3287 = vpop.f32.mrf.mxu0
  %v3288 = vadd.f32 0.0, %v3287
  %3289 = vdwg.mxu0
  %v3290 = vadd.f32 %v3144, %v3215
  %v3291 = vadd.f32 %v3145, %v3217
  %v3292 = vadd.f32 %v3146, %v3286
  %v3293 = vadd.f32 %v3147, %v3288
  %v3294 = vxor.u32 %v3290, 2147483648
  %v3295 = vmul.f32 %v3294, 1.442695
  %v3296 = vpow.pop %v3295
  %v3297 = vadd.f32 %v3296, 1.0
  %v3298 = vrcp.pop %v3297
  %v3299 = vmul.f32 1.0, %v3298
  %v3300 = vxor.u32 %v3291, 2147483648
  %v3301 = vmul.f32 %v3300, 1.442695
  %v3302 = vpow.pop %v3301
  %v3303 = vadd.f32 %v3302, 1.0
  %v3304 = vrcp.pop %v3303
  %v3305 = vmul.f32 1.0, %v3304
  %v3306 = vtanh.pop %v3292
  %v3307 = vxor.u32 %v3293, 2147483648
  %v3308 = vmul.f32 %v3307, 1.442695
  %v3309 = vpow.pop %v3308
  %v3310 = vadd.f32 %v3309, 1.0
  %v3311 = vrcp.pop %v3310
  %v3312 = vmul.f32 1.0, %v3311
  %v3313 = vmul.f32 %v3305, %v3141
  %v3314 = vmul.f32 %v3299, %v3306
  %v3315 = vadd.f32 %v3313, %v3314
  %v3316 = vtanh.pop %v3315
  %v3317 = vmul.f32 %v3312, %v3316
  %v3318 = vld [vmem:[#allocation2 + $0x1c0] sm:$0xff]
  %v3319 = vld [vmem:[#allocation2 + $0x1c8] sm:$0xff]
  %v3320 = vld [vmem:[#allocation2 + $0x1d0] sm:$0xff]
  %v3321 = vld [vmem:[#allocation2 + $0x1d8] sm:$0xff]
  %3322 = vmatprep.subr.mxu0 %v883
  %3323 = vmatpush1.msra.mxu0 %v882
  %3324 = vmatprep.subr.mxu0 %v879
  %3325 = vmatpush1.msra.mxu0 %v878
  %3326 = vmatprep.subr.mxu0 %v875
  %3327 = vmatpush1.msra.mxu0 %v874
  %3328 = vmatprep.subr.mxu0 %v871
  %3329 = vmatpush1.msra.mxu0 %v870
  %3330 = vmatprep.subr.mxu0 %v867
  %3331 = vmatpush1.msra.mxu0 %v866
  %3332 = vmatprep.subr.mxu0 %v863
  %3333 = vmatpush1.msra.mxu0 %v862
  %3334 = vmatprep.subr.mxu0 %v859
  %3335 = vmatpush1.msra.mxu0 %v858
  %3336 = vmatprep.subr.mxu0 %v855
  %3337 = vmatpush1.msra.mxu0 %v854
  %3338 = vmatprep.subr.mxu0 %v851
  %3339 = vmatpush1.msra.mxu0 %v850
  %3340 = vmatprep.subr.mxu0 %v847
  %3341 = vmatpush1.msra.mxu0 %v846
  %3342 = vmatprep.subr.mxu0 %v843
  %3343 = vmatpush1.msra.mxu0 %v842
  %3344 = vmatprep.subr.mxu0 %v839
  %3345 = vmatpush1.msra.mxu0 %v838
  %3346 = vmatprep.subr.mxu0 %v835
  %3347 = vmatpush1.msra.mxu0 %v834
  %3348 = vmatprep.subr.mxu0 %v831
  %3349 = vmatpush1.msra.mxu0 %v830
  %3350 = vmatprep.subr.mxu0 %v827
  %3351 = vmatpush1.msra.mxu0 %v826
  %3352 = vmatprep.subr.mxu0 %v823
  %3353 = vmatpush1.msra.mxu0 %v822
  %3354 = vmatprep.subr.mxu0 0.0
  %3355 = vmatpush2.msra.mxu0 0.0
  %3356 = vmatprep.subr.mxu0 0.0
  %3357 = vmatpush2.msra.mxu0 0.0
  %3358 = vmatprep.subr.mxu0 0.0
  %3359 = vmatpush2.msra.mxu0 0.0
  %3360 = vmatprep.subr.mxu0 0.0
  %3361 = vmatpush2.msra.mxu0 0.0
  %3362 = vmatprep.subr.mxu0 0.0
  %3363 = vmatpush2.msra.mxu0 0.0
  %3364 = vmatprep.subr.mxu0 0.0
  %3365 = vmatpush2.msra.mxu0 0.0
  %3366 = vmatprep.subr.mxu0 0.0
  %3367 = vmatpush2.msra.mxu0 0.0
  %3368 = vmatprep.subr.mxu0 0.0
  %3369 = vmatpush2.msra.mxu0 0.0
  %3370 = vmatprep.subr.mxu0 0.0
  %3371 = vmatpush2.msra.mxu0 0.0
  %3372 = vmatprep.subr.mxu0 0.0
  %3373 = vmatpush2.msra.mxu0 0.0
  %3374 = vmatprep.subr.mxu0 0.0
  %3375 = vmatpush2.msra.mxu0 0.0
  %3376 = vmatprep.subr.mxu0 0.0
  %3377 = vmatpush2.msra.mxu0 0.0
  %3378 = vmatprep.subr.mxu0 0.0
  %3379 = vmatpush2.msra.mxu0 0.0
  %3380 = vmatprep.subr.mxu0 0.0
  %3381 = vmatpush2.msra.mxu0 0.0
  %3382 = vmatprep.subr.mxu0 0.0
  %3383 = vmatpush2.msra.mxu0 0.0
  %3384 = vmatprep.subr.mxu0 0.0
  %3385 = vmatpush2.msra.mxu0 0.0
  %3386 = vmatprep.mubr.f32.mxu0 0.0
  %3387 = vmatmul.mubr.f32.gmra.mxu0 %v3317
  %v3388 = vpop.f32.mrf.mxu0
  %v3389 = vadd.f32 0.0, %v3388
  %v3390 = vpop.f32.mrf.mxu0
  %v3391 = vadd.f32 0.0, %v3390
  %3392 = vdwg.mxu0
  %3393 = vmatprep.subr.mxu0 %v885
  %3394 = vmatpush1.msra.mxu0 %v884
  %3395 = vmatprep.subr.mxu0 %v881
  %3396 = vmatpush1.msra.mxu0 %v880
  %3397 = vmatprep.subr.mxu0 %v877
  %3398 = vmatpush1.msra.mxu0 %v876
  %3399 = vmatprep.subr.mxu0 %v873
  %3400 = vmatpush1.msra.mxu0 %v872
  %3401 = vmatprep.subr.mxu0 %v869
  %3402 = vmatpush1.msra.mxu0 %v868
  %3403 = vmatprep.subr.mxu0 %v865
  %3404 = vmatpush1.msra.mxu0 %v864
  %3405 = vmatprep.subr.mxu0 %v861
  %3406 = vmatpush1.msra.mxu0 %v860
  %3407 = vmatprep.subr.mxu0 %v857
  %3408 = vmatpush1.msra.mxu0 %v856
  %3409 = vmatprep.subr.mxu0 %v853
  %3410 = vmatpush1.msra.mxu0 %v852
  %3411 = vmatprep.subr.mxu0 %v849
  %3412 = vmatpush1.msra.mxu0 %v848
  %3413 = vmatprep.subr.mxu0 %v845
  %3414 = vmatpush1.msra.mxu0 %v844
  %3415 = vmatprep.subr.mxu0 %v841
  %3416 = vmatpush1.msra.mxu0 %v840
  %3417 = vmatprep.subr.mxu0 %v837
  %3418 = vmatpush1.msra.mxu0 %v836
  %3419 = vmatprep.subr.mxu0 %v833
  %3420 = vmatpush1.msra.mxu0 %v832
  %3421 = vmatprep.subr.mxu0 %v829
  %3422 = vmatpush1.msra.mxu0 %v828
  %3423 = vmatprep.subr.mxu0 %v825
  %3424 = vmatpush1.msra.mxu0 %v824
  %3425 = vmatprep.subr.mxu0 0.0
  %3426 = vmatpush2.msra.mxu0 0.0
  %3427 = vmatprep.subr.mxu0 0.0
  %3428 = vmatpush2.msra.mxu0 0.0
  %3429 = vmatprep.subr.mxu0 0.0
  %3430 = vmatpush2.msra.mxu0 0.0
  %3431 = vmatprep.subr.mxu0 0.0
  %3432 = vmatpush2.msra.mxu0 0.0
  %3433 = vmatprep.subr.mxu0 0.0
  %3434 = vmatpush2.msra.mxu0 0.0
  %3435 = vmatprep.subr.mxu0 0.0
  %3436 = vmatpush2.msra.mxu0 0.0
  %3437 = vmatprep.subr.mxu0 0.0
  %3438 = vmatpush2.msra.mxu0 0.0
  %3439 = vmatprep.subr.mxu0 0.0
  %3440 = vmatpush2.msra.mxu0 0.0
  %3441 = vmatprep.subr.mxu0 0.0
  %3442 = vmatpush2.msra.mxu0 0.0
  %3443 = vmatprep.subr.mxu0 0.0
  %3444 = vmatpush2.msra.mxu0 0.0
  %3445 = vmatprep.subr.mxu0 0.0
  %3446 = vmatpush2.msra.mxu0 0.0
  %3447 = vmatprep.subr.mxu0 0.0
  %3448 = vmatpush2.msra.mxu0 0.0
  %3449 = vmatprep.subr.mxu0 0.0
  %3450 = vmatpush2.msra.mxu0 0.0
  %3451 = vmatprep.subr.mxu0 0.0
  %3452 = vmatpush2.msra.mxu0 0.0
  %3453 = vmatprep.subr.mxu0 0.0
  %3454 = vmatpush2.msra.mxu0 0.0
  %3455 = vmatprep.subr.mxu0 0.0
  %3456 = vmatpush2.msra.mxu0 0.0
  %3457 = vmatprep.mubr.f32.mxu0 0.0
  %3458 = vmatmul.mubr.f32.gmra.mxu0 %v3317
  %v3459 = vpop.f32.mrf.mxu0
  %v3460 = vadd.f32 0.0, %v3459
  %v3461 = vpop.f32.mrf.mxu0
  %v3462 = vadd.f32 0.0, %v3461
  %3463 = vdwg.mxu0
  %v3464 = vadd.f32 %v3318, %v3389
  %v3465 = vadd.f32 %v3319, %v3391
  %v3466 = vadd.f32 %v3320, %v3460
  %v3467 = vadd.f32 %v3321, %v3462
  %v3468 = vxor.u32 %v3464, 2147483648
  %v3469 = vmul.f32 %v3468, 1.442695
  %v3470 = vpow.pop %v3469
  %v3471 = vadd.f32 %v3470, 1.0
  %v3472 = vrcp.pop %v3471
  %v3473 = vmul.f32 1.0, %v3472
  %v3474 = vxor.u32 %v3465, 2147483648
  %v3475 = vmul.f32 %v3474, 1.442695
  %v3476 = vpow.pop %v3475
  %v3477 = vadd.f32 %v3476, 1.0
  %v3478 = vrcp.pop %v3477
  %v3479 = vmul.f32 1.0, %v3478
  %v3480 = vtanh.pop %v3466
  %v3481 = vxor.u32 %v3467, 2147483648
  %v3482 = vmul.f32 %v3481, 1.442695
  %v3483 = vpow.pop %v3482
  %v3484 = vadd.f32 %v3483, 1.0
  %v3485 = vrcp.pop %v3484
  %v3486 = vmul.f32 1.0, %v3485
  %v3487 = vmul.f32 %v3479, %v3315
  %v3488 = vmul.f32 %v3473, %v3480
  %v3489 = vadd.f32 %v3487, %v3488
  %v3490 = vtanh.pop %v3489
  %v3491 = vmul.f32 %v3486, %v3490
  %v3492 = vld [vmem:[#allocation2 + $0x1e0] sm:$0xff]
  %v3493 = vld [vmem:[#allocation2 + $0x1e8] sm:$0xff]
  %v3494 = vld [vmem:[#allocation2 + $0x1f0] sm:$0xff]
  %v3495 = vld [vmem:[#allocation2 + $0x1f8] sm:$0xff]
  %3496 = vmatprep.subr.mxu0 %v883
  %3497 = vmatpush1.msra.mxu0 %v882
  %3498 = vmatprep.subr.mxu0 %v879
  %3499 = vmatpush1.msra.mxu0 %v878
  %3500 = vmatprep.subr.mxu0 %v875
  %3501 = vmatpush1.msra.mxu0 %v874
  %3502 = vmatprep.subr.mxu0 %v871
  %3503 = vmatpush1.msra.mxu0 %v870
  %3504 = vmatprep.subr.mxu0 %v867
  %3505 = vmatpush1.msra.mxu0 %v866
  %3506 = vmatprep.subr.mxu0 %v863
  %3507 = vmatpush1.msra.mxu0 %v862
  %3508 = vmatprep.subr.mxu0 %v859
  %3509 = vmatpush1.msra.mxu0 %v858
  %3510 = vmatprep.subr.mxu0 %v855
  %3511 = vmatpush1.msra.mxu0 %v854
  %3512 = vmatprep.subr.mxu0 %v851
  %3513 = vmatpush1.msra.mxu0 %v850
  %3514 = vmatprep.subr.mxu0 %v847
  %3515 = vmatpush1.msra.mxu0 %v846
  %3516 = vmatprep.subr.mxu0 %v843
  %3517 = vmatpush1.msra.mxu0 %v842
  %3518 = vmatprep.subr.mxu0 %v839
  %3519 = vmatpush1.msra.mxu0 %v838
  %3520 = vmatprep.subr.mxu0 %v835
  %3521 = vmatpush1.msra.mxu0 %v834
  %3522 = vmatprep.subr.mxu0 %v831
  %3523 = vmatpush1.msra.mxu0 %v830
  %3524 = vmatprep.subr.mxu0 %v827
  %3525 = vmatpush1.msra.mxu0 %v826
  %3526 = vmatprep.subr.mxu0 %v823
  %3527 = vmatpush1.msra.mxu0 %v822
  %3528 = vmatprep.subr.mxu0 0.0
  %3529 = vmatpush2.msra.mxu0 0.0
  %3530 = vmatprep.subr.mxu0 0.0
  %3531 = vmatpush2.msra.mxu0 0.0
  %3532 = vmatprep.subr.mxu0 0.0
  %3533 = vmatpush2.msra.mxu0 0.0
  %3534 = vmatprep.subr.mxu0 0.0
  %3535 = vmatpush2.msra.mxu0 0.0
  %3536 = vmatprep.subr.mxu0 0.0
  %3537 = vmatpush2.msra.mxu0 0.0
  %3538 = vmatprep.subr.mxu0 0.0
  %3539 = vmatpush2.msra.mxu0 0.0
  %3540 = vmatprep.subr.mxu0 0.0
  %3541 = vmatpush2.msra.mxu0 0.0
  %3542 = vmatprep.subr.mxu0 0.0
  %3543 = vmatpush2.msra.mxu0 0.0
  %3544 = vmatprep.subr.mxu0 0.0
  %3545 = vmatpush2.msra.mxu0 0.0
  %3546 = vmatprep.subr.mxu0 0.0
  %3547 = vmatpush2.msra.mxu0 0.0
  %3548 = vmatprep.subr.mxu0 0.0
  %3549 = vmatpush2.msra.mxu0 0.0
  %3550 = vmatprep.subr.mxu0 0.0
  %3551 = vmatpush2.msra.mxu0 0.0
  %3552 = vmatprep.subr.mxu0 0.0
  %3553 = vmatpush2.msra.mxu0 0.0
  %3554 = vmatprep.subr.mxu0 0.0
  %3555 = vmatpush2.msra.mxu0 0.0
  %3556 = vmatprep.subr.mxu0 0.0
  %3557 = vmatpush2.msra.mxu0 0.0
  %3558 = vmatprep.subr.mxu0 0.0
  %3559 = vmatpush2.msra.mxu0 0.0
  %3560 = vmatprep.mubr.f32.mxu0 0.0
  %3561 = vmatmul.mubr.f32.gmra.mxu0 %v3491
  %v3562 = vpop.f32.mrf.mxu0
  %v3563 = vadd.f32 0.0, %v3562
  %v3564 = vpop.f32.mrf.mxu0
  %v3565 = vadd.f32 0.0, %v3564
  %3566 = vdwg.mxu0
  %3567 = vmatprep.subr.mxu0 %v885
  %3568 = vmatpush1.msra.mxu0 %v884
  %3569 = vmatprep.subr.mxu0 %v881
  %3570 = vmatpush1.msra.mxu0 %v880
  %3571 = vmatprep.subr.mxu0 %v877
  %3572 = vmatpush1.msra.mxu0 %v876
  %3573 = vmatprep.subr.mxu0 %v873
  %3574 = vmatpush1.msra.mxu0 %v872
  %3575 = vmatprep.subr.mxu0 %v869
  %3576 = vmatpush1.msra.mxu0 %v868
  %3577 = vmatprep.subr.mxu0 %v865
  %3578 = vmatpush1.msra.mxu0 %v864
  %3579 = vmatprep.subr.mxu0 %v861
  %3580 = vmatpush1.msra.mxu0 %v860
  %3581 = vmatprep.subr.mxu0 %v857
  %3582 = vmatpush1.msra.mxu0 %v856
  %3583 = vmatprep.subr.mxu0 %v853
  %3584 = vmatpush1.msra.mxu0 %v852
  %3585 = vmatprep.subr.mxu0 %v849
  %3586 = vmatpush1.msra.mxu0 %v848
  %3587 = vmatprep.subr.mxu0 %v845
  %3588 = vmatpush1.msra.mxu0 %v844
  %3589 = vmatprep.subr.mxu0 %v841
  %3590 = vmatpush1.msra.mxu0 %v840
  %3591 = vmatprep.subr.mxu0 %v837
  %3592 = vmatpush1.msra.mxu0 %v836
  %3593 = vmatprep.subr.mxu0 %v833
  %3594 = vmatpush1.msra.mxu0 %v832
  %3595 = vmatprep.subr.mxu0 %v829
  %3596 = vmatpush1.msra.mxu0 %v828
  %3597 = vmatprep.subr.mxu0 %v825
  %3598 = vmatpush1.msra.mxu0 %v824
  %3599 = vmatprep.subr.mxu0 0.0
  %3600 = vmatpush2.msra.mxu0 0.0
  %3601 = vmatprep.subr.mxu0 0.0
  %3602 = vmatpush2.msra.mxu0 0.0
  %3603 = vmatprep.subr.mxu0 0.0
  %3604 = vmatpush2.msra.mxu0 0.0
  %3605 = vmatprep.subr.mxu0 0.0
  %3606 = vmatpush2.msra.mxu0 0.0
  %3607 = vmatprep.subr.mxu0 0.0
  %3608 = vmatpush2.msra.mxu0 0.0
  %3609 = vmatprep.subr.mxu0 0.0
  %3610 = vmatpush2.msra.mxu0 0.0
  %3611 = vmatprep.subr.mxu0 0.0
  %3612 = vmatpush2.msra.mxu0 0.0
  %3613 = vmatprep.subr.mxu0 0.0
  %3614 = vmatpush2.msra.mxu0 0.0
  %3615 = vmatprep.subr.mxu0 0.0
  %3616 = vmatpush2.msra.mxu0 0.0
  %3617 = vmatprep.subr.mxu0 0.0
  %3618 = vmatpush2.msra.mxu0 0.0
  %3619 = vmatprep.subr.mxu0 0.0
  %3620 = vmatpush2.msra.mxu0 0.0
  %3621 = vmatprep.subr.mxu0 0.0
  %3622 = vmatpush2.msra.mxu0 0.0
  %3623 = vmatprep.subr.mxu0 0.0
  %3624 = vmatpush2.msra.mxu0 0.0
  %3625 = vmatprep.subr.mxu0 0.0
  %3626 = vmatpush2.msra.mxu0 0.0
  %3627 = vmatprep.subr.mxu0 0.0
  %3628 = vmatpush2.msra.mxu0 0.0
  %3629 = vmatprep.subr.mxu0 0.0
  %3630 = vmatpush2.msra.mxu0 0.0
  %3631 = vmatprep.mubr.f32.mxu0 0.0
  %3632 = vmatmul.mubr.f32.gmra.mxu0 %v3491
  %v3633 = vpop.f32.mrf.mxu0
  %v3634 = vadd.f32 0.0, %v3633
  %v3635 = vpop.f32.mrf.mxu0
  %v3636 = vadd.f32 0.0, %v3635
  %3637 = vdwg.mxu0
  %v3638 = vadd.f32 %v3492, %v3563
  %v3639 = vadd.f32 %v3493, %v3565
  %v3640 = vadd.f32 %v3494, %v3634
  %v3641 = vadd.f32 %v3495, %v3636
  %v3642 = vxor.u32 %v3638, 2147483648
  %v3643 = vmul.f32 %v3642, 1.442695
  %v3644 = vpow.pop %v3643
  %v3645 = vadd.f32 %v3644, 1.0
  %v3646 = vrcp.pop %v3645
  %v3647 = vmul.f32 1.0, %v3646
  %v3648 = vxor.u32 %v3639, 2147483648
  %v3649 = vmul.f32 %v3648, 1.442695
  %v3650 = vpow.pop %v3649
  %v3651 = vadd.f32 %v3650, 1.0
  %v3652 = vrcp.pop %v3651
  %v3653 = vmul.f32 1.0, %v3652
  %v3654 = vtanh.pop %v3640
  %v3655 = vxor.u32 %v3641, 2147483648
  %v3656 = vmul.f32 %v3655, 1.442695
  %v3657 = vpow.pop %v3656
  %v3658 = vadd.f32 %v3657, 1.0
  %v3659 = vrcp.pop %v3658
  %v3660 = vmul.f32 1.0, %v3659
  %v3661 = vmul.f32 %v3653, %v3489
  %v3662 = vmul.f32 %v3647, %v3654
  %v3663 = vadd.f32 %v3661, %v3662
  %v3664 = vtanh.pop %v3663
  %v3665 = vmul.f32 %v3660, %v3664
  %v3666 = vld [vmem:[#allocation2 + $0x200] sm:$0xff]
  %v3667 = vld [vmem:[#allocation2 + $0x208] sm:$0xff]
  %v3668 = vld [vmem:[#allocation2 + $0x210] sm:$0xff]
  %v3669 = vld [vmem:[#allocation2 + $0x218] sm:$0xff]
  %3670 = vmatprep.subr.mxu0 %v883
  %3671 = vmatpush1.msra.mxu0 %v882
  %3672 = vmatprep.subr.mxu0 %v879
  %3673 = vmatpush1.msra.mxu0 %v878
  %3674 = vmatprep.subr.mxu0 %v875
  %3675 = vmatpush1.msra.mxu0 %v874
  %3676 = vmatprep.subr.mxu0 %v871
  %3677 = vmatpush1.msra.mxu0 %v870
  %3678 = vmatprep.subr.mxu0 %v867
  %3679 = vmatpush1.msra.mxu0 %v866
  %3680 = vmatprep.subr.mxu0 %v863
  %3681 = vmatpush1.msra.mxu0 %v862
  %3682 = vmatprep.subr.mxu0 %v859
  %3683 = vmatpush1.msra.mxu0 %v858
  %3684 = vmatprep.subr.mxu0 %v855
  %3685 = vmatpush1.msra.mxu0 %v854
  %3686 = vmatprep.subr.mxu0 %v851
  %3687 = vmatpush1.msra.mxu0 %v850
  %3688 = vmatprep.subr.mxu0 %v847
  %3689 = vmatpush1.msra.mxu0 %v846
  %3690 = vmatprep.subr.mxu0 %v843
  %3691 = vmatpush1.msra.mxu0 %v842
  %3692 = vmatprep.subr.mxu0 %v839
  %3693 = vmatpush1.msra.mxu0 %v838
  %3694 = vmatprep.subr.mxu0 %v835
  %3695 = vmatpush1.msra.mxu0 %v834
  %3696 = vmatprep.subr.mxu0 %v831
  %3697 = vmatpush1.msra.mxu0 %v830
  %3698 = vmatprep.subr.mxu0 %v827
  %3699 = vmatpush1.msra.mxu0 %v826
  %3700 = vmatprep.subr.mxu0 %v823
  %3701 = vmatpush1.msra.mxu0 %v822
  %3702 = vmatprep.subr.mxu0 0.0
  %3703 = vmatpush2.msra.mxu0 0.0
  %3704 = vmatprep.subr.mxu0 0.0
  %3705 = vmatpush2.msra.mxu0 0.0
  %3706 = vmatprep.subr.mxu0 0.0
  %3707 = vmatpush2.msra.mxu0 0.0
  %3708 = vmatprep.subr.mxu0 0.0
  %3709 = vmatpush2.msra.mxu0 0.0
  %3710 = vmatprep.subr.mxu0 0.0
  %3711 = vmatpush2.msra.mxu0 0.0
  %3712 = vmatprep.subr.mxu0 0.0
  %3713 = vmatpush2.msra.mxu0 0.0
  %3714 = vmatprep.subr.mxu0 0.0
  %3715 = vmatpush2.msra.mxu0 0.0
  %3716 = vmatprep.subr.mxu0 0.0
  %3717 = vmatpush2.msra.mxu0 0.0
  %3718 = vmatprep.subr.mxu0 0.0
  %3719 = vmatpush2.msra.mxu0 0.0
  %3720 = vmatprep.subr.mxu0 0.0
  %3721 = vmatpush2.msra.mxu0 0.0
  %3722 = vmatprep.subr.mxu0 0.0
  %3723 = vmatpush2.msra.mxu0 0.0
  %3724 = vmatprep.subr.mxu0 0.0
  %3725 = vmatpush2.msra.mxu0 0.0
  %3726 = vmatprep.subr.mxu0 0.0
  %3727 = vmatpush2.msra.mxu0 0.0
  %3728 = vmatprep.subr.mxu0 0.0
  %3729 = vmatpush2.msra.mxu0 0.0
  %3730 = vmatprep.subr.mxu0 0.0
  %3731 = vmatpush2.msra.mxu0 0.0
  %3732 = vmatprep.subr.mxu0 0.0
  %3733 = vmatpush2.msra.mxu0 0.0
  %3734 = vmatprep.mubr.f32.mxu0 0.0
  %3735 = vmatmul.mubr.f32.gmra.mxu0 %v3665
  %v3736 = vpop.f32.mrf.mxu0
  %v3737 = vadd.f32 0.0, %v3736
  %v3738 = vpop.f32.mrf.mxu0
  %v3739 = vadd.f32 0.0, %v3738
  %3740 = vdwg.mxu0
  %3741 = vmatprep.subr.mxu0 %v885
  %3742 = vmatpush1.msra.mxu0 %v884
  %3743 = vmatprep.subr.mxu0 %v881
  %3744 = vmatpush1.msra.mxu0 %v880
  %3745 = vmatprep.subr.mxu0 %v877
  %3746 = vmatpush1.msra.mxu0 %v876
  %3747 = vmatprep.subr.mxu0 %v873
  %3748 = vmatpush1.msra.mxu0 %v872
  %3749 = vmatprep.subr.mxu0 %v869
  %3750 = vmatpush1.msra.mxu0 %v868
  %3751 = vmatprep.subr.mxu0 %v865
  %3752 = vmatpush1.msra.mxu0 %v864
  %3753 = vmatprep.subr.mxu0 %v861
  %3754 = vmatpush1.msra.mxu0 %v860
  %3755 = vmatprep.subr.mxu0 %v857
  %3756 = vmatpush1.msra.mxu0 %v856
  %3757 = vmatprep.subr.mxu0 %v853
  %3758 = vmatpush1.msra.mxu0 %v852
  %3759 = vmatprep.subr.mxu0 %v849
  %3760 = vmatpush1.msra.mxu0 %v848
  %3761 = vmatprep.subr.mxu0 %v845
  %3762 = vmatpush1.msra.mxu0 %v844
  %3763 = vmatprep.subr.mxu0 %v841
  %3764 = vmatpush1.msra.mxu0 %v840
  %3765 = vmatprep.subr.mxu0 %v837
  %3766 = vmatpush1.msra.mxu0 %v836
  %3767 = vmatprep.subr.mxu0 %v833
  %3768 = vmatpush1.msra.mxu0 %v832
  %3769 = vmatprep.subr.mxu0 %v829
  %3770 = vmatpush1.msra.mxu0 %v828
  %3771 = vmatprep.subr.mxu0 %v825
  %3772 = vmatpush1.msra.mxu0 %v824
  %3773 = vmatprep.subr.mxu0 0.0
  %3774 = vmatpush2.msra.mxu0 0.0
  %3775 = vmatprep.subr.mxu0 0.0
  %3776 = vmatpush2.msra.mxu0 0.0
  %3777 = vmatprep.subr.mxu0 0.0
  %3778 = vmatpush2.msra.mxu0 0.0
  %3779 = vmatprep.subr.mxu0 0.0
  %3780 = vmatpush2.msra.mxu0 0.0
  %3781 = vmatprep.subr.mxu0 0.0
  %3782 = vmatpush2.msra.mxu0 0.0
  %3783 = vmatprep.subr.mxu0 0.0
  %3784 = vmatpush2.msra.mxu0 0.0
  %3785 = vmatprep.subr.mxu0 0.0
  %3786 = vmatpush2.msra.mxu0 0.0
  %3787 = vmatprep.subr.mxu0 0.0
  %3788 = vmatpush2.msra.mxu0 0.0
  %3789 = vmatprep.subr.mxu0 0.0
  %3790 = vmatpush2.msra.mxu0 0.0
  %3791 = vmatprep.subr.mxu0 0.0
  %3792 = vmatpush2.msra.mxu0 0.0
  %3793 = vmatprep.subr.mxu0 0.0
  %3794 = vmatpush2.msra.mxu0 0.0
  %3795 = vmatprep.subr.mxu0 0.0
  %3796 = vmatpush2.msra.mxu0 0.0
  %3797 = vmatprep.subr.mxu0 0.0
  %3798 = vmatpush2.msra.mxu0 0.0
  %3799 = vmatprep.subr.mxu0 0.0
  %3800 = vmatpush2.msra.mxu0 0.0
  %3801 = vmatprep.subr.mxu0 0.0
  %3802 = vmatpush2.msra.mxu0 0.0
  %3803 = vmatprep.subr.mxu0 0.0
  %3804 = vmatpush2.msra.mxu0 0.0
  %3805 = vmatprep.mubr.f32.mxu0 0.0
  %3806 = vmatmul.mubr.f32.gmra.mxu0 %v3665
  %v3807 = vpop.f32.mrf.mxu0
  %v3808 = vadd.f32 0.0, %v3807
  %v3809 = vpop.f32.mrf.mxu0
  %v3810 = vadd.f32 0.0, %v3809
  %3811 = vdwg.mxu0
  %v3812 = vadd.f32 %v3666, %v3737
  %v3813 = vadd.f32 %v3667, %v3739
  %v3814 = vadd.f32 %v3668, %v3808
  %v3815 = vadd.f32 %v3669, %v3810
  %v3816 = vxor.u32 %v3812, 2147483648
  %v3817 = vmul.f32 %v3816, 1.442695
  %v3818 = vpow.pop %v3817
  %v3819 = vadd.f32 %v3818, 1.0
  %v3820 = vrcp.pop %v3819
  %v3821 = vmul.f32 1.0, %v3820
  %v3822 = vxor.u32 %v3813, 2147483648
  %v3823 = vmul.f32 %v3822, 1.442695
  %v3824 = vpow.pop %v3823
  %v3825 = vadd.f32 %v3824, 1.0
  %v3826 = vrcp.pop %v3825
  %v3827 = vmul.f32 1.0, %v3826
  %v3828 = vtanh.pop %v3814
  %v3829 = vxor.u32 %v3815, 2147483648
  %v3830 = vmul.f32 %v3829, 1.442695
  %v3831 = vpow.pop %v3830
  %v3832 = vadd.f32 %v3831, 1.0
  %v3833 = vrcp.pop %v3832
  %v3834 = vmul.f32 1.0, %v3833
  %v3835 = vmul.f32 %v3827, %v3663
  %v3836 = vmul.f32 %v3821, %v3828
  %v3837 = vadd.f32 %v3835, %v3836
  %v3838 = vtanh.pop %v3837
  %v3839 = vmul.f32 %v3834, %v3838
  %v3840 = vld [vmem:[#allocation2 + $0x220] sm:$0xff]
  %v3841 = vld [vmem:[#allocation2 + $0x228] sm:$0xff]
  %v3842 = vld [vmem:[#allocation2 + $0x230] sm:$0xff]
  %v3843 = vld [vmem:[#allocation2 + $0x238] sm:$0xff]
  %3844 = vmatprep.subr.mxu0 %v883
  %3845 = vmatpush1.msra.mxu0 %v882
  %3846 = vmatprep.subr.mxu0 %v879
  %3847 = vmatpush1.msra.mxu0 %v878
  %3848 = vmatprep.subr.mxu0 %v875
  %3849 = vmatpush1.msra.mxu0 %v874
  %3850 = vmatprep.subr.mxu0 %v871
  %3851 = vmatpush1.msra.mxu0 %v870
  %3852 = vmatprep.subr.mxu0 %v867
  %3853 = vmatpush1.msra.mxu0 %v866
  %3854 = vmatprep.subr.mxu0 %v863
  %3855 = vmatpush1.msra.mxu0 %v862
  %3856 = vmatprep.subr.mxu0 %v859
  %3857 = vmatpush1.msra.mxu0 %v858
  %3858 = vmatprep.subr.mxu0 %v855
  %3859 = vmatpush1.msra.mxu0 %v854
  %3860 = vmatprep.subr.mxu0 %v851
  %3861 = vmatpush1.msra.mxu0 %v850
  %3862 = vmatprep.subr.mxu0 %v847
  %3863 = vmatpush1.msra.mxu0 %v846
  %3864 = vmatprep.subr.mxu0 %v843
  %3865 = vmatpush1.msra.mxu0 %v842
  %3866 = vmatprep.subr.mxu0 %v839
  %3867 = vmatpush1.msra.mxu0 %v838
  %3868 = vmatprep.subr.mxu0 %v835
  %3869 = vmatpush1.msra.mxu0 %v834
  %3870 = vmatprep.subr.mxu0 %v831
  %3871 = vmatpush1.msra.mxu0 %v830
  %3872 = vmatprep.subr.mxu0 %v827
  %3873 = vmatpush1.msra.mxu0 %v826
  %3874 = vmatprep.subr.mxu0 %v823
  %3875 = vmatpush1.msra.mxu0 %v822
  %3876 = vmatprep.subr.mxu0 0.0
  %3877 = vmatpush2.msra.mxu0 0.0
  %3878 = vmatprep.subr.mxu0 0.0
  %3879 = vmatpush2.msra.mxu0 0.0
  %3880 = vmatprep.subr.mxu0 0.0
  %3881 = vmatpush2.msra.mxu0 0.0
  %3882 = vmatprep.subr.mxu0 0.0
  %3883 = vmatpush2.msra.mxu0 0.0
  %3884 = vmatprep.subr.mxu0 0.0
  %3885 = vmatpush2.msra.mxu0 0.0
  %3886 = vmatprep.subr.mxu0 0.0
  %3887 = vmatpush2.msra.mxu0 0.0
  %3888 = vmatprep.subr.mxu0 0.0
  %3889 = vmatpush2.msra.mxu0 0.0
  %3890 = vmatprep.subr.mxu0 0.0
  %3891 = vmatpush2.msra.mxu0 0.0
  %3892 = vmatprep.subr.mxu0 0.0
  %3893 = vmatpush2.msra.mxu0 0.0
  %3894 = vmatprep.subr.mxu0 0.0
  %3895 = vmatpush2.msra.mxu0 0.0
  %3896 = vmatprep.subr.mxu0 0.0
  %3897 = vmatpush2.msra.mxu0 0.0
  %3898 = vmatprep.subr.mxu0 0.0
  %3899 = vmatpush2.msra.mxu0 0.0
  %3900 = vmatprep.subr.mxu0 0.0
  %3901 = vmatpush2.msra.mxu0 0.0
  %3902 = vmatprep.subr.mxu0 0.0
  %3903 = vmatpush2.msra.mxu0 0.0
  %3904 = vmatprep.subr.mxu0 0.0
  %3905 = vmatpush2.msra.mxu0 0.0
  %3906 = vmatprep.subr.mxu0 0.0
  %3907 = vmatpush2.msra.mxu0 0.0
  %3908 = vmatprep.mubr.f32.mxu0 0.0
  %3909 = vmatmul.mubr.f32.gmra.mxu0 %v3839
  %v3910 = vpop.f32.mrf.mxu0
  %v3911 = vadd.f32 0.0, %v3910
  %v3912 = vpop.f32.mrf.mxu0
  %v3913 = vadd.f32 0.0, %v3912
  %3914 = vdwg.mxu0
  %3915 = vmatprep.subr.mxu0 %v885
  %3916 = vmatpush1.msra.mxu0 %v884
  %3917 = vmatprep.subr.mxu0 %v881
  %3918 = vmatpush1.msra.mxu0 %v880
  %3919 = vmatprep.subr.mxu0 %v877
  %3920 = vmatpush1.msra.mxu0 %v876
  %3921 = vmatprep.subr.mxu0 %v873
  %3922 = vmatpush1.msra.mxu0 %v872
  %3923 = vmatprep.subr.mxu0 %v869
  %3924 = vmatpush1.msra.mxu0 %v868
  %3925 = vmatprep.subr.mxu0 %v865
  %3926 = vmatpush1.msra.mxu0 %v864
  %3927 = vmatprep.subr.mxu0 %v861
  %3928 = vmatpush1.msra.mxu0 %v860
  %3929 = vmatprep.subr.mxu0 %v857
  %3930 = vmatpush1.msra.mxu0 %v856
  %3931 = vmatprep.subr.mxu0 %v853
  %3932 = vmatpush1.msra.mxu0 %v852
  %3933 = vmatprep.subr.mxu0 %v849
  %3934 = vmatpush1.msra.mxu0 %v848
  %3935 = vmatprep.subr.mxu0 %v845
  %3936 = vmatpush1.msra.mxu0 %v844
  %3937 = vmatprep.subr.mxu0 %v841
  %3938 = vmatpush1.msra.mxu0 %v840
  %3939 = vmatprep.subr.mxu0 %v837
  %3940 = vmatpush1.msra.mxu0 %v836
  %3941 = vmatprep.subr.mxu0 %v833
  %3942 = vmatpush1.msra.mxu0 %v832
  %3943 = vmatprep.subr.mxu0 %v829
  %3944 = vmatpush1.msra.mxu0 %v828
  %3945 = vmatprep.subr.mxu0 %v825
  %3946 = vmatpush1.msra.mxu0 %v824
  %3947 = vmatprep.subr.mxu0 0.0
  %3948 = vmatpush2.msra.mxu0 0.0
  %3949 = vmatprep.subr.mxu0 0.0
  %3950 = vmatpush2.msra.mxu0 0.0
  %3951 = vmatprep.subr.mxu0 0.0
  %3952 = vmatpush2.msra.mxu0 0.0
  %3953 = vmatprep.subr.mxu0 0.0
  %3954 = vmatpush2.msra.mxu0 0.0
  %3955 = vmatprep.subr.mxu0 0.0
  %3956 = vmatpush2.msra.mxu0 0.0
  %3957 = vmatprep.subr.mxu0 0.0
  %3958 = vmatpush2.msra.mxu0 0.0
  %3959 = vmatprep.subr.mxu0 0.0
  %3960 = vmatpush2.msra.mxu0 0.0
  %3961 = vmatprep.subr.mxu0 0.0
  %3962 = vmatpush2.msra.mxu0 0.0
  %3963 = vmatprep.subr.mxu0 0.0
  %3964 = vmatpush2.msra.mxu0 0.0
  %3965 = vmatprep.subr.mxu0 0.0
  %3966 = vmatpush2.msra.mxu0 0.0
  %3967 = vmatprep.subr.mxu0 0.0
  %3968 = vmatpush2.msra.mxu0 0.0
  %3969 = vmatprep.subr.mxu0 0.0
  %3970 = vmatpush2.msra.mxu0 0.0
  %3971 = vmatprep.subr.mxu0 0.0
  %3972 = vmatpush2.msra.mxu0 0.0
  %3973 = vmatprep.subr.mxu0 0.0
  %3974 = vmatpush2.msra.mxu0 0.0
  %3975 = vmatprep.subr.mxu0 0.0
  %3976 = vmatpush2.msra.mxu0 0.0
  %3977 = vmatprep.subr.mxu0 0.0
  %3978 = vmatpush2.msra.mxu0 0.0
  %3979 = vmatprep.mubr.f32.mxu0 0.0
  %3980 = vmatmul.mubr.f32.gmra.mxu0 %v3839
  %v3981 = vpop.f32.mrf.mxu0
  %v3982 = vadd.f32 0.0, %v3981
  %v3983 = vpop.f32.mrf.mxu0
  %v3984 = vadd.f32 0.0, %v3983
  %3985 = vdwg.mxu0
  %v3986 = vadd.f32 %v3840, %v3911
  %v3987 = vadd.f32 %v3841, %v3913
  %v3988 = vadd.f32 %v3842, %v3982
  %v3989 = vadd.f32 %v3843, %v3984
  %v3990 = vxor.u32 %v3986, 2147483648
  %v3991 = vmul.f32 %v3990, 1.442695
  %v3992 = vpow.pop %v3991
  %v3993 = vadd.f32 %v3992, 1.0
  %v3994 = vrcp.pop %v3993
  %v3995 = vmul.f32 1.0, %v3994
  %v3996 = vxor.u32 %v3987, 2147483648
  %v3997 = vmul.f32 %v3996, 1.442695
  %v3998 = vpow.pop %v3997
  %v3999 = vadd.f32 %v3998, 1.0
  %v4000 = vrcp.pop %v3999
  %v4001 = vmul.f32 1.0, %v4000
  %v4002 = vtanh.pop %v3988
  %v4003 = vxor.u32 %v3989, 2147483648
  %v4004 = vmul.f32 %v4003, 1.442695
  %v4005 = vpow.pop %v4004
  %v4006 = vadd.f32 %v4005, 1.0
  %v4007 = vrcp.pop %v4006
  %v4008 = vmul.f32 1.0, %v4007
  %v4009 = vmul.f32 %v4001, %v3837
  %v4010 = vmul.f32 %v3995, %v4002
  %v4011 = vadd.f32 %v4009, %v4010
  %v4012 = vtanh.pop %v4011
  %v4013 = vmul.f32 %v4008, %v4012
  %v4014 = vld [vmem:[#allocation2 + $0x240] sm:$0xff]
  %v4015 = vld [vmem:[#allocation2 + $0x248] sm:$0xff]
  %v4016 = vld [vmem:[#allocation2 + $0x250] sm:$0xff]
  %v4017 = vld [vmem:[#allocation2 + $0x258] sm:$0xff]
  %4018 = vmatprep.subr.mxu0 %v883
  %4019 = vmatpush1.msra.mxu0 %v882
  %4020 = vmatprep.subr.mxu0 %v879
  %4021 = vmatpush1.msra.mxu0 %v878
  %4022 = vmatprep.subr.mxu0 %v875
  %4023 = vmatpush1.msra.mxu0 %v874
  %4024 = vmatprep.subr.mxu0 %v871
  %4025 = vmatpush1.msra.mxu0 %v870
  %4026 = vmatprep.subr.mxu0 %v867
  %4027 = vmatpush1.msra.mxu0 %v866
  %4028 = vmatprep.subr.mxu0 %v863
  %4029 = vmatpush1.msra.mxu0 %v862
  %4030 = vmatprep.subr.mxu0 %v859
  %4031 = vmatpush1.msra.mxu0 %v858
  %4032 = vmatprep.subr.mxu0 %v855
  %4033 = vmatpush1.msra.mxu0 %v854
  %4034 = vmatprep.subr.mxu0 %v851
  %4035 = vmatpush1.msra.mxu0 %v850
  %4036 = vmatprep.subr.mxu0 %v847
  %4037 = vmatpush1.msra.mxu0 %v846
  %4038 = vmatprep.subr.mxu0 %v843
  %4039 = vmatpush1.msra.mxu0 %v842
  %4040 = vmatprep.subr.mxu0 %v839
  %4041 = vmatpush1.msra.mxu0 %v838
  %4042 = vmatprep.subr.mxu0 %v835
  %4043 = vmatpush1.msra.mxu0 %v834
  %4044 = vmatprep.subr.mxu0 %v831
  %4045 = vmatpush1.msra.mxu0 %v830
  %4046 = vmatprep.subr.mxu0 %v827
  %4047 = vmatpush1.msra.mxu0 %v826
  %4048 = vmatprep.subr.mxu0 %v823
  %4049 = vmatpush1.msra.mxu0 %v822
  %4050 = vmatprep.subr.mxu0 0.0
  %4051 = vmatpush2.msra.mxu0 0.0
  %4052 = vmatprep.subr.mxu0 0.0
  %4053 = vmatpush2.msra.mxu0 0.0
  %4054 = vmatprep.subr.mxu0 0.0
  %4055 = vmatpush2.msra.mxu0 0.0
  %4056 = vmatprep.subr.mxu0 0.0
  %4057 = vmatpush2.msra.mxu0 0.0
  %4058 = vmatprep.subr.mxu0 0.0
  %4059 = vmatpush2.msra.mxu0 0.0
  %4060 = vmatprep.subr.mxu0 0.0
  %4061 = vmatpush2.msra.mxu0 0.0
  %4062 = vmatprep.subr.mxu0 0.0
  %4063 = vmatpush2.msra.mxu0 0.0
  %4064 = vmatprep.subr.mxu0 0.0
  %4065 = vmatpush2.msra.mxu0 0.0
  %4066 = vmatprep.subr.mxu0 0.0
  %4067 = vmatpush2.msra.mxu0 0.0
  %4068 = vmatprep.subr.mxu0 0.0
  %4069 = vmatpush2.msra.mxu0 0.0
  %4070 = vmatprep.subr.mxu0 0.0
  %4071 = vmatpush2.msra.mxu0 0.0
  %4072 = vmatprep.subr.mxu0 0.0
  %4073 = vmatpush2.msra.mxu0 0.0
  %4074 = vmatprep.subr.mxu0 0.0
  %4075 = vmatpush2.msra.mxu0 0.0
  %4076 = vmatprep.subr.mxu0 0.0
  %4077 = vmatpush2.msra.mxu0 0.0
  %4078 = vmatprep.subr.mxu0 0.0
  %4079 = vmatpush2.msra.mxu0 0.0
  %4080 = vmatprep.subr.mxu0 0.0
  %4081 = vmatpush2.msra.mxu0 0.0
  %4082 = vmatprep.mubr.f32.mxu0 0.0
  %4083 = vmatmul.mubr.f32.gmra.mxu0 %v4013
  %v4084 = vpop.f32.mrf.mxu0
  %v4085 = vadd.f32 0.0, %v4084
  %v4086 = vpop.f32.mrf.mxu0
  %v4087 = vadd.f32 0.0, %v4086
  %4088 = vdwg.mxu0
  %4089 = vmatprep.subr.mxu0 %v885
  %4090 = vmatpush1.msra.mxu0 %v884
  %4091 = vmatprep.subr.mxu0 %v881
  %4092 = vmatpush1.msra.mxu0 %v880
  %4093 = vmatprep.subr.mxu0 %v877
  %4094 = vmatpush1.msra.mxu0 %v876
  %4095 = vmatprep.subr.mxu0 %v873
  %4096 = vmatpush1.msra.mxu0 %v872
  %4097 = vmatprep.subr.mxu0 %v869
  %4098 = vmatpush1.msra.mxu0 %v868
  %4099 = vmatprep.subr.mxu0 %v865
  %4100 = vmatpush1.msra.mxu0 %v864
  %4101 = vmatprep.subr.mxu0 %v861
  %4102 = vmatpush1.msra.mxu0 %v860
  %4103 = vmatprep.subr.mxu0 %v857
  %4104 = vmatpush1.msra.mxu0 %v856
  %4105 = vmatprep.subr.mxu0 %v853
  %4106 = vmatpush1.msra.mxu0 %v852
  %4107 = vmatprep.subr.mxu0 %v849
  %4108 = vmatpush1.msra.mxu0 %v848
  %4109 = vmatprep.subr.mxu0 %v845
  %4110 = vmatpush1.msra.mxu0 %v844
  %4111 = vmatprep.subr.mxu0 %v841
  %4112 = vmatpush1.msra.mxu0 %v840
  %4113 = vmatprep.subr.mxu0 %v837
  %4114 = vmatpush1.msra.mxu0 %v836
  %4115 = vmatprep.subr.mxu0 %v833
  %4116 = vmatpush1.msra.mxu0 %v832
  %4117 = vmatprep.subr.mxu0 %v829
  %4118 = vmatpush1.msra.mxu0 %v828
  %4119 = vmatprep.subr.mxu0 %v825
  %4120 = vmatpush1.msra.mxu0 %v824
  %4121 = vmatprep.subr.mxu0 0.0
  %4122 = vmatpush2.msra.mxu0 0.0
  %4123 = vmatprep.subr.mxu0 0.0
  %4124 = vmatpush2.msra.mxu0 0.0
  %4125 = vmatprep.subr.mxu0 0.0
  %4126 = vmatpush2.msra.mxu0 0.0
  %4127 = vmatprep.subr.mxu0 0.0
  %4128 = vmatpush2.msra.mxu0 0.0
  %4129 = vmatprep.subr.mxu0 0.0
  %4130 = vmatpush2.msra.mxu0 0.0
  %4131 = vmatprep.subr.mxu0 0.0
  %4132 = vmatpush2.msra.mxu0 0.0
  %4133 = vmatprep.subr.mxu0 0.0
  %4134 = vmatpush2.msra.mxu0 0.0
  %4135 = vmatprep.subr.mxu0 0.0
  %4136 = vmatpush2.msra.mxu0 0.0
  %4137 = vmatprep.subr.mxu0 0.0
  %4138 = vmatpush2.msra.mxu0 0.0
  %4139 = vmatprep.subr.mxu0 0.0
  %4140 = vmatpush2.msra.mxu0 0.0
  %4141 = vmatprep.subr.mxu0 0.0
  %4142 = vmatpush2.msra.mxu0 0.0
  %4143 = vmatprep.subr.mxu0 0.0
  %4144 = vmatpush2.msra.mxu0 0.0
  %4145 = vmatprep.subr.mxu0 0.0
  %4146 = vmatpush2.msra.mxu0 0.0
  %4147 = vmatprep.subr.mxu0 0.0
  %4148 = vmatpush2.msra.mxu0 0.0
  %4149 = vmatprep.subr.mxu0 0.0
  %4150 = vmatpush2.msra.mxu0 0.0
  %4151 = vmatprep.subr.mxu0 0.0
  %4152 = vmatpush2.msra.mxu0 0.0
  %4153 = vmatprep.mubr.f32.mxu0 0.0
  %4154 = vmatmul.mubr.f32.gmra.mxu0 %v4013
  %v4155 = vpop.f32.mrf.mxu0
  %v4156 = vadd.f32 0.0, %v4155
  %v4157 = vpop.f32.mrf.mxu0
  %v4158 = vadd.f32 0.0, %v4157
  %4159 = vdwg.mxu0
  %v4160 = vadd.f32 %v4014, %v4085
  %v4161 = vadd.f32 %v4015, %v4087
  %v4162 = vadd.f32 %v4016, %v4156
  %v4163 = vadd.f32 %v4017, %v4158
  %v4164 = vxor.u32 %v4160, 2147483648
  %v4165 = vmul.f32 %v4164, 1.442695
  %v4166 = vpow.pop %v4165
  %v4167 = vadd.f32 %v4166, 1.0
  %v4168 = vrcp.pop %v4167
  %v4169 = vmul.f32 1.0, %v4168
  %v4170 = vxor.u32 %v4161, 2147483648
  %v4171 = vmul.f32 %v4170, 1.442695
  %v4172 = vpow.pop %v4171
  %v4173 = vadd.f32 %v4172, 1.0
  %v4174 = vrcp.pop %v4173
  %v4175 = vmul.f32 1.0, %v4174
  %v4176 = vtanh.pop %v4162
  %v4177 = vxor.u32 %v4163, 2147483648
  %v4178 = vmul.f32 %v4177, 1.442695
  %v4179 = vpow.pop %v4178
  %v4180 = vadd.f32 %v4179, 1.0
  %v4181 = vrcp.pop %v4180
  %v4182 = vmul.f32 1.0, %v4181
  %v4183 = vmul.f32 %v4175, %v4011
  %v4184 = vmul.f32 %v4169, %v4176
  %v4185 = vadd.f32 %v4183, %v4184
  %v4186 = vtanh.pop %v4185
  %v4187 = vmul.f32 %v4182, %v4186
  %v4188 = vld [vmem:[#allocation2 + $0x260] sm:$0xff]
  %v4189 = vld [vmem:[#allocation2 + $0x268] sm:$0xff]
  %v4190 = vld [vmem:[#allocation2 + $0x270] sm:$0xff]
  %v4191 = vld [vmem:[#allocation2 + $0x278] sm:$0xff]
  %4192 = vmatprep.subr.mxu0 %v883
  %4193 = vmatpush1.msra.mxu0 %v882
  %4194 = vmatprep.subr.mxu0 %v879
  %4195 = vmatpush1.msra.mxu0 %v878
  %4196 = vmatprep.subr.mxu0 %v875
  %4197 = vmatpush1.msra.mxu0 %v874
  %4198 = vmatprep.subr.mxu0 %v871
  %4199 = vmatpush1.msra.mxu0 %v870
  %4200 = vmatprep.subr.mxu0 %v867
  %4201 = vmatpush1.msra.mxu0 %v866
  %4202 = vmatprep.subr.mxu0 %v863
  %4203 = vmatpush1.msra.mxu0 %v862
  %4204 = vmatprep.subr.mxu0 %v859
  %4205 = vmatpush1.msra.mxu0 %v858
  %4206 = vmatprep.subr.mxu0 %v855
  %4207 = vmatpush1.msra.mxu0 %v854
  %4208 = vmatprep.subr.mxu0 %v851
  %4209 = vmatpush1.msra.mxu0 %v850
  %4210 = vmatprep.subr.mxu0 %v847
  %4211 = vmatpush1.msra.mxu0 %v846
  %4212 = vmatprep.subr.mxu0 %v843
  %4213 = vmatpush1.msra.mxu0 %v842
  %4214 = vmatprep.subr.mxu0 %v839
  %4215 = vmatpush1.msra.mxu0 %v838
  %4216 = vmatprep.subr.mxu0 %v835
  %4217 = vmatpush1.msra.mxu0 %v834
  %4218 = vmatprep.subr.mxu0 %v831
  %4219 = vmatpush1.msra.mxu0 %v830
  %4220 = vmatprep.subr.mxu0 %v827
  %4221 = vmatpush1.msra.mxu0 %v826
  %4222 = vmatprep.subr.mxu0 %v823
  %4223 = vmatpush1.msra.mxu0 %v822
  %4224 = vmatprep.subr.mxu0 0.0
  %4225 = vmatpush2.msra.mxu0 0.0
  %4226 = vmatprep.subr.mxu0 0.0
  %4227 = vmatpush2.msra.mxu0 0.0
  %4228 = vmatprep.subr.mxu0 0.0
  %4229 = vmatpush2.msra.mxu0 0.0
  %4230 = vmatprep.subr.mxu0 0.0
  %4231 = vmatpush2.msra.mxu0 0.0
  %4232 = vmatprep.subr.mxu0 0.0
  %4233 = vmatpush2.msra.mxu0 0.0
  %4234 = vmatprep.subr.mxu0 0.0
  %4235 = vmatpush2.msra.mxu0 0.0
  %4236 = vmatprep.subr.mxu0 0.0
  %4237 = vmatpush2.msra.mxu0 0.0
  %4238 = vmatprep.subr.mxu0 0.0
  %4239 = vmatpush2.msra.mxu0 0.0
  %4240 = vmatprep.subr.mxu0 0.0
  %4241 = vmatpush2.msra.mxu0 0.0
  %4242 = vmatprep.subr.mxu0 0.0
  %4243 = vmatpush2.msra.mxu0 0.0
  %4244 = vmatprep.subr.mxu0 0.0
  %4245 = vmatpush2.msra.mxu0 0.0
  %4246 = vmatprep.subr.mxu0 0.0
  %4247 = vmatpush2.msra.mxu0 0.0
  %4248 = vmatprep.subr.mxu0 0.0
  %4249 = vmatpush2.msra.mxu0 0.0
  %4250 = vmatprep.subr.mxu0 0.0
  %4251 = vmatpush2.msra.mxu0 0.0
  %4252 = vmatprep.subr.mxu0 0.0
  %4253 = vmatpush2.msra.mxu0 0.0
  %4254 = vmatprep.subr.mxu0 0.0
  %4255 = vmatpush2.msra.mxu0 0.0
  %4256 = vmatprep.mubr.f32.mxu0 0.0
  %4257 = vmatmul.mubr.f32.gmra.mxu0 %v4187
  %v4258 = vpop.f32.mrf.mxu0
  %v4259 = vadd.f32 0.0, %v4258
  %v4260 = vpop.f32.mrf.mxu0
  %v4261 = vadd.f32 0.0, %v4260
  %4262 = vdwg.mxu0
  %4263 = vmatprep.subr.mxu0 %v885
  %4264 = vmatpush1.msra.mxu0 %v884
  %4265 = vmatprep.subr.mxu0 %v881
  %4266 = vmatpush1.msra.mxu0 %v880
  %4267 = vmatprep.subr.mxu0 %v877
  %4268 = vmatpush1.msra.mxu0 %v876
  %4269 = vmatprep.subr.mxu0 %v873
  %4270 = vmatpush1.msra.mxu0 %v872
  %4271 = vmatprep.subr.mxu0 %v869
  %4272 = vmatpush1.msra.mxu0 %v868
  %4273 = vmatprep.subr.mxu0 %v865
  %4274 = vmatpush1.msra.mxu0 %v864
  %4275 = vmatprep.subr.mxu0 %v861
  %4276 = vmatpush1.msra.mxu0 %v860
  %4277 = vmatprep.subr.mxu0 %v857
  %4278 = vmatpush1.msra.mxu0 %v856
  %4279 = vmatprep.subr.mxu0 %v853
  %4280 = vmatpush1.msra.mxu0 %v852
  %4281 = vmatprep.subr.mxu0 %v849
  %4282 = vmatpush1.msra.mxu0 %v848
  %4283 = vmatprep.subr.mxu0 %v845
  %4284 = vmatpush1.msra.mxu0 %v844
  %4285 = vmatprep.subr.mxu0 %v841
  %4286 = vmatpush1.msra.mxu0 %v840
  %4287 = vmatprep.subr.mxu0 %v837
  %4288 = vmatpush1.msra.mxu0 %v836
  %4289 = vmatprep.subr.mxu0 %v833
  %4290 = vmatpush1.msra.mxu0 %v832
  %4291 = vmatprep.subr.mxu0 %v829
  %4292 = vmatpush1.msra.mxu0 %v828
  %4293 = vmatprep.subr.mxu0 %v825
  %4294 = vmatpush1.msra.mxu0 %v824
  %4295 = vmatprep.subr.mxu0 0.0
  %4296 = vmatpush2.msra.mxu0 0.0
  %4297 = vmatprep.subr.mxu0 0.0
  %4298 = vmatpush2.msra.mxu0 0.0
  %4299 = vmatprep.subr.mxu0 0.0
  %4300 = vmatpush2.msra.mxu0 0.0
  %4301 = vmatprep.subr.mxu0 0.0
  %4302 = vmatpush2.msra.mxu0 0.0
  %4303 = vmatprep.subr.mxu0 0.0
  %4304 = vmatpush2.msra.mxu0 0.0
  %4305 = vmatprep.subr.mxu0 0.0
  %4306 = vmatpush2.msra.mxu0 0.0
  %4307 = vmatprep.subr.mxu0 0.0
  %4308 = vmatpush2.msra.mxu0 0.0
  %4309 = vmatprep.subr.mxu0 0.0
  %4310 = vmatpush2.msra.mxu0 0.0
  %4311 = vmatprep.subr.mxu0 0.0
  %4312 = vmatpush2.msra.mxu0 0.0
  %4313 = vmatprep.subr.mxu0 0.0
  %4314 = vmatpush2.msra.mxu0 0.0
  %4315 = vmatprep.subr.mxu0 0.0
  %4316 = vmatpush2.msra.mxu0 0.0
  %4317 = vmatprep.subr.mxu0 0.0
  %4318 = vmatpush2.msra.mxu0 0.0
  %4319 = vmatprep.subr.mxu0 0.0
  %4320 = vmatpush2.msra.mxu0 0.0
  %4321 = vmatprep.subr.mxu0 0.0
  %4322 = vmatpush2.msra.mxu0 0.0
  %4323 = vmatprep.subr.mxu0 0.0
  %4324 = vmatpush2.msra.mxu0 0.0
  %4325 = vmatprep.subr.mxu0 0.0
  %4326 = vmatpush2.msra.mxu0 0.0
  %4327 = vmatprep.mubr.f32.mxu0 0.0
  %4328 = vmatmul.mubr.f32.gmra.mxu0 %v4187
  %v4329 = vpop.f32.mrf.mxu0
  %v4330 = vadd.f32 0.0, %v4329
  %v4331 = vpop.f32.mrf.mxu0
  %v4332 = vadd.f32 0.0, %v4331
  %4333 = vdwg.mxu0
  %v4334 = vadd.f32 %v4188, %v4259
  %v4335 = vadd.f32 %v4189, %v4261
  %v4336 = vadd.f32 %v4190, %v4330
  %v4337 = vadd.f32 %v4191, %v4332
  %v4338 = vxor.u32 %v4334, 2147483648
  %v4339 = vmul.f32 %v4338, 1.442695
  %v4340 = vpow.pop %v4339
  %v4341 = vadd.f32 %v4340, 1.0
  %v4342 = vrcp.pop %v4341
  %v4343 = vmul.f32 1.0, %v4342
  %v4344 = vxor.u32 %v4335, 2147483648
  %v4345 = vmul.f32 %v4344, 1.442695
  %v4346 = vpow.pop %v4345
  %v4347 = vadd.f32 %v4346, 1.0
  %v4348 = vrcp.pop %v4347
  %v4349 = vmul.f32 1.0, %v4348
  %v4350 = vtanh.pop %v4336
  %v4351 = vxor.u32 %v4337, 2147483648
  %v4352 = vmul.f32 %v4351, 1.442695
  %v4353 = vpow.pop %v4352
  %v4354 = vadd.f32 %v4353, 1.0
  %v4355 = vrcp.pop %v4354
  %v4356 = vmul.f32 1.0, %v4355
  %v4357 = vmul.f32 %v4349, %v4185
  %v4358 = vmul.f32 %v4343, %v4350
  %v4359 = vadd.f32 %v4357, %v4358
  %v4360 = vtanh.pop %v4359
  %v4361 = vmul.f32 %v4356, %v4360
  %v4362 = vld [vmem:[#allocation2 + $0x280] sm:$0xff]
  %v4363 = vld [vmem:[#allocation2 + $0x288] sm:$0xff]
  %v4364 = vld [vmem:[#allocation2 + $0x290] sm:$0xff]
  %v4365 = vld [vmem:[#allocation2 + $0x298] sm:$0xff]
  %4366 = vmatprep.subr.mxu0 %v883
  %4367 = vmatpush1.msra.mxu0 %v882
  %4368 = vmatprep.subr.mxu0 %v879
  %4369 = vmatpush1.msra.mxu0 %v878
  %4370 = vmatprep.subr.mxu0 %v875
  %4371 = vmatpush1.msra.mxu0 %v874
  %4372 = vmatprep.subr.mxu0 %v871
  %4373 = vmatpush1.msra.mxu0 %v870
  %4374 = vmatprep.subr.mxu0 %v867
  %4375 = vmatpush1.msra.mxu0 %v866
  %4376 = vmatprep.subr.mxu0 %v863
  %4377 = vmatpush1.msra.mxu0 %v862
  %4378 = vmatprep.subr.mxu0 %v859
  %4379 = vmatpush1.msra.mxu0 %v858
  %4380 = vmatprep.subr.mxu0 %v855
  %4381 = vmatpush1.msra.mxu0 %v854
  %4382 = vmatprep.subr.mxu0 %v851
  %4383 = vmatpush1.msra.mxu0 %v850
  %4384 = vmatprep.subr.mxu0 %v847
  %4385 = vmatpush1.msra.mxu0 %v846
  %4386 = vmatprep.subr.mxu0 %v843
  %4387 = vmatpush1.msra.mxu0 %v842
  %4388 = vmatprep.subr.mxu0 %v839
  %4389 = vmatpush1.msra.mxu0 %v838
  %4390 = vmatprep.subr.mxu0 %v835
  %4391 = vmatpush1.msra.mxu0 %v834
  %4392 = vmatprep.subr.mxu0 %v831
  %4393 = vmatpush1.msra.mxu0 %v830
  %4394 = vmatprep.subr.mxu0 %v827
  %4395 = vmatpush1.msra.mxu0 %v826
  %4396 = vmatprep.subr.mxu0 %v823
  %4397 = vmatpush1.msra.mxu0 %v822
  %4398 = vmatprep.subr.mxu0 0.0
  %4399 = vmatpush2.msra.mxu0 0.0
  %4400 = vmatprep.subr.mxu0 0.0
  %4401 = vmatpush2.msra.mxu0 0.0
  %4402 = vmatprep.subr.mxu0 0.0
  %4403 = vmatpush2.msra.mxu0 0.0
  %4404 = vmatprep.subr.mxu0 0.0
  %4405 = vmatpush2.msra.mxu0 0.0
  %4406 = vmatprep.subr.mxu0 0.0
  %4407 = vmatpush2.msra.mxu0 0.0
  %4408 = vmatprep.subr.mxu0 0.0
  %4409 = vmatpush2.msra.mxu0 0.0
  %4410 = vmatprep.subr.mxu0 0.0
  %4411 = vmatpush2.msra.mxu0 0.0
  %4412 = vmatprep.subr.mxu0 0.0
  %4413 = vmatpush2.msra.mxu0 0.0
  %4414 = vmatprep.subr.mxu0 0.0
  %4415 = vmatpush2.msra.mxu0 0.0
  %4416 = vmatprep.subr.mxu0 0.0
  %4417 = vmatpush2.msra.mxu0 0.0
  %4418 = vmatprep.subr.mxu0 0.0
  %4419 = vmatpush2.msra.mxu0 0.0
  %4420 = vmatprep.subr.mxu0 0.0
  %4421 = vmatpush2.msra.mxu0 0.0
  %4422 = vmatprep.subr.mxu0 0.0
  %4423 = vmatpush2.msra.mxu0 0.0
  %4424 = vmatprep.subr.mxu0 0.0
  %4425 = vmatpush2.msra.mxu0 0.0
  %4426 = vmatprep.subr.mxu0 0.0
  %4427 = vmatpush2.msra.mxu0 0.0
  %4428 = vmatprep.subr.mxu0 0.0
  %4429 = vmatpush2.msra.mxu0 0.0
  %4430 = vmatprep.mubr.f32.mxu0 0.0
  %4431 = vmatmul.mubr.f32.gmra.mxu0 %v4361
  %v4432 = vpop.f32.mrf.mxu0
  %v4433 = vadd.f32 0.0, %v4432
  %v4434 = vpop.f32.mrf.mxu0
  %v4435 = vadd.f32 0.0, %v4434
  %4436 = vdwg.mxu0
  %4437 = vmatprep.subr.mxu0 %v885
  %4438 = vmatpush1.msra.mxu0 %v884
  %4439 = vmatprep.subr.mxu0 %v881
  %4440 = vmatpush1.msra.mxu0 %v880
  %4441 = vmatprep.subr.mxu0 %v877
  %4442 = vmatpush1.msra.mxu0 %v876
  %4443 = vmatprep.subr.mxu0 %v873
  %4444 = vmatpush1.msra.mxu0 %v872
  %4445 = vmatprep.subr.mxu0 %v869
  %4446 = vmatpush1.msra.mxu0 %v868
  %4447 = vmatprep.subr.mxu0 %v865
  %4448 = vmatpush1.msra.mxu0 %v864
  %4449 = vmatprep.subr.mxu0 %v861
  %4450 = vmatpush1.msra.mxu0 %v860
  %4451 = vmatprep.subr.mxu0 %v857
  %4452 = vmatpush1.msra.mxu0 %v856
  %4453 = vmatprep.subr.mxu0 %v853
  %4454 = vmatpush1.msra.mxu0 %v852
  %4455 = vmatprep.subr.mxu0 %v849
  %4456 = vmatpush1.msra.mxu0 %v848
  %4457 = vmatprep.subr.mxu0 %v845
  %4458 = vmatpush1.msra.mxu0 %v844
  %4459 = vmatprep.subr.mxu0 %v841
  %4460 = vmatpush1.msra.mxu0 %v840
  %4461 = vmatprep.subr.mxu0 %v837
  %4462 = vmatpush1.msra.mxu0 %v836
  %4463 = vmatprep.subr.mxu0 %v833
  %4464 = vmatpush1.msra.mxu0 %v832
  %4465 = vmatprep.subr.mxu0 %v829
  %4466 = vmatpush1.msra.mxu0 %v828
  %4467 = vmatprep.subr.mxu0 %v825
  %4468 = vmatpush1.msra.mxu0 %v824
  %4469 = vmatprep.subr.mxu0 0.0
  %4470 = vmatpush2.msra.mxu0 0.0
  %4471 = vmatprep.subr.mxu0 0.0
  %4472 = vmatpush2.msra.mxu0 0.0
  %4473 = vmatprep.subr.mxu0 0.0
  %4474 = vmatpush2.msra.mxu0 0.0
  %4475 = vmatprep.subr.mxu0 0.0
  %4476 = vmatpush2.msra.mxu0 0.0
  %4477 = vmatprep.subr.mxu0 0.0
  %4478 = vmatpush2.msra.mxu0 0.0
  %4479 = vmatprep.subr.mxu0 0.0
  %4480 = vmatpush2.msra.mxu0 0.0
  %4481 = vmatprep.subr.mxu0 0.0
  %4482 = vmatpush2.msra.mxu0 0.0
  %4483 = vmatprep.subr.mxu0 0.0
  %4484 = vmatpush2.msra.mxu0 0.0
  %4485 = vmatprep.subr.mxu0 0.0
  %4486 = vmatpush2.msra.mxu0 0.0
  %4487 = vmatprep.subr.mxu0 0.0
  %4488 = vmatpush2.msra.mxu0 0.0
  %4489 = vmatprep.subr.mxu0 0.0
  %4490 = vmatpush2.msra.mxu0 0.0
  %4491 = vmatprep.subr.mxu0 0.0
  %4492 = vmatpush2.msra.mxu0 0.0
  %4493 = vmatprep.subr.mxu0 0.0
  %4494 = vmatpush2.msra.mxu0 0.0
  %4495 = vmatprep.subr.mxu0 0.0
  %4496 = vmatpush2.msra.mxu0 0.0
  %4497 = vmatprep.subr.mxu0 0.0
  %4498 = vmatpush2.msra.mxu0 0.0
  %4499 = vmatprep.subr.mxu0 0.0
  %4500 = vmatpush2.msra.mxu0 0.0
  %4501 = vmatprep.mubr.f32.mxu0 0.0
  %4502 = vmatmul.mubr.f32.gmra.mxu0 %v4361
  %v4503 = vpop.f32.mrf.mxu0
  %v4504 = vadd.f32 0.0, %v4503
  %v4505 = vpop.f32.mrf.mxu0
  %v4506 = vadd.f32 0.0, %v4505
  %4507 = vdwg.mxu0
  %v4508 = vadd.f32 %v4362, %v4433
  %v4509 = vadd.f32 %v4363, %v4435
  %v4510 = vadd.f32 %v4364, %v4504
  %v4511 = vadd.f32 %v4365, %v4506
  %v4512 = vxor.u32 %v4508, 2147483648
  %v4513 = vmul.f32 %v4512, 1.442695
  %v4514 = vpow.pop %v4513
  %v4515 = vadd.f32 %v4514, 1.0
  %v4516 = vrcp.pop %v4515
  %v4517 = vmul.f32 1.0, %v4516
  %v4518 = vxor.u32 %v4509, 2147483648
  %v4519 = vmul.f32 %v4518, 1.442695
  %v4520 = vpow.pop %v4519
  %v4521 = vadd.f32 %v4520, 1.0
  %v4522 = vrcp.pop %v4521
  %v4523 = vmul.f32 1.0, %v4522
  %v4524 = vtanh.pop %v4510
  %v4525 = vxor.u32 %v4511, 2147483648
  %v4526 = vmul.f32 %v4525, 1.442695
  %v4527 = vpow.pop %v4526
  %v4528 = vadd.f32 %v4527, 1.0
  %v4529 = vrcp.pop %v4528
  %v4530 = vmul.f32 1.0, %v4529
  %v4531 = vmul.f32 %v4523, %v4359
  %v4532 = vmul.f32 %v4517, %v4524
  %v4533 = vadd.f32 %v4531, %v4532
  %v4534 = vtanh.pop %v4533
  %v4535 = vmul.f32 %v4530, %v4534
  %v4536 = vld [vmem:[#allocation2 + $0x2a0] sm:$0xff]
  %v4537 = vld [vmem:[#allocation2 + $0x2a8] sm:$0xff]
  %v4538 = vld [vmem:[#allocation2 + $0x2b0] sm:$0xff]
  %v4539 = vld [vmem:[#allocation2 + $0x2b8] sm:$0xff]
  %4540 = vmatprep.subr.mxu0 %v883
  %4541 = vmatpush1.msra.mxu0 %v882
  %4542 = vmatprep.subr.mxu0 %v879
  %4543 = vmatpush1.msra.mxu0 %v878
  %4544 = vmatprep.subr.mxu0 %v875
  %4545 = vmatpush1.msra.mxu0 %v874
  %4546 = vmatprep.subr.mxu0 %v871
  %4547 = vmatpush1.msra.mxu0 %v870
  %4548 = vmatprep.subr.mxu0 %v867
  %4549 = vmatpush1.msra.mxu0 %v866
  %4550 = vmatprep.subr.mxu0 %v863
  %4551 = vmatpush1.msra.mxu0 %v862
  %4552 = vmatprep.subr.mxu0 %v859
  %4553 = vmatpush1.msra.mxu0 %v858
  %4554 = vmatprep.subr.mxu0 %v855
  %4555 = vmatpush1.msra.mxu0 %v854
  %4556 = vmatprep.subr.mxu0 %v851
  %4557 = vmatpush1.msra.mxu0 %v850
  %4558 = vmatprep.subr.mxu0 %v847
  %4559 = vmatpush1.msra.mxu0 %v846
  %4560 = vmatprep.subr.mxu0 %v843
  %4561 = vmatpush1.msra.mxu0 %v842
  %4562 = vmatprep.subr.mxu0 %v839
  %4563 = vmatpush1.msra.mxu0 %v838
  %4564 = vmatprep.subr.mxu0 %v835
  %4565 = vmatpush1.msra.mxu0 %v834
  %4566 = vmatprep.subr.mxu0 %v831
  %4567 = vmatpush1.msra.mxu0 %v830
  %4568 = vmatprep.subr.mxu0 %v827
  %4569 = vmatpush1.msra.mxu0 %v826
  %4570 = vmatprep.subr.mxu0 %v823
  %4571 = vmatpush1.msra.mxu0 %v822
  %4572 = vmatprep.subr.mxu0 0.0
  %4573 = vmatpush2.msra.mxu0 0.0
  %4574 = vmatprep.subr.mxu0 0.0
  %4575 = vmatpush2.msra.mxu0 0.0
  %4576 = vmatprep.subr.mxu0 0.0
  %4577 = vmatpush2.msra.mxu0 0.0
  %4578 = vmatprep.subr.mxu0 0.0
  %4579 = vmatpush2.msra.mxu0 0.0
  %4580 = vmatprep.subr.mxu0 0.0
  %4581 = vmatpush2.msra.mxu0 0.0
  %4582 = vmatprep.subr.mxu0 0.0
  %4583 = vmatpush2.msra.mxu0 0.0
  %4584 = vmatprep.subr.mxu0 0.0
  %4585 = vmatpush2.msra.mxu0 0.0
  %4586 = vmatprep.subr.mxu0 0.0
  %4587 = vmatpush2.msra.mxu0 0.0
  %4588 = vmatprep.subr.mxu0 0.0
  %4589 = vmatpush2.msra.mxu0 0.0
  %4590 = vmatprep.subr.mxu0 0.0
  %4591 = vmatpush2.msra.mxu0 0.0
  %4592 = vmatprep.subr.mxu0 0.0
  %4593 = vmatpush2.msra.mxu0 0.0
  %4594 = vmatprep.subr.mxu0 0.0
  %4595 = vmatpush2.msra.mxu0 0.0
  %4596 = vmatprep.subr.mxu0 0.0
  %4597 = vmatpush2.msra.mxu0 0.0
  %4598 = vmatprep.subr.mxu0 0.0
  %4599 = vmatpush2.msra.mxu0 0.0
  %4600 = vmatprep.subr.mxu0 0.0
  %4601 = vmatpush2.msra.mxu0 0.0
  %4602 = vmatprep.subr.mxu0 0.0
  %4603 = vmatpush2.msra.mxu0 0.0
  %4604 = vmatprep.mubr.f32.mxu0 0.0
  %4605 = vmatmul.mubr.f32.gmra.mxu0 %v4535
  %v4606 = vpop.f32.mrf.mxu0
  %v4607 = vadd.f32 0.0, %v4606
  %v4608 = vpop.f32.mrf.mxu0
  %v4609 = vadd.f32 0.0, %v4608
  %4610 = vdwg.mxu0
  %4611 = vmatprep.subr.mxu0 %v885
  %4612 = vmatpush1.msra.mxu0 %v884
  %4613 = vmatprep.subr.mxu0 %v881
  %4614 = vmatpush1.msra.mxu0 %v880
  %4615 = vmatprep.subr.mxu0 %v877
  %4616 = vmatpush1.msra.mxu0 %v876
  %4617 = vmatprep.subr.mxu0 %v873
  %4618 = vmatpush1.msra.mxu0 %v872
  %4619 = vmatprep.subr.mxu0 %v869
  %4620 = vmatpush1.msra.mxu0 %v868
  %4621 = vmatprep.subr.mxu0 %v865
  %4622 = vmatpush1.msra.mxu0 %v864
  %4623 = vmatprep.subr.mxu0 %v861
  %4624 = vmatpush1.msra.mxu0 %v860
  %4625 = vmatprep.subr.mxu0 %v857
  %4626 = vmatpush1.msra.mxu0 %v856
  %4627 = vmatprep.subr.mxu0 %v853
  %4628 = vmatpush1.msra.mxu0 %v852
  %4629 = vmatprep.subr.mxu0 %v849
  %4630 = vmatpush1.msra.mxu0 %v848
  %4631 = vmatprep.subr.mxu0 %v845
  %4632 = vmatpush1.msra.mxu0 %v844
  %4633 = vmatprep.subr.mxu0 %v841
  %4634 = vmatpush1.msra.mxu0 %v840
  %4635 = vmatprep.subr.mxu0 %v837
  %4636 = vmatpush1.msra.mxu0 %v836
  %4637 = vmatprep.subr.mxu0 %v833
  %4638 = vmatpush1.msra.mxu0 %v832
  %4639 = vmatprep.subr.mxu0 %v829
  %4640 = vmatpush1.msra.mxu0 %v828
  %4641 = vmatprep.subr.mxu0 %v825
  %4642 = vmatpush1.msra.mxu0 %v824
  %4643 = vmatprep.subr.mxu0 0.0
  %4644 = vmatpush2.msra.mxu0 0.0
  %4645 = vmatprep.subr.mxu0 0.0
  %4646 = vmatpush2.msra.mxu0 0.0
  %4647 = vmatprep.subr.mxu0 0.0
  %4648 = vmatpush2.msra.mxu0 0.0
  %4649 = vmatprep.subr.mxu0 0.0
  %4650 = vmatpush2.msra.mxu0 0.0
  %4651 = vmatprep.subr.mxu0 0.0
  %4652 = vmatpush2.msra.mxu0 0.0
  %4653 = vmatprep.subr.mxu0 0.0
  %4654 = vmatpush2.msra.mxu0 0.0
  %4655 = vmatprep.subr.mxu0 0.0
  %4656 = vmatpush2.msra.mxu0 0.0
  %4657 = vmatprep.subr.mxu0 0.0
  %4658 = vmatpush2.msra.mxu0 0.0
  %4659 = vmatprep.subr.mxu0 0.0
  %4660 = vmatpush2.msra.mxu0 0.0
  %4661 = vmatprep.subr.mxu0 0.0
  %4662 = vmatpush2.msra.mxu0 0.0
  %4663 = vmatprep.subr.mxu0 0.0
  %4664 = vmatpush2.msra.mxu0 0.0
  %4665 = vmatprep.subr.mxu0 0.0
  %4666 = vmatpush2.msra.mxu0 0.0
  %4667 = vmatprep.subr.mxu0 0.0
  %4668 = vmatpush2.msra.mxu0 0.0
  %4669 = vmatprep.subr.mxu0 0.0
  %4670 = vmatpush2.msra.mxu0 0.0
  %4671 = vmatprep.subr.mxu0 0.0
  %4672 = vmatpush2.msra.mxu0 0.0
  %4673 = vmatprep.subr.mxu0 0.0
  %4674 = vmatpush2.msra.mxu0 0.0
  %4675 = vmatprep.mubr.f32.mxu0 0.0
  %4676 = vmatmul.mubr.f32.gmra.mxu0 %v4535
  %v4677 = vpop.f32.mrf.mxu0
  %v4678 = vadd.f32 0.0, %v4677
  %v4679 = vpop.f32.mrf.mxu0
  %v4680 = vadd.f32 0.0, %v4679
  %4681 = vdwg.mxu0
  %v4682 = vadd.f32 %v4536, %v4607
  %v4683 = vadd.f32 %v4537, %v4609
  %v4684 = vadd.f32 %v4538, %v4678
  %v4685 = vadd.f32 %v4539, %v4680
  %v4686 = vxor.u32 %v4682, 2147483648
  %v4687 = vmul.f32 %v4686, 1.442695
  %v4688 = vpow.pop %v4687
  %v4689 = vadd.f32 %v4688, 1.0
  %v4690 = vrcp.pop %v4689
  %v4691 = vmul.f32 1.0, %v4690
  %v4692 = vxor.u32 %v4683, 2147483648
  %v4693 = vmul.f32 %v4692, 1.442695
  %v4694 = vpow.pop %v4693
  %v4695 = vadd.f32 %v4694, 1.0
  %v4696 = vrcp.pop %v4695
  %v4697 = vmul.f32 1.0, %v4696
  %v4698 = vtanh.pop %v4684
  %v4699 = vxor.u32 %v4685, 2147483648
  %v4700 = vmul.f32 %v4699, 1.442695
  %v4701 = vpow.pop %v4700
  %v4702 = vadd.f32 %v4701, 1.0
  %v4703 = vrcp.pop %v4702
  %v4704 = vmul.f32 1.0, %v4703
  %v4705 = vmul.f32 %v4697, %v4533
  %v4706 = vmul.f32 %v4691, %v4698
  %v4707 = vadd.f32 %v4705, %v4706
  %v4708 = vtanh.pop %v4707
  %v4709 = vmul.f32 %v4704, %v4708
  %v4710 = vld [vmem:[#allocation2 + $0x2c0] sm:$0xff]
  %v4711 = vld [vmem:[#allocation2 + $0x2c8] sm:$0xff]
  %v4712 = vld [vmem:[#allocation2 + $0x2d0] sm:$0xff]
  %v4713 = vld [vmem:[#allocation2 + $0x2d8] sm:$0xff]
  %4714 = vmatprep.subr.mxu0 %v883
  %4715 = vmatpush1.msra.mxu0 %v882
  %4716 = vmatprep.subr.mxu0 %v879
  %4717 = vmatpush1.msra.mxu0 %v878
  %4718 = vmatprep.subr.mxu0 %v875
  %4719 = vmatpush1.msra.mxu0 %v874
  %4720 = vmatprep.subr.mxu0 %v871
  %4721 = vmatpush1.msra.mxu0 %v870
  %4722 = vmatprep.subr.mxu0 %v867
  %4723 = vmatpush1.msra.mxu0 %v866
  %4724 = vmatprep.subr.mxu0 %v863
  %4725 = vmatpush1.msra.mxu0 %v862
  %4726 = vmatprep.subr.mxu0 %v859
  %4727 = vmatpush1.msra.mxu0 %v858
  %4728 = vmatprep.subr.mxu0 %v855
  %4729 = vmatpush1.msra.mxu0 %v854
  %4730 = vmatprep.subr.mxu0 %v851
  %4731 = vmatpush1.msra.mxu0 %v850
  %4732 = vmatprep.subr.mxu0 %v847
  %4733 = vmatpush1.msra.mxu0 %v846
  %4734 = vmatprep.subr.mxu0 %v843
  %4735 = vmatpush1.msra.mxu0 %v842
  %4736 = vmatprep.subr.mxu0 %v839
  %4737 = vmatpush1.msra.mxu0 %v838
  %4738 = vmatprep.subr.mxu0 %v835
  %4739 = vmatpush1.msra.mxu0 %v834
  %4740 = vmatprep.subr.mxu0 %v831
  %4741 = vmatpush1.msra.mxu0 %v830
  %4742 = vmatprep.subr.mxu0 %v827
  %4743 = vmatpush1.msra.mxu0 %v826
  %4744 = vmatprep.subr.mxu0 %v823
  %4745 = vmatpush1.msra.mxu0 %v822
  %4746 = vmatprep.subr.mxu0 0.0
  %4747 = vmatpush2.msra.mxu0 0.0
  %4748 = vmatprep.subr.mxu0 0.0
  %4749 = vmatpush2.msra.mxu0 0.0
  %4750 = vmatprep.subr.mxu0 0.0
  %4751 = vmatpush2.msra.mxu0 0.0
  %4752 = vmatprep.subr.mxu0 0.0
  %4753 = vmatpush2.msra.mxu0 0.0
  %4754 = vmatprep.subr.mxu0 0.0
  %4755 = vmatpush2.msra.mxu0 0.0
  %4756 = vmatprep.subr.mxu0 0.0
  %4757 = vmatpush2.msra.mxu0 0.0
  %4758 = vmatprep.subr.mxu0 0.0
  %4759 = vmatpush2.msra.mxu0 0.0
  %4760 = vmatprep.subr.mxu0 0.0
  %4761 = vmatpush2.msra.mxu0 0.0
  %4762 = vmatprep.subr.mxu0 0.0
  %4763 = vmatpush2.msra.mxu0 0.0
  %4764 = vmatprep.subr.mxu0 0.0
  %4765 = vmatpush2.msra.mxu0 0.0
  %4766 = vmatprep.subr.mxu0 0.0
  %4767 = vmatpush2.msra.mxu0 0.0
  %4768 = vmatprep.subr.mxu0 0.0
  %4769 = vmatpush2.msra.mxu0 0.0
  %4770 = vmatprep.subr.mxu0 0.0
  %4771 = vmatpush2.msra.mxu0 0.0
  %4772 = vmatprep.subr.mxu0 0.0
  %4773 = vmatpush2.msra.mxu0 0.0
  %4774 = vmatprep.subr.mxu0 0.0
  %4775 = vmatpush2.msra.mxu0 0.0
  %4776 = vmatprep.subr.mxu0 0.0
  %4777 = vmatpush2.msra.mxu0 0.0
  %4778 = vmatprep.mubr.f32.mxu0 0.0
  %4779 = vmatmul.mubr.f32.gmra.mxu0 %v4709
  %v4780 = vpop.f32.mrf.mxu0
  %v4781 = vadd.f32 0.0, %v4780
  %v4782 = vpop.f32.mrf.mxu0
  %v4783 = vadd.f32 0.0, %v4782
  %4784 = vdwg.mxu0
  %4785 = vmatprep.subr.mxu0 %v885
  %4786 = vmatpush1.msra.mxu0 %v884
  %4787 = vmatprep.subr.mxu0 %v881
  %4788 = vmatpush1.msra.mxu0 %v880
  %4789 = vmatprep.subr.mxu0 %v877
  %4790 = vmatpush1.msra.mxu0 %v876
  %4791 = vmatprep.subr.mxu0 %v873
  %4792 = vmatpush1.msra.mxu0 %v872
  %4793 = vmatprep.subr.mxu0 %v869
  %4794 = vmatpush1.msra.mxu0 %v868
  %4795 = vmatprep.subr.mxu0 %v865
  %4796 = vmatpush1.msra.mxu0 %v864
  %4797 = vmatprep.subr.mxu0 %v861
  %4798 = vmatpush1.msra.mxu0 %v860
  %4799 = vmatprep.subr.mxu0 %v857
  %4800 = vmatpush1.msra.mxu0 %v856
  %4801 = vmatprep.subr.mxu0 %v853
  %4802 = vmatpush1.msra.mxu0 %v852
  %4803 = vmatprep.subr.mxu0 %v849
  %4804 = vmatpush1.msra.mxu0 %v848
  %4805 = vmatprep.subr.mxu0 %v845
  %4806 = vmatpush1.msra.mxu0 %v844
  %4807 = vmatprep.subr.mxu0 %v841
  %4808 = vmatpush1.msra.mxu0 %v840
  %4809 = vmatprep.subr.mxu0 %v837
  %4810 = vmatpush1.msra.mxu0 %v836
  %4811 = vmatprep.subr.mxu0 %v833
  %4812 = vmatpush1.msra.mxu0 %v832
  %4813 = vmatprep.subr.mxu0 %v829
  %4814 = vmatpush1.msra.mxu0 %v828
  %4815 = vmatprep.subr.mxu0 %v825
  %4816 = vmatpush1.msra.mxu0 %v824
  %4817 = vmatprep.subr.mxu0 0.0
  %4818 = vmatpush2.msra.mxu0 0.0
  %4819 = vmatprep.subr.mxu0 0.0
  %4820 = vmatpush2.msra.mxu0 0.0
  %4821 = vmatprep.subr.mxu0 0.0
  %4822 = vmatpush2.msra.mxu0 0.0
  %4823 = vmatprep.subr.mxu0 0.0
  %4824 = vmatpush2.msra.mxu0 0.0
  %4825 = vmatprep.subr.mxu0 0.0
  %4826 = vmatpush2.msra.mxu0 0.0
  %4827 = vmatprep.subr.mxu0 0.0
  %4828 = vmatpush2.msra.mxu0 0.0
  %4829 = vmatprep.subr.mxu0 0.0
  %4830 = vmatpush2.msra.mxu0 0.0
  %4831 = vmatprep.subr.mxu0 0.0
  %4832 = vmatpush2.msra.mxu0 0.0
  %4833 = vmatprep.subr.mxu0 0.0
  %4834 = vmatpush2.msra.mxu0 0.0
  %4835 = vmatprep.subr.mxu0 0.0
  %4836 = vmatpush2.msra.mxu0 0.0
  %4837 = vmatprep.subr.mxu0 0.0
  %4838 = vmatpush2.msra.mxu0 0.0
  %4839 = vmatprep.subr.mxu0 0.0
  %4840 = vmatpush2.msra.mxu0 0.0
  %4841 = vmatprep.subr.mxu0 0.0
  %4842 = vmatpush2.msra.mxu0 0.0
  %4843 = vmatprep.subr.mxu0 0.0
  %4844 = vmatpush2.msra.mxu0 0.0
  %4845 = vmatprep.subr.mxu0 0.0
  %4846 = vmatpush2.msra.mxu0 0.0
  %4847 = vmatprep.subr.mxu0 0.0
  %4848 = vmatpush2.msra.mxu0 0.0
  %4849 = vmatprep.mubr.f32.mxu0 0.0
  %4850 = vmatmul.mubr.f32.gmra.mxu0 %v4709
  %v4851 = vpop.f32.mrf.mxu0
  %v4852 = vadd.f32 0.0, %v4851
  %v4853 = vpop.f32.mrf.mxu0
  %v4854 = vadd.f32 0.0, %v4853
  %4855 = vdwg.mxu0
  %v4856 = vadd.f32 %v4710, %v4781
  %v4857 = vadd.f32 %v4711, %v4783
  %v4858 = vadd.f32 %v4712, %v4852
  %v4859 = vadd.f32 %v4713, %v4854
  %v4860 = vxor.u32 %v4856, 2147483648
  %v4861 = vmul.f32 %v4860, 1.442695
  %v4862 = vpow.pop %v4861
  %v4863 = vadd.f32 %v4862, 1.0
  %v4864 = vrcp.pop %v4863
  %v4865 = vmul.f32 1.0, %v4864
  %v4866 = vxor.u32 %v4857, 2147483648
  %v4867 = vmul.f32 %v4866, 1.442695
  %v4868 = vpow.pop %v4867
  %v4869 = vadd.f32 %v4868, 1.0
  %v4870 = vrcp.pop %v4869
  %v4871 = vmul.f32 1.0, %v4870
  %v4872 = vtanh.pop %v4858
  %v4873 = vxor.u32 %v4859, 2147483648
  %v4874 = vmul.f32 %v4873, 1.442695
  %v4875 = vpow.pop %v4874
  %v4876 = vadd.f32 %v4875, 1.0
  %v4877 = vrcp.pop %v4876
  %v4878 = vmul.f32 1.0, %v4877
  %v4879 = vmul.f32 %v4871, %v4707
  %v4880 = vmul.f32 %v4865, %v4872
  %v4881 = vadd.f32 %v4879, %v4880
  %v4882 = vtanh.pop %v4881
  %v4883 = vmul.f32 %v4878, %v4882
  %v4884 = vld [vmem:[#allocation2 + $0x2e0] sm:$0xff]
  %v4885 = vld [vmem:[#allocation2 + $0x2e8] sm:$0xff]
  %v4886 = vld [vmem:[#allocation2 + $0x2f0] sm:$0xff]
  %v4887 = vld [vmem:[#allocation2 + $0x2f8] sm:$0xff]
  %4888 = vmatprep.subr.mxu0 %v883
  %4889 = vmatpush1.msra.mxu0 %v882
  %4890 = vmatprep.subr.mxu0 %v879
  %4891 = vmatpush1.msra.mxu0 %v878
  %4892 = vmatprep.subr.mxu0 %v875
  %4893 = vmatpush1.msra.mxu0 %v874
  %4894 = vmatprep.subr.mxu0 %v871
  %4895 = vmatpush1.msra.mxu0 %v870
  %4896 = vmatprep.subr.mxu0 %v867
  %4897 = vmatpush1.msra.mxu0 %v866
  %4898 = vmatprep.subr.mxu0 %v863
  %4899 = vmatpush1.msra.mxu0 %v862
  %4900 = vmatprep.subr.mxu0 %v859
  %4901 = vmatpush1.msra.mxu0 %v858
  %4902 = vmatprep.subr.mxu0 %v855
  %4903 = vmatpush1.msra.mxu0 %v854
  %4904 = vmatprep.subr.mxu0 %v851
  %4905 = vmatpush1.msra.mxu0 %v850
  %4906 = vmatprep.subr.mxu0 %v847
  %4907 = vmatpush1.msra.mxu0 %v846
  %4908 = vmatprep.subr.mxu0 %v843
  %4909 = vmatpush1.msra.mxu0 %v842
  %4910 = vmatprep.subr.mxu0 %v839
  %4911 = vmatpush1.msra.mxu0 %v838
  %4912 = vmatprep.subr.mxu0 %v835
  %4913 = vmatpush1.msra.mxu0 %v834
  %4914 = vmatprep.subr.mxu0 %v831
  %4915 = vmatpush1.msra.mxu0 %v830
  %4916 = vmatprep.subr.mxu0 %v827
  %4917 = vmatpush1.msra.mxu0 %v826
  %4918 = vmatprep.subr.mxu0 %v823
  %4919 = vmatpush1.msra.mxu0 %v822
  %4920 = vmatprep.subr.mxu0 0.0
  %4921 = vmatpush2.msra.mxu0 0.0
  %4922 = vmatprep.subr.mxu0 0.0
  %4923 = vmatpush2.msra.mxu0 0.0
  %4924 = vmatprep.subr.mxu0 0.0
  %4925 = vmatpush2.msra.mxu0 0.0
  %4926 = vmatprep.subr.mxu0 0.0
  %4927 = vmatpush2.msra.mxu0 0.0
  %4928 = vmatprep.subr.mxu0 0.0
  %4929 = vmatpush2.msra.mxu0 0.0
  %4930 = vmatprep.subr.mxu0 0.0
  %4931 = vmatpush2.msra.mxu0 0.0
  %4932 = vmatprep.subr.mxu0 0.0
  %4933 = vmatpush2.msra.mxu0 0.0
  %4934 = vmatprep.subr.mxu0 0.0
  %4935 = vmatpush2.msra.mxu0 0.0
  %4936 = vmatprep.subr.mxu0 0.0
  %4937 = vmatpush2.msra.mxu0 0.0
  %4938 = vmatprep.subr.mxu0 0.0
  %4939 = vmatpush2.msra.mxu0 0.0
  %4940 = vmatprep.subr.mxu0 0.0
  %4941 = vmatpush2.msra.mxu0 0.0
  %4942 = vmatprep.subr.mxu0 0.0
  %4943 = vmatpush2.msra.mxu0 0.0
  %4944 = vmatprep.subr.mxu0 0.0
  %4945 = vmatpush2.msra.mxu0 0.0
  %4946 = vmatprep.subr.mxu0 0.0
  %4947 = vmatpush2.msra.mxu0 0.0
  %4948 = vmatprep.subr.mxu0 0.0
  %4949 = vmatpush2.msra.mxu0 0.0
  %4950 = vmatprep.subr.mxu0 0.0
  %4951 = vmatpush2.msra.mxu0 0.0
  %4952 = vmatprep.mubr.f32.mxu0 0.0
  %4953 = vmatmul.mubr.f32.gmra.mxu0 %v4883
  %v4954 = vpop.f32.mrf.mxu0
  %v4955 = vadd.f32 0.0, %v4954
  %v4956 = vpop.f32.mrf.mxu0
  %v4957 = vadd.f32 0.0, %v4956
  %4958 = vdwg.mxu0
  %4959 = vmatprep.subr.mxu0 %v885
  %4960 = vmatpush1.msra.mxu0 %v884
  %4961 = vmatprep.subr.mxu0 %v881
  %4962 = vmatpush1.msra.mxu0 %v880
  %4963 = vmatprep.subr.mxu0 %v877
  %4964 = vmatpush1.msra.mxu0 %v876
  %4965 = vmatprep.subr.mxu0 %v873
  %4966 = vmatpush1.msra.mxu0 %v872
  %4967 = vmatprep.subr.mxu0 %v869
  %4968 = vmatpush1.msra.mxu0 %v868
  %4969 = vmatprep.subr.mxu0 %v865
  %4970 = vmatpush1.msra.mxu0 %v864
  %4971 = vmatprep.subr.mxu0 %v861
  %4972 = vmatpush1.msra.mxu0 %v860
  %4973 = vmatprep.subr.mxu0 %v857
  %4974 = vmatpush1.msra.mxu0 %v856
  %4975 = vmatprep.subr.mxu0 %v853
  %4976 = vmatpush1.msra.mxu0 %v852
  %4977 = vmatprep.subr.mxu0 %v849
  %4978 = vmatpush1.msra.mxu0 %v848
  %4979 = vmatprep.subr.mxu0 %v845
  %4980 = vmatpush1.msra.mxu0 %v844
  %4981 = vmatprep.subr.mxu0 %v841
  %4982 = vmatpush1.msra.mxu0 %v840
  %4983 = vmatprep.subr.mxu0 %v837
  %4984 = vmatpush1.msra.mxu0 %v836
  %4985 = vmatprep.subr.mxu0 %v833
  %4986 = vmatpush1.msra.mxu0 %v832
  %4987 = vmatprep.subr.mxu0 %v829
  %4988 = vmatpush1.msra.mxu0 %v828
  %4989 = vmatprep.subr.mxu0 %v825
  %4990 = vmatpush1.msra.mxu0 %v824
  %4991 = vmatprep.subr.mxu0 0.0
  %4992 = vmatpush2.msra.mxu0 0.0
  %4993 = vmatprep.subr.mxu0 0.0
  %4994 = vmatpush2.msra.mxu0 0.0
  %4995 = vmatprep.subr.mxu0 0.0
  %4996 = vmatpush2.msra.mxu0 0.0
  %4997 = vmatprep.subr.mxu0 0.0
  %4998 = vmatpush2.msra.mxu0 0.0
  %4999 = vmatprep.subr.mxu0 0.0
  %5000 = vmatpush2.msra.mxu0 0.0
  %5001 = vmatprep.subr.mxu0 0.0
  %5002 = vmatpush2.msra.mxu0 0.0
  %5003 = vmatprep.subr.mxu0 0.0
  %5004 = vmatpush2.msra.mxu0 0.0
  %5005 = vmatprep.subr.mxu0 0.0
  %5006 = vmatpush2.msra.mxu0 0.0
  %5007 = vmatprep.subr.mxu0 0.0
  %5008 = vmatpush2.msra.mxu0 0.0
  %5009 = vmatprep.subr.mxu0 0.0
  %5010 = vmatpush2.msra.mxu0 0.0
  %5011 = vmatprep.subr.mxu0 0.0
  %5012 = vmatpush2.msra.mxu0 0.0
  %5013 = vmatprep.subr.mxu0 0.0
  %5014 = vmatpush2.msra.mxu0 0.0
  %5015 = vmatprep.subr.mxu0 0.0
  %5016 = vmatpush2.msra.mxu0 0.0
  %5017 = vmatprep.subr.mxu0 0.0
  %5018 = vmatpush2.msra.mxu0 0.0
  %5019 = vmatprep.subr.mxu0 0.0
  %5020 = vmatpush2.msra.mxu0 0.0
  %5021 = vmatprep.subr.mxu0 0.0
  %5022 = vmatpush2.msra.mxu0 0.0
  %5023 = vmatprep.mubr.f32.mxu0 0.0
  %5024 = vmatmul.mubr.f32.gmra.mxu0 %v4883
  %v5025 = vpop.f32.mrf.mxu0
  %v5026 = vadd.f32 0.0, %v5025
  %v5027 = vpop.f32.mrf.mxu0
  %v5028 = vadd.f32 0.0, %v5027
  %5029 = vdwg.mxu0
  %v5030 = vadd.f32 %v4884, %v4955
  %v5031 = vadd.f32 %v4885, %v4957
  %v5032 = vadd.f32 %v4886, %v5026
  %v5033 = vadd.f32 %v4887, %v5028
  %v5034 = vxor.u32 %v5030, 2147483648
  %v5035 = vmul.f32 %v5034, 1.442695
  %v5036 = vpow.pop %v5035
  %v5037 = vadd.f32 %v5036, 1.0
  %v5038 = vrcp.pop %v5037
  %v5039 = vmul.f32 1.0, %v5038
  %v5040 = vxor.u32 %v5031, 2147483648
  %v5041 = vmul.f32 %v5040, 1.442695
  %v5042 = vpow.pop %v5041
  %v5043 = vadd.f32 %v5042, 1.0
  %v5044 = vrcp.pop %v5043
  %v5045 = vmul.f32 1.0, %v5044
  %v5046 = vtanh.pop %v5032
  %v5047 = vxor.u32 %v5033, 2147483648
  %v5048 = vmul.f32 %v5047, 1.442695
  %v5049 = vpow.pop %v5048
  %v5050 = vadd.f32 %v5049, 1.0
  %v5051 = vrcp.pop %v5050
  %v5052 = vmul.f32 1.0, %v5051
  %v5053 = vmul.f32 %v5045, %v4881
  %v5054 = vmul.f32 %v5039, %v5046
  %v5055 = vadd.f32 %v5053, %v5054
  %v5056 = vtanh.pop %v5055
  %v5057 = vmul.f32 %v5052, %v5056
  %v5058 = vld [vmem:[#allocation2 + $0x300] sm:$0xff]
  %v5059 = vld [vmem:[#allocation2 + $0x308] sm:$0xff]
  %v5060 = vld [vmem:[#allocation2 + $0x310] sm:$0xff]
  %v5061 = vld [vmem:[#allocation2 + $0x318] sm:$0xff]
  %5062 = vmatprep.subr.mxu0 %v883
  %5063 = vmatpush1.msra.mxu0 %v882
  %5064 = vmatprep.subr.mxu0 %v879
  %5065 = vmatpush1.msra.mxu0 %v878
  %5066 = vmatprep.subr.mxu0 %v875
  %5067 = vmatpush1.msra.mxu0 %v874
  %5068 = vmatprep.subr.mxu0 %v871
  %5069 = vmatpush1.msra.mxu0 %v870
  %5070 = vmatprep.subr.mxu0 %v867
  %5071 = vmatpush1.msra.mxu0 %v866
  %5072 = vmatprep.subr.mxu0 %v863
  %5073 = vmatpush1.msra.mxu0 %v862
  %5074 = vmatprep.subr.mxu0 %v859
  %5075 = vmatpush1.msra.mxu0 %v858
  %5076 = vmatprep.subr.mxu0 %v855
  %5077 = vmatpush1.msra.mxu0 %v854
  %5078 = vmatprep.subr.mxu0 %v851
  %5079 = vmatpush1.msra.mxu0 %v850
  %5080 = vmatprep.subr.mxu0 %v847
  %5081 = vmatpush1.msra.mxu0 %v846
  %5082 = vmatprep.subr.mxu0 %v843
  %5083 = vmatpush1.msra.mxu0 %v842
  %5084 = vmatprep.subr.mxu0 %v839
  %5085 = vmatpush1.msra.mxu0 %v838
  %5086 = vmatprep.subr.mxu0 %v835
  %5087 = vmatpush1.msra.mxu0 %v834
  %5088 = vmatprep.subr.mxu0 %v831
  %5089 = vmatpush1.msra.mxu0 %v830
  %5090 = vmatprep.subr.mxu0 %v827
  %5091 = vmatpush1.msra.mxu0 %v826
  %5092 = vmatprep.subr.mxu0 %v823
  %5093 = vmatpush1.msra.mxu0 %v822
  %5094 = vmatprep.subr.mxu0 0.0
  %5095 = vmatpush2.msra.mxu0 0.0
  %5096 = vmatprep.subr.mxu0 0.0
  %5097 = vmatpush2.msra.mxu0 0.0
  %5098 = vmatprep.subr.mxu0 0.0
  %5099 = vmatpush2.msra.mxu0 0.0
  %5100 = vmatprep.subr.mxu0 0.0
  %5101 = vmatpush2.msra.mxu0 0.0
  %5102 = vmatprep.subr.mxu0 0.0
  %5103 = vmatpush2.msra.mxu0 0.0
  %5104 = vmatprep.subr.mxu0 0.0
  %5105 = vmatpush2.msra.mxu0 0.0
  %5106 = vmatprep.subr.mxu0 0.0
  %5107 = vmatpush2.msra.mxu0 0.0
  %5108 = vmatprep.subr.mxu0 0.0
  %5109 = vmatpush2.msra.mxu0 0.0
  %5110 = vmatprep.subr.mxu0 0.0
  %5111 = vmatpush2.msra.mxu0 0.0
  %5112 = vmatprep.subr.mxu0 0.0
  %5113 = vmatpush2.msra.mxu0 0.0
  %5114 = vmatprep.subr.mxu0 0.0
  %5115 = vmatpush2.msra.mxu0 0.0
  %5116 = vmatprep.subr.mxu0 0.0
  %5117 = vmatpush2.msra.mxu0 0.0
  %5118 = vmatprep.subr.mxu0 0.0
  %5119 = vmatpush2.msra.mxu0 0.0
  %5120 = vmatprep.subr.mxu0 0.0
  %5121 = vmatpush2.msra.mxu0 0.0
  %5122 = vmatprep.subr.mxu0 0.0
  %5123 = vmatpush2.msra.mxu0 0.0
  %5124 = vmatprep.subr.mxu0 0.0
  %5125 = vmatpush2.msra.mxu0 0.0
  %5126 = vmatprep.mubr.f32.mxu0 0.0
  %5127 = vmatmul.mubr.f32.gmra.mxu0 %v5057
  %v5128 = vpop.f32.mrf.mxu0
  %v5129 = vadd.f32 0.0, %v5128
  %v5130 = vpop.f32.mrf.mxu0
  %v5131 = vadd.f32 0.0, %v5130
  %5132 = vdwg.mxu0
  %5133 = vmatprep.subr.mxu0 %v885
  %5134 = vmatpush1.msra.mxu0 %v884
  %5135 = vmatprep.subr.mxu0 %v881
  %5136 = vmatpush1.msra.mxu0 %v880
  %5137 = vmatprep.subr.mxu0 %v877
  %5138 = vmatpush1.msra.mxu0 %v876
  %5139 = vmatprep.subr.mxu0 %v873
  %5140 = vmatpush1.msra.mxu0 %v872
  %5141 = vmatprep.subr.mxu0 %v869
  %5142 = vmatpush1.msra.mxu0 %v868
  %5143 = vmatprep.subr.mxu0 %v865
  %5144 = vmatpush1.msra.mxu0 %v864
  %5145 = vmatprep.subr.mxu0 %v861
  %5146 = vmatpush1.msra.mxu0 %v860
  %5147 = vmatprep.subr.mxu0 %v857
  %5148 = vmatpush1.msra.mxu0 %v856
  %5149 = vmatprep.subr.mxu0 %v853
  %5150 = vmatpush1.msra.mxu0 %v852
  %5151 = vmatprep.subr.mxu0 %v849
  %5152 = vmatpush1.msra.mxu0 %v848
  %5153 = vmatprep.subr.mxu0 %v845
  %5154 = vmatpush1.msra.mxu0 %v844
  %5155 = vmatprep.subr.mxu0 %v841
  %5156 = vmatpush1.msra.mxu0 %v840
  %5157 = vmatprep.subr.mxu0 %v837
  %5158 = vmatpush1.msra.mxu0 %v836
  %5159 = vmatprep.subr.mxu0 %v833
  %5160 = vmatpush1.msra.mxu0 %v832
  %5161 = vmatprep.subr.mxu0 %v829
  %5162 = vmatpush1.msra.mxu0 %v828
  %5163 = vmatprep.subr.mxu0 %v825
  %5164 = vmatpush1.msra.mxu0 %v824
  %5165 = vmatprep.subr.mxu0 0.0
  %5166 = vmatpush2.msra.mxu0 0.0
  %5167 = vmatprep.subr.mxu0 0.0
  %5168 = vmatpush2.msra.mxu0 0.0
  %5169 = vmatprep.subr.mxu0 0.0
  %5170 = vmatpush2.msra.mxu0 0.0
  %5171 = vmatprep.subr.mxu0 0.0
  %5172 = vmatpush2.msra.mxu0 0.0
  %5173 = vmatprep.subr.mxu0 0.0
  %5174 = vmatpush2.msra.mxu0 0.0
  %5175 = vmatprep.subr.mxu0 0.0
  %5176 = vmatpush2.msra.mxu0 0.0
  %5177 = vmatprep.subr.mxu0 0.0
  %5178 = vmatpush2.msra.mxu0 0.0
  %5179 = vmatprep.subr.mxu0 0.0
  %5180 = vmatpush2.msra.mxu0 0.0
  %5181 = vmatprep.subr.mxu0 0.0
  %5182 = vmatpush2.msra.mxu0 0.0
  %5183 = vmatprep.subr.mxu0 0.0
  %5184 = vmatpush2.msra.mxu0 0.0
  %5185 = vmatprep.subr.mxu0 0.0
  %5186 = vmatpush2.msra.mxu0 0.0
  %5187 = vmatprep.subr.mxu0 0.0
  %5188 = vmatpush2.msra.mxu0 0.0
  %5189 = vmatprep.subr.mxu0 0.0
  %5190 = vmatpush2.msra.mxu0 0.0
  %5191 = vmatprep.subr.mxu0 0.0
  %5192 = vmatpush2.msra.mxu0 0.0
  %5193 = vmatprep.subr.mxu0 0.0
  %5194 = vmatpush2.msra.mxu0 0.0
  %5195 = vmatprep.subr.mxu0 0.0
  %5196 = vmatpush2.msra.mxu0 0.0
  %5197 = vmatprep.mubr.f32.mxu0 0.0
  %5198 = vmatmul.mubr.f32.gmra.mxu0 %v5057
  %v5199 = vpop.f32.mrf.mxu0
  %v5200 = vadd.f32 0.0, %v5199
  %v5201 = vpop.f32.mrf.mxu0
  %v5202 = vadd.f32 0.0, %v5201
  %5203 = vdwg.mxu0
  %v5204 = vadd.f32 %v5058, %v5129
  %v5205 = vadd.f32 %v5059, %v5131
  %v5206 = vadd.f32 %v5060, %v5200
  %v5207 = vadd.f32 %v5061, %v5202
  %v5208 = vxor.u32 %v5204, 2147483648
  %v5209 = vmul.f32 %v5208, 1.442695
  %v5210 = vpow.pop %v5209
  %v5211 = vadd.f32 %v5210, 1.0
  %v5212 = vrcp.pop %v5211
  %v5213 = vmul.f32 1.0, %v5212
  %v5214 = vxor.u32 %v5205, 2147483648
  %v5215 = vmul.f32 %v5214, 1.442695
  %v5216 = vpow.pop %v5215
  %v5217 = vadd.f32 %v5216, 1.0
  %v5218 = vrcp.pop %v5217
  %v5219 = vmul.f32 1.0, %v5218
  %v5220 = vtanh.pop %v5206
  %v5221 = vxor.u32 %v5207, 2147483648
  %v5222 = vmul.f32 %v5221, 1.442695
  %v5223 = vpow.pop %v5222
  %v5224 = vadd.f32 %v5223, 1.0
  %v5225 = vrcp.pop %v5224
  %v5226 = vmul.f32 1.0, %v5225
  %v5227 = vmul.f32 %v5219, %v5055
  %v5228 = vmul.f32 %v5213, %v5220
  %v5229 = vadd.f32 %v5227, %v5228
  %v5230 = vtanh.pop %v5229
  %v5231 = vmul.f32 %v5226, %v5230
  %v5232 = vld [vmem:[#allocation2 + $0x320] sm:$0xff]
  %v5233 = vld [vmem:[#allocation2 + $0x328] sm:$0xff]
  %v5234 = vld [vmem:[#allocation2 + $0x330] sm:$0xff]
  %v5235 = vld [vmem:[#allocation2 + $0x338] sm:$0xff]
  %5236 = vmatprep.subr.mxu0 %v883
  %5237 = vmatpush1.msra.mxu0 %v882
  %5238 = vmatprep.subr.mxu0 %v879
  %5239 = vmatpush1.msra.mxu0 %v878
  %5240 = vmatprep.subr.mxu0 %v875
  %5241 = vmatpush1.msra.mxu0 %v874
  %5242 = vmatprep.subr.mxu0 %v871
  %5243 = vmatpush1.msra.mxu0 %v870
  %5244 = vmatprep.subr.mxu0 %v867
  %5245 = vmatpush1.msra.mxu0 %v866
  %5246 = vmatprep.subr.mxu0 %v863
  %5247 = vmatpush1.msra.mxu0 %v862
  %5248 = vmatprep.subr.mxu0 %v859
  %5249 = vmatpush1.msra.mxu0 %v858
  %5250 = vmatprep.subr.mxu0 %v855
  %5251 = vmatpush1.msra.mxu0 %v854
  %5252 = vmatprep.subr.mxu0 %v851
  %5253 = vmatpush1.msra.mxu0 %v850
  %5254 = vmatprep.subr.mxu0 %v847
  %5255 = vmatpush1.msra.mxu0 %v846
  %5256 = vmatprep.subr.mxu0 %v843
  %5257 = vmatpush1.msra.mxu0 %v842
  %5258 = vmatprep.subr.mxu0 %v839
  %5259 = vmatpush1.msra.mxu0 %v838
  %5260 = vmatprep.subr.mxu0 %v835
  %5261 = vmatpush1.msra.mxu0 %v834
  %5262 = vmatprep.subr.mxu0 %v831
  %5263 = vmatpush1.msra.mxu0 %v830
  %5264 = vmatprep.subr.mxu0 %v827
  %5265 = vmatpush1.msra.mxu0 %v826
  %5266 = vmatprep.subr.mxu0 %v823
  %5267 = vmatpush1.msra.mxu0 %v822
  %5268 = vmatprep.subr.mxu0 0.0
  %5269 = vmatpush2.msra.mxu0 0.0
  %5270 = vmatprep.subr.mxu0 0.0
  %5271 = vmatpush2.msra.mxu0 0.0
  %5272 = vmatprep.subr.mxu0 0.0
  %5273 = vmatpush2.msra.mxu0 0.0
  %5274 = vmatprep.subr.mxu0 0.0
  %5275 = vmatpush2.msra.mxu0 0.0
  %5276 = vmatprep.subr.mxu0 0.0
  %5277 = vmatpush2.msra.mxu0 0.0
  %5278 = vmatprep.subr.mxu0 0.0
  %5279 = vmatpush2.msra.mxu0 0.0
  %5280 = vmatprep.subr.mxu0 0.0
  %5281 = vmatpush2.msra.mxu0 0.0
  %5282 = vmatprep.subr.mxu0 0.0
  %5283 = vmatpush2.msra.mxu0 0.0
  %5284 = vmatprep.subr.mxu0 0.0
  %5285 = vmatpush2.msra.mxu0 0.0
  %5286 = vmatprep.subr.mxu0 0.0
  %5287 = vmatpush2.msra.mxu0 0.0
  %5288 = vmatprep.subr.mxu0 0.0
  %5289 = vmatpush2.msra.mxu0 0.0
  %5290 = vmatprep.subr.mxu0 0.0
  %5291 = vmatpush2.msra.mxu0 0.0
  %5292 = vmatprep.subr.mxu0 0.0
  %5293 = vmatpush2.msra.mxu0 0.0
  %5294 = vmatprep.subr.mxu0 0.0
  %5295 = vmatpush2.msra.mxu0 0.0
  %5296 = vmatprep.subr.mxu0 0.0
  %5297 = vmatpush2.msra.mxu0 0.0
  %5298 = vmatprep.subr.mxu0 0.0
  %5299 = vmatpush2.msra.mxu0 0.0
  %5300 = vmatprep.mubr.f32.mxu0 0.0
  %5301 = vmatmul.mubr.f32.gmra.mxu0 %v5231
  %v5302 = vpop.f32.mrf.mxu0
  %v5303 = vadd.f32 0.0, %v5302
  %v5304 = vpop.f32.mrf.mxu0
  %v5305 = vadd.f32 0.0, %v5304
  %5306 = vdwg.mxu0
  %5307 = vmatprep.subr.mxu0 %v885
  %5308 = vmatpush1.msra.mxu0 %v884
  %5309 = vmatprep.subr.mxu0 %v881
  %5310 = vmatpush1.msra.mxu0 %v880
  %5311 = vmatprep.subr.mxu0 %v877
  %5312 = vmatpush1.msra.mxu0 %v876
  %5313 = vmatprep.subr.mxu0 %v873
  %5314 = vmatpush1.msra.mxu0 %v872
  %5315 = vmatprep.subr.mxu0 %v869
  %5316 = vmatpush1.msra.mxu0 %v868
  %5317 = vmatprep.subr.mxu0 %v865
  %5318 = vmatpush1.msra.mxu0 %v864
  %5319 = vmatprep.subr.mxu0 %v861
  %5320 = vmatpush1.msra.mxu0 %v860
  %5321 = vmatprep.subr.mxu0 %v857
  %5322 = vmatpush1.msra.mxu0 %v856
  %5323 = vmatprep.subr.mxu0 %v853
  %5324 = vmatpush1.msra.mxu0 %v852
  %5325 = vmatprep.subr.mxu0 %v849
  %5326 = vmatpush1.msra.mxu0 %v848
  %5327 = vmatprep.subr.mxu0 %v845
  %5328 = vmatpush1.msra.mxu0 %v844
  %5329 = vmatprep.subr.mxu0 %v841
  %5330 = vmatpush1.msra.mxu0 %v840
  %5331 = vmatprep.subr.mxu0 %v837
  %5332 = vmatpush1.msra.mxu0 %v836
  %5333 = vmatprep.subr.mxu0 %v833
  %5334 = vmatpush1.msra.mxu0 %v832
  %5335 = vmatprep.subr.mxu0 %v829
  %5336 = vmatpush1.msra.mxu0 %v828
  %5337 = vmatprep.subr.mxu0 %v825
  %5338 = vmatpush1.msra.mxu0 %v824
  %5339 = vmatprep.subr.mxu0 0.0
  %5340 = vmatpush2.msra.mxu0 0.0
  %5341 = vmatprep.subr.mxu0 0.0
  %5342 = vmatpush2.msra.mxu0 0.0
  %5343 = vmatprep.subr.mxu0 0.0
  %5344 = vmatpush2.msra.mxu0 0.0
  %5345 = vmatprep.subr.mxu0 0.0
  %5346 = vmatpush2.msra.mxu0 0.0
  %5347 = vmatprep.subr.mxu0 0.0
  %5348 = vmatpush2.msra.mxu0 0.0
  %5349 = vmatprep.subr.mxu0 0.0
  %5350 = vmatpush2.msra.mxu0 0.0
  %5351 = vmatprep.subr.mxu0 0.0
  %5352 = vmatpush2.msra.mxu0 0.0
  %5353 = vmatprep.subr.mxu0 0.0
  %5354 = vmatpush2.msra.mxu0 0.0
  %5355 = vmatprep.subr.mxu0 0.0
  %5356 = vmatpush2.msra.mxu0 0.0
  %5357 = vmatprep.subr.mxu0 0.0
  %5358 = vmatpush2.msra.mxu0 0.0
  %5359 = vmatprep.subr.mxu0 0.0
  %5360 = vmatpush2.msra.mxu0 0.0
  %5361 = vmatprep.subr.mxu0 0.0
  %5362 = vmatpush2.msra.mxu0 0.0
  %5363 = vmatprep.subr.mxu0 0.0
  %5364 = vmatpush2.msra.mxu0 0.0
  %5365 = vmatprep.subr.mxu0 0.0
  %5366 = vmatpush2.msra.mxu0 0.0
  %5367 = vmatprep.subr.mxu0 0.0
  %5368 = vmatpush2.msra.mxu0 0.0
  %5369 = vmatprep.subr.mxu0 0.0
  %5370 = vmatpush2.msra.mxu0 0.0
  %5371 = vmatprep.mubr.f32.mxu0 0.0
  %5372 = vmatmul.mubr.f32.gmra.mxu0 %v5231
  %v5373 = vpop.f32.mrf.mxu0
  %v5374 = vadd.f32 0.0, %v5373
  %v5375 = vpop.f32.mrf.mxu0
  %v5376 = vadd.f32 0.0, %v5375
  %5377 = vdwg.mxu0
  %v5378 = vadd.f32 %v5232, %v5303
  %v5379 = vadd.f32 %v5233, %v5305
  %v5380 = vadd.f32 %v5234, %v5374
  %v5381 = vadd.f32 %v5235, %v5376
  %v5382 = vxor.u32 %v5378, 2147483648
  %v5383 = vmul.f32 %v5382, 1.442695
  %v5384 = vpow.pop %v5383
  %v5385 = vadd.f32 %v5384, 1.0
  %v5386 = vrcp.pop %v5385
  %v5387 = vmul.f32 1.0, %v5386
  %v5388 = vxor.u32 %v5379, 2147483648
  %v5389 = vmul.f32 %v5388, 1.442695
  %v5390 = vpow.pop %v5389
  %v5391 = vadd.f32 %v5390, 1.0
  %v5392 = vrcp.pop %v5391
  %v5393 = vmul.f32 1.0, %v5392
  %v5394 = vtanh.pop %v5380
  %v5395 = vxor.u32 %v5381, 2147483648
  %v5396 = vmul.f32 %v5395, 1.442695
  %v5397 = vpow.pop %v5396
  %v5398 = vadd.f32 %v5397, 1.0
  %v5399 = vrcp.pop %v5398
  %v5400 = vmul.f32 1.0, %v5399
  %v5401 = vmul.f32 %v5393, %v5229
  %v5402 = vmul.f32 %v5387, %v5394
  %v5403 = vadd.f32 %v5401, %v5402
  %v5404 = vtanh.pop %v5403
  %v5405 = vmul.f32 %v5400, %v5404
  %v5406 = vld [vmem:[#allocation2 + $0x340] sm:$0xff]
  %v5407 = vld [vmem:[#allocation2 + $0x348] sm:$0xff]
  %v5408 = vld [vmem:[#allocation2 + $0x350] sm:$0xff]
  %v5409 = vld [vmem:[#allocation2 + $0x358] sm:$0xff]
  %5410 = vmatprep.subr.mxu0 %v883
  %5411 = vmatpush1.msra.mxu0 %v882
  %5412 = vmatprep.subr.mxu0 %v879
  %5413 = vmatpush1.msra.mxu0 %v878
  %5414 = vmatprep.subr.mxu0 %v875
  %5415 = vmatpush1.msra.mxu0 %v874
  %5416 = vmatprep.subr.mxu0 %v871
  %5417 = vmatpush1.msra.mxu0 %v870
  %5418 = vmatprep.subr.mxu0 %v867
  %5419 = vmatpush1.msra.mxu0 %v866
  %5420 = vmatprep.subr.mxu0 %v863
  %5421 = vmatpush1.msra.mxu0 %v862
  %5422 = vmatprep.subr.mxu0 %v859
  %5423 = vmatpush1.msra.mxu0 %v858
  %5424 = vmatprep.subr.mxu0 %v855
  %5425 = vmatpush1.msra.mxu0 %v854
  %5426 = vmatprep.subr.mxu0 %v851
  %5427 = vmatpush1.msra.mxu0 %v850
  %5428 = vmatprep.subr.mxu0 %v847
  %5429 = vmatpush1.msra.mxu0 %v846
  %5430 = vmatprep.subr.mxu0 %v843
  %5431 = vmatpush1.msra.mxu0 %v842
  %5432 = vmatprep.subr.mxu0 %v839
  %5433 = vmatpush1.msra.mxu0 %v838
  %5434 = vmatprep.subr.mxu0 %v835
  %5435 = vmatpush1.msra.mxu0 %v834
  %5436 = vmatprep.subr.mxu0 %v831
  %5437 = vmatpush1.msra.mxu0 %v830
  %5438 = vmatprep.subr.mxu0 %v827
  %5439 = vmatpush1.msra.mxu0 %v826
  %5440 = vmatprep.subr.mxu0 %v823
  %5441 = vmatpush1.msra.mxu0 %v822
  %5442 = vmatprep.subr.mxu0 0.0
  %5443 = vmatpush2.msra.mxu0 0.0
  %5444 = vmatprep.subr.mxu0 0.0
  %5445 = vmatpush2.msra.mxu0 0.0
  %5446 = vmatprep.subr.mxu0 0.0
  %5447 = vmatpush2.msra.mxu0 0.0
  %5448 = vmatprep.subr.mxu0 0.0
  %5449 = vmatpush2.msra.mxu0 0.0
  %5450 = vmatprep.subr.mxu0 0.0
  %5451 = vmatpush2.msra.mxu0 0.0
  %5452 = vmatprep.subr.mxu0 0.0
  %5453 = vmatpush2.msra.mxu0 0.0
  %5454 = vmatprep.subr.mxu0 0.0
  %5455 = vmatpush2.msra.mxu0 0.0
  %5456 = vmatprep.subr.mxu0 0.0
  %5457 = vmatpush2.msra.mxu0 0.0
  %5458 = vmatprep.subr.mxu0 0.0
  %5459 = vmatpush2.msra.mxu0 0.0
  %5460 = vmatprep.subr.mxu0 0.0
  %5461 = vmatpush2.msra.mxu0 0.0
  %5462 = vmatprep.subr.mxu0 0.0
  %5463 = vmatpush2.msra.mxu0 0.0
  %5464 = vmatprep.subr.mxu0 0.0
  %5465 = vmatpush2.msra.mxu0 0.0
  %5466 = vmatprep.subr.mxu0 0.0
  %5467 = vmatpush2.msra.mxu0 0.0
  %5468 = vmatprep.subr.mxu0 0.0
  %5469 = vmatpush2.msra.mxu0 0.0
  %5470 = vmatprep.subr.mxu0 0.0
  %5471 = vmatpush2.msra.mxu0 0.0
  %5472 = vmatprep.subr.mxu0 0.0
  %5473 = vmatpush2.msra.mxu0 0.0
  %5474 = vmatprep.mubr.f32.mxu0 0.0
  %5475 = vmatmul.mubr.f32.gmra.mxu0 %v5405
  %v5476 = vpop.f32.mrf.mxu0
  %v5477 = vadd.f32 0.0, %v5476
  %v5478 = vpop.f32.mrf.mxu0
  %v5479 = vadd.f32 0.0, %v5478
  %5480 = vdwg.mxu0
  %5481 = vmatprep.subr.mxu0 %v885
  %5482 = vmatpush1.msra.mxu0 %v884
  %5483 = vmatprep.subr.mxu0 %v881
  %5484 = vmatpush1.msra.mxu0 %v880
  %5485 = vmatprep.subr.mxu0 %v877
  %5486 = vmatpush1.msra.mxu0 %v876
  %5487 = vmatprep.subr.mxu0 %v873
  %5488 = vmatpush1.msra.mxu0 %v872
  %5489 = vmatprep.subr.mxu0 %v869
  %5490 = vmatpush1.msra.mxu0 %v868
  %5491 = vmatprep.subr.mxu0 %v865
  %5492 = vmatpush1.msra.mxu0 %v864
  %5493 = vmatprep.subr.mxu0 %v861
  %5494 = vmatpush1.msra.mxu0 %v860
  %5495 = vmatprep.subr.mxu0 %v857
  %5496 = vmatpush1.msra.mxu0 %v856
  %5497 = vmatprep.subr.mxu0 %v853
  %5498 = vmatpush1.msra.mxu0 %v852
  %5499 = vmatprep.subr.mxu0 %v849
  %5500 = vmatpush1.msra.mxu0 %v848
  %5501 = vmatprep.subr.mxu0 %v845
  %5502 = vmatpush1.msra.mxu0 %v844
  %5503 = vmatprep.subr.mxu0 %v841
  %5504 = vmatpush1.msra.mxu0 %v840
  %5505 = vmatprep.subr.mxu0 %v837
  %5506 = vmatpush1.msra.mxu0 %v836
  %5507 = vmatprep.subr.mxu0 %v833
  %5508 = vmatpush1.msra.mxu0 %v832
  %5509 = vmatprep.subr.mxu0 %v829
  %5510 = vmatpush1.msra.mxu0 %v828
  %5511 = vmatprep.subr.mxu0 %v825
  %5512 = vmatpush1.msra.mxu0 %v824
  %5513 = vmatprep.subr.mxu0 0.0
  %5514 = vmatpush2.msra.mxu0 0.0
  %5515 = vmatprep.subr.mxu0 0.0
  %5516 = vmatpush2.msra.mxu0 0.0
  %5517 = vmatprep.subr.mxu0 0.0
  %5518 = vmatpush2.msra.mxu0 0.0
  %5519 = vmatprep.subr.mxu0 0.0
  %5520 = vmatpush2.msra.mxu0 0.0
  %5521 = vmatprep.subr.mxu0 0.0
  %5522 = vmatpush2.msra.mxu0 0.0
  %5523 = vmatprep.subr.mxu0 0.0
  %5524 = vmatpush2.msra.mxu0 0.0
  %5525 = vmatprep.subr.mxu0 0.0
  %5526 = vmatpush2.msra.mxu0 0.0
  %5527 = vmatprep.subr.mxu0 0.0
  %5528 = vmatpush2.msra.mxu0 0.0
  %5529 = vmatprep.subr.mxu0 0.0
  %5530 = vmatpush2.msra.mxu0 0.0
  %5531 = vmatprep.subr.mxu0 0.0
  %5532 = vmatpush2.msra.mxu0 0.0
  %5533 = vmatprep.subr.mxu0 0.0
  %5534 = vmatpush2.msra.mxu0 0.0
  %5535 = vmatprep.subr.mxu0 0.0
  %5536 = vmatpush2.msra.mxu0 0.0
  %5537 = vmatprep.subr.mxu0 0.0
  %5538 = vmatpush2.msra.mxu0 0.0
  %5539 = vmatprep.subr.mxu0 0.0
  %5540 = vmatpush2.msra.mxu0 0.0
  %5541 = vmatprep.subr.mxu0 0.0
  %5542 = vmatpush2.msra.mxu0 0.0
  %5543 = vmatprep.subr.mxu0 0.0
  %5544 = vmatpush2.msra.mxu0 0.0
  %5545 = vmatprep.mubr.f32.mxu0 0.0
  %5546 = vmatmul.mubr.f32.gmra.mxu0 %v5405
  %v5547 = vpop.f32.mrf.mxu0
  %v5548 = vadd.f32 0.0, %v5547
  %v5549 = vpop.f32.mrf.mxu0
  %v5550 = vadd.f32 0.0, %v5549
  %5551 = vdwg.mxu0
  %v5552 = vadd.f32 %v5406, %v5477
  %v5553 = vadd.f32 %v5407, %v5479
  %v5554 = vadd.f32 %v5408, %v5548
  %v5555 = vadd.f32 %v5409, %v5550
  %v5556 = vxor.u32 %v5552, 2147483648
  %v5557 = vmul.f32 %v5556, 1.442695
  %v5558 = vpow.pop %v5557
  %v5559 = vadd.f32 %v5558, 1.0
  %v5560 = vrcp.pop %v5559
  %v5561 = vmul.f32 1.0, %v5560
  %v5562 = vxor.u32 %v5553, 2147483648
  %v5563 = vmul.f32 %v5562, 1.442695
  %v5564 = vpow.pop %v5563
  %v5565 = vadd.f32 %v5564, 1.0
  %v5566 = vrcp.pop %v5565
  %v5567 = vmul.f32 1.0, %v5566
  %v5568 = vtanh.pop %v5554
  %v5569 = vxor.u32 %v5555, 2147483648
  %v5570 = vmul.f32 %v5569, 1.442695
  %v5571 = vpow.pop %v5570
  %v5572 = vadd.f32 %v5571, 1.0
  %v5573 = vrcp.pop %v5572
  %v5574 = vmul.f32 1.0, %v5573
  %v5575 = vmul.f32 %v5567, %v5403
  %v5576 = vmul.f32 %v5561, %v5568
  %v5577 = vadd.f32 %v5575, %v5576
  %v5578 = vtanh.pop %v5577
  %v5579 = vmul.f32 %v5574, %v5578
  %v5580 = vld [vmem:[#allocation2 + $0x360] sm:$0xff]
  %v5581 = vld [vmem:[#allocation2 + $0x368] sm:$0xff]
  %v5582 = vld [vmem:[#allocation2 + $0x370] sm:$0xff]
  %v5583 = vld [vmem:[#allocation2 + $0x378] sm:$0xff]
  %5584 = vmatprep.subr.mxu0 %v883
  %5585 = vmatpush1.msra.mxu0 %v882
  %5586 = vmatprep.subr.mxu0 %v879
  %5587 = vmatpush1.msra.mxu0 %v878
  %5588 = vmatprep.subr.mxu0 %v875
  %5589 = vmatpush1.msra.mxu0 %v874
  %5590 = vmatprep.subr.mxu0 %v871
  %5591 = vmatpush1.msra.mxu0 %v870
  %5592 = vmatprep.subr.mxu0 %v867
  %5593 = vmatpush1.msra.mxu0 %v866
  %5594 = vmatprep.subr.mxu0 %v863
  %5595 = vmatpush1.msra.mxu0 %v862
  %5596 = vmatprep.subr.mxu0 %v859
  %5597 = vmatpush1.msra.mxu0 %v858
  %5598 = vmatprep.subr.mxu0 %v855
  %5599 = vmatpush1.msra.mxu0 %v854
  %5600 = vmatprep.subr.mxu0 %v851
  %5601 = vmatpush1.msra.mxu0 %v850
  %5602 = vmatprep.subr.mxu0 %v847
  %5603 = vmatpush1.msra.mxu0 %v846
  %5604 = vmatprep.subr.mxu0 %v843
  %5605 = vmatpush1.msra.mxu0 %v842
  %5606 = vmatprep.subr.mxu0 %v839
  %5607 = vmatpush1.msra.mxu0 %v838
  %5608 = vmatprep.subr.mxu0 %v835
  %5609 = vmatpush1.msra.mxu0 %v834
  %5610 = vmatprep.subr.mxu0 %v831
  %5611 = vmatpush1.msra.mxu0 %v830
  %5612 = vmatprep.subr.mxu0 %v827
  %5613 = vmatpush1.msra.mxu0 %v826
  %5614 = vmatprep.subr.mxu0 %v823
  %5615 = vmatpush1.msra.mxu0 %v822
  %5616 = vmatprep.subr.mxu0 0.0
  %5617 = vmatpush2.msra.mxu0 0.0
  %5618 = vmatprep.subr.mxu0 0.0
  %5619 = vmatpush2.msra.mxu0 0.0
  %5620 = vmatprep.subr.mxu0 0.0
  %5621 = vmatpush2.msra.mxu0 0.0
  %5622 = vmatprep.subr.mxu0 0.0
  %5623 = vmatpush2.msra.mxu0 0.0
  %5624 = vmatprep.subr.mxu0 0.0
  %5625 = vmatpush2.msra.mxu0 0.0
  %5626 = vmatprep.subr.mxu0 0.0
  %5627 = vmatpush2.msra.mxu0 0.0
  %5628 = vmatprep.subr.mxu0 0.0
  %5629 = vmatpush2.msra.mxu0 0.0
  %5630 = vmatprep.subr.mxu0 0.0
  %5631 = vmatpush2.msra.mxu0 0.0
  %5632 = vmatprep.subr.mxu0 0.0
  %5633 = vmatpush2.msra.mxu0 0.0
  %5634 = vmatprep.subr.mxu0 0.0
  %5635 = vmatpush2.msra.mxu0 0.0
  %5636 = vmatprep.subr.mxu0 0.0
  %5637 = vmatpush2.msra.mxu0 0.0
  %5638 = vmatprep.subr.mxu0 0.0
  %5639 = vmatpush2.msra.mxu0 0.0
  %5640 = vmatprep.subr.mxu0 0.0
  %5641 = vmatpush2.msra.mxu0 0.0
  %5642 = vmatprep.subr.mxu0 0.0
  %5643 = vmatpush2.msra.mxu0 0.0
  %5644 = vmatprep.subr.mxu0 0.0
  %5645 = vmatpush2.msra.mxu0 0.0
  %5646 = vmatprep.subr.mxu0 0.0
  %5647 = vmatpush2.msra.mxu0 0.0
  %5648 = vmatprep.mubr.f32.mxu0 0.0
  %5649 = vmatmul.mubr.f32.gmra.mxu0 %v5579
  %v5650 = vpop.f32.mrf.mxu0
  %v5651 = vadd.f32 0.0, %v5650
  %v5652 = vpop.f32.mrf.mxu0
  %v5653 = vadd.f32 0.0, %v5652
  %5654 = vdwg.mxu0
  %5655 = vmatprep.subr.mxu0 %v885
  %5656 = vmatpush1.msra.mxu0 %v884
  %5657 = vmatprep.subr.mxu0 %v881
  %5658 = vmatpush1.msra.mxu0 %v880
  %5659 = vmatprep.subr.mxu0 %v877
  %5660 = vmatpush1.msra.mxu0 %v876
  %5661 = vmatprep.subr.mxu0 %v873
  %5662 = vmatpush1.msra.mxu0 %v872
  %5663 = vmatprep.subr.mxu0 %v869
  %5664 = vmatpush1.msra.mxu0 %v868
  %5665 = vmatprep.subr.mxu0 %v865
  %5666 = vmatpush1.msra.mxu0 %v864
  %5667 = vmatprep.subr.mxu0 %v861
  %5668 = vmatpush1.msra.mxu0 %v860
  %5669 = vmatprep.subr.mxu0 %v857
  %5670 = vmatpush1.msra.mxu0 %v856
  %5671 = vmatprep.subr.mxu0 %v853
  %5672 = vmatpush1.msra.mxu0 %v852
  %5673 = vmatprep.subr.mxu0 %v849
  %5674 = vmatpush1.msra.mxu0 %v848
  %5675 = vmatprep.subr.mxu0 %v845
  %5676 = vmatpush1.msra.mxu0 %v844
  %5677 = vmatprep.subr.mxu0 %v841
  %5678 = vmatpush1.msra.mxu0 %v840
  %5679 = vmatprep.subr.mxu0 %v837
  %5680 = vmatpush1.msra.mxu0 %v836
  %5681 = vmatprep.subr.mxu0 %v833
  %5682 = vmatpush1.msra.mxu0 %v832
  %5683 = vmatprep.subr.mxu0 %v829
  %5684 = vmatpush1.msra.mxu0 %v828
  %5685 = vmatprep.subr.mxu0 %v825
  %5686 = vmatpush1.msra.mxu0 %v824
  %5687 = vmatprep.subr.mxu0 0.0
  %5688 = vmatpush2.msra.mxu0 0.0
  %5689 = vmatprep.subr.mxu0 0.0
  %5690 = vmatpush2.msra.mxu0 0.0
  %5691 = vmatprep.subr.mxu0 0.0
  %5692 = vmatpush2.msra.mxu0 0.0
  %5693 = vmatprep.subr.mxu0 0.0
  %5694 = vmatpush2.msra.mxu0 0.0
  %5695 = vmatprep.subr.mxu0 0.0
  %5696 = vmatpush2.msra.mxu0 0.0
  %5697 = vmatprep.subr.mxu0 0.0
  %5698 = vmatpush2.msra.mxu0 0.0
  %5699 = vmatprep.subr.mxu0 0.0
  %5700 = vmatpush2.msra.mxu0 0.0
  %5701 = vmatprep.subr.mxu0 0.0
  %5702 = vmatpush2.msra.mxu0 0.0
  %5703 = vmatprep.subr.mxu0 0.0
  %5704 = vmatpush2.msra.mxu0 0.0
  %5705 = vmatprep.subr.mxu0 0.0
  %5706 = vmatpush2.msra.mxu0 0.0
  %5707 = vmatprep.subr.mxu0 0.0
  %5708 = vmatpush2.msra.mxu0 0.0
  %5709 = vmatprep.subr.mxu0 0.0
  %5710 = vmatpush2.msra.mxu0 0.0
  %5711 = vmatprep.subr.mxu0 0.0
  %5712 = vmatpush2.msra.mxu0 0.0
  %5713 = vmatprep.subr.mxu0 0.0
  %5714 = vmatpush2.msra.mxu0 0.0
  %5715 = vmatprep.subr.mxu0 0.0
  %5716 = vmatpush2.msra.mxu0 0.0
  %5717 = vmatprep.subr.mxu0 0.0
  %5718 = vmatpush2.msra.mxu0 0.0
  %5719 = vmatprep.mubr.f32.mxu0 0.0
  %5720 = vmatmul.mubr.f32.gmra.mxu0 %v5579
  %v5721 = vpop.f32.mrf.mxu0
  %v5722 = vadd.f32 0.0, %v5721
  %v5723 = vpop.f32.mrf.mxu0
  %v5724 = vadd.f32 0.0, %v5723
  %5725 = vdwg.mxu0
  %v5726 = vadd.f32 %v5580, %v5651
  %v5727 = vadd.f32 %v5581, %v5653
  %v5728 = vadd.f32 %v5582, %v5722
  %v5729 = vadd.f32 %v5583, %v5724
  %v5730 = vxor.u32 %v5726, 2147483648
  %v5731 = vmul.f32 %v5730, 1.442695
  %v5732 = vpow.pop %v5731
  %v5733 = vadd.f32 %v5732, 1.0
  %v5734 = vrcp.pop %v5733
  %v5735 = vmul.f32 1.0, %v5734
  %v5736 = vxor.u32 %v5727, 2147483648
  %v5737 = vmul.f32 %v5736, 1.442695
  %v5738 = vpow.pop %v5737
  %v5739 = vadd.f32 %v5738, 1.0
  %v5740 = vrcp.pop %v5739
  %v5741 = vmul.f32 1.0, %v5740
  %v5742 = vtanh.pop %v5728
  %v5743 = vxor.u32 %v5729, 2147483648
  %v5744 = vmul.f32 %v5743, 1.442695
  %v5745 = vpow.pop %v5744
  %v5746 = vadd.f32 %v5745, 1.0
  %v5747 = vrcp.pop %v5746
  %v5748 = vmul.f32 1.0, %v5747
  %v5749 = vmul.f32 %v5741, %v5577
  %v5750 = vmul.f32 %v5735, %v5742
  %v5751 = vadd.f32 %v5749, %v5750
  %v5752 = vtanh.pop %v5751
  %v5753 = vmul.f32 %v5748, %v5752
  %v5754 = vld [vmem:[#allocation2 + $0x380] sm:$0xff]
  %v5755 = vld [vmem:[#allocation2 + $0x388] sm:$0xff]
  %v5756 = vld [vmem:[#allocation2 + $0x390] sm:$0xff]
  %v5757 = vld [vmem:[#allocation2 + $0x398] sm:$0xff]
  %5758 = vmatprep.subr.mxu0 %v883
  %5759 = vmatpush1.msra.mxu0 %v882
  %5760 = vmatprep.subr.mxu0 %v879
  %5761 = vmatpush1.msra.mxu0 %v878
  %5762 = vmatprep.subr.mxu0 %v875
  %5763 = vmatpush1.msra.mxu0 %v874
  %5764 = vmatprep.subr.mxu0 %v871
  %5765 = vmatpush1.msra.mxu0 %v870
  %5766 = vmatprep.subr.mxu0 %v867
  %5767 = vmatpush1.msra.mxu0 %v866
  %5768 = vmatprep.subr.mxu0 %v863
  %5769 = vmatpush1.msra.mxu0 %v862
  %5770 = vmatprep.subr.mxu0 %v859
  %5771 = vmatpush1.msra.mxu0 %v858
  %5772 = vmatprep.subr.mxu0 %v855
  %5773 = vmatpush1.msra.mxu0 %v854
  %5774 = vmatprep.subr.mxu0 %v851
  %5775 = vmatpush1.msra.mxu0 %v850
  %5776 = vmatprep.subr.mxu0 %v847
  %5777 = vmatpush1.msra.mxu0 %v846
  %5778 = vmatprep.subr.mxu0 %v843
  %5779 = vmatpush1.msra.mxu0 %v842
  %5780 = vmatprep.subr.mxu0 %v839
  %5781 = vmatpush1.msra.mxu0 %v838
  %5782 = vmatprep.subr.mxu0 %v835
  %5783 = vmatpush1.msra.mxu0 %v834
  %5784 = vmatprep.subr.mxu0 %v831
  %5785 = vmatpush1.msra.mxu0 %v830
  %5786 = vmatprep.subr.mxu0 %v827
  %5787 = vmatpush1.msra.mxu0 %v826
  %5788 = vmatprep.subr.mxu0 %v823
  %5789 = vmatpush1.msra.mxu0 %v822
  %5790 = vmatprep.subr.mxu0 0.0
  %5791 = vmatpush2.msra.mxu0 0.0
  %5792 = vmatprep.subr.mxu0 0.0
  %5793 = vmatpush2.msra.mxu0 0.0
  %5794 = vmatprep.subr.mxu0 0.0
  %5795 = vmatpush2.msra.mxu0 0.0
  %5796 = vmatprep.subr.mxu0 0.0
  %5797 = vmatpush2.msra.mxu0 0.0
  %5798 = vmatprep.subr.mxu0 0.0
  %5799 = vmatpush2.msra.mxu0 0.0
  %5800 = vmatprep.subr.mxu0 0.0
  %5801 = vmatpush2.msra.mxu0 0.0
  %5802 = vmatprep.subr.mxu0 0.0
  %5803 = vmatpush2.msra.mxu0 0.0
  %5804 = vmatprep.subr.mxu0 0.0
  %5805 = vmatpush2.msra.mxu0 0.0
  %5806 = vmatprep.subr.mxu0 0.0
  %5807 = vmatpush2.msra.mxu0 0.0
  %5808 = vmatprep.subr.mxu0 0.0
  %5809 = vmatpush2.msra.mxu0 0.0
  %5810 = vmatprep.subr.mxu0 0.0
  %5811 = vmatpush2.msra.mxu0 0.0
  %5812 = vmatprep.subr.mxu0 0.0
  %5813 = vmatpush2.msra.mxu0 0.0
  %5814 = vmatprep.subr.mxu0 0.0
  %5815 = vmatpush2.msra.mxu0 0.0
  %5816 = vmatprep.subr.mxu0 0.0
  %5817 = vmatpush2.msra.mxu0 0.0
  %5818 = vmatprep.subr.mxu0 0.0
  %5819 = vmatpush2.msra.mxu0 0.0
  %5820 = vmatprep.subr.mxu0 0.0
  %5821 = vmatpush2.msra.mxu0 0.0
  %5822 = vmatprep.mubr.f32.mxu0 0.0
  %5823 = vmatmul.mubr.f32.gmra.mxu0 %v5753
  %v5824 = vpop.f32.mrf.mxu0
  %v5825 = vadd.f32 0.0, %v5824
  %v5826 = vpop.f32.mrf.mxu0
  %v5827 = vadd.f32 0.0, %v5826
  %5828 = vdwg.mxu0
  %5829 = vmatprep.subr.mxu0 %v885
  %5830 = vmatpush1.msra.mxu0 %v884
  %5831 = vmatprep.subr.mxu0 %v881
  %5832 = vmatpush1.msra.mxu0 %v880
  %5833 = vmatprep.subr.mxu0 %v877
  %5834 = vmatpush1.msra.mxu0 %v876
  %5835 = vmatprep.subr.mxu0 %v873
  %5836 = vmatpush1.msra.mxu0 %v872
  %5837 = vmatprep.subr.mxu0 %v869
  %5838 = vmatpush1.msra.mxu0 %v868
  %5839 = vmatprep.subr.mxu0 %v865
  %5840 = vmatpush1.msra.mxu0 %v864
  %5841 = vmatprep.subr.mxu0 %v861
  %5842 = vmatpush1.msra.mxu0 %v860
  %5843 = vmatprep.subr.mxu0 %v857
  %5844 = vmatpush1.msra.mxu0 %v856
  %5845 = vmatprep.subr.mxu0 %v853
  %5846 = vmatpush1.msra.mxu0 %v852
  %5847 = vmatprep.subr.mxu0 %v849
  %5848 = vmatpush1.msra.mxu0 %v848
  %5849 = vmatprep.subr.mxu0 %v845
  %5850 = vmatpush1.msra.mxu0 %v844
  %5851 = vmatprep.subr.mxu0 %v841
  %5852 = vmatpush1.msra.mxu0 %v840
  %5853 = vmatprep.subr.mxu0 %v837
  %5854 = vmatpush1.msra.mxu0 %v836
  %5855 = vmatprep.subr.mxu0 %v833
  %5856 = vmatpush1.msra.mxu0 %v832
  %5857 = vmatprep.subr.mxu0 %v829
  %5858 = vmatpush1.msra.mxu0 %v828
  %5859 = vmatprep.subr.mxu0 %v825
  %5860 = vmatpush1.msra.mxu0 %v824
  %5861 = vmatprep.subr.mxu0 0.0
  %5862 = vmatpush2.msra.mxu0 0.0
  %5863 = vmatprep.subr.mxu0 0.0
  %5864 = vmatpush2.msra.mxu0 0.0
  %5865 = vmatprep.subr.mxu0 0.0
  %5866 = vmatpush2.msra.mxu0 0.0
  %5867 = vmatprep.subr.mxu0 0.0
  %5868 = vmatpush2.msra.mxu0 0.0
  %5869 = vmatprep.subr.mxu0 0.0
  %5870 = vmatpush2.msra.mxu0 0.0
  %5871 = vmatprep.subr.mxu0 0.0
  %5872 = vmatpush2.msra.mxu0 0.0
  %5873 = vmatprep.subr.mxu0 0.0
  %5874 = vmatpush2.msra.mxu0 0.0
  %5875 = vmatprep.subr.mxu0 0.0
  %5876 = vmatpush2.msra.mxu0 0.0
  %5877 = vmatprep.subr.mxu0 0.0
  %5878 = vmatpush2.msra.mxu0 0.0
  %5879 = vmatprep.subr.mxu0 0.0
  %5880 = vmatpush2.msra.mxu0 0.0
  %5881 = vmatprep.subr.mxu0 0.0
  %5882 = vmatpush2.msra.mxu0 0.0
  %5883 = vmatprep.subr.mxu0 0.0
  %5884 = vmatpush2.msra.mxu0 0.0
  %5885 = vmatprep.subr.mxu0 0.0
  %5886 = vmatpush2.msra.mxu0 0.0
  %5887 = vmatprep.subr.mxu0 0.0
  %5888 = vmatpush2.msra.mxu0 0.0
  %5889 = vmatprep.subr.mxu0 0.0
  %5890 = vmatpush2.msra.mxu0 0.0
  %5891 = vmatprep.subr.mxu0 0.0
  %5892 = vmatpush2.msra.mxu0 0.0
  %5893 = vmatprep.mubr.f32.mxu0 0.0
  %5894 = vmatmul.mubr.f32.gmra.mxu0 %v5753
  %v5895 = vpop.f32.mrf.mxu0
  %v5896 = vadd.f32 0.0, %v5895
  %v5897 = vpop.f32.mrf.mxu0
  %v5898 = vadd.f32 0.0, %v5897
  %5899 = vdwg.mxu0
  %v5900 = vadd.f32 %v5754, %v5825
  %v5901 = vadd.f32 %v5755, %v5827
  %v5902 = vadd.f32 %v5756, %v5896
  %v5903 = vadd.f32 %v5757, %v5898
  %v5904 = vxor.u32 %v5900, 2147483648
  %v5905 = vmul.f32 %v5904, 1.442695
  %v5906 = vpow.pop %v5905
  %v5907 = vadd.f32 %v5906, 1.0
  %v5908 = vrcp.pop %v5907
  %v5909 = vmul.f32 1.0, %v5908
  %v5910 = vxor.u32 %v5901, 2147483648
  %v5911 = vmul.f32 %v5910, 1.442695
  %v5912 = vpow.pop %v5911
  %v5913 = vadd.f32 %v5912, 1.0
  %v5914 = vrcp.pop %v5913
  %v5915 = vmul.f32 1.0, %v5914
  %v5916 = vtanh.pop %v5902
  %v5917 = vxor.u32 %v5903, 2147483648
  %v5918 = vmul.f32 %v5917, 1.442695
  %v5919 = vpow.pop %v5918
  %v5920 = vadd.f32 %v5919, 1.0
  %v5921 = vrcp.pop %v5920
  %v5922 = vmul.f32 1.0, %v5921
  %v5923 = vmul.f32 %v5915, %v5751
  %v5924 = vmul.f32 %v5909, %v5916
  %v5925 = vadd.f32 %v5923, %v5924
  %v5926 = vtanh.pop %v5925
  %v5927 = vmul.f32 %v5922, %v5926
  %v5928 = vld [vmem:[#allocation2 + $0x3a0] sm:$0xff]
  %v5929 = vld [vmem:[#allocation2 + $0x3a8] sm:$0xff]
  %v5930 = vld [vmem:[#allocation2 + $0x3b0] sm:$0xff]
  %v5931 = vld [vmem:[#allocation2 + $0x3b8] sm:$0xff]
  %5932 = vmatprep.subr.mxu0 %v883
  %5933 = vmatpush1.msra.mxu0 %v882
  %5934 = vmatprep.subr.mxu0 %v879
  %5935 = vmatpush1.msra.mxu0 %v878
  %5936 = vmatprep.subr.mxu0 %v875
  %5937 = vmatpush1.msra.mxu0 %v874
  %5938 = vmatprep.subr.mxu0 %v871
  %5939 = vmatpush1.msra.mxu0 %v870
  %5940 = vmatprep.subr.mxu0 %v867
  %5941 = vmatpush1.msra.mxu0 %v866
  %5942 = vmatprep.subr.mxu0 %v863
  %5943 = vmatpush1.msra.mxu0 %v862
  %5944 = vmatprep.subr.mxu0 %v859
  %5945 = vmatpush1.msra.mxu0 %v858
  %5946 = vmatprep.subr.mxu0 %v855
  %5947 = vmatpush1.msra.mxu0 %v854
  %5948 = vmatprep.subr.mxu0 %v851
  %5949 = vmatpush1.msra.mxu0 %v850
  %5950 = vmatprep.subr.mxu0 %v847
  %5951 = vmatpush1.msra.mxu0 %v846
  %5952 = vmatprep.subr.mxu0 %v843
  %5953 = vmatpush1.msra.mxu0 %v842
  %5954 = vmatprep.subr.mxu0 %v839
  %5955 = vmatpush1.msra.mxu0 %v838
  %5956 = vmatprep.subr.mxu0 %v835
  %5957 = vmatpush1.msra.mxu0 %v834
  %5958 = vmatprep.subr.mxu0 %v831
  %5959 = vmatpush1.msra.mxu0 %v830
  %5960 = vmatprep.subr.mxu0 %v827
  %5961 = vmatpush1.msra.mxu0 %v826
  %5962 = vmatprep.subr.mxu0 %v823
  %5963 = vmatpush1.msra.mxu0 %v822
  %5964 = vmatprep.subr.mxu0 0.0
  %5965 = vmatpush2.msra.mxu0 0.0
  %5966 = vmatprep.subr.mxu0 0.0
  %5967 = vmatpush2.msra.mxu0 0.0
  %5968 = vmatprep.subr.mxu0 0.0
  %5969 = vmatpush2.msra.mxu0 0.0
  %5970 = vmatprep.subr.mxu0 0.0
  %5971 = vmatpush2.msra.mxu0 0.0
  %5972 = vmatprep.subr.mxu0 0.0
  %5973 = vmatpush2.msra.mxu0 0.0
  %5974 = vmatprep.subr.mxu0 0.0
  %5975 = vmatpush2.msra.mxu0 0.0
  %5976 = vmatprep.subr.mxu0 0.0
  %5977 = vmatpush2.msra.mxu0 0.0
  %5978 = vmatprep.subr.mxu0 0.0
  %5979 = vmatpush2.msra.mxu0 0.0
  %5980 = vmatprep.subr.mxu0 0.0
  %5981 = vmatpush2.msra.mxu0 0.0
  %5982 = vmatprep.subr.mxu0 0.0
  %5983 = vmatpush2.msra.mxu0 0.0
  %5984 = vmatprep.subr.mxu0 0.0
  %5985 = vmatpush2.msra.mxu0 0.0
  %5986 = vmatprep.subr.mxu0 0.0
  %5987 = vmatpush2.msra.mxu0 0.0
  %5988 = vmatprep.subr.mxu0 0.0
  %5989 = vmatpush2.msra.mxu0 0.0
  %5990 = vmatprep.subr.mxu0 0.0
  %5991 = vmatpush2.msra.mxu0 0.0
  %5992 = vmatprep.subr.mxu0 0.0
  %5993 = vmatpush2.msra.mxu0 0.0
  %5994 = vmatprep.subr.mxu0 0.0
  %5995 = vmatpush2.msra.mxu0 0.0
  %5996 = vmatprep.mubr.f32.mxu0 0.0
  %5997 = vmatmul.mubr.f32.gmra.mxu0 %v5927
  %v5998 = vpop.f32.mrf.mxu0
  %v5999 = vadd.f32 0.0, %v5998
  %v6000 = vpop.f32.mrf.mxu0
  %v6001 = vadd.f32 0.0, %v6000
  %6002 = vdwg.mxu0
  %6003 = vmatprep.subr.mxu0 %v885
  %6004 = vmatpush1.msra.mxu0 %v884
  %6005 = vmatprep.subr.mxu0 %v881
  %6006 = vmatpush1.msra.mxu0 %v880
  %6007 = vmatprep.subr.mxu0 %v877
  %6008 = vmatpush1.msra.mxu0 %v876
  %6009 = vmatprep.subr.mxu0 %v873
  %6010 = vmatpush1.msra.mxu0 %v872
  %6011 = vmatprep.subr.mxu0 %v869
  %6012 = vmatpush1.msra.mxu0 %v868
  %6013 = vmatprep.subr.mxu0 %v865
  %6014 = vmatpush1.msra.mxu0 %v864
  %6015 = vmatprep.subr.mxu0 %v861
  %6016 = vmatpush1.msra.mxu0 %v860
  %6017 = vmatprep.subr.mxu0 %v857
  %6018 = vmatpush1.msra.mxu0 %v856
  %6019 = vmatprep.subr.mxu0 %v853
  %6020 = vmatpush1.msra.mxu0 %v852
  %6021 = vmatprep.subr.mxu0 %v849
  %6022 = vmatpush1.msra.mxu0 %v848
  %6023 = vmatprep.subr.mxu0 %v845
  %6024 = vmatpush1.msra.mxu0 %v844
  %6025 = vmatprep.subr.mxu0 %v841
  %6026 = vmatpush1.msra.mxu0 %v840
  %6027 = vmatprep.subr.mxu0 %v837
  %6028 = vmatpush1.msra.mxu0 %v836
  %6029 = vmatprep.subr.mxu0 %v833
  %6030 = vmatpush1.msra.mxu0 %v832
  %6031 = vmatprep.subr.mxu0 %v829
  %6032 = vmatpush1.msra.mxu0 %v828
  %6033 = vmatprep.subr.mxu0 %v825
  %6034 = vmatpush1.msra.mxu0 %v824
  %6035 = vmatprep.subr.mxu0 0.0
  %6036 = vmatpush2.msra.mxu0 0.0
  %6037 = vmatprep.subr.mxu0 0.0
  %6038 = vmatpush2.msra.mxu0 0.0
  %6039 = vmatprep.subr.mxu0 0.0
  %6040 = vmatpush2.msra.mxu0 0.0
  %6041 = vmatprep.subr.mxu0 0.0
  %6042 = vmatpush2.msra.mxu0 0.0
  %6043 = vmatprep.subr.mxu0 0.0
  %6044 = vmatpush2.msra.mxu0 0.0
  %6045 = vmatprep.subr.mxu0 0.0
  %6046 = vmatpush2.msra.mxu0 0.0
  %6047 = vmatprep.subr.mxu0 0.0
  %6048 = vmatpush2.msra.mxu0 0.0
  %6049 = vmatprep.subr.mxu0 0.0
  %6050 = vmatpush2.msra.mxu0 0.0
  %6051 = vmatprep.subr.mxu0 0.0
  %6052 = vmatpush2.msra.mxu0 0.0
  %6053 = vmatprep.subr.mxu0 0.0
  %6054 = vmatpush2.msra.mxu0 0.0
  %6055 = vmatprep.subr.mxu0 0.0
  %6056 = vmatpush2.msra.mxu0 0.0
  %6057 = vmatprep.subr.mxu0 0.0
  %6058 = vmatpush2.msra.mxu0 0.0
  %6059 = vmatprep.subr.mxu0 0.0
  %6060 = vmatpush2.msra.mxu0 0.0
  %6061 = vmatprep.subr.mxu0 0.0
  %6062 = vmatpush2.msra.mxu0 0.0
  %6063 = vmatprep.subr.mxu0 0.0
  %6064 = vmatpush2.msra.mxu0 0.0
  %6065 = vmatprep.subr.mxu0 0.0
  %6066 = vmatpush2.msra.mxu0 0.0
  %6067 = vmatprep.mubr.f32.mxu0 0.0
  %6068 = vmatmul.mubr.f32.gmra.mxu0 %v5927
  %v6069 = vpop.f32.mrf.mxu0
  %v6070 = vadd.f32 0.0, %v6069
  %v6071 = vpop.f32.mrf.mxu0
  %v6072 = vadd.f32 0.0, %v6071
  %6073 = vdwg.mxu0
  %v6074 = vadd.f32 %v5928, %v5999
  %v6075 = vadd.f32 %v5929, %v6001
  %v6076 = vadd.f32 %v5930, %v6070
  %v6077 = vadd.f32 %v5931, %v6072
  %v6078 = vxor.u32 %v6074, 2147483648
  %v6079 = vmul.f32 %v6078, 1.442695
  %v6080 = vpow.pop %v6079
  %v6081 = vadd.f32 %v6080, 1.0
  %v6082 = vrcp.pop %v6081
  %v6083 = vmul.f32 1.0, %v6082
  %v6084 = vxor.u32 %v6075, 2147483648
  %v6085 = vmul.f32 %v6084, 1.442695
  %v6086 = vpow.pop %v6085
  %v6087 = vadd.f32 %v6086, 1.0
  %v6088 = vrcp.pop %v6087
  %v6089 = vmul.f32 1.0, %v6088
  %v6090 = vtanh.pop %v6076
  %v6091 = vxor.u32 %v6077, 2147483648
  %v6092 = vmul.f32 %v6091, 1.442695
  %v6093 = vpow.pop %v6092
  %v6094 = vadd.f32 %v6093, 1.0
  %v6095 = vrcp.pop %v6094
  %v6096 = vmul.f32 1.0, %v6095
  %v6097 = vmul.f32 %v6089, %v5925
  %v6098 = vmul.f32 %v6083, %v6090
  %v6099 = vadd.f32 %v6097, %v6098
  %v6100 = vtanh.pop %v6099
  %v6101 = vmul.f32 %v6096, %v6100
  %v6102 = vld [vmem:[#allocation2 + $0x3c0] sm:$0xff]
  %v6103 = vld [vmem:[#allocation2 + $0x3c8] sm:$0xff]
  %v6104 = vld [vmem:[#allocation2 + $0x3d0] sm:$0xff]
  %v6105 = vld [vmem:[#allocation2 + $0x3d8] sm:$0xff]
  %6106 = vmatprep.subr.mxu0 %v883
  %6107 = vmatpush1.msra.mxu0 %v882
  %6108 = vmatprep.subr.mxu0 %v879
  %6109 = vmatpush1.msra.mxu0 %v878
  %6110 = vmatprep.subr.mxu0 %v875
  %6111 = vmatpush1.msra.mxu0 %v874
  %6112 = vmatprep.subr.mxu0 %v871
  %6113 = vmatpush1.msra.mxu0 %v870
  %6114 = vmatprep.subr.mxu0 %v867
  %6115 = vmatpush1.msra.mxu0 %v866
  %6116 = vmatprep.subr.mxu0 %v863
  %6117 = vmatpush1.msra.mxu0 %v862
  %6118 = vmatprep.subr.mxu0 %v859
  %6119 = vmatpush1.msra.mxu0 %v858
  %6120 = vmatprep.subr.mxu0 %v855
  %6121 = vmatpush1.msra.mxu0 %v854
  %6122 = vmatprep.subr.mxu0 %v851
  %6123 = vmatpush1.msra.mxu0 %v850
  %6124 = vmatprep.subr.mxu0 %v847
  %6125 = vmatpush1.msra.mxu0 %v846
  %6126 = vmatprep.subr.mxu0 %v843
  %6127 = vmatpush1.msra.mxu0 %v842
  %6128 = vmatprep.subr.mxu0 %v839
  %6129 = vmatpush1.msra.mxu0 %v838
  %6130 = vmatprep.subr.mxu0 %v835
  %6131 = vmatpush1.msra.mxu0 %v834
  %6132 = vmatprep.subr.mxu0 %v831
  %6133 = vmatpush1.msra.mxu0 %v830
  %6134 = vmatprep.subr.mxu0 %v827
  %6135 = vmatpush1.msra.mxu0 %v826
  %6136 = vmatprep.subr.mxu0 %v823
  %6137 = vmatpush1.msra.mxu0 %v822
  %6138 = vmatprep.subr.mxu0 0.0
  %6139 = vmatpush2.msra.mxu0 0.0
  %6140 = vmatprep.subr.mxu0 0.0
  %6141 = vmatpush2.msra.mxu0 0.0
  %6142 = vmatprep.subr.mxu0 0.0
  %6143 = vmatpush2.msra.mxu0 0.0
  %6144 = vmatprep.subr.mxu0 0.0
  %6145 = vmatpush2.msra.mxu0 0.0
  %6146 = vmatprep.subr.mxu0 0.0
  %6147 = vmatpush2.msra.mxu0 0.0
  %6148 = vmatprep.subr.mxu0 0.0
  %6149 = vmatpush2.msra.mxu0 0.0
  %6150 = vmatprep.subr.mxu0 0.0
  %6151 = vmatpush2.msra.mxu0 0.0
  %6152 = vmatprep.subr.mxu0 0.0
  %6153 = vmatpush2.msra.mxu0 0.0
  %6154 = vmatprep.subr.mxu0 0.0
  %6155 = vmatpush2.msra.mxu0 0.0
  %6156 = vmatprep.subr.mxu0 0.0
  %6157 = vmatpush2.msra.mxu0 0.0
  %6158 = vmatprep.subr.mxu0 0.0
  %6159 = vmatpush2.msra.mxu0 0.0
  %6160 = vmatprep.subr.mxu0 0.0
  %6161 = vmatpush2.msra.mxu0 0.0
  %6162 = vmatprep.subr.mxu0 0.0
  %6163 = vmatpush2.msra.mxu0 0.0
  %6164 = vmatprep.subr.mxu0 0.0
  %6165 = vmatpush2.msra.mxu0 0.0
  %6166 = vmatprep.subr.mxu0 0.0
  %6167 = vmatpush2.msra.mxu0 0.0
  %6168 = vmatprep.subr.mxu0 0.0
  %6169 = vmatpush2.msra.mxu0 0.0
  %6170 = vmatprep.mubr.f32.mxu0 0.0
  %6171 = vmatmul.mubr.f32.gmra.mxu0 %v6101
  %v6172 = vpop.f32.mrf.mxu0
  %v6173 = vadd.f32 0.0, %v6172
  %v6174 = vpop.f32.mrf.mxu0
  %v6175 = vadd.f32 0.0, %v6174
  %6176 = vdwg.mxu0
  %6177 = vmatprep.subr.mxu0 %v885
  %6178 = vmatpush1.msra.mxu0 %v884
  %6179 = vmatprep.subr.mxu0 %v881
  %6180 = vmatpush1.msra.mxu0 %v880
  %6181 = vmatprep.subr.mxu0 %v877
  %6182 = vmatpush1.msra.mxu0 %v876
  %6183 = vmatprep.subr.mxu0 %v873
  %6184 = vmatpush1.msra.mxu0 %v872
  %6185 = vmatprep.subr.mxu0 %v869
  %6186 = vmatpush1.msra.mxu0 %v868
  %6187 = vmatprep.subr.mxu0 %v865
  %6188 = vmatpush1.msra.mxu0 %v864
  %6189 = vmatprep.subr.mxu0 %v861
  %6190 = vmatpush1.msra.mxu0 %v860
  %6191 = vmatprep.subr.mxu0 %v857
  %6192 = vmatpush1.msra.mxu0 %v856
  %6193 = vmatprep.subr.mxu0 %v853
  %6194 = vmatpush1.msra.mxu0 %v852
  %6195 = vmatprep.subr.mxu0 %v849
  %6196 = vmatpush1.msra.mxu0 %v848
  %6197 = vmatprep.subr.mxu0 %v845
  %6198 = vmatpush1.msra.mxu0 %v844
  %6199 = vmatprep.subr.mxu0 %v841
  %6200 = vmatpush1.msra.mxu0 %v840
  %6201 = vmatprep.subr.mxu0 %v837
  %6202 = vmatpush1.msra.mxu0 %v836
  %6203 = vmatprep.subr.mxu0 %v833
  %6204 = vmatpush1.msra.mxu0 %v832
  %6205 = vmatprep.subr.mxu0 %v829
  %6206 = vmatpush1.msra.mxu0 %v828
  %6207 = vmatprep.subr.mxu0 %v825
  %6208 = vmatpush1.msra.mxu0 %v824
  %6209 = vmatprep.subr.mxu0 0.0
  %6210 = vmatpush2.msra.mxu0 0.0
  %6211 = vmatprep.subr.mxu0 0.0
  %6212 = vmatpush2.msra.mxu0 0.0
  %6213 = vmatprep.subr.mxu0 0.0
  %6214 = vmatpush2.msra.mxu0 0.0
  %6215 = vmatprep.subr.mxu0 0.0
  %6216 = vmatpush2.msra.mxu0 0.0
  %6217 = vmatprep.subr.mxu0 0.0
  %6218 = vmatpush2.msra.mxu0 0.0
  %6219 = vmatprep.subr.mxu0 0.0
  %6220 = vmatpush2.msra.mxu0 0.0
  %6221 = vmatprep.subr.mxu0 0.0
  %6222 = vmatpush2.msra.mxu0 0.0
  %6223 = vmatprep.subr.mxu0 0.0
  %6224 = vmatpush2.msra.mxu0 0.0
  %6225 = vmatprep.subr.mxu0 0.0
  %6226 = vmatpush2.msra.mxu0 0.0
  %6227 = vmatprep.subr.mxu0 0.0
  %6228 = vmatpush2.msra.mxu0 0.0
  %6229 = vmatprep.subr.mxu0 0.0
  %6230 = vmatpush2.msra.mxu0 0.0
  %6231 = vmatprep.subr.mxu0 0.0
  %6232 = vmatpush2.msra.mxu0 0.0
  %6233 = vmatprep.subr.mxu0 0.0
  %6234 = vmatpush2.msra.mxu0 0.0
  %6235 = vmatprep.subr.mxu0 0.0
  %6236 = vmatpush2.msra.mxu0 0.0
  %6237 = vmatprep.subr.mxu0 0.0
  %6238 = vmatpush2.msra.mxu0 0.0
  %6239 = vmatprep.subr.mxu0 0.0
  %6240 = vmatpush2.msra.mxu0 0.0
  %6241 = vmatprep.mubr.f32.mxu0 0.0
  %6242 = vmatmul.mubr.f32.gmra.mxu0 %v6101
  %v6243 = vpop.f32.mrf.mxu0
  %v6244 = vadd.f32 0.0, %v6243
  %v6245 = vpop.f32.mrf.mxu0
  %v6246 = vadd.f32 0.0, %v6245
  %6247 = vdwg.mxu0
  %v6248 = vadd.f32 %v6102, %v6173
  %v6249 = vadd.f32 %v6103, %v6175
  %v6250 = vadd.f32 %v6104, %v6244
  %v6251 = vadd.f32 %v6105, %v6246
  %v6252 = vxor.u32 %v6248, 2147483648
  %v6253 = vmul.f32 %v6252, 1.442695
  %v6254 = vpow.pop %v6253
  %v6255 = vadd.f32 %v6254, 1.0
  %v6256 = vrcp.pop %v6255
  %v6257 = vmul.f32 1.0, %v6256
  %v6258 = vxor.u32 %v6249, 2147483648
  %v6259 = vmul.f32 %v6258, 1.442695
  %v6260 = vpow.pop %v6259
  %v6261 = vadd.f32 %v6260, 1.0
  %v6262 = vrcp.pop %v6261
  %v6263 = vmul.f32 1.0, %v6262
  %v6264 = vtanh.pop %v6250
  %v6265 = vxor.u32 %v6251, 2147483648
  %v6266 = vmul.f32 %v6265, 1.442695
  %v6267 = vpow.pop %v6266
  %v6268 = vadd.f32 %v6267, 1.0
  %v6269 = vrcp.pop %v6268
  %v6270 = vmul.f32 1.0, %v6269
  %v6271 = vmul.f32 %v6263, %v6099
  %v6272 = vmul.f32 %v6257, %v6264
  %v6273 = vadd.f32 %v6271, %v6272
  %v6274 = vtanh.pop %v6273
  %v6275 = vmul.f32 %v6270, %v6274
  %v6276 = vld [vmem:[#allocation2 + $0x3e0] sm:$0xff]
  %v6277 = vld [vmem:[#allocation2 + $0x3e8] sm:$0xff]
  %v6278 = vld [vmem:[#allocation2 + $0x3f0] sm:$0xff]
  %v6279 = vld [vmem:[#allocation2 + $0x3f8] sm:$0xff]
  %6280 = vmatprep.subr.mxu0 %v883
  %6281 = vmatpush1.msra.mxu0 %v882
  %6282 = vmatprep.subr.mxu0 %v879
  %6283 = vmatpush1.msra.mxu0 %v878
  %6284 = vmatprep.subr.mxu0 %v875
  %6285 = vmatpush1.msra.mxu0 %v874
  %6286 = vmatprep.subr.mxu0 %v871
  %6287 = vmatpush1.msra.mxu0 %v870
  %6288 = vmatprep.subr.mxu0 %v867
  %6289 = vmatpush1.msra.mxu0 %v866
  %6290 = vmatprep.subr.mxu0 %v863
  %6291 = vmatpush1.msra.mxu0 %v862
  %6292 = vmatprep.subr.mxu0 %v859
  %6293 = vmatpush1.msra.mxu0 %v858
  %6294 = vmatprep.subr.mxu0 %v855
  %6295 = vmatpush1.msra.mxu0 %v854
  %6296 = vmatprep.subr.mxu0 %v851
  %6297 = vmatpush1.msra.mxu0 %v850
  %6298 = vmatprep.subr.mxu0 %v847
  %6299 = vmatpush1.msra.mxu0 %v846
  %6300 = vmatprep.subr.mxu0 %v843
  %6301 = vmatpush1.msra.mxu0 %v842
  %6302 = vmatprep.subr.mxu0 %v839
  %6303 = vmatpush1.msra.mxu0 %v838
  %6304 = vmatprep.subr.mxu0 %v835
  %6305 = vmatpush1.msra.mxu0 %v834
  %6306 = vmatprep.subr.mxu0 %v831
  %6307 = vmatpush1.msra.mxu0 %v830
  %6308 = vmatprep.subr.mxu0 %v827
  %6309 = vmatpush1.msra.mxu0 %v826
  %6310 = vmatprep.subr.mxu0 %v823
  %6311 = vmatpush1.msra.mxu0 %v822
  %6312 = vmatprep.subr.mxu0 0.0
  %6313 = vmatpush2.msra.mxu0 0.0
  %6314 = vmatprep.subr.mxu0 0.0
  %6315 = vmatpush2.msra.mxu0 0.0
  %6316 = vmatprep.subr.mxu0 0.0
  %6317 = vmatpush2.msra.mxu0 0.0
  %6318 = vmatprep.subr.mxu0 0.0
  %6319 = vmatpush2.msra.mxu0 0.0
  %6320 = vmatprep.subr.mxu0 0.0
  %6321 = vmatpush2.msra.mxu0 0.0
  %6322 = vmatprep.subr.mxu0 0.0
  %6323 = vmatpush2.msra.mxu0 0.0
  %6324 = vmatprep.subr.mxu0 0.0
  %6325 = vmatpush2.msra.mxu0 0.0
  %6326 = vmatprep.subr.mxu0 0.0
  %6327 = vmatpush2.msra.mxu0 0.0
  %6328 = vmatprep.subr.mxu0 0.0
  %6329 = vmatpush2.msra.mxu0 0.0
  %6330 = vmatprep.subr.mxu0 0.0
  %6331 = vmatpush2.msra.mxu0 0.0
  %6332 = vmatprep.subr.mxu0 0.0
  %6333 = vmatpush2.msra.mxu0 0.0
  %6334 = vmatprep.subr.mxu0 0.0
  %6335 = vmatpush2.msra.mxu0 0.0
  %6336 = vmatprep.subr.mxu0 0.0
  %6337 = vmatpush2.msra.mxu0 0.0
  %6338 = vmatprep.subr.mxu0 0.0
  %6339 = vmatpush2.msra.mxu0 0.0
  %6340 = vmatprep.subr.mxu0 0.0
  %6341 = vmatpush2.msra.mxu0 0.0
  %6342 = vmatprep.subr.mxu0 0.0
  %6343 = vmatpush2.msra.mxu0 0.0
  %6344 = vmatprep.mubr.f32.mxu0 0.0
  %6345 = vmatmul.mubr.f32.gmra.mxu0 %v6275
  %v6346 = vpop.f32.mrf.mxu0
  %v6347 = vadd.f32 0.0, %v6346
  %v6348 = vpop.f32.mrf.mxu0
  %v6349 = vadd.f32 0.0, %v6348
  %6350 = vdwg.mxu0
  %6351 = vmatprep.subr.mxu0 %v885
  %6352 = vmatpush1.msra.mxu0 %v884
  %6353 = vmatprep.subr.mxu0 %v881
  %6354 = vmatpush1.msra.mxu0 %v880
  %6355 = vmatprep.subr.mxu0 %v877
  %6356 = vmatpush1.msra.mxu0 %v876
  %6357 = vmatprep.subr.mxu0 %v873
  %6358 = vmatpush1.msra.mxu0 %v872
  %6359 = vmatprep.subr.mxu0 %v869
  %6360 = vmatpush1.msra.mxu0 %v868
  %6361 = vmatprep.subr.mxu0 %v865
  %6362 = vmatpush1.msra.mxu0 %v864
  %6363 = vmatprep.subr.mxu0 %v861
  %6364 = vmatpush1.msra.mxu0 %v860
  %6365 = vmatprep.subr.mxu0 %v857
  %6366 = vmatpush1.msra.mxu0 %v856
  %6367 = vmatprep.subr.mxu0 %v853
  %6368 = vmatpush1.msra.mxu0 %v852
  %6369 = vmatprep.subr.mxu0 %v849
  %6370 = vmatpush1.msra.mxu0 %v848
  %6371 = vmatprep.subr.mxu0 %v845
  %6372 = vmatpush1.msra.mxu0 %v844
  %6373 = vmatprep.subr.mxu0 %v841
  %6374 = vmatpush1.msra.mxu0 %v840
  %6375 = vmatprep.subr.mxu0 %v837
  %6376 = vmatpush1.msra.mxu0 %v836
  %6377 = vmatprep.subr.mxu0 %v833
  %6378 = vmatpush1.msra.mxu0 %v832
  %6379 = vmatprep.subr.mxu0 %v829
  %6380 = vmatpush1.msra.mxu0 %v828
  %6381 = vmatprep.subr.mxu0 %v825
  %6382 = vmatpush1.msra.mxu0 %v824
  %6383 = vmatprep.subr.mxu0 0.0
  %6384 = vmatpush2.msra.mxu0 0.0
  %6385 = vmatprep.subr.mxu0 0.0
  %6386 = vmatpush2.msra.mxu0 0.0
  %6387 = vmatprep.subr.mxu0 0.0
  %6388 = vmatpush2.msra.mxu0 0.0
  %6389 = vmatprep.subr.mxu0 0.0
  %6390 = vmatpush2.msra.mxu0 0.0
  %6391 = vmatprep.subr.mxu0 0.0
  %6392 = vmatpush2.msra.mxu0 0.0
  %6393 = vmatprep.subr.mxu0 0.0
  %6394 = vmatpush2.msra.mxu0 0.0
  %6395 = vmatprep.subr.mxu0 0.0
  %6396 = vmatpush2.msra.mxu0 0.0
  %6397 = vmatprep.subr.mxu0 0.0
  %6398 = vmatpush2.msra.mxu0 0.0
  %6399 = vmatprep.subr.mxu0 0.0
  %6400 = vmatpush2.msra.mxu0 0.0
  %6401 = vmatprep.subr.mxu0 0.0
  %6402 = vmatpush2.msra.mxu0 0.0
  %6403 = vmatprep.subr.mxu0 0.0
  %6404 = vmatpush2.msra.mxu0 0.0
  %6405 = vmatprep.subr.mxu0 0.0
  %6406 = vmatpush2.msra.mxu0 0.0
  %6407 = vmatprep.subr.mxu0 0.0
  %6408 = vmatpush2.msra.mxu0 0.0
  %6409 = vmatprep.subr.mxu0 0.0
  %6410 = vmatpush2.msra.mxu0 0.0
  %6411 = vmatprep.subr.mxu0 0.0
  %6412 = vmatpush2.msra.mxu0 0.0
  %6413 = vmatprep.subr.mxu0 0.0
  %6414 = vmatpush2.msra.mxu0 0.0
  %6415 = vmatprep.mubr.f32.mxu0 0.0
  %6416 = vmatmul.mubr.f32.gmra.mxu0 %v6275
  %v6417 = vpop.f32.mrf.mxu0
  %v6418 = vadd.f32 0.0, %v6417
  %v6419 = vpop.f32.mrf.mxu0
  %v6420 = vadd.f32 0.0, %v6419
  %6421 = vdwg.mxu0
  %v6422 = vadd.f32 %v6276, %v6347
  %v6423 = vadd.f32 %v6277, %v6349
  %v6424 = vadd.f32 %v6278, %v6418
  %v6425 = vadd.f32 %v6279, %v6420
  %v6426 = vxor.u32 %v6422, 2147483648
  %v6427 = vmul.f32 %v6426, 1.442695
  %v6428 = vpow.pop %v6427
  %v6429 = vadd.f32 %v6428, 1.0
  %v6430 = vrcp.pop %v6429
  %v6431 = vmul.f32 1.0, %v6430
  %v6432 = vxor.u32 %v6423, 2147483648
  %v6433 = vmul.f32 %v6432, 1.442695
  %v6434 = vpow.pop %v6433
  %v6435 = vadd.f32 %v6434, 1.0
  %v6436 = vrcp.pop %v6435
  %v6437 = vmul.f32 1.0, %v6436
  %v6438 = vtanh.pop %v6424
  %v6439 = vxor.u32 %v6425, 2147483648
  %v6440 = vmul.f32 %v6439, 1.442695
  %v6441 = vpow.pop %v6440
  %v6442 = vadd.f32 %v6441, 1.0
  %v6443 = vrcp.pop %v6442
  %v6444 = vmul.f32 1.0, %v6443
  %v6445 = vmul.f32 %v6437, %v6273
  %v6446 = vmul.f32 %v6431, %v6438
  %v6447 = vadd.f32 %v6445, %v6446
  %v6448 = vtanh.pop %v6447
  %v6449 = vmul.f32 %v6444, %v6448
  %6450 = vst [vmem:[%s4] sm:$0xff] %v6449
  // Predicated region
  $region18: #{mlstm_fcn_forward.2} parent=0 // pred_check
    _
  $region19: #{mlstm_fcn_forward.2} parent=0 // pred_check_branch
    %6452 = sbr.rel (0) target = $region21
  $region20: #{mlstm_fcn_forward.2} parent=0 // pred_region
    _
  $region21: #{mlstm_fcn_forward.2} parent=0 // pred_fallthru
    _
  // Predicated region
  $region22: #{mlstm_fcn_forward.2} parent=0 // pred_check
    _
  $region23: #{mlstm_fcn_forward.2} parent=0 // pred_check_branch
    %6454 = sbr.rel (0) target = $region25
  $region24: #{mlstm_fcn_forward.2} parent=0 // pred_region
    _
  $region25: #{mlstm_fcn_forward.2} parent=0 // pred_fallthru
    _

</llo_original>
